<compile_context>
chip_gen: v7x
topology: tpu7x:2x2x1
jax: 0.10.0
libtpu: 0.0.40
codegen_flags: <defaults>
</compile_context>

<pallas_src>
import math
import functools

import jax
import jax.numpy as jnp
from jax.experimental import pallas as pl
from jax.experimental.pallas import tpu as pltpu

PI = 3.1415926
MAX_TN = 1024  # max row tile; blocks stay far below the scoped VMEM limit
_PARALLEL = pltpu.CompilerParams(dimension_semantics=("parallel",))


def _row_tile(n):
    """Largest sublane-aligned row tile <= MAX_TN for n rows."""
    n8 = ((n + 7) // 8) * 8
    return max(8, min(MAX_TN, n8))


# --------------------------------------------------------------------------
# Pallas kernels
# --------------------------------------------------------------------------
def _select_matmul_kernel(k_ref, x_ref, w_ref, o_ref, *, n_k):
    # k_ref: (TN, 1) int32, x_ref: (TN, E) bf16, w_ref: (2K*E, E) bf16,
    # o_ref: (TN, E) f32.
    # One-hot-pack x along the lane axis and do a single MXU matmul:
    #   xh[n, k*E + e] = x[n, e] * [k_idx[n] == k]
    #   y = xh @ w2d  with  w2d[k*E + e, f] = w[k, e, f]
    x = x_ref[...]
    k = k_ref[...]
    zero = jnp.zeros_like(x)
    pieces = [jnp.where(k == kk, x, zero) for kk in range(n_k)]
    xh = jnp.concatenate(pieces, axis=-1)                    # (TN, 2K*E) bf16
    o_ref[...] = jnp.dot(xh, w_ref[...],
                         preferred_element_type=jnp.float32)


def _select_matmul_pallas(x, k_idx, w2d, n_k):
    N, E = x.shape
    TN = _row_tile(N)
    return pl.pallas_call(
        functools.partial(_select_matmul_kernel, n_k=n_k),
        out_shape=jax.ShapeDtypeStruct((N, E), jnp.float32),
        grid=(pl.cdiv(N, TN),),
        in_specs=[
            pl.BlockSpec((TN, 1), lambda i: (i, 0)),
            pl.BlockSpec((TN, E), lambda i: (i, 0)),
            pl.BlockSpec(w2d.shape, lambda i: (0, 0)),
        ],
        out_specs=pl.BlockSpec((TN, E), lambda i: (i, 0)),
        compiler_params=_PARALLEL,
    )(k_idx.astype(jnp.int32)[:, None], x.astype(jnp.bfloat16), w2d)


def select_matmul(x, k_idx, w_all):
    """y[n] = x[n] @ w_all[k_idx[n]]   (differentiable in x only)."""
    n_k, E, _ = w_all.shape
    w2d = w_all.astype(jnp.bfloat16).reshape(n_k * E, E)
    wT2d = jnp.swapaxes(w_all, -1, -2).astype(jnp.bfloat16).reshape(n_k * E, E)

    @jax.custom_vjp
    def f(x):
        return _select_matmul_pallas(x, k_idx, w2d, n_k)

    def f_fwd(x):
        return _select_matmul_pallas(x, k_idx, w2d, n_k), None

    def f_bwd(_, g):
        return (_select_matmul_pallas(g, k_idx, wT2d, n_k),)

    f.defvjp(f_fwd, f_bwd)
    # TODO(synk): gradient w.r.t. w_k is not propagated (the PyTorch forward
    # computes it inside loss.backward() but immediately discards it).
    return f(x)


def _vocab_lp_kernel(tok_ref, z_ref, emb_ref, lp_ref, lse_ref):
    # z_ref: (TN, E) bf16, emb_ref: (V, E) bf16, tok_ref: (TN, 1) int32,
    # lp_ref: (1, TN) f32 (lane-dense), lse_ref: (TN, 1) f32 (residual).
    logits = jax.lax.dot_general(z_ref[...], emb_ref[...],
                                 (((1,), (1,)), ((), ())),
                                 preferred_element_type=jnp.float32)  # (TN,V)
    m = jnp.max(logits, axis=-1, keepdims=True)
    lse = m + jnp.log(jnp.sum(jnp.exp(logits - m), axis=-1, keepdims=True))
    logp = logits - lse
    tok = tok_ref[...]
    vid = jax.lax.broadcasted_iota(jnp.int32, logits.shape, 1)
    masked = jnp.where(vid == tok, logp, 0.0)                 # (TN, V)
    # Lane-dense (1, TN) output via an MXU contraction over V: avoids the
    # masked (TN, 1) partial-store path on the primary output.
    ones = jnp.ones((1, logits.shape[1]), jnp.float32)
    lp_ref[...] = jax.lax.dot_general(ones, masked,
                                      (((1,), (1,)), ((), ())),
                                      preferred_element_type=jnp.float32)
    lse_ref[...] = lse


def _vocab_lp_bwd_kernel(tok_ref, z_ref, g_ref, lse_ref, emb_ref, dz_ref):
    # Recomputes logits (correct for large V) but reuses the saved lse, so the
    # max + renormalisation passes are skipped.
    emb = emb_ref[...]
    logits = jax.lax.dot_general(z_ref[...], emb,
                                 (((1,), (1,)), ((), ())),
                                 preferred_element_type=jnp.float32)
    p = jnp.exp(logits - lse_ref[...])                        # softmax (TN, V)
    tok = tok_ref[...]
    vid = jax.lax.broadcasted_iota(jnp.int32, logits.shape, 1)
    onehot = (vid == tok).astype(jnp.float32)
    dlogits = g_ref[...] * (onehot - p)
    dz_ref[...] = jnp.dot(dlogits.astype(emb.dtype), emb,
                          preferred_element_type=jnp.float32)


def _vocab_lp_fwd_pallas(z, tok, emb_bf16):
    N, E = z.shape
    V = emb_bf16.shape[0]
    TN = _row_tile(N)
    nt = pl.cdiv(N, TN)
    lp2d, lse = pl.pallas_call(
        _vocab_lp_kernel,
        out_shape=(jax.ShapeDtypeStruct((nt, TN), jnp.float32),
                   jax.ShapeDtypeStruct((N, 1), jnp.float32)),
        grid=(nt,),
        in_specs=[
            pl.BlockSpec((TN, 1), lambda i: (i, 0)),
            pl.BlockSpec((TN, E), lambda i: (i, 0)),
            pl.BlockSpec((V, E), lambda i: (0, 0)),
        ],
        out_specs=(pl.BlockSpec((1, TN), lambda i: (i, 0)),
                   pl.BlockSpec((TN, 1), lambda i: (i, 0))),
        compiler_params=_PARALLEL,
    )(tok.astype(jnp.int32)[:, None], z.astype(jnp.bfloat16), emb_bf16)
    lp = lp2d.reshape(-1)[:N]
    return lp, lse


def _vocab_lp_bwd_pallas(z, g, tok, lse, emb_bf16):
    N, E = z.shape
    V = emb_bf16.shape[0]
    TN = _row_tile(N)
    return pl.pallas_call(
        _vocab_lp_bwd_kernel,
        out_shape=jax.ShapeDtypeStruct((N, E), jnp.float32),
        grid=(pl.cdiv(N, TN),),
        in_specs=[
            pl.BlockSpec((TN, 1), lambda i: (i, 0)),   # tok
            pl.BlockSpec((TN, E), lambda i: (i, 0)),   # z
            pl.BlockSpec((TN, 1), lambda i: (i, 0)),   # g
            pl.BlockSpec((TN, 1), lambda i: (i, 0)),   # lse residual
            pl.BlockSpec((V, E), lambda i: (0, 0)),    # emb
        ],
        out_specs=pl.BlockSpec((TN, E), lambda i: (i, 0)),
        compiler_params=_PARALLEL,
    )(tok.astype(jnp.int32)[:, None], z.astype(jnp.bfloat16),
      g.astype(jnp.float32)[:, None], lse, emb_bf16)


def vocab_logprob(z, tok, emb):
    """lp[n] = log_softmax(z[n] @ emb.T)[tok[n]]   (differentiable in z)."""
    emb_bf16 = emb.astype(jnp.bfloat16)

    @jax.custom_vjp
    def f(z):
        lp, _ = _vocab_lp_fwd_pallas(z, tok, emb_bf16)
        return lp

    def f_fwd(z):
        lp, lse = _vocab_lp_fwd_pallas(z, tok, emb_bf16)
        return lp, (z, lse)

    def f_bwd(res, g):
        z_res, lse = res
        return (_vocab_lp_bwd_pallas(z_res, g, tok, lse, emb_bf16),)

    f.defvjp(f_fwd, f_bwd)
    # TODO(synk): gradient w.r.t. emb_vocab not propagated (discarded in torch).
    return f(z)


# --------------------------------------------------------------------------
# Model glue (plain JAX) — mirrors dptm/dptm.py
# --------------------------------------------------------------------------
def expand_graph_proposals(params, node_par, node_par_k, t):
    K = params['K']
    EPS = params['EPS']
    M = params['M']
    B = node_par.shape[0]
    L = node_par.shape[2] // 2
    L2, K2 = 2 * L, 2 * K

    # parent proposals ------------------------------------------------------
    par_exp = jnp.broadcast_to(node_par[:, :, :, None], (B, M, L2, L2))
    i_idx = jnp.arange(L2)[:, None]
    j_idx = jnp.arange(L2)[None, :]
    c = jnp.where((i_idx == j_idx)[None, None], L + t, par_exp)
    c = c.at[:, :, t, :].set(L + t)
    if t > 0:
        c = c.at[:, :, L + t, :].set(node_par)
    node_par_exp_c = jnp.broadcast_to(c[:, :, :, None, :], (B, M, L2, K2, L2))

    # parent-k proposals ----------------------------------------------------
    k_exp = jnp.broadcast_to(node_par_k[:, :, :, None, None],
                             (B, M, L2, K2, L2))
    ii = jnp.arange(L2)[:, None, None]
    kk = jnp.arange(K2)[None, :, None]
    k_sib = jnp.broadcast_to((kk + K) % K2, (L2, K2, L2))
    k_new = jnp.broadcast_to(kk, (L2, K2, L2))
    jj = jnp.arange(L2)[None, None, :]
    kc = jnp.where((ii == jj)[None, None], k_sib[None, None], k_exp)
    kc = jnp.where((ii == t)[None, None], k_new[None, None], kc)
    kc = jnp.where((ii == (L + t))[None, None],
                   node_par_k[:, :, None, None, :], kc)

    # prior over proposals --------------------------------------------------
    ar = jnp.arange(L)
    a = (ar <= max(0, t - 1)).astype(jnp.float32)
    b = ((ar <= t - 1) & (ar > 0)).astype(jnp.float32)
    opt = jnp.concatenate([a, b], axis=0)
    opt = jnp.broadcast_to(opt[None], (K2, L2)) + EPS
    opt = jnp.log(opt / jnp.sum(opt))
    opt_prior_cond = opt[None, None]  # (1,1,2K,2L)
    return node_par_exp_c, kc, opt_prior_cond


def select_bmkl(array, idx_array):
    K2, L2 = array.shape[2], array.shape[3]
    B, M = idx_array.shape
    idx_m = idx_array // (K2 * L2)
    rem = idx_array % (K2 * L2)
    idx_k = rem // L2
    idx_l = rem % L2
    idx_b = jnp.broadcast_to(jnp.arange(B)[:, None], (B, M))
    return array[idx_b, idx_m, idx_k, idx_l]


def get_local_logp(node_ie_exp, noise, node_par_prop, node_par_k_prop,
                   w_k, emb_vocab, tok_external, lp_graph_prop,
                   t, T, betasq, betasq_2, is_mask_last):
    B, M, L2, K2, _, E = node_ie_exp.shape
    L = L2 // 2
    node_ie_exp_noise = node_ie_exp + noise

    # TODO(synk): the parent gather (take_along_axis on the broadcast tensor)
    # could be fused into the select_matmul kernel via scalar prefetch to cut
    # HBM traffic; kept in plain JAX here so autodiff handles the scatter-add.
    idx = jnp.broadcast_to(node_par_prop[..., None], node_ie_exp.shape)
    node_ie_par_prop = jnp.take_along_axis(node_ie_exp, idx, axis=2)

    # ---- Pallas: per-proposal (E x E) selective matmul --------------------
    x_flat = node_ie_par_prop.reshape(-1, E)
    k_flat = node_par_k_prop.reshape(-1)
    node_wke_prop = select_matmul(x_flat, k_flat, w_k).reshape(
        node_ie_par_prop.shape)
    node_wke_prop = node_wke_prop.at[:, :, T:T + 1].set(0.0)

    diff = node_ie_exp_noise[:, :, T:T + t + 1] - node_wke_prop[:, :, T:T + t + 1]
    nz = noise[:, :, T:T + t + 1]
    lp_internal = jnp.sum(
        0.5 * math.log(betasq / 2 / PI) - 0.5 * betasq * jnp.square(diff)
        - 0.5 * math.log(betasq_2 / 2 / PI) + 0.5 * betasq_2 * jnp.square(nz),
        axis=(2, 5))

    n_ext = t + 1 - is_mask_last
    if n_ext > 0:
        z = node_wke_prop[:, :, 0:n_ext]                         # (B,M,n,2K,2L,E)
        tok = jnp.broadcast_to(tok_external[:, None, :, None, None],
                               (B, M, L, K2, L2))[:, :, 0:n_ext]
        # ---- Pallas: vocab projection + log-softmax + token gather --------
        lp_tok = vocab_logprob(z.reshape(-1, E), tok.reshape(-1), emb_vocab)
        lp_external = lp_tok.reshape(z.shape[:-1]).sum(axis=2)   # (B,M,2K,2L)
    else:
        lp_external = 0.0

    opt_logp = lp_internal + lp_external + lp_graph_prop
    return opt_logp, node_wke_prop


def inner_loop(params, weights, xd, t, max_t, is_ar_loss, key):
    w_k = weights['w_k']
    emb_vocab = weights['emb_vocab']
    tok_external = xd['tok_external']
    lp_graph = xd['lp_graph']
    node_ie = xd['node_ie']
    node_par = xd['node_par']
    node_par_k = xd['node_par_k']

    K = params['K']
    E = params['E']
    M = params['M']
    betasq = params['betasq']
    betasq_2 = params['betasq_2']
    inner_nstep = params['inner_nstep']
    inner_nsample = params['inner_nsample']
    inner_lr = params['inner_lr']

    B, L = tok_external.shape
    T = max_t
    is_mask_last = int(is_ar_loss)

    node_par_prop, node_par_k_prop, opt_prior_cond = expand_graph_proposals(
        params, node_par, node_par_k, t)
    node_ie_exp = jnp.broadcast_to(node_ie[:, :, :, None, None, :],
                                   (B, M, 2 * L, 2 * K, 2 * L, E)) + 0.0
    lp_graph_prop = opt_prior_cond + lp_graph[:, :, None, None]
    sigma2 = (1.0 / betasq_2) ** 0.5

    def objective(node_ie_exp, noises):
        opt_logp = 0.0
        nwke = None
        for s in range(inner_nsample):
            ol, nwke = get_local_logp(node_ie_exp, noises[s], node_par_prop,
                                      node_par_k_prop, w_k, emb_vocab,
                                      tok_external, lp_graph_prop, t, T,
                                      betasq, betasq_2, is_mask_last)
            opt_logp = opt_logp + ol
        opt_logp = opt_logp / inner_nsample
        return -jnp.sum(opt_logp), (opt_logp, nwke)

    grad_fn = jax.value_and_grad(objective, has_aux=True)

    opt_logp = None
    node_wke_prop = None
    for _ in range(inner_nstep):
        key, sk = jax.random.split(key)
        noises = sigma2 * jax.random.normal(
            sk, (inner_nsample,) + node_ie_exp.shape, dtype=jnp.float32)
        (_, (opt_logp, node_wke_prop)), g = grad_fn(node_ie_exp, noises)
        node_ie_exp = node_ie_exp - inner_lr * g

    opt_logp_max = opt_logp
    xd_next = dict(xd)

    if is_ar_loss:
        z = node_wke_prop[:, :, t:t + 1]
        tok = jnp.broadcast_to(tok_external[:, None, :, None, None],
                               (B, M, L, 2 * K, 2 * L))[:, :, t:t + 1]
        lp_cond = vocab_logprob(z.reshape(-1, E), tok.reshape(-1),
                                emb_vocab).reshape(B, M, 1, 2 * K, 2 * L)[:, :, 0]
        opt_logp_max_post = opt_logp_max - jax.scipy.special.logsumexp(
            opt_logp_max, axis=(1, 2, 3), keepdims=True)
        opt_logp_max = opt_logp_max + lp_cond
        ar_cond_lp = jax.scipy.special.logsumexp(
            opt_logp_max_post + lp_cond, axis=(1, 2, 3))[:, None]
        xd_next['lp_ar'] = xd['lp_ar'] + ar_cond_lp

    opt_reshape = opt_logp_max.reshape(B, M * (2 * K) * (2 * L))
    _, max_m_idx = jax.lax.top_k(opt_reshape, M)
    xd_next['lp_joint_bm'] = jnp.take_along_axis(opt_reshape, max_m_idx, axis=1)
    xd_next['lp_graph'] = select_bmkl(lp_graph_prop, max_m_idx)
    xd_next['node_ie'] = select_bmkl(
        jnp.transpose(node_ie_exp, (0, 1, 3, 4, 2, 5)), max_m_idx)
    xd_next['node_par'] = select_bmkl(
        jnp.transpose(node_par_prop, (0, 1, 3, 4, 2)), max_m_idx)
    xd_next['node_par_k'] = select_bmkl(
        jnp.transpose(node_par_k_prop, (0, 1, 3, 4, 2)), max_m_idx)
    return xd_next, key


def get_init_dict(params, tok_external):
    B, L = tok_external.shape
    M, E, T = params['M'], params['E'], params['T']
    assert L <= T, (L, T)
    return dict(
        tok_external=tok_external,
        lp_graph=jnp.zeros((B, M), jnp.float32),
        node_ie=jnp.zeros((B, M, 2 * L, E), jnp.float32),
        node_par=jnp.zeros((B, M, 2 * L), jnp.int32),
        node_par_k=jnp.zeros((B, M, 2 * L), jnp.int32),
        lp_joint_bm=jnp.zeros((B, M), jnp.float32),
        lp_ar=jnp.zeros((B, 1), jnp.float32),
        max_t=min(L, T),
    )


def dpt_forward(params, weights, tok_external, key, is_ar_loss=False):
    xd = get_init_dict(params, tok_external)
    max_t = xd['max_t']
    for t in range(max_t):
        xd, key = inner_loop(params, weights, xd, t, max_t, is_ar_loss, key)
    loss_bm = xd['lp_ar'] if is_ar_loss else xd['lp_joint_bm']
    return loss_bm, xd


# --------------------------------------------------------------------------
if __name__ == "__main__":
    key = jax.random.PRNGKey(0)
    B, L = 2, 4
    V, K, E, M, T = 16, 2, 8, 2, 4
    params = dict(V=V, K=K, E=E, M=M, T=T, EPS=1e-8,
                  betasq=1.0, betasq_2=1.0,
                  inner_nsample=1, inner_nstep=2, inner_lr=0.05)

    k1, k2, k3, key = jax.random.split(key, 4)
    weights = dict(
        emb_vocab=0.1 * jax.random.normal(k1, (V, E), jnp.float32),   # (V, E)
        w_k=0.1 * jax.random.normal(k2, (2 * K, E, E), jnp.float32),  # (2K,E,E)
    )
    tok_external = jax.random.randint(k3, (B, L), 0, V, dtype=jnp.int32)

    loss_bm, xd = dpt_forward(params, weights, tok_external, key,
                              is_ar_loss=False)
    jax.block_until_ready(loss_bm)
    jax.block_until_ready(xd['node_ie'])
    assert loss_bm.shape == (B, M)
    assert bool(jnp.all(jnp.isfinite(loss_bm)))
    print("KERNEL_OK")
</pallas_src>

<mosaic_0001>
module attributes {stable_mosaic.version = 11 : i64} {
  func.func @_select_matmul_kernel(%arg0: i32, %arg1: memref<1024x1xi32, #tpu.memory_space<vmem>>, %arg2: memref<1024x8xbf16, #tpu.memory_space<vmem>>, %arg3: memref<32x8xbf16, #tpu.memory_space<vmem>>, %arg4: memref<1024x8xf32, #tpu.memory_space<vmem>>) attributes {dimension_semantics = [#tpu.dimension_semantics<parallel>], iteration_bounds = array<i64: 1>, scalar_prefetch = 0 : i64, scratch_operands = 0 : i64, tpu.core_type = #tpu.core_type<tc>, window_params = [{transform_indices = @transform_0, window_bounds = array<i64: 1024, 1>}, {transform_indices = @transform_1, window_bounds = array<i64: 1024, 8>}, {pipeline_mode = #tpu.pipeline_mode<synchronous>, transform_indices = @transform_2, window_bounds = array<i64: 32, 8>}, {transform_indices = @transform_3, window_bounds = array<i64: 1024, 8>}]} {
    %c0 = arith.constant 0 : index
    %c0_0 = arith.constant 0 : index
    %0 = vector.load %arg2[%c0, %c0_0] : memref<1024x8xbf16, #tpu.memory_space<vmem>>, vector<1024x8xbf16>
    %c0_1 = arith.constant 0 : index
    %c0_2 = arith.constant 0 : index
    %1 = vector.load %arg1[%c0_1, %c0_2] : memref<1024x1xi32, #tpu.memory_space<vmem>>, vector<1024x1xi32>
    %cst = arith.constant 0.000000e+00 : bf16
    %2 = vector.broadcast %cst : bf16 to vector<1024x8xbf16>
    %c0_i32 = arith.constant 0 : i32
    %3 = vector.broadcast %c0_i32 : i32 to vector<1024x1xi32>
    %4 = arith.cmpi eq, %1, %3 : vector<1024x1xi32>
    %5 = vector.shape_cast %4 : vector<1024x1xi1> to vector<1024x1xi1>
    %6 = vector.broadcast %5 : vector<1024x1xi1> to vector<1024x8xi1>
    %7 = arith.select %6, %0, %2 : vector<1024x8xi1>, vector<1024x8xbf16>
    %c1_i32 = arith.constant 1 : i32
    %8 = vector.broadcast %c1_i32 : i32 to vector<1024x1xi32>
    %9 = arith.cmpi eq, %1, %8 : vector<1024x1xi32>
    %10 = vector.shape_cast %9 : vector<1024x1xi1> to vector<1024x1xi1>
    %11 = vector.broadcast %10 : vector<1024x1xi1> to vector<1024x8xi1>
    %12 = arith.select %11, %0, %2 : vector<1024x8xi1>, vector<1024x8xbf16>
    %c2_i32 = arith.constant 2 : i32
    %13 = vector.broadcast %c2_i32 : i32 to vector<1024x1xi32>
    %14 = arith.cmpi eq, %1, %13 : vector<1024x1xi32>
    %15 = vector.shape_cast %14 : vector<1024x1xi1> to vector<1024x1xi1>
    %16 = vector.broadcast %15 : vector<1024x1xi1> to vector<1024x8xi1>
    %17 = arith.select %16, %0, %2 : vector<1024x8xi1>, vector<1024x8xbf16>
    %c3_i32 = arith.constant 3 : i32
    %18 = vector.broadcast %c3_i32 : i32 to vector<1024x1xi32>
    %19 = arith.cmpi eq, %1, %18 : vector<1024x1xi32>
    %20 = vector.shape_cast %19 : vector<1024x1xi1> to vector<1024x1xi1>
    %21 = vector.broadcast %20 : vector<1024x1xi1> to vector<1024x8xi1>
    %22 = arith.select %21, %0, %2 : vector<1024x8xi1>, vector<1024x8xbf16>
    %23 = tpu.concatenate %7, %12, %17, %22 in 1 : vector<1024x8xbf16>, vector<1024x8xbf16>, vector<1024x8xbf16>, vector<1024x8xbf16> -> vector<1024x32xbf16>
    %c0_3 = arith.constant 0 : index
    %c0_4 = arith.constant 0 : index
    %24 = vector.load %arg3[%c0_3, %c0_4] : memref<32x8xbf16, #tpu.memory_space<vmem>>, vector<32x8xbf16>
    %cst_5 = arith.constant dense<0.000000e+00> : vector<1024x8xf32>
    %25 = tpu.matmul %23, %24, %cst_5 {dimension_numbers = #tpu.dot_dimension_numbers<[1], [0], [0], [1], [0, 0, 1, 1], [], []>} : vector<1024x32xbf16>, vector<32x8xbf16>, vector<1024x8xf32> -> vector<1024x8xf32>
    %c0_6 = arith.constant 0 : index
    %c0_7 = arith.constant 0 : index
    %26 = vector.load %arg4[%c0_6, %c0_7] : memref<1024x8xf32, #tpu.memory_space<vmem>>, vector<1024x8xf32>
    tpu.vector_store %arg4[%c0_6, %c0_7], %25 {strides = array<i32>} : memref<1024x8xf32, #tpu.memory_space<vmem>>, vector<1024x8xf32>,
    return
  }
  func.func @transform_0(%arg0: i32) -> (i32, i32) {
    %c0_i32 = arith.constant 0 : i32
    %c0_i32_0 = arith.constant 0 : i32
    return %arg0, %c0_i32 : i32, i32
  }
  func.func @transform_1(%arg0: i32) -> (i32, i32) {
    %c0_i32 = arith.constant 0 : i32
    %c0_i32_0 = arith.constant 0 : i32
    return %arg0, %c0_i32 : i32, i32
  }
  func.func @transform_2(%arg0: i32) -> (i32, i32) {
    %c0_i32 = arith.constant 0 : i32
    %c0_i32_0 = arith.constant 0 : i32
    %c0_i32_1 = arith.constant 0 : i32
    return %c0_i32, %c0_i32_0 : i32, i32
  }
  func.func @transform_3(%arg0: i32) -> (i32, i32) {
    %c0_i32 = arith.constant 0 : i32
    %c0_i32_0 = arith.constant 0 : i32
    return %arg0, %c0_i32 : i32, i32
  }
}

</mosaic_0001>

<llo_original>
// kernel: tpu_custom_call.1
$region0: #{tpu_custom_call.1}
  #allocation0 [shape = 'u32[]', space=smem, size = 0x4, offset = 0x4, fixed_abs, tag = 'smem constant byte address 0x4 - core index']
  #allocation1 [shape = 'u32[144,128]{1,0:T(1,128)}', space=vmem, size = 0x12000, scoped, tag = 'internal scratch']
  %s0 = inlined_call_operand.vmem [shape: s32[1024,1], index: 0, kind: input, shape index: {}]
  %s1 = inlined_call_operand.vmem [shape: bf16[1024,8], index: 1, kind: input, shape index: {}]
  %s2 = inlined_call_operand.vmem [shape: bf16[32,8], index: 2, kind: input, shape index: {}]
  %s3 = inlined_call_operand.vmem [shape: f32[1024,8], index: 3, kind: output, shape index: {}]
  %s4 = sld [smem:[#allocation0]]
  $region22: #{tpu_custom_call.1} parent=0
    _
  %s6 = ssub.s32 1, %s4
  %s7 = scalar_select 0, %s6, %s4
  // Predicated region
  $region2: #{tpu_custom_call.1} parent=0 // pred_check
    _
  $region3: #{tpu_custom_call.1} parent=0 // pred_check_branch
    %9 = sbr.rel (0) target = $region5
  $region4: #{tpu_custom_call.1} parent=0 // pred_region
    _
  $region5: #{tpu_custom_call.1} parent=0 // pred_fallthru
    _
  // Predicated region
  $region6: #{tpu_custom_call.1} parent=0 // pred_check
    _
  $region7: #{tpu_custom_call.1} parent=0 // pred_check_branch
    %11 = sbr.rel (0) target = $region9
  $region8: #{tpu_custom_call.1} parent=0 // pred_region
    _
  $region9: #{tpu_custom_call.1} parent=0 // pred_fallthru
    _
  // Predicated region
  $region10: #{tpu_custom_call.1} parent=0 // pred_check
    _
  $region11: #{tpu_custom_call.1} parent=0 // pred_check_branch
    %13 = sbr.rel (0) target = $region13
  $region12: #{tpu_custom_call.1} parent=0 // pred_region
    _
  $region13: #{tpu_custom_call.1} parent=0 // pred_fallthru
    _
  %v15 = vld [vmem:[%s1] sm:$0xf]
  %v16 = vld [vmem:[%s1 + $0x4] sm:$0xf]
  %v17 = vld [vmem:[%s1 + $0x8] sm:$0xf]
  %v18 = vld [vmem:[%s1 + $0xc] sm:$0xf]
  %v19 = vld [vmem:[%s1 + $0x10] sm:$0xf]
  %v20 = vld [vmem:[%s1 + $0x14] sm:$0xf]
  %v21 = vld [vmem:[%s1 + $0x18] sm:$0xf]
  %v22 = vld [vmem:[%s1 + $0x1c] sm:$0xf]
  %v23 = vld [vmem:[%s1 + $0x20] sm:$0xf]
  %v24 = vld [vmem:[%s1 + $0x24] sm:$0xf]
  %v25 = vld [vmem:[%s1 + $0x28] sm:$0xf]
  %v26 = vld [vmem:[%s1 + $0x2c] sm:$0xf]
  %v27 = vld [vmem:[%s1 + $0x30] sm:$0xf]
  %v28 = vld [vmem:[%s1 + $0x34] sm:$0xf]
  %v29 = vld [vmem:[%s1 + $0x38] sm:$0xf]
  %v30 = vld [vmem:[%s1 + $0x3c] sm:$0xf]
  %v31 = vld [vmem:[%s1 + $0x40] sm:$0xf]
  %v32 = vld [vmem:[%s1 + $0x44] sm:$0xf]
  %v33 = vld [vmem:[%s1 + $0x48] sm:$0xf]
  %v34 = vld [vmem:[%s1 + $0x4c] sm:$0xf]
  %v35 = vld [vmem:[%s1 + $0x50] sm:$0xf]
  %v36 = vld [vmem:[%s1 + $0x54] sm:$0xf]
  %v37 = vld [vmem:[%s1 + $0x58] sm:$0xf]
  %v38 = vld [vmem:[%s1 + $0x5c] sm:$0xf]
  %v39 = vld [vmem:[%s1 + $0x60] sm:$0xf]
  %v40 = vld [vmem:[%s1 + $0x64] sm:$0xf]
  %v41 = vld [vmem:[%s1 + $0x68] sm:$0xf]
  %v42 = vld [vmem:[%s1 + $0x6c] sm:$0xf]
  %v43 = vld [vmem:[%s1 + $0x70] sm:$0xf]
  %v44 = vld [vmem:[%s1 + $0x74] sm:$0xf]
  %v45 = vld [vmem:[%s1 + $0x78] sm:$0xf]
  %v46 = vld [vmem:[%s1 + $0x7c] sm:$0xf]
  %v47 = vld [vmem:[%s1 + $0x80] sm:$0xf]
  %v48 = vld [vmem:[%s1 + $0x84] sm:$0xf]
  %v49 = vld [vmem:[%s1 + $0x88] sm:$0xf]
  %v50 = vld [vmem:[%s1 + $0x8c] sm:$0xf]
  %v51 = vld [vmem:[%s1 + $0x90] sm:$0xf]
  %v52 = vld [vmem:[%s1 + $0x94] sm:$0xf]
  %v53 = vld [vmem:[%s1 + $0x98] sm:$0xf]
  %v54 = vld [vmem:[%s1 + $0x9c] sm:$0xf]
  %v55 = vld [vmem:[%s1 + $0xa0] sm:$0xf]
  %v56 = vld [vmem:[%s1 + $0xa4] sm:$0xf]
  %v57 = vld [vmem:[%s1 + $0xa8] sm:$0xf]
  %v58 = vld [vmem:[%s1 + $0xac] sm:$0xf]
  %v59 = vld [vmem:[%s1 + $0xb0] sm:$0xf]
  %v60 = vld [vmem:[%s1 + $0xb4] sm:$0xf]
  %v61 = vld [vmem:[%s1 + $0xb8] sm:$0xf]
  %v62 = vld [vmem:[%s1 + $0xbc] sm:$0xf]
  %v63 = vld [vmem:[%s1 + $0xc0] sm:$0xf]
  %v64 = vld [vmem:[%s1 + $0xc4] sm:$0xf]
  %v65 = vld [vmem:[%s1 + $0xc8] sm:$0xf]
  %v66 = vld [vmem:[%s1 + $0xcc] sm:$0xf]
  %v67 = vld [vmem:[%s1 + $0xd0] sm:$0xf]
  %v68 = vld [vmem:[%s1 + $0xd4] sm:$0xf]
  %v69 = vld [vmem:[%s1 + $0xd8] sm:$0xf]
  %v70 = vld [vmem:[%s1 + $0xdc] sm:$0xf]
  %v71 = vld [vmem:[%s1 + $0xe0] sm:$0xf]
  %v72 = vld [vmem:[%s1 + $0xe4] sm:$0xf]
  %v73 = vld [vmem:[%s1 + $0xe8] sm:$0xf]
  %v74 = vld [vmem:[%s1 + $0xec] sm:$0xf]
  %v75 = vld [vmem:[%s1 + $0xf0] sm:$0xf]
  %v76 = vld [vmem:[%s1 + $0xf4] sm:$0xf]
  %v77 = vld [vmem:[%s1 + $0xf8] sm:$0xf]
  %v78 = vld [vmem:[%s1 + $0xfc] sm:$0xf]
  %v79 = vld [vmem:[%s1 + $0x100] sm:$0xf]
  %v80 = vld [vmem:[%s1 + $0x104] sm:$0xf]
  %v81 = vld [vmem:[%s1 + $0x108] sm:$0xf]
  %v82 = vld [vmem:[%s1 + $0x10c] sm:$0xf]
  %v83 = vld [vmem:[%s1 + $0x110] sm:$0xf]
  %v84 = vld [vmem:[%s1 + $0x114] sm:$0xf]
  %v85 = vld [vmem:[%s1 + $0x118] sm:$0xf]
  %v86 = vld [vmem:[%s1 + $0x11c] sm:$0xf]
  %v87 = vld [vmem:[%s1 + $0x120] sm:$0xf]
  %v88 = vld [vmem:[%s1 + $0x124] sm:$0xf]
  %v89 = vld [vmem:[%s1 + $0x128] sm:$0xf]
  %v90 = vld [vmem:[%s1 + $0x12c] sm:$0xf]
  %v91 = vld [vmem:[%s1 + $0x130] sm:$0xf]
  %v92 = vld [vmem:[%s1 + $0x134] sm:$0xf]
  %v93 = vld [vmem:[%s1 + $0x138] sm:$0xf]
  %v94 = vld [vmem:[%s1 + $0x13c] sm:$0xf]
  %v95 = vld [vmem:[%s1 + $0x140] sm:$0xf]
  %v96 = vld [vmem:[%s1 + $0x144] sm:$0xf]
  %v97 = vld [vmem:[%s1 + $0x148] sm:$0xf]
  %v98 = vld [vmem:[%s1 + $0x14c] sm:$0xf]
  %v99 = vld [vmem:[%s1 + $0x150] sm:$0xf]
  %v100 = vld [vmem:[%s1 + $0x154] sm:$0xf]
  %v101 = vld [vmem:[%s1 + $0x158] sm:$0xf]
  %v102 = vld [vmem:[%s1 + $0x15c] sm:$0xf]
  %v103 = vld [vmem:[%s1 + $0x160] sm:$0xf]
  %v104 = vld [vmem:[%s1 + $0x164] sm:$0xf]
  %v105 = vld [vmem:[%s1 + $0x168] sm:$0xf]
  %v106 = vld [vmem:[%s1 + $0x16c] sm:$0xf]
  %v107 = vld [vmem:[%s1 + $0x170] sm:$0xf]
  %v108 = vld [vmem:[%s1 + $0x174] sm:$0xf]
  %v109 = vld [vmem:[%s1 + $0x178] sm:$0xf]
  %v110 = vld [vmem:[%s1 + $0x17c] sm:$0xf]
  %v111 = vld [vmem:[%s1 + $0x180] sm:$0xf]
  %v112 = vld [vmem:[%s1 + $0x184] sm:$0xf]
  %v113 = vld [vmem:[%s1 + $0x188] sm:$0xf]
  %v114 = vld [vmem:[%s1 + $0x18c] sm:$0xf]
  %v115 = vld [vmem:[%s1 + $0x190] sm:$0xf]
  %v116 = vld [vmem:[%s1 + $0x194] sm:$0xf]
  %v117 = vld [vmem:[%s1 + $0x198] sm:$0xf]
  %v118 = vld [vmem:[%s1 + $0x19c] sm:$0xf]
  %v119 = vld [vmem:[%s1 + $0x1a0] sm:$0xf]
  %v120 = vld [vmem:[%s1 + $0x1a4] sm:$0xf]
  %v121 = vld [vmem:[%s1 + $0x1a8] sm:$0xf]
  %v122 = vld [vmem:[%s1 + $0x1ac] sm:$0xf]
  %v123 = vld [vmem:[%s1 + $0x1b0] sm:$0xf]
  %v124 = vld [vmem:[%s1 + $0x1b4] sm:$0xf]
  %v125 = vld [vmem:[%s1 + $0x1b8] sm:$0xf]
  %v126 = vld [vmem:[%s1 + $0x1bc] sm:$0xf]
  %v127 = vld [vmem:[%s1 + $0x1c0] sm:$0xf]
  %v128 = vld [vmem:[%s1 + $0x1c4] sm:$0xf]
  %v129 = vld [vmem:[%s1 + $0x1c8] sm:$0xf]
  %v130 = vld [vmem:[%s1 + $0x1cc] sm:$0xf]
  %v131 = vld [vmem:[%s1 + $0x1d0] sm:$0xf]
  %v132 = vld [vmem:[%s1 + $0x1d4] sm:$0xf]
  %v133 = vld [vmem:[%s1 + $0x1d8] sm:$0xf]
  %v134 = vld [vmem:[%s1 + $0x1dc] sm:$0xf]
  %v135 = vld [vmem:[%s1 + $0x1e0] sm:$0xf]
  %v136 = vld [vmem:[%s1 + $0x1e4] sm:$0xf]
  %v137 = vld [vmem:[%s1 + $0x1e8] sm:$0xf]
  %v138 = vld [vmem:[%s1 + $0x1ec] sm:$0xf]
  %v139 = vld [vmem:[%s1 + $0x1f0] sm:$0xf]
  %v140 = vld [vmem:[%s1 + $0x1f4] sm:$0xf]
  %v141 = vld [vmem:[%s1 + $0x1f8] sm:$0xf]
  %v142 = vld [vmem:[%s1 + $0x1fc] sm:$0xf]
  %v143 = vld [vmem:[%s0] sm:$0xff]
  %v144 = vld [vmem:[%s0 + $0x8] sm:$0xff]
  %v145 = vld [vmem:[%s0 + $0x10] sm:$0xff]
  %v146 = vld [vmem:[%s0 + $0x18] sm:$0xff]
  %v147 = vld [vmem:[%s0 + $0x20] sm:$0xff]
  %v148 = vld [vmem:[%s0 + $0x28] sm:$0xff]
  %v149 = vld [vmem:[%s0 + $0x30] sm:$0xff]
  %v150 = vld [vmem:[%s0 + $0x38] sm:$0xff]
  %v151 = vld [vmem:[%s0 + $0x40] sm:$0xff]
  %v152 = vld [vmem:[%s0 + $0x48] sm:$0xff]
  %v153 = vld [vmem:[%s0 + $0x50] sm:$0xff]
  %v154 = vld [vmem:[%s0 + $0x58] sm:$0xff]
  %v155 = vld [vmem:[%s0 + $0x60] sm:$0xff]
  %v156 = vld [vmem:[%s0 + $0x68] sm:$0xff]
  %v157 = vld [vmem:[%s0 + $0x70] sm:$0xff]
  %v158 = vld [vmem:[%s0 + $0x78] sm:$0xff]
  %v159 = vld [vmem:[%s0 + $0x80] sm:$0xff]
  %v160 = vld [vmem:[%s0 + $0x88] sm:$0xff]
  %v161 = vld [vmem:[%s0 + $0x90] sm:$0xff]
  %v162 = vld [vmem:[%s0 + $0x98] sm:$0xff]
  %v163 = vld [vmem:[%s0 + $0xa0] sm:$0xff]
  %v164 = vld [vmem:[%s0 + $0xa8] sm:$0xff]
  %v165 = vld [vmem:[%s0 + $0xb0] sm:$0xff]
  %v166 = vld [vmem:[%s0 + $0xb8] sm:$0xff]
  %v167 = vld [vmem:[%s0 + $0xc0] sm:$0xff]
  %v168 = vld [vmem:[%s0 + $0xc8] sm:$0xff]
  %v169 = vld [vmem:[%s0 + $0xd0] sm:$0xff]
  %v170 = vld [vmem:[%s0 + $0xd8] sm:$0xff]
  %v171 = vld [vmem:[%s0 + $0xe0] sm:$0xff]
  %v172 = vld [vmem:[%s0 + $0xe8] sm:$0xff]
  %v173 = vld [vmem:[%s0 + $0xf0] sm:$0xff]
  %v174 = vld [vmem:[%s0 + $0xf8] sm:$0xff]
  %v175 = vld [vmem:[%s0 + $0x100] sm:$0xff]
  %v176 = vld [vmem:[%s0 + $0x108] sm:$0xff]
  %v177 = vld [vmem:[%s0 + $0x110] sm:$0xff]
  %v178 = vld [vmem:[%s0 + $0x118] sm:$0xff]
  %v179 = vld [vmem:[%s0 + $0x120] sm:$0xff]
  %v180 = vld [vmem:[%s0 + $0x128] sm:$0xff]
  %v181 = vld [vmem:[%s0 + $0x130] sm:$0xff]
  %v182 = vld [vmem:[%s0 + $0x138] sm:$0xff]
  %v183 = vld [vmem:[%s0 + $0x140] sm:$0xff]
  %v184 = vld [vmem:[%s0 + $0x148] sm:$0xff]
  %v185 = vld [vmem:[%s0 + $0x150] sm:$0xff]
  %v186 = vld [vmem:[%s0 + $0x158] sm:$0xff]
  %v187 = vld [vmem:[%s0 + $0x160] sm:$0xff]
  %v188 = vld [vmem:[%s0 + $0x168] sm:$0xff]
  %v189 = vld [vmem:[%s0 + $0x170] sm:$0xff]
  %v190 = vld [vmem:[%s0 + $0x178] sm:$0xff]
  %v191 = vld [vmem:[%s0 + $0x180] sm:$0xff]
  %v192 = vld [vmem:[%s0 + $0x188] sm:$0xff]
  %v193 = vld [vmem:[%s0 + $0x190] sm:$0xff]
  %v194 = vld [vmem:[%s0 + $0x198] sm:$0xff]
  %v195 = vld [vmem:[%s0 + $0x1a0] sm:$0xff]
  %v196 = vld [vmem:[%s0 + $0x1a8] sm:$0xff]
  %v197 = vld [vmem:[%s0 + $0x1b0] sm:$0xff]
  %v198 = vld [vmem:[%s0 + $0x1b8] sm:$0xff]
  %v199 = vld [vmem:[%s0 + $0x1c0] sm:$0xff]
  %v200 = vld [vmem:[%s0 + $0x1c8] sm:$0xff]
  %v201 = vld [vmem:[%s0 + $0x1d0] sm:$0xff]
  %v202 = vld [vmem:[%s0 + $0x1d8] sm:$0xff]
  %v203 = vld [vmem:[%s0 + $0x1e0] sm:$0xff]
  %v204 = vld [vmem:[%s0 + $0x1e8] sm:$0xff]
  %v205 = vld [vmem:[%s0 + $0x1f0] sm:$0xff]
  %v206 = vld [vmem:[%s0 + $0x1f8] sm:$0xff]
  %v207 = vld [vmem:[%s0 + $0x200] sm:$0xff]
  %v208 = vld [vmem:[%s0 + $0x208] sm:$0xff]
  %v209 = vld [vmem:[%s0 + $0x210] sm:$0xff]
  %v210 = vld [vmem:[%s0 + $0x218] sm:$0xff]
  %v211 = vld [vmem:[%s0 + $0x220] sm:$0xff]
  %v212 = vld [vmem:[%s0 + $0x228] sm:$0xff]
  %v213 = vld [vmem:[%s0 + $0x230] sm:$0xff]
  %v214 = vld [vmem:[%s0 + $0x238] sm:$0xff]
  %v215 = vld [vmem:[%s0 + $0x240] sm:$0xff]
  %v216 = vld [vmem:[%s0 + $0x248] sm:$0xff]
  %v217 = vld [vmem:[%s0 + $0x250] sm:$0xff]
  %v218 = vld [vmem:[%s0 + $0x258] sm:$0xff]
  %v219 = vld [vmem:[%s0 + $0x260] sm:$0xff]
  %v220 = vld [vmem:[%s0 + $0x268] sm:$0xff]
  %v221 = vld [vmem:[%s0 + $0x270] sm:$0xff]
  %v222 = vld [vmem:[%s0 + $0x278] sm:$0xff]
  %v223 = vld [vmem:[%s0 + $0x280] sm:$0xff]
  %v224 = vld [vmem:[%s0 + $0x288] sm:$0xff]
  %v225 = vld [vmem:[%s0 + $0x290] sm:$0xff]
  %v226 = vld [vmem:[%s0 + $0x298] sm:$0xff]
  %v227 = vld [vmem:[%s0 + $0x2a0] sm:$0xff]
  %v228 = vld [vmem:[%s0 + $0x2a8] sm:$0xff]
  %v229 = vld [vmem:[%s0 + $0x2b0] sm:$0xff]
  %v230 = vld [vmem:[%s0 + $0x2b8] sm:$0xff]
  %v231 = vld [vmem:[%s0 + $0x2c0] sm:$0xff]
  %v232 = vld [vmem:[%s0 + $0x2c8] sm:$0xff]
  %v233 = vld [vmem:[%s0 + $0x2d0] sm:$0xff]
  %v234 = vld [vmem:[%s0 + $0x2d8] sm:$0xff]
  %v235 = vld [vmem:[%s0 + $0x2e0] sm:$0xff]
  %v236 = vld [vmem:[%s0 + $0x2e8] sm:$0xff]
  %v237 = vld [vmem:[%s0 + $0x2f0] sm:$0xff]
  %v238 = vld [vmem:[%s0 + $0x2f8] sm:$0xff]
  %v239 = vld [vmem:[%s0 + $0x300] sm:$0xff]
  %v240 = vld [vmem:[%s0 + $0x308] sm:$0xff]
  %v241 = vld [vmem:[%s0 + $0x310] sm:$0xff]
  %v242 = vld [vmem:[%s0 + $0x318] sm:$0xff]
  %v243 = vld [vmem:[%s0 + $0x320] sm:$0xff]
  %v244 = vld [vmem:[%s0 + $0x328] sm:$0xff]
  %v245 = vld [vmem:[%s0 + $0x330] sm:$0xff]
  %v246 = vld [vmem:[%s0 + $0x338] sm:$0xff]
  %v247 = vld [vmem:[%s0 + $0x340] sm:$0xff]
  %v248 = vld [vmem:[%s0 + $0x348] sm:$0xff]
  %v249 = vld [vmem:[%s0 + $0x350] sm:$0xff]
  %v250 = vld [vmem:[%s0 + $0x358] sm:$0xff]
  %v251 = vld [vmem:[%s0 + $0x360] sm:$0xff]
  %v252 = vld [vmem:[%s0 + $0x368] sm:$0xff]
  %v253 = vld [vmem:[%s0 + $0x370] sm:$0xff]
  %v254 = vld [vmem:[%s0 + $0x378] sm:$0xff]
  %v255 = vld [vmem:[%s0 + $0x380] sm:$0xff]
  %v256 = vld [vmem:[%s0 + $0x388] sm:$0xff]
  %v257 = vld [vmem:[%s0 + $0x390] sm:$0xff]
  %v258 = vld [vmem:[%s0 + $0x398] sm:$0xff]
  %v259 = vld [vmem:[%s0 + $0x3a0] sm:$0xff]
  %v260 = vld [vmem:[%s0 + $0x3a8] sm:$0xff]
  %v261 = vld [vmem:[%s0 + $0x3b0] sm:$0xff]
  %v262 = vld [vmem:[%s0 + $0x3b8] sm:$0xff]
  %v263 = vld [vmem:[%s0 + $0x3c0] sm:$0xff]
  %v264 = vld [vmem:[%s0 + $0x3c8] sm:$0xff]
  %v265 = vld [vmem:[%s0 + $0x3d0] sm:$0xff]
  %v266 = vld [vmem:[%s0 + $0x3d8] sm:$0xff]
  %v267 = vld [vmem:[%s0 + $0x3e0] sm:$0xff]
  %v268 = vld [vmem:[%s0 + $0x3e8] sm:$0xff]
  %v269 = vld [vmem:[%s0 + $0x3f0] sm:$0xff]
  %v270 = vld [vmem:[%s0 + $0x3f8] sm:$0xff]
  %vm271 = vcmp.eq.s32.totalorder %v143, 0
  %vm272 = vcmp.eq.s32.totalorder %v144, 0
  %vm273 = vcmp.eq.s32.totalorder %v145, 0
  %vm274 = vcmp.eq.s32.totalorder %v146, 0
  %vm275 = vcmp.eq.s32.totalorder %v147, 0
  %vm276 = vcmp.eq.s32.totalorder %v148, 0
  %vm277 = vcmp.eq.s32.totalorder %v149, 0
  %vm278 = vcmp.eq.s32.totalorder %v150, 0
  %vm279 = vcmp.eq.s32.totalorder %v151, 0
  %vm280 = vcmp.eq.s32.totalorder %v152, 0
  %vm281 = vcmp.eq.s32.totalorder %v153, 0
  %vm282 = vcmp.eq.s32.totalorder %v154, 0
  %vm283 = vcmp.eq.s32.totalorder %v155, 0
  %vm284 = vcmp.eq.s32.totalorder %v156, 0
  %vm285 = vcmp.eq.s32.totalorder %v157, 0
  %vm286 = vcmp.eq.s32.totalorder %v158, 0
  %vm287 = vcmp.eq.s32.totalorder %v159, 0
  %vm288 = vcmp.eq.s32.totalorder %v160, 0
  %vm289 = vcmp.eq.s32.totalorder %v161, 0
  %vm290 = vcmp.eq.s32.totalorder %v162, 0
  %vm291 = vcmp.eq.s32.totalorder %v163, 0
  %vm292 = vcmp.eq.s32.totalorder %v164, 0
  %vm293 = vcmp.eq.s32.totalorder %v165, 0
  %vm294 = vcmp.eq.s32.totalorder %v166, 0
  %vm295 = vcmp.eq.s32.totalorder %v167, 0
  %vm296 = vcmp.eq.s32.totalorder %v168, 0
  %vm297 = vcmp.eq.s32.totalorder %v169, 0
  %vm298 = vcmp.eq.s32.totalorder %v170, 0
  %vm299 = vcmp.eq.s32.totalorder %v171, 0
  %vm300 = vcmp.eq.s32.totalorder %v172, 0
  %vm301 = vcmp.eq.s32.totalorder %v173, 0
  %vm302 = vcmp.eq.s32.totalorder %v174, 0
  %vm303 = vcmp.eq.s32.totalorder %v175, 0
  %vm304 = vcmp.eq.s32.totalorder %v176, 0
  %vm305 = vcmp.eq.s32.totalorder %v177, 0
  %vm306 = vcmp.eq.s32.totalorder %v178, 0
  %vm307 = vcmp.eq.s32.totalorder %v179, 0
  %vm308 = vcmp.eq.s32.totalorder %v180, 0
  %vm309 = vcmp.eq.s32.totalorder %v181, 0
  %vm310 = vcmp.eq.s32.totalorder %v182, 0
  %vm311 = vcmp.eq.s32.totalorder %v183, 0
  %vm312 = vcmp.eq.s32.totalorder %v184, 0
  %vm313 = vcmp.eq.s32.totalorder %v185, 0
  %vm314 = vcmp.eq.s32.totalorder %v186, 0
  %vm315 = vcmp.eq.s32.totalorder %v187, 0
  %vm316 = vcmp.eq.s32.totalorder %v188, 0
  %vm317 = vcmp.eq.s32.totalorder %v189, 0
  %vm318 = vcmp.eq.s32.totalorder %v190, 0
  %vm319 = vcmp.eq.s32.totalorder %v191, 0
  %vm320 = vcmp.eq.s32.totalorder %v192, 0
  %vm321 = vcmp.eq.s32.totalorder %v193, 0
  %vm322 = vcmp.eq.s32.totalorder %v194, 0
  %vm323 = vcmp.eq.s32.totalorder %v195, 0
  %vm324 = vcmp.eq.s32.totalorder %v196, 0
  %vm325 = vcmp.eq.s32.totalorder %v197, 0
  %vm326 = vcmp.eq.s32.totalorder %v198, 0
  %vm327 = vcmp.eq.s32.totalorder %v199, 0
  %vm328 = vcmp.eq.s32.totalorder %v200, 0
  %vm329 = vcmp.eq.s32.totalorder %v201, 0
  %vm330 = vcmp.eq.s32.totalorder %v202, 0
  %vm331 = vcmp.eq.s32.totalorder %v203, 0
  %vm332 = vcmp.eq.s32.totalorder %v204, 0
  %vm333 = vcmp.eq.s32.totalorder %v205, 0
  %vm334 = vcmp.eq.s32.totalorder %v206, 0
  %vm335 = vcmp.eq.s32.totalorder %v207, 0
  %vm336 = vcmp.eq.s32.totalorder %v208, 0
  %vm337 = vcmp.eq.s32.totalorder %v209, 0
  %vm338 = vcmp.eq.s32.totalorder %v210, 0
  %vm339 = vcmp.eq.s32.totalorder %v211, 0
  %vm340 = vcmp.eq.s32.totalorder %v212, 0
  %vm341 = vcmp.eq.s32.totalorder %v213, 0
  %vm342 = vcmp.eq.s32.totalorder %v214, 0
  %vm343 = vcmp.eq.s32.totalorder %v215, 0
  %vm344 = vcmp.eq.s32.totalorder %v216, 0
  %vm345 = vcmp.eq.s32.totalorder %v217, 0
  %vm346 = vcmp.eq.s32.totalorder %v218, 0
  %vm347 = vcmp.eq.s32.totalorder %v219, 0
  %vm348 = vcmp.eq.s32.totalorder %v220, 0
  %vm349 = vcmp.eq.s32.totalorder %v221, 0
  %vm350 = vcmp.eq.s32.totalorder %v222, 0
  %vm351 = vcmp.eq.s32.totalorder %v223, 0
  %vm352 = vcmp.eq.s32.totalorder %v224, 0
  %vm353 = vcmp.eq.s32.totalorder %v225, 0
  %vm354 = vcmp.eq.s32.totalorder %v226, 0
  %vm355 = vcmp.eq.s32.totalorder %v227, 0
  %vm356 = vcmp.eq.s32.totalorder %v228, 0
  %vm357 = vcmp.eq.s32.totalorder %v229, 0
  %vm358 = vcmp.eq.s32.totalorder %v230, 0
  %vm359 = vcmp.eq.s32.totalorder %v231, 0
  %vm360 = vcmp.eq.s32.totalorder %v232, 0
  %vm361 = vcmp.eq.s32.totalorder %v233, 0
  %vm362 = vcmp.eq.s32.totalorder %v234, 0
  %vm363 = vcmp.eq.s32.totalorder %v235, 0
  %vm364 = vcmp.eq.s32.totalorder %v236, 0
  %vm365 = vcmp.eq.s32.totalorder %v237, 0
  %vm366 = vcmp.eq.s32.totalorder %v238, 0
  %vm367 = vcmp.eq.s32.totalorder %v239, 0
  %vm368 = vcmp.eq.s32.totalorder %v240, 0
  %vm369 = vcmp.eq.s32.totalorder %v241, 0
  %vm370 = vcmp.eq.s32.totalorder %v242, 0
  %vm371 = vcmp.eq.s32.totalorder %v243, 0
  %vm372 = vcmp.eq.s32.totalorder %v244, 0
  %vm373 = vcmp.eq.s32.totalorder %v245, 0
  %vm374 = vcmp.eq.s32.totalorder %v246, 0
  %vm375 = vcmp.eq.s32.totalorder %v247, 0
  %vm376 = vcmp.eq.s32.totalorder %v248, 0
  %vm377 = vcmp.eq.s32.totalorder %v249, 0
  %vm378 = vcmp.eq.s32.totalorder %v250, 0
  %vm379 = vcmp.eq.s32.totalorder %v251, 0
  %vm380 = vcmp.eq.s32.totalorder %v252, 0
  %vm381 = vcmp.eq.s32.totalorder %v253, 0
  %vm382 = vcmp.eq.s32.totalorder %v254, 0
  %vm383 = vcmp.eq.s32.totalorder %v255, 0
  %vm384 = vcmp.eq.s32.totalorder %v256, 0
  %vm385 = vcmp.eq.s32.totalorder %v257, 0
  %vm386 = vcmp.eq.s32.totalorder %v258, 0
  %vm387 = vcmp.eq.s32.totalorder %v259, 0
  %vm388 = vcmp.eq.s32.totalorder %v260, 0
  %vm389 = vcmp.eq.s32.totalorder %v261, 0
  %vm390 = vcmp.eq.s32.totalorder %v262, 0
  %vm391 = vcmp.eq.s32.totalorder %v263, 0
  %vm392 = vcmp.eq.s32.totalorder %v264, 0
  %vm393 = vcmp.eq.s32.totalorder %v265, 0
  %vm394 = vcmp.eq.s32.totalorder %v266, 0
  %vm395 = vcmp.eq.s32.totalorder %v267, 0
  %vm396 = vcmp.eq.s32.totalorder %v268, 0
  %vm397 = vcmp.eq.s32.totalorder %v269, 0
  %vm398 = vcmp.eq.s32.totalorder %v270, 0
  %v399 = vsel %vm271, 1, 0
  %v400 = vsel %vm272, 1, 0
  %v401 = vsel %vm273, 1, 0
  %v402 = vsel %vm274, 1, 0
  %v403 = vsel %vm275, 1, 0
  %v404 = vsel %vm276, 1, 0
  %v405 = vsel %vm277, 1, 0
  %v406 = vsel %vm278, 1, 0
  %v407 = vsel %vm279, 1, 0
  %v408 = vsel %vm280, 1, 0
  %v409 = vsel %vm281, 1, 0
  %v410 = vsel %vm282, 1, 0
  %v411 = vsel %vm283, 1, 0
  %v412 = vsel %vm284, 1, 0
  %v413 = vsel %vm285, 1, 0
  %v414 = vsel %vm286, 1, 0
  %v415 = vsel %vm287, 1, 0
  %v416 = vsel %vm288, 1, 0
  %v417 = vsel %vm289, 1, 0
  %v418 = vsel %vm290, 1, 0
  %v419 = vsel %vm291, 1, 0
  %v420 = vsel %vm292, 1, 0
  %v421 = vsel %vm293, 1, 0
  %v422 = vsel %vm294, 1, 0
  %v423 = vsel %vm295, 1, 0
  %v424 = vsel %vm296, 1, 0
  %v425 = vsel %vm297, 1, 0
  %v426 = vsel %vm298, 1, 0
  %v427 = vsel %vm299, 1, 0
  %v428 = vsel %vm300, 1, 0
  %v429 = vsel %vm301, 1, 0
  %v430 = vsel %vm302, 1, 0
  %v431 = vsel %vm303, 1, 0
  %v432 = vsel %vm304, 1, 0
  %v433 = vsel %vm305, 1, 0
  %v434 = vsel %vm306, 1, 0
  %v435 = vsel %vm307, 1, 0
  %v436 = vsel %vm308, 1, 0
  %v437 = vsel %vm309, 1, 0
  %v438 = vsel %vm310, 1, 0
  %v439 = vsel %vm311, 1, 0
  %v440 = vsel %vm312, 1, 0
  %v441 = vsel %vm313, 1, 0
  %v442 = vsel %vm314, 1, 0
  %v443 = vsel %vm315, 1, 0
  %v444 = vsel %vm316, 1, 0
  %v445 = vsel %vm317, 1, 0
  %v446 = vsel %vm318, 1, 0
  %v447 = vsel %vm319, 1, 0
  %v448 = vsel %vm320, 1, 0
  %v449 = vsel %vm321, 1, 0
  %v450 = vsel %vm322, 1, 0
  %v451 = vsel %vm323, 1, 0
  %v452 = vsel %vm324, 1, 0
  %v453 = vsel %vm325, 1, 0
  %v454 = vsel %vm326, 1, 0
  %v455 = vsel %vm327, 1, 0
  %v456 = vsel %vm328, 1, 0
  %v457 = vsel %vm329, 1, 0
  %v458 = vsel %vm330, 1, 0
  %v459 = vsel %vm331, 1, 0
  %v460 = vsel %vm332, 1, 0
  %v461 = vsel %vm333, 1, 0
  %v462 = vsel %vm334, 1, 0
  %v463 = vsel %vm335, 1, 0
  %v464 = vsel %vm336, 1, 0
  %v465 = vsel %vm337, 1, 0
  %v466 = vsel %vm338, 1, 0
  %v467 = vsel %vm339, 1, 0
  %v468 = vsel %vm340, 1, 0
  %v469 = vsel %vm341, 1, 0
  %v470 = vsel %vm342, 1, 0
  %v471 = vsel %vm343, 1, 0
  %v472 = vsel %vm344, 1, 0
  %v473 = vsel %vm345, 1, 0
  %v474 = vsel %vm346, 1, 0
  %v475 = vsel %vm347, 1, 0
  %v476 = vsel %vm348, 1, 0
  %v477 = vsel %vm349, 1, 0
  %v478 = vsel %vm350, 1, 0
  %v479 = vsel %vm351, 1, 0
  %v480 = vsel %vm352, 1, 0
  %v481 = vsel %vm353, 1, 0
  %v482 = vsel %vm354, 1, 0
  %v483 = vsel %vm355, 1, 0
  %v484 = vsel %vm356, 1, 0
  %v485 = vsel %vm357, 1, 0
  %v486 = vsel %vm358, 1, 0
  %v487 = vsel %vm359, 1, 0
  %v488 = vsel %vm360, 1, 0
  %v489 = vsel %vm361, 1, 0
  %v490 = vsel %vm362, 1, 0
  %v491 = vsel %vm363, 1, 0
  %v492 = vsel %vm364, 1, 0
  %v493 = vsel %vm365, 1, 0
  %v494 = vsel %vm366, 1, 0
  %v495 = vsel %vm367, 1, 0
  %v496 = vsel %vm368, 1, 0
  %v497 = vsel %vm369, 1, 0
  %v498 = vsel %vm370, 1, 0
  %v499 = vsel %vm371, 1, 0
  %v500 = vsel %vm372, 1, 0
  %v501 = vsel %vm373, 1, 0
  %v502 = vsel %vm374, 1, 0
  %v503 = vsel %vm375, 1, 0
  %v504 = vsel %vm376, 1, 0
  %v505 = vsel %vm377, 1, 0
  %v506 = vsel %vm378, 1, 0
  %v507 = vsel %vm379, 1, 0
  %v508 = vsel %vm380, 1, 0
  %v509 = vsel %vm381, 1, 0
  %v510 = vsel %vm382, 1, 0
  %v511 = vsel %vm383, 1, 0
  %v512 = vsel %vm384, 1, 0
  %v513 = vsel %vm385, 1, 0
  %v514 = vsel %vm386, 1, 0
  %v515 = vsel %vm387, 1, 0
  %v516 = vsel %vm388, 1, 0
  %v517 = vsel %vm389, 1, 0
  %v518 = vsel %vm390, 1, 0
  %v519 = vsel %vm391, 1, 0
  %v520 = vsel %vm392, 1, 0
  %v521 = vsel %vm393, 1, 0
  %v522 = vsel %vm394, 1, 0
  %v523 = vsel %vm395, 1, 0
  %v524 = vsel %vm396, 1, 0
  %v525 = vsel %vm397, 1, 0
  %v526 = vsel %vm398, 1, 0
  %527 = vset.pattern.permute.xlu0 0
  %528 = vperm.xlu0 %527, %v399
  %v529 = vpop.permute.xlu0 %528
  %530 = vset.pattern.permute.xlu0 0
  %531 = vperm.xlu0 %530, %v400
  %v532 = vpop.permute.xlu0 %531
  %533 = vset.pattern.permute.xlu0 0
  %534 = vperm.xlu0 %533, %v401
  %v535 = vpop.permute.xlu0 %534
  %536 = vset.pattern.permute.xlu0 0
  %537 = vperm.xlu0 %536, %v402
  %v538 = vpop.permute.xlu0 %537
  %539 = vset.pattern.permute.xlu0 0
  %540 = vperm.xlu0 %539, %v403
  %v541 = vpop.permute.xlu0 %540
  %542 = vset.pattern.permute.xlu0 0
  %543 = vperm.xlu0 %542, %v404
  %v544 = vpop.permute.xlu0 %543
  %545 = vset.pattern.permute.xlu0 0
  %546 = vperm.xlu0 %545, %v405
  %v547 = vpop.permute.xlu0 %546
  %548 = vset.pattern.permute.xlu0 0
  %549 = vperm.xlu0 %548, %v406
  %v550 = vpop.permute.xlu0 %549
  %551 = vset.pattern.permute.xlu0 0
  %552 = vperm.xlu0 %551, %v407
  %v553 = vpop.permute.xlu0 %552
  %554 = vset.pattern.permute.xlu0 0
  %555 = vperm.xlu0 %554, %v408
  %v556 = vpop.permute.xlu0 %555
  %557 = vset.pattern.permute.xlu0 0
  %558 = vperm.xlu0 %557, %v409
  %v559 = vpop.permute.xlu0 %558
  %560 = vset.pattern.permute.xlu0 0
  %561 = vperm.xlu0 %560, %v410
  %v562 = vpop.permute.xlu0 %561
  %563 = vset.pattern.permute.xlu0 0
  %564 = vperm.xlu0 %563, %v411
  %v565 = vpop.permute.xlu0 %564
  %566 = vset.pattern.permute.xlu0 0
  %567 = vperm.xlu0 %566, %v412
  %v568 = vpop.permute.xlu0 %567
  %569 = vset.pattern.permute.xlu0 0
  %570 = vperm.xlu0 %569, %v413
  %v571 = vpop.permute.xlu0 %570
  %572 = vset.pattern.permute.xlu0 0
  %573 = vperm.xlu0 %572, %v414
  %v574 = vpop.permute.xlu0 %573
  %575 = vset.pattern.permute.xlu0 0
  %576 = vperm.xlu0 %575, %v415
  %v577 = vpop.permute.xlu0 %576
  %578 = vset.pattern.permute.xlu0 0
  %579 = vperm.xlu0 %578, %v416
  %v580 = vpop.permute.xlu0 %579
  %581 = vset.pattern.permute.xlu0 0
  %582 = vperm.xlu0 %581, %v417
  %v583 = vpop.permute.xlu0 %582
  %584 = vset.pattern.permute.xlu0 0
  %585 = vperm.xlu0 %584, %v418
  %v586 = vpop.permute.xlu0 %585
  %587 = vset.pattern.permute.xlu0 0
  %588 = vperm.xlu0 %587, %v419
  %v589 = vpop.permute.xlu0 %588
  %590 = vset.pattern.permute.xlu0 0
  %591 = vperm.xlu0 %590, %v420
  %v592 = vpop.permute.xlu0 %591
  %593 = vset.pattern.permute.xlu0 0
  %594 = vperm.xlu0 %593, %v421
  %v595 = vpop.permute.xlu0 %594
  %596 = vset.pattern.permute.xlu0 0
  %597 = vperm.xlu0 %596, %v422
  %v598 = vpop.permute.xlu0 %597
  %599 = vset.pattern.permute.xlu0 0
  %600 = vperm.xlu0 %599, %v423
  %v601 = vpop.permute.xlu0 %600
  %602 = vset.pattern.permute.xlu0 0
  %603 = vperm.xlu0 %602, %v424
  %v604 = vpop.permute.xlu0 %603
  %605 = vset.pattern.permute.xlu0 0
  %606 = vperm.xlu0 %605, %v425
  %v607 = vpop.permute.xlu0 %606
  %608 = vset.pattern.permute.xlu0 0
  %609 = vperm.xlu0 %608, %v426
  %v610 = vpop.permute.xlu0 %609
  %611 = vset.pattern.permute.xlu0 0
  %612 = vperm.xlu0 %611, %v427
  %v613 = vpop.permute.xlu0 %612
  %614 = vset.pattern.permute.xlu0 0
  %615 = vperm.xlu0 %614, %v428
  %v616 = vpop.permute.xlu0 %615
  %617 = vset.pattern.permute.xlu0 0
  %618 = vperm.xlu0 %617, %v429
  %v619 = vpop.permute.xlu0 %618
  %620 = vset.pattern.permute.xlu0 0
  %621 = vperm.xlu0 %620, %v430
  %v622 = vpop.permute.xlu0 %621
  %623 = vset.pattern.permute.xlu0 0
  %624 = vperm.xlu0 %623, %v431
  %v625 = vpop.permute.xlu0 %624
  %626 = vset.pattern.permute.xlu0 0
  %627 = vperm.xlu0 %626, %v432
  %v628 = vpop.permute.xlu0 %627
  %629 = vset.pattern.permute.xlu0 0
  %630 = vperm.xlu0 %629, %v433
  %v631 = vpop.permute.xlu0 %630
  %632 = vset.pattern.permute.xlu0 0
  %633 = vperm.xlu0 %632, %v434
  %v634 = vpop.permute.xlu0 %633
  %635 = vset.pattern.permute.xlu0 0
  %636 = vperm.xlu0 %635, %v435
  %v637 = vpop.permute.xlu0 %636
  %638 = vset.pattern.permute.xlu0 0
  %639 = vperm.xlu0 %638, %v436
  %v640 = vpop.permute.xlu0 %639
  %641 = vset.pattern.permute.xlu0 0
  %642 = vperm.xlu0 %641, %v437
  %v643 = vpop.permute.xlu0 %642
  %644 = vset.pattern.permute.xlu0 0
  %645 = vperm.xlu0 %644, %v438
  %v646 = vpop.permute.xlu0 %645
  %647 = vset.pattern.permute.xlu0 0
  %648 = vperm.xlu0 %647, %v439
  %v649 = vpop.permute.xlu0 %648
  %650 = vset.pattern.permute.xlu0 0
  %651 = vperm.xlu0 %650, %v440
  %v652 = vpop.permute.xlu0 %651
  %653 = vset.pattern.permute.xlu0 0
  %654 = vperm.xlu0 %653, %v441
  %v655 = vpop.permute.xlu0 %654
  %656 = vset.pattern.permute.xlu0 0
  %657 = vperm.xlu0 %656, %v442
  %v658 = vpop.permute.xlu0 %657
  %659 = vset.pattern.permute.xlu0 0
  %660 = vperm.xlu0 %659, %v443
  %v661 = vpop.permute.xlu0 %660
  %662 = vset.pattern.permute.xlu0 0
  %663 = vperm.xlu0 %662, %v444
  %v664 = vpop.permute.xlu0 %663
  %665 = vset.pattern.permute.xlu0 0
  %666 = vperm.xlu0 %665, %v445
  %v667 = vpop.permute.xlu0 %666
  %668 = vset.pattern.permute.xlu0 0
  %669 = vperm.xlu0 %668, %v446
  %v670 = vpop.permute.xlu0 %669
  %671 = vset.pattern.permute.xlu0 0
  %672 = vperm.xlu0 %671, %v447
  %v673 = vpop.permute.xlu0 %672
  %674 = vset.pattern.permute.xlu0 0
  %675 = vperm.xlu0 %674, %v448
  %v676 = vpop.permute.xlu0 %675
  %677 = vset.pattern.permute.xlu0 0
  %678 = vperm.xlu0 %677, %v449
  %v679 = vpop.permute.xlu0 %678
  %680 = vset.pattern.permute.xlu0 0
  %681 = vperm.xlu0 %680, %v450
  %v682 = vpop.permute.xlu0 %681
  %683 = vset.pattern.permute.xlu0 0
  %684 = vperm.xlu0 %683, %v451
  %v685 = vpop.permute.xlu0 %684
  %686 = vset.pattern.permute.xlu0 0
  %687 = vperm.xlu0 %686, %v452
  %v688 = vpop.permute.xlu0 %687
  %689 = vset.pattern.permute.xlu0 0
  %690 = vperm.xlu0 %689, %v453
  %v691 = vpop.permute.xlu0 %690
  %692 = vset.pattern.permute.xlu0 0
  %693 = vperm.xlu0 %692, %v454
  %v694 = vpop.permute.xlu0 %693
  %695 = vset.pattern.permute.xlu0 0
  %696 = vperm.xlu0 %695, %v455
  %v697 = vpop.permute.xlu0 %696
  %698 = vset.pattern.permute.xlu0 0
  %699 = vperm.xlu0 %698, %v456
  %v700 = vpop.permute.xlu0 %699
  %701 = vset.pattern.permute.xlu0 0
  %702 = vperm.xlu0 %701, %v457
  %v703 = vpop.permute.xlu0 %702
  %704 = vset.pattern.permute.xlu0 0
  %705 = vperm.xlu0 %704, %v458
  %v706 = vpop.permute.xlu0 %705
  %707 = vset.pattern.permute.xlu0 0
  %708 = vperm.xlu0 %707, %v459
  %v709 = vpop.permute.xlu0 %708
  %710 = vset.pattern.permute.xlu0 0
  %711 = vperm.xlu0 %710, %v460
  %v712 = vpop.permute.xlu0 %711
  %713 = vset.pattern.permute.xlu0 0
  %714 = vperm.xlu0 %713, %v461
  %v715 = vpop.permute.xlu0 %714
  %716 = vset.pattern.permute.xlu0 0
  %717 = vperm.xlu0 %716, %v462
  %v718 = vpop.permute.xlu0 %717
  %719 = vset.pattern.permute.xlu0 0
  %720 = vperm.xlu0 %719, %v463
  %v721 = vpop.permute.xlu0 %720
  %722 = vset.pattern.permute.xlu0 0
  %723 = vperm.xlu0 %722, %v464
  %v724 = vpop.permute.xlu0 %723
  %725 = vset.pattern.permute.xlu0 0
  %726 = vperm.xlu0 %725, %v465
  %v727 = vpop.permute.xlu0 %726
  %728 = vset.pattern.permute.xlu0 0
  %729 = vperm.xlu0 %728, %v466
  %v730 = vpop.permute.xlu0 %729
  %731 = vset.pattern.permute.xlu0 0
  %732 = vperm.xlu0 %731, %v467
  %v733 = vpop.permute.xlu0 %732
  %734 = vset.pattern.permute.xlu0 0
  %735 = vperm.xlu0 %734, %v468
  %v736 = vpop.permute.xlu0 %735
  %737 = vset.pattern.permute.xlu0 0
  %738 = vperm.xlu0 %737, %v469
  %v739 = vpop.permute.xlu0 %738
  %740 = vset.pattern.permute.xlu0 0
  %741 = vperm.xlu0 %740, %v470
  %v742 = vpop.permute.xlu0 %741
  %743 = vset.pattern.permute.xlu0 0
  %744 = vperm.xlu0 %743, %v471
  %v745 = vpop.permute.xlu0 %744
  %746 = vset.pattern.permute.xlu0 0
  %747 = vperm.xlu0 %746, %v472
  %v748 = vpop.permute.xlu0 %747
  %749 = vset.pattern.permute.xlu0 0
  %750 = vperm.xlu0 %749, %v473
  %v751 = vpop.permute.xlu0 %750
  %752 = vset.pattern.permute.xlu0 0
  %753 = vperm.xlu0 %752, %v474
  %v754 = vpop.permute.xlu0 %753
  %755 = vset.pattern.permute.xlu0 0
  %756 = vperm.xlu0 %755, %v475
  %v757 = vpop.permute.xlu0 %756
  %758 = vset.pattern.permute.xlu0 0
  %759 = vperm.xlu0 %758, %v476
  %v760 = vpop.permute.xlu0 %759
  %761 = vset.pattern.permute.xlu0 0
  %762 = vperm.xlu0 %761, %v477
  %v763 = vpop.permute.xlu0 %762
  %764 = vset.pattern.permute.xlu0 0
  %765 = vperm.xlu0 %764, %v478
  %v766 = vpop.permute.xlu0 %765
  %767 = vset.pattern.permute.xlu0 0
  %768 = vperm.xlu0 %767, %v479
  %v769 = vpop.permute.xlu0 %768
  %770 = vset.pattern.permute.xlu0 0
  %771 = vperm.xlu0 %770, %v480
  %v772 = vpop.permute.xlu0 %771
  %773 = vset.pattern.permute.xlu0 0
  %774 = vperm.xlu0 %773, %v481
  %v775 = vpop.permute.xlu0 %774
  %776 = vset.pattern.permute.xlu0 0
  %777 = vperm.xlu0 %776, %v482
  %v778 = vpop.permute.xlu0 %777
  %779 = vset.pattern.permute.xlu0 0
  %780 = vperm.xlu0 %779, %v483
  %v781 = vpop.permute.xlu0 %780
  %782 = vset.pattern.permute.xlu0 0
  %783 = vperm.xlu0 %782, %v484
  %v784 = vpop.permute.xlu0 %783
  %785 = vset.pattern.permute.xlu0 0
  %786 = vperm.xlu0 %785, %v485
  %v787 = vpop.permute.xlu0 %786
  %788 = vset.pattern.permute.xlu0 0
  %789 = vperm.xlu0 %788, %v486
  %v790 = vpop.permute.xlu0 %789
  %791 = vset.pattern.permute.xlu0 0
  %792 = vperm.xlu0 %791, %v487
  %v793 = vpop.permute.xlu0 %792
  %794 = vset.pattern.permute.xlu0 0
  %795 = vperm.xlu0 %794, %v488
  %v796 = vpop.permute.xlu0 %795
  %797 = vset.pattern.permute.xlu0 0
  %798 = vperm.xlu0 %797, %v489
  %v799 = vpop.permute.xlu0 %798
  %800 = vset.pattern.permute.xlu0 0
  %801 = vperm.xlu0 %800, %v490
  %v802 = vpop.permute.xlu0 %801
  %803 = vset.pattern.permute.xlu0 0
  %804 = vperm.xlu0 %803, %v491
  %v805 = vpop.permute.xlu0 %804
  %806 = vset.pattern.permute.xlu0 0
  %807 = vperm.xlu0 %806, %v492
  %v808 = vpop.permute.xlu0 %807
  %809 = vset.pattern.permute.xlu0 0
  %810 = vperm.xlu0 %809, %v493
  %v811 = vpop.permute.xlu0 %810
  %812 = vset.pattern.permute.xlu0 0
  %813 = vperm.xlu0 %812, %v494
  %v814 = vpop.permute.xlu0 %813
  %815 = vset.pattern.permute.xlu0 0
  %816 = vperm.xlu0 %815, %v495
  %v817 = vpop.permute.xlu0 %816
  %818 = vset.pattern.permute.xlu0 0
  %819 = vperm.xlu0 %818, %v496
  %v820 = vpop.permute.xlu0 %819
  %821 = vset.pattern.permute.xlu0 0
  %822 = vperm.xlu0 %821, %v497
  %v823 = vpop.permute.xlu0 %822
  %824 = vset.pattern.permute.xlu0 0
  %825 = vperm.xlu0 %824, %v498
  %v826 = vpop.permute.xlu0 %825
  %827 = vset.pattern.permute.xlu0 0
  %828 = vperm.xlu0 %827, %v499
  %v829 = vpop.permute.xlu0 %828
  %830 = vset.pattern.permute.xlu0 0
  %831 = vperm.xlu0 %830, %v500
  %v832 = vpop.permute.xlu0 %831
  %833 = vset.pattern.permute.xlu0 0
  %834 = vperm.xlu0 %833, %v501
  %v835 = vpop.permute.xlu0 %834
  %836 = vset.pattern.permute.xlu0 0
  %837 = vperm.xlu0 %836, %v502
  %v838 = vpop.permute.xlu0 %837
  %839 = vset.pattern.permute.xlu0 0
  %840 = vperm.xlu0 %839, %v503
  %v841 = vpop.permute.xlu0 %840
  %842 = vset.pattern.permute.xlu0 0
  %843 = vperm.xlu0 %842, %v504
  %v844 = vpop.permute.xlu0 %843
  %845 = vset.pattern.permute.xlu0 0
  %846 = vperm.xlu0 %845, %v505
  %v847 = vpop.permute.xlu0 %846
  %848 = vset.pattern.permute.xlu0 0
  %849 = vperm.xlu0 %848, %v506
  %v850 = vpop.permute.xlu0 %849
  %851 = vset.pattern.permute.xlu0 0
  %852 = vperm.xlu0 %851, %v507
  %v853 = vpop.permute.xlu0 %852
  %854 = vset.pattern.permute.xlu0 0
  %855 = vperm.xlu0 %854, %v508
  %v856 = vpop.permute.xlu0 %855
  %857 = vset.pattern.permute.xlu0 0
  %858 = vperm.xlu0 %857, %v509
  %v859 = vpop.permute.xlu0 %858
  %860 = vset.pattern.permute.xlu0 0
  %861 = vperm.xlu0 %860, %v510
  %v862 = vpop.permute.xlu0 %861
  %863 = vset.pattern.permute.xlu0 0
  %864 = vperm.xlu0 %863, %v511
  %v865 = vpop.permute.xlu0 %864
  %866 = vset.pattern.permute.xlu0 0
  %867 = vperm.xlu0 %866, %v512
  %v868 = vpop.permute.xlu0 %867
  %869 = vset.pattern.permute.xlu0 0
  %870 = vperm.xlu0 %869, %v513
  %v871 = vpop.permute.xlu0 %870
  %872 = vset.pattern.permute.xlu0 0
  %873 = vperm.xlu0 %872, %v514
  %v874 = vpop.permute.xlu0 %873
  %875 = vset.pattern.permute.xlu0 0
  %876 = vperm.xlu0 %875, %v515
  %v877 = vpop.permute.xlu0 %876
  %878 = vset.pattern.permute.xlu0 0
  %879 = vperm.xlu0 %878, %v516
  %v880 = vpop.permute.xlu0 %879
  %881 = vset.pattern.permute.xlu0 0
  %882 = vperm.xlu0 %881, %v517
  %v883 = vpop.permute.xlu0 %882
  %884 = vset.pattern.permute.xlu0 0
  %885 = vperm.xlu0 %884, %v518
  %v886 = vpop.permute.xlu0 %885
  %887 = vset.pattern.permute.xlu0 0
  %888 = vperm.xlu0 %887, %v519
  %v889 = vpop.permute.xlu0 %888
  %890 = vset.pattern.permute.xlu0 0
  %891 = vperm.xlu0 %890, %v520
  %v892 = vpop.permute.xlu0 %891
  %893 = vset.pattern.permute.xlu0 0
  %894 = vperm.xlu0 %893, %v521
  %v895 = vpop.permute.xlu0 %894
  %896 = vset.pattern.permute.xlu0 0
  %897 = vperm.xlu0 %896, %v522
  %v898 = vpop.permute.xlu0 %897
  %899 = vset.pattern.permute.xlu0 0
  %900 = vperm.xlu0 %899, %v523
  %v901 = vpop.permute.xlu0 %900
  %902 = vset.pattern.permute.xlu0 0
  %903 = vperm.xlu0 %902, %v524
  %v904 = vpop.permute.xlu0 %903
  %905 = vset.pattern.permute.xlu0 0
  %906 = vperm.xlu0 %905, %v525
  %v907 = vpop.permute.xlu0 %906
  %908 = vset.pattern.permute.xlu0 0
  %909 = vperm.xlu0 %908, %v526
  %v910 = vpop.permute.xlu0 %909
  %vm911 = vcmp.eq.s32.totalorder %v529, 1
  %vm912 = vcmp.eq.s32.totalorder %v532, 1
  %vm913 = vcmp.eq.s32.totalorder %v535, 1
  %vm914 = vcmp.eq.s32.totalorder %v538, 1
  %vm915 = vcmp.eq.s32.totalorder %v541, 1
  %vm916 = vcmp.eq.s32.totalorder %v544, 1
  %vm917 = vcmp.eq.s32.totalorder %v547, 1
  %vm918 = vcmp.eq.s32.totalorder %v550, 1
  %vm919 = vcmp.eq.s32.totalorder %v553, 1
  %vm920 = vcmp.eq.s32.totalorder %v556, 1
  %vm921 = vcmp.eq.s32.totalorder %v559, 1
  %vm922 = vcmp.eq.s32.totalorder %v562, 1
  %vm923 = vcmp.eq.s32.totalorder %v565, 1
  %vm924 = vcmp.eq.s32.totalorder %v568, 1
  %vm925 = vcmp.eq.s32.totalorder %v571, 1
  %vm926 = vcmp.eq.s32.totalorder %v574, 1
  %vm927 = vcmp.eq.s32.totalorder %v577, 1
  %vm928 = vcmp.eq.s32.totalorder %v580, 1
  %vm929 = vcmp.eq.s32.totalorder %v583, 1
  %vm930 = vcmp.eq.s32.totalorder %v586, 1
  %vm931 = vcmp.eq.s32.totalorder %v589, 1
  %vm932 = vcmp.eq.s32.totalorder %v592, 1
  %vm933 = vcmp.eq.s32.totalorder %v595, 1
  %vm934 = vcmp.eq.s32.totalorder %v598, 1
  %vm935 = vcmp.eq.s32.totalorder %v601, 1
  %vm936 = vcmp.eq.s32.totalorder %v604, 1
  %vm937 = vcmp.eq.s32.totalorder %v607, 1
  %vm938 = vcmp.eq.s32.totalorder %v610, 1
  %vm939 = vcmp.eq.s32.totalorder %v613, 1
  %vm940 = vcmp.eq.s32.totalorder %v616, 1
  %vm941 = vcmp.eq.s32.totalorder %v619, 1
  %vm942 = vcmp.eq.s32.totalorder %v622, 1
  %vm943 = vcmp.eq.s32.totalorder %v625, 1
  %vm944 = vcmp.eq.s32.totalorder %v628, 1
  %vm945 = vcmp.eq.s32.totalorder %v631, 1
  %vm946 = vcmp.eq.s32.totalorder %v634, 1
  %vm947 = vcmp.eq.s32.totalorder %v637, 1
  %vm948 = vcmp.eq.s32.totalorder %v640, 1
  %vm949 = vcmp.eq.s32.totalorder %v643, 1
  %vm950 = vcmp.eq.s32.totalorder %v646, 1
  %vm951 = vcmp.eq.s32.totalorder %v649, 1
  %vm952 = vcmp.eq.s32.totalorder %v652, 1
  %vm953 = vcmp.eq.s32.totalorder %v655, 1
  %vm954 = vcmp.eq.s32.totalorder %v658, 1
  %vm955 = vcmp.eq.s32.totalorder %v661, 1
  %vm956 = vcmp.eq.s32.totalorder %v664, 1
  %vm957 = vcmp.eq.s32.totalorder %v667, 1
  %vm958 = vcmp.eq.s32.totalorder %v670, 1
  %vm959 = vcmp.eq.s32.totalorder %v673, 1
  %vm960 = vcmp.eq.s32.totalorder %v676, 1
  %vm961 = vcmp.eq.s32.totalorder %v679, 1
  %vm962 = vcmp.eq.s32.totalorder %v682, 1
  %vm963 = vcmp.eq.s32.totalorder %v685, 1
  %vm964 = vcmp.eq.s32.totalorder %v688, 1
  %vm965 = vcmp.eq.s32.totalorder %v691, 1
  %vm966 = vcmp.eq.s32.totalorder %v694, 1
  %vm967 = vcmp.eq.s32.totalorder %v697, 1
  %vm968 = vcmp.eq.s32.totalorder %v700, 1
  %vm969 = vcmp.eq.s32.totalorder %v703, 1
  %vm970 = vcmp.eq.s32.totalorder %v706, 1
  %vm971 = vcmp.eq.s32.totalorder %v709, 1
  %vm972 = vcmp.eq.s32.totalorder %v712, 1
  %vm973 = vcmp.eq.s32.totalorder %v715, 1
  %vm974 = vcmp.eq.s32.totalorder %v718, 1
  %vm975 = vcmp.eq.s32.totalorder %v721, 1
  %vm976 = vcmp.eq.s32.totalorder %v724, 1
  %vm977 = vcmp.eq.s32.totalorder %v727, 1
  %vm978 = vcmp.eq.s32.totalorder %v730, 1
  %vm979 = vcmp.eq.s32.totalorder %v733, 1
  %vm980 = vcmp.eq.s32.totalorder %v736, 1
  %vm981 = vcmp.eq.s32.totalorder %v739, 1
  %vm982 = vcmp.eq.s32.totalorder %v742, 1
  %vm983 = vcmp.eq.s32.totalorder %v745, 1
  %vm984 = vcmp.eq.s32.totalorder %v748, 1
  %vm985 = vcmp.eq.s32.totalorder %v751, 1
  %vm986 = vcmp.eq.s32.totalorder %v754, 1
  %vm987 = vcmp.eq.s32.totalorder %v757, 1
  %vm988 = vcmp.eq.s32.totalorder %v760, 1
  %vm989 = vcmp.eq.s32.totalorder %v763, 1
  %vm990 = vcmp.eq.s32.totalorder %v766, 1
  %vm991 = vcmp.eq.s32.totalorder %v769, 1
  %vm992 = vcmp.eq.s32.totalorder %v772, 1
  %vm993 = vcmp.eq.s32.totalorder %v775, 1
  %vm994 = vcmp.eq.s32.totalorder %v778, 1
  %vm995 = vcmp.eq.s32.totalorder %v781, 1
  %vm996 = vcmp.eq.s32.totalorder %v784, 1
  %vm997 = vcmp.eq.s32.totalorder %v787, 1
  %vm998 = vcmp.eq.s32.totalorder %v790, 1
  %vm999 = vcmp.eq.s32.totalorder %v793, 1
  %vm1000 = vcmp.eq.s32.totalorder %v796, 1
  %vm1001 = vcmp.eq.s32.totalorder %v799, 1
  %vm1002 = vcmp.eq.s32.totalorder %v802, 1
  %vm1003 = vcmp.eq.s32.totalorder %v805, 1
  %vm1004 = vcmp.eq.s32.totalorder %v808, 1
  %vm1005 = vcmp.eq.s32.totalorder %v811, 1
  %vm1006 = vcmp.eq.s32.totalorder %v814, 1
  %vm1007 = vcmp.eq.s32.totalorder %v817, 1
  %vm1008 = vcmp.eq.s32.totalorder %v820, 1
  %vm1009 = vcmp.eq.s32.totalorder %v823, 1
  %vm1010 = vcmp.eq.s32.totalorder %v826, 1
  %vm1011 = vcmp.eq.s32.totalorder %v829, 1
  %vm1012 = vcmp.eq.s32.totalorder %v832, 1
  %vm1013 = vcmp.eq.s32.totalorder %v835, 1
  %vm1014 = vcmp.eq.s32.totalorder %v838, 1
  %vm1015 = vcmp.eq.s32.totalorder %v841, 1
  %vm1016 = vcmp.eq.s32.totalorder %v844, 1
  %vm1017 = vcmp.eq.s32.totalorder %v847, 1
  %vm1018 = vcmp.eq.s32.totalorder %v850, 1
  %vm1019 = vcmp.eq.s32.totalorder %v853, 1
  %vm1020 = vcmp.eq.s32.totalorder %v856, 1
  %vm1021 = vcmp.eq.s32.totalorder %v859, 1
  %vm1022 = vcmp.eq.s32.totalorder %v862, 1
  %vm1023 = vcmp.eq.s32.totalorder %v865, 1
  %vm1024 = vcmp.eq.s32.totalorder %v868, 1
  %vm1025 = vcmp.eq.s32.totalorder %v871, 1
  %vm1026 = vcmp.eq.s32.totalorder %v874, 1
  %vm1027 = vcmp.eq.s32.totalorder %v877, 1
  %vm1028 = vcmp.eq.s32.totalorder %v880, 1
  %vm1029 = vcmp.eq.s32.totalorder %v883, 1
  %vm1030 = vcmp.eq.s32.totalorder %v886, 1
  %vm1031 = vcmp.eq.s32.totalorder %v889, 1
  %vm1032 = vcmp.eq.s32.totalorder %v892, 1
  %vm1033 = vcmp.eq.s32.totalorder %v895, 1
  %vm1034 = vcmp.eq.s32.totalorder %v898, 1
  %vm1035 = vcmp.eq.s32.totalorder %v901, 1
  %vm1036 = vcmp.eq.s32.totalorder %v904, 1
  %vm1037 = vcmp.eq.s32.totalorder %v907, 1
  %vm1038 = vcmp.eq.s32.totalorder %v910, 1
  %vm1039 = vmpackc.low %vm911, %vm911
  %vm1040 = vmpackc.low %vm912, %vm912
  %vm1041 = vmpackc.low %vm913, %vm913
  %vm1042 = vmpackc.low %vm914, %vm914
  %vm1043 = vmpackc.low %vm915, %vm915
  %vm1044 = vmpackc.low %vm916, %vm916
  %vm1045 = vmpackc.low %vm917, %vm917
  %vm1046 = vmpackc.low %vm918, %vm918
  %vm1047 = vmpackc.low %vm919, %vm919
  %vm1048 = vmpackc.low %vm920, %vm920
  %vm1049 = vmpackc.low %vm921, %vm921
  %vm1050 = vmpackc.low %vm922, %vm922
  %vm1051 = vmpackc.low %vm923, %vm923
  %vm1052 = vmpackc.low %vm924, %vm924
  %vm1053 = vmpackc.low %vm925, %vm925
  %vm1054 = vmpackc.low %vm926, %vm926
  %vm1055 = vmpackc.low %vm927, %vm927
  %vm1056 = vmpackc.low %vm928, %vm928
  %vm1057 = vmpackc.low %vm929, %vm929
  %vm1058 = vmpackc.low %vm930, %vm930
  %vm1059 = vmpackc.low %vm931, %vm931
  %vm1060 = vmpackc.low %vm932, %vm932
  %vm1061 = vmpackc.low %vm933, %vm933
  %vm1062 = vmpackc.low %vm934, %vm934
  %vm1063 = vmpackc.low %vm935, %vm935
  %vm1064 = vmpackc.low %vm936, %vm936
  %vm1065 = vmpackc.low %vm937, %vm937
  %vm1066 = vmpackc.low %vm938, %vm938
  %vm1067 = vmpackc.low %vm939, %vm939
  %vm1068 = vmpackc.low %vm940, %vm940
  %vm1069 = vmpackc.low %vm941, %vm941
  %vm1070 = vmpackc.low %vm942, %vm942
  %vm1071 = vmpackc.low %vm943, %vm943
  %vm1072 = vmpackc.low %vm944, %vm944
  %vm1073 = vmpackc.low %vm945, %vm945
  %vm1074 = vmpackc.low %vm946, %vm946
  %vm1075 = vmpackc.low %vm947, %vm947
  %vm1076 = vmpackc.low %vm948, %vm948
  %vm1077 = vmpackc.low %vm949, %vm949
  %vm1078 = vmpackc.low %vm950, %vm950
  %vm1079 = vmpackc.low %vm951, %vm951
  %vm1080 = vmpackc.low %vm952, %vm952
  %vm1081 = vmpackc.low %vm953, %vm953
  %vm1082 = vmpackc.low %vm954, %vm954
  %vm1083 = vmpackc.low %vm955, %vm955
  %vm1084 = vmpackc.low %vm956, %vm956
  %vm1085 = vmpackc.low %vm957, %vm957
  %vm1086 = vmpackc.low %vm958, %vm958
  %vm1087 = vmpackc.low %vm959, %vm959
  %vm1088 = vmpackc.low %vm960, %vm960
  %vm1089 = vmpackc.low %vm961, %vm961
  %vm1090 = vmpackc.low %vm962, %vm962
  %vm1091 = vmpackc.low %vm963, %vm963
  %vm1092 = vmpackc.low %vm964, %vm964
  %vm1093 = vmpackc.low %vm965, %vm965
  %vm1094 = vmpackc.low %vm966, %vm966
  %vm1095 = vmpackc.low %vm967, %vm967
  %vm1096 = vmpackc.low %vm968, %vm968
  %vm1097 = vmpackc.low %vm969, %vm969
  %vm1098 = vmpackc.low %vm970, %vm970
  %vm1099 = vmpackc.low %vm971, %vm971
  %vm1100 = vmpackc.low %vm972, %vm972
  %vm1101 = vmpackc.low %vm973, %vm973
  %vm1102 = vmpackc.low %vm974, %vm974
  %vm1103 = vmpackc.low %vm975, %vm975
  %vm1104 = vmpackc.low %vm976, %vm976
  %vm1105 = vmpackc.low %vm977, %vm977
  %vm1106 = vmpackc.low %vm978, %vm978
  %vm1107 = vmpackc.low %vm979, %vm979
  %vm1108 = vmpackc.low %vm980, %vm980
  %vm1109 = vmpackc.low %vm981, %vm981
  %vm1110 = vmpackc.low %vm982, %vm982
  %vm1111 = vmpackc.low %vm983, %vm983
  %vm1112 = vmpackc.low %vm984, %vm984
  %vm1113 = vmpackc.low %vm985, %vm985
  %vm1114 = vmpackc.low %vm986, %vm986
  %vm1115 = vmpackc.low %vm987, %vm987
  %vm1116 = vmpackc.low %vm988, %vm988
  %vm1117 = vmpackc.low %vm989, %vm989
  %vm1118 = vmpackc.low %vm990, %vm990
  %vm1119 = vmpackc.low %vm991, %vm991
  %vm1120 = vmpackc.low %vm992, %vm992
  %vm1121 = vmpackc.low %vm993, %vm993
  %vm1122 = vmpackc.low %vm994, %vm994
  %vm1123 = vmpackc.low %vm995, %vm995
  %vm1124 = vmpackc.low %vm996, %vm996
  %vm1125 = vmpackc.low %vm997, %vm997
  %vm1126 = vmpackc.low %vm998, %vm998
  %vm1127 = vmpackc.low %vm999, %vm999
  %vm1128 = vmpackc.low %vm1000, %vm1000
  %vm1129 = vmpackc.low %vm1001, %vm1001
  %vm1130 = vmpackc.low %vm1002, %vm1002
  %vm1131 = vmpackc.low %vm1003, %vm1003
  %vm1132 = vmpackc.low %vm1004, %vm1004
  %vm1133 = vmpackc.low %vm1005, %vm1005
  %vm1134 = vmpackc.low %vm1006, %vm1006
  %vm1135 = vmpackc.low %vm1007, %vm1007
  %vm1136 = vmpackc.low %vm1008, %vm1008
  %vm1137 = vmpackc.low %vm1009, %vm1009
  %vm1138 = vmpackc.low %vm1010, %vm1010
  %vm1139 = vmpackc.low %vm1011, %vm1011
  %vm1140 = vmpackc.low %vm1012, %vm1012
  %vm1141 = vmpackc.low %vm1013, %vm1013
  %vm1142 = vmpackc.low %vm1014, %vm1014
  %vm1143 = vmpackc.low %vm1015, %vm1015
  %vm1144 = vmpackc.low %vm1016, %vm1016
  %vm1145 = vmpackc.low %vm1017, %vm1017
  %vm1146 = vmpackc.low %vm1018, %vm1018
  %vm1147 = vmpackc.low %vm1019, %vm1019
  %vm1148 = vmpackc.low %vm1020, %vm1020
  %vm1149 = vmpackc.low %vm1021, %vm1021
  %vm1150 = vmpackc.low %vm1022, %vm1022
  %vm1151 = vmpackc.low %vm1023, %vm1023
  %vm1152 = vmpackc.low %vm1024, %vm1024
  %vm1153 = vmpackc.low %vm1025, %vm1025
  %vm1154 = vmpackc.low %vm1026, %vm1026
  %vm1155 = vmpackc.low %vm1027, %vm1027
  %vm1156 = vmpackc.low %vm1028, %vm1028
  %vm1157 = vmpackc.low %vm1029, %vm1029
  %vm1158 = vmpackc.low %vm1030, %vm1030
  %vm1159 = vmpackc.low %vm1031, %vm1031
  %vm1160 = vmpackc.low %vm1032, %vm1032
  %vm1161 = vmpackc.low %vm1033, %vm1033
  %vm1162 = vmpackc.low %vm1034, %vm1034
  %vm1163 = vmpackc.low %vm1035, %vm1035
  %vm1164 = vmpackc.low %vm1036, %vm1036
  %vm1165 = vmpackc.low %vm1037, %vm1037
  %vm1166 = vmpackc.low %vm1038, %vm1038
  %v1167 = vsel %vm1039, %v15, 0
  %v1168 = vsel %vm1040, %v16, 0
  %v1169 = vsel %vm1041, %v17, 0
  %v1170 = vsel %vm1042, %v18, 0
  %v1171 = vsel %vm1043, %v19, 0
  %v1172 = vsel %vm1044, %v20, 0
  %v1173 = vsel %vm1045, %v21, 0
  %v1174 = vsel %vm1046, %v22, 0
  %v1175 = vsel %vm1047, %v23, 0
  %v1176 = vsel %vm1048, %v24, 0
  %v1177 = vsel %vm1049, %v25, 0
  %v1178 = vsel %vm1050, %v26, 0
  %v1179 = vsel %vm1051, %v27, 0
  %v1180 = vsel %vm1052, %v28, 0
  %v1181 = vsel %vm1053, %v29, 0
  %v1182 = vsel %vm1054, %v30, 0
  %v1183 = vsel %vm1055, %v31, 0
  %v1184 = vsel %vm1056, %v32, 0
  %v1185 = vsel %vm1057, %v33, 0
  %v1186 = vsel %vm1058, %v34, 0
  %v1187 = vsel %vm1059, %v35, 0
  %v1188 = vsel %vm1060, %v36, 0
  %v1189 = vsel %vm1061, %v37, 0
  %v1190 = vsel %vm1062, %v38, 0
  %v1191 = vsel %vm1063, %v39, 0
  %v1192 = vsel %vm1064, %v40, 0
  %v1193 = vsel %vm1065, %v41, 0
  %v1194 = vsel %vm1066, %v42, 0
  %v1195 = vsel %vm1067, %v43, 0
  %v1196 = vsel %vm1068, %v44, 0
  %v1197 = vsel %vm1069, %v45, 0
  %v1198 = vsel %vm1070, %v46, 0
  %v1199 = vsel %vm1071, %v47, 0
  %v1200 = vsel %vm1072, %v48, 0
  %v1201 = vsel %vm1073, %v49, 0
  %v1202 = vsel %vm1074, %v50, 0
  %v1203 = vsel %vm1075, %v51, 0
  %v1204 = vsel %vm1076, %v52, 0
  %v1205 = vsel %vm1077, %v53, 0
  %v1206 = vsel %vm1078, %v54, 0
  %v1207 = vsel %vm1079, %v55, 0
  %v1208 = vsel %vm1080, %v56, 0
  %v1209 = vsel %vm1081, %v57, 0
  %v1210 = vsel %vm1082, %v58, 0
  %v1211 = vsel %vm1083, %v59, 0
  %v1212 = vsel %vm1084, %v60, 0
  %v1213 = vsel %vm1085, %v61, 0
  %v1214 = vsel %vm1086, %v62, 0
  %v1215 = vsel %vm1087, %v63, 0
  %v1216 = vsel %vm1088, %v64, 0
  %v1217 = vsel %vm1089, %v65, 0
  %v1218 = vsel %vm1090, %v66, 0
  %v1219 = vsel %vm1091, %v67, 0
  %v1220 = vsel %vm1092, %v68, 0
  %v1221 = vsel %vm1093, %v69, 0
  %v1222 = vsel %vm1094, %v70, 0
  %v1223 = vsel %vm1095, %v71, 0
  %v1224 = vsel %vm1096, %v72, 0
  %v1225 = vsel %vm1097, %v73, 0
  %v1226 = vsel %vm1098, %v74, 0
  %v1227 = vsel %vm1099, %v75, 0
  %v1228 = vsel %vm1100, %v76, 0
  %v1229 = vsel %vm1101, %v77, 0
  %v1230 = vsel %vm1102, %v78, 0
  %v1231 = vsel %vm1103, %v79, 0
  %v1232 = vsel %vm1104, %v80, 0
  %v1233 = vsel %vm1105, %v81, 0
  %v1234 = vsel %vm1106, %v82, 0
  %v1235 = vsel %vm1107, %v83, 0
  %v1236 = vsel %vm1108, %v84, 0
  %v1237 = vsel %vm1109, %v85, 0
  %v1238 = vsel %vm1110, %v86, 0
  %v1239 = vsel %vm1111, %v87, 0
  %v1240 = vsel %vm1112, %v88, 0
  %v1241 = vsel %vm1113, %v89, 0
  %v1242 = vsel %vm1114, %v90, 0
  %v1243 = vsel %vm1115, %v91, 0
  %v1244 = vsel %vm1116, %v92, 0
  %v1245 = vsel %vm1117, %v93, 0
  %v1246 = vsel %vm1118, %v94, 0
  %v1247 = vsel %vm1119, %v95, 0
  %v1248 = vsel %vm1120, %v96, 0
  %v1249 = vsel %vm1121, %v97, 0
  %v1250 = vsel %vm1122, %v98, 0
  %v1251 = vsel %vm1123, %v99, 0
  %v1252 = vsel %vm1124, %v100, 0
  %v1253 = vsel %vm1125, %v101, 0
  %v1254 = vsel %vm1126, %v102, 0
  %v1255 = vsel %vm1127, %v103, 0
  %v1256 = vsel %vm1128, %v104, 0
  %v1257 = vsel %vm1129, %v105, 0
  %v1258 = vsel %vm1130, %v106, 0
  %v1259 = vsel %vm1131, %v107, 0
  %v1260 = vsel %vm1132, %v108, 0
  %v1261 = vsel %vm1133, %v109, 0
  %v1262 = vsel %vm1134, %v110, 0
  %v1263 = vsel %vm1135, %v111, 0
  %v1264 = vsel %vm1136, %v112, 0
  %v1265 = vsel %vm1137, %v113, 0
  %v1266 = vsel %vm1138, %v114, 0
  %v1267 = vsel %vm1139, %v115, 0
  %v1268 = vsel %vm1140, %v116, 0
  %v1269 = vsel %vm1141, %v117, 0
  %v1270 = vsel %vm1142, %v118, 0
  %v1271 = vsel %vm1143, %v119, 0
  %v1272 = vsel %vm1144, %v120, 0
  %v1273 = vsel %vm1145, %v121, 0
  %v1274 = vsel %vm1146, %v122, 0
  %v1275 = vsel %vm1147, %v123, 0
  %v1276 = vsel %vm1148, %v124, 0
  %v1277 = vsel %vm1149, %v125, 0
  %v1278 = vsel %vm1150, %v126, 0
  %v1279 = vsel %vm1151, %v127, 0
  %v1280 = vsel %vm1152, %v128, 0
  %v1281 = vsel %vm1153, %v129, 0
  %v1282 = vsel %vm1154, %v130, 0
  %v1283 = vsel %vm1155, %v131, 0
  %v1284 = vsel %vm1156, %v132, 0
  %v1285 = vsel %vm1157, %v133, 0
  %v1286 = vsel %vm1158, %v134, 0
  %v1287 = vsel %vm1159, %v135, 0
  %v1288 = vsel %vm1160, %v136, 0
  %v1289 = vsel %vm1161, %v137, 0
  %v1290 = vsel %vm1162, %v138, 0
  %v1291 = vsel %vm1163, %v139, 0
  %v1292 = vsel %vm1164, %v140, 0
  %v1293 = vsel %vm1165, %v141, 0
  %v1294 = vsel %vm1166, %v142, 0
  %vm1295 = vcmp.eq.s32.totalorder %v143, 1
  %vm1296 = vcmp.eq.s32.totalorder %v144, 1
  %vm1297 = vcmp.eq.s32.totalorder %v145, 1
  %vm1298 = vcmp.eq.s32.totalorder %v146, 1
  %vm1299 = vcmp.eq.s32.totalorder %v147, 1
  %vm1300 = vcmp.eq.s32.totalorder %v148, 1
  %vm1301 = vcmp.eq.s32.totalorder %v149, 1
  %vm1302 = vcmp.eq.s32.totalorder %v150, 1
  %vm1303 = vcmp.eq.s32.totalorder %v151, 1
  %vm1304 = vcmp.eq.s32.totalorder %v152, 1
  %vm1305 = vcmp.eq.s32.totalorder %v153, 1
  %vm1306 = vcmp.eq.s32.totalorder %v154, 1
  %vm1307 = vcmp.eq.s32.totalorder %v155, 1
  %vm1308 = vcmp.eq.s32.totalorder %v156, 1
  %vm1309 = vcmp.eq.s32.totalorder %v157, 1
  %vm1310 = vcmp.eq.s32.totalorder %v158, 1
  %vm1311 = vcmp.eq.s32.totalorder %v159, 1
  %vm1312 = vcmp.eq.s32.totalorder %v160, 1
  %vm1313 = vcmp.eq.s32.totalorder %v161, 1
  %vm1314 = vcmp.eq.s32.totalorder %v162, 1
  %vm1315 = vcmp.eq.s32.totalorder %v163, 1
  %vm1316 = vcmp.eq.s32.totalorder %v164, 1
  %vm1317 = vcmp.eq.s32.totalorder %v165, 1
  %vm1318 = vcmp.eq.s32.totalorder %v166, 1
  %vm1319 = vcmp.eq.s32.totalorder %v167, 1
  %vm1320 = vcmp.eq.s32.totalorder %v168, 1
  %vm1321 = vcmp.eq.s32.totalorder %v169, 1
  %vm1322 = vcmp.eq.s32.totalorder %v170, 1
  %vm1323 = vcmp.eq.s32.totalorder %v171, 1
  %vm1324 = vcmp.eq.s32.totalorder %v172, 1
  %vm1325 = vcmp.eq.s32.totalorder %v173, 1
  %vm1326 = vcmp.eq.s32.totalorder %v174, 1
  %vm1327 = vcmp.eq.s32.totalorder %v175, 1
  %vm1328 = vcmp.eq.s32.totalorder %v176, 1
  %vm1329 = vcmp.eq.s32.totalorder %v177, 1
  %vm1330 = vcmp.eq.s32.totalorder %v178, 1
  %vm1331 = vcmp.eq.s32.totalorder %v179, 1
  %vm1332 = vcmp.eq.s32.totalorder %v180, 1
  %vm1333 = vcmp.eq.s32.totalorder %v181, 1
  %vm1334 = vcmp.eq.s32.totalorder %v182, 1
  %vm1335 = vcmp.eq.s32.totalorder %v183, 1
  %vm1336 = vcmp.eq.s32.totalorder %v184, 1
  %vm1337 = vcmp.eq.s32.totalorder %v185, 1
  %vm1338 = vcmp.eq.s32.totalorder %v186, 1
  %vm1339 = vcmp.eq.s32.totalorder %v187, 1
  %vm1340 = vcmp.eq.s32.totalorder %v188, 1
  %vm1341 = vcmp.eq.s32.totalorder %v189, 1
  %vm1342 = vcmp.eq.s32.totalorder %v190, 1
  %vm1343 = vcmp.eq.s32.totalorder %v191, 1
  %vm1344 = vcmp.eq.s32.totalorder %v192, 1
  %vm1345 = vcmp.eq.s32.totalorder %v193, 1
  %vm1346 = vcmp.eq.s32.totalorder %v194, 1
  %vm1347 = vcmp.eq.s32.totalorder %v195, 1
  %vm1348 = vcmp.eq.s32.totalorder %v196, 1
  %vm1349 = vcmp.eq.s32.totalorder %v197, 1
  %vm1350 = vcmp.eq.s32.totalorder %v198, 1
  %vm1351 = vcmp.eq.s32.totalorder %v199, 1
  %vm1352 = vcmp.eq.s32.totalorder %v200, 1
  %vm1353 = vcmp.eq.s32.totalorder %v201, 1
  %vm1354 = vcmp.eq.s32.totalorder %v202, 1
  %vm1355 = vcmp.eq.s32.totalorder %v203, 1
  %vm1356 = vcmp.eq.s32.totalorder %v204, 1
  %vm1357 = vcmp.eq.s32.totalorder %v205, 1
  %vm1358 = vcmp.eq.s32.totalorder %v206, 1
  %vm1359 = vcmp.eq.s32.totalorder %v207, 1
  %vm1360 = vcmp.eq.s32.totalorder %v208, 1
  %vm1361 = vcmp.eq.s32.totalorder %v209, 1
  %vm1362 = vcmp.eq.s32.totalorder %v210, 1
  %vm1363 = vcmp.eq.s32.totalorder %v211, 1
  %vm1364 = vcmp.eq.s32.totalorder %v212, 1
  %vm1365 = vcmp.eq.s32.totalorder %v213, 1
  %vm1366 = vcmp.eq.s32.totalorder %v214, 1
  %vm1367 = vcmp.eq.s32.totalorder %v215, 1
  %vm1368 = vcmp.eq.s32.totalorder %v216, 1
  %vm1369 = vcmp.eq.s32.totalorder %v217, 1
  %vm1370 = vcmp.eq.s32.totalorder %v218, 1
  %vm1371 = vcmp.eq.s32.totalorder %v219, 1
  %vm1372 = vcmp.eq.s32.totalorder %v220, 1
  %vm1373 = vcmp.eq.s32.totalorder %v221, 1
  %vm1374 = vcmp.eq.s32.totalorder %v222, 1
  %vm1375 = vcmp.eq.s32.totalorder %v223, 1
  %vm1376 = vcmp.eq.s32.totalorder %v224, 1
  %vm1377 = vcmp.eq.s32.totalorder %v225, 1
  %vm1378 = vcmp.eq.s32.totalorder %v226, 1
  %vm1379 = vcmp.eq.s32.totalorder %v227, 1
  %vm1380 = vcmp.eq.s32.totalorder %v228, 1
  %vm1381 = vcmp.eq.s32.totalorder %v229, 1
  %vm1382 = vcmp.eq.s32.totalorder %v230, 1
  %vm1383 = vcmp.eq.s32.totalorder %v231, 1
  %vm1384 = vcmp.eq.s32.totalorder %v232, 1
  %vm1385 = vcmp.eq.s32.totalorder %v233, 1
  %vm1386 = vcmp.eq.s32.totalorder %v234, 1
  %vm1387 = vcmp.eq.s32.totalorder %v235, 1
  %vm1388 = vcmp.eq.s32.totalorder %v236, 1
  %vm1389 = vcmp.eq.s32.totalorder %v237, 1
  %vm1390 = vcmp.eq.s32.totalorder %v238, 1
  %vm1391 = vcmp.eq.s32.totalorder %v239, 1
  %vm1392 = vcmp.eq.s32.totalorder %v240, 1
  %vm1393 = vcmp.eq.s32.totalorder %v241, 1
  %vm1394 = vcmp.eq.s32.totalorder %v242, 1
  %vm1395 = vcmp.eq.s32.totalorder %v243, 1
  %vm1396 = vcmp.eq.s32.totalorder %v244, 1
  %vm1397 = vcmp.eq.s32.totalorder %v245, 1
  %vm1398 = vcmp.eq.s32.totalorder %v246, 1
  %vm1399 = vcmp.eq.s32.totalorder %v247, 1
  %vm1400 = vcmp.eq.s32.totalorder %v248, 1
  %vm1401 = vcmp.eq.s32.totalorder %v249, 1
  %vm1402 = vcmp.eq.s32.totalorder %v250, 1
  %vm1403 = vcmp.eq.s32.totalorder %v251, 1
  %vm1404 = vcmp.eq.s32.totalorder %v252, 1
  %vm1405 = vcmp.eq.s32.totalorder %v253, 1
  %vm1406 = vcmp.eq.s32.totalorder %v254, 1
  %vm1407 = vcmp.eq.s32.totalorder %v255, 1
  %vm1408 = vcmp.eq.s32.totalorder %v256, 1
  %vm1409 = vcmp.eq.s32.totalorder %v257, 1
  %vm1410 = vcmp.eq.s32.totalorder %v258, 1
  %vm1411 = vcmp.eq.s32.totalorder %v259, 1
  %vm1412 = vcmp.eq.s32.totalorder %v260, 1
  %vm1413 = vcmp.eq.s32.totalorder %v261, 1
  %vm1414 = vcmp.eq.s32.totalorder %v262, 1
  %vm1415 = vcmp.eq.s32.totalorder %v263, 1
  %vm1416 = vcmp.eq.s32.totalorder %v264, 1
  %vm1417 = vcmp.eq.s32.totalorder %v265, 1
  %vm1418 = vcmp.eq.s32.totalorder %v266, 1
  %vm1419 = vcmp.eq.s32.totalorder %v267, 1
  %vm1420 = vcmp.eq.s32.totalorder %v268, 1
  %vm1421 = vcmp.eq.s32.totalorder %v269, 1
  %vm1422 = vcmp.eq.s32.totalorder %v270, 1
  %v1423 = vsel %vm1295, 1, 0
  %v1424 = vsel %vm1296, 1, 0
  %v1425 = vsel %vm1297, 1, 0
  %v1426 = vsel %vm1298, 1, 0
  %v1427 = vsel %vm1299, 1, 0
  %v1428 = vsel %vm1300, 1, 0
  %v1429 = vsel %vm1301, 1, 0
  %v1430 = vsel %vm1302, 1, 0
  %v1431 = vsel %vm1303, 1, 0
  %v1432 = vsel %vm1304, 1, 0
  %v1433 = vsel %vm1305, 1, 0
  %v1434 = vsel %vm1306, 1, 0
  %v1435 = vsel %vm1307, 1, 0
  %v1436 = vsel %vm1308, 1, 0
  %v1437 = vsel %vm1309, 1, 0
  %v1438 = vsel %vm1310, 1, 0
  %v1439 = vsel %vm1311, 1, 0
  %v1440 = vsel %vm1312, 1, 0
  %v1441 = vsel %vm1313, 1, 0
  %v1442 = vsel %vm1314, 1, 0
  %v1443 = vsel %vm1315, 1, 0
  %v1444 = vsel %vm1316, 1, 0
  %v1445 = vsel %vm1317, 1, 0
  %v1446 = vsel %vm1318, 1, 0
  %v1447 = vsel %vm1319, 1, 0
  %v1448 = vsel %vm1320, 1, 0
  %v1449 = vsel %vm1321, 1, 0
  %v1450 = vsel %vm1322, 1, 0
  %v1451 = vsel %vm1323, 1, 0
  %v1452 = vsel %vm1324, 1, 0
  %v1453 = vsel %vm1325, 1, 0
  %v1454 = vsel %vm1326, 1, 0
  %v1455 = vsel %vm1327, 1, 0
  %v1456 = vsel %vm1328, 1, 0
  %v1457 = vsel %vm1329, 1, 0
  %v1458 = vsel %vm1330, 1, 0
  %v1459 = vsel %vm1331, 1, 0
  %v1460 = vsel %vm1332, 1, 0
  %v1461 = vsel %vm1333, 1, 0
  %v1462 = vsel %vm1334, 1, 0
  %v1463 = vsel %vm1335, 1, 0
  %v1464 = vsel %vm1336, 1, 0
  %v1465 = vsel %vm1337, 1, 0
  %v1466 = vsel %vm1338, 1, 0
  %v1467 = vsel %vm1339, 1, 0
  %v1468 = vsel %vm1340, 1, 0
  %v1469 = vsel %vm1341, 1, 0
  %v1470 = vsel %vm1342, 1, 0
  %v1471 = vsel %vm1343, 1, 0
  %v1472 = vsel %vm1344, 1, 0
  %v1473 = vsel %vm1345, 1, 0
  %v1474 = vsel %vm1346, 1, 0
  %v1475 = vsel %vm1347, 1, 0
  %v1476 = vsel %vm1348, 1, 0
  %v1477 = vsel %vm1349, 1, 0
  %v1478 = vsel %vm1350, 1, 0
  %v1479 = vsel %vm1351, 1, 0
  %v1480 = vsel %vm1352, 1, 0
  %v1481 = vsel %vm1353, 1, 0
  %v1482 = vsel %vm1354, 1, 0
  %v1483 = vsel %vm1355, 1, 0
  %v1484 = vsel %vm1356, 1, 0
  %v1485 = vsel %vm1357, 1, 0
  %v1486 = vsel %vm1358, 1, 0
  %v1487 = vsel %vm1359, 1, 0
  %v1488 = vsel %vm1360, 1, 0
  %v1489 = vsel %vm1361, 1, 0
  %v1490 = vsel %vm1362, 1, 0
  %v1491 = vsel %vm1363, 1, 0
  %v1492 = vsel %vm1364, 1, 0
  %v1493 = vsel %vm1365, 1, 0
  %v1494 = vsel %vm1366, 1, 0
  %v1495 = vsel %vm1367, 1, 0
  %v1496 = vsel %vm1368, 1, 0
  %v1497 = vsel %vm1369, 1, 0
  %v1498 = vsel %vm1370, 1, 0
  %v1499 = vsel %vm1371, 1, 0
  %v1500 = vsel %vm1372, 1, 0
  %v1501 = vsel %vm1373, 1, 0
  %v1502 = vsel %vm1374, 1, 0
  %v1503 = vsel %vm1375, 1, 0
  %v1504 = vsel %vm1376, 1, 0
  %v1505 = vsel %vm1377, 1, 0
  %v1506 = vsel %vm1378, 1, 0
  %v1507 = vsel %vm1379, 1, 0
  %v1508 = vsel %vm1380, 1, 0
  %v1509 = vsel %vm1381, 1, 0
  %v1510 = vsel %vm1382, 1, 0
  %v1511 = vsel %vm1383, 1, 0
  %v1512 = vsel %vm1384, 1, 0
  %v1513 = vsel %vm1385, 1, 0
  %v1514 = vsel %vm1386, 1, 0
  %v1515 = vsel %vm1387, 1, 0
  %v1516 = vsel %vm1388, 1, 0
  %v1517 = vsel %vm1389, 1, 0
  %v1518 = vsel %vm1390, 1, 0
  %v1519 = vsel %vm1391, 1, 0
  %v1520 = vsel %vm1392, 1, 0
  %v1521 = vsel %vm1393, 1, 0
  %v1522 = vsel %vm1394, 1, 0
  %v1523 = vsel %vm1395, 1, 0
  %v1524 = vsel %vm1396, 1, 0
  %v1525 = vsel %vm1397, 1, 0
  %v1526 = vsel %vm1398, 1, 0
  %v1527 = vsel %vm1399, 1, 0
  %v1528 = vsel %vm1400, 1, 0
  %v1529 = vsel %vm1401, 1, 0
  %v1530 = vsel %vm1402, 1, 0
  %v1531 = vsel %vm1403, 1, 0
  %v1532 = vsel %vm1404, 1, 0
  %v1533 = vsel %vm1405, 1, 0
  %v1534 = vsel %vm1406, 1, 0
  %v1535 = vsel %vm1407, 1, 0
  %v1536 = vsel %vm1408, 1, 0
  %v1537 = vsel %vm1409, 1, 0
  %v1538 = vsel %vm1410, 1, 0
  %v1539 = vsel %vm1411, 1, 0
  %v1540 = vsel %vm1412, 1, 0
  %v1541 = vsel %vm1413, 1, 0
  %v1542 = vsel %vm1414, 1, 0
  %v1543 = vsel %vm1415, 1, 0
  %v1544 = vsel %vm1416, 1, 0
  %v1545 = vsel %vm1417, 1, 0
  %v1546 = vsel %vm1418, 1, 0
  %v1547 = vsel %vm1419, 1, 0
  %v1548 = vsel %vm1420, 1, 0
  %v1549 = vsel %vm1421, 1, 0
  %v1550 = vsel %vm1422, 1, 0
  %1551 = vset.pattern.permute.xlu0 0
  %1552 = vperm.xlu0 %1551, %v1423
  %v1553 = vpop.permute.xlu0 %1552
  %1554 = vset.pattern.permute.xlu0 0
  %1555 = vperm.xlu0 %1554, %v1424
  %v1556 = vpop.permute.xlu0 %1555
  %1557 = vset.pattern.permute.xlu0 0
  %1558 = vperm.xlu0 %1557, %v1425
  %v1559 = vpop.permute.xlu0 %1558
  %1560 = vset.pattern.permute.xlu0 0
  %1561 = vperm.xlu0 %1560, %v1426
  %v1562 = vpop.permute.xlu0 %1561
  %1563 = vset.pattern.permute.xlu0 0
  %1564 = vperm.xlu0 %1563, %v1427
  %v1565 = vpop.permute.xlu0 %1564
  %1566 = vset.pattern.permute.xlu0 0
  %1567 = vperm.xlu0 %1566, %v1428
  %v1568 = vpop.permute.xlu0 %1567
  %1569 = vset.pattern.permute.xlu0 0
  %1570 = vperm.xlu0 %1569, %v1429
  %v1571 = vpop.permute.xlu0 %1570
  %1572 = vset.pattern.permute.xlu0 0
  %1573 = vperm.xlu0 %1572, %v1430
  %v1574 = vpop.permute.xlu0 %1573
  %1575 = vset.pattern.permute.xlu0 0
  %1576 = vperm.xlu0 %1575, %v1431
  %v1577 = vpop.permute.xlu0 %1576
  %1578 = vset.pattern.permute.xlu0 0
  %1579 = vperm.xlu0 %1578, %v1432
  %v1580 = vpop.permute.xlu0 %1579
  %1581 = vset.pattern.permute.xlu0 0
  %1582 = vperm.xlu0 %1581, %v1433
  %v1583 = vpop.permute.xlu0 %1582
  %1584 = vset.pattern.permute.xlu0 0
  %1585 = vperm.xlu0 %1584, %v1434
  %v1586 = vpop.permute.xlu0 %1585
  %1587 = vset.pattern.permute.xlu0 0
  %1588 = vperm.xlu0 %1587, %v1435
  %v1589 = vpop.permute.xlu0 %1588
  %1590 = vset.pattern.permute.xlu0 0
  %1591 = vperm.xlu0 %1590, %v1436
  %v1592 = vpop.permute.xlu0 %1591
  %1593 = vset.pattern.permute.xlu0 0
  %1594 = vperm.xlu0 %1593, %v1437
  %v1595 = vpop.permute.xlu0 %1594
  %1596 = vset.pattern.permute.xlu0 0
  %1597 = vperm.xlu0 %1596, %v1438
  %v1598 = vpop.permute.xlu0 %1597
  %1599 = vset.pattern.permute.xlu0 0
  %1600 = vperm.xlu0 %1599, %v1439
  %v1601 = vpop.permute.xlu0 %1600
  %1602 = vset.pattern.permute.xlu0 0
  %1603 = vperm.xlu0 %1602, %v1440
  %v1604 = vpop.permute.xlu0 %1603
  %1605 = vset.pattern.permute.xlu0 0
  %1606 = vperm.xlu0 %1605, %v1441
  %v1607 = vpop.permute.xlu0 %1606
  %1608 = vset.pattern.permute.xlu0 0
  %1609 = vperm.xlu0 %1608, %v1442
  %v1610 = vpop.permute.xlu0 %1609
  %1611 = vset.pattern.permute.xlu0 0
  %1612 = vperm.xlu0 %1611, %v1443
  %v1613 = vpop.permute.xlu0 %1612
  %1614 = vset.pattern.permute.xlu0 0
  %1615 = vperm.xlu0 %1614, %v1444
  %v1616 = vpop.permute.xlu0 %1615
  %1617 = vset.pattern.permute.xlu0 0
  %1618 = vperm.xlu0 %1617, %v1445
  %v1619 = vpop.permute.xlu0 %1618
  %1620 = vset.pattern.permute.xlu0 0
  %1621 = vperm.xlu0 %1620, %v1446
  %v1622 = vpop.permute.xlu0 %1621
  %1623 = vset.pattern.permute.xlu0 0
  %1624 = vperm.xlu0 %1623, %v1447
  %v1625 = vpop.permute.xlu0 %1624
  %1626 = vset.pattern.permute.xlu0 0
  %1627 = vperm.xlu0 %1626, %v1448
  %v1628 = vpop.permute.xlu0 %1627
  %1629 = vset.pattern.permute.xlu0 0
  %1630 = vperm.xlu0 %1629, %v1449
  %v1631 = vpop.permute.xlu0 %1630
  %1632 = vset.pattern.permute.xlu0 0
  %1633 = vperm.xlu0 %1632, %v1450
  %v1634 = vpop.permute.xlu0 %1633
  %1635 = vset.pattern.permute.xlu0 0
  %1636 = vperm.xlu0 %1635, %v1451
  %v1637 = vpop.permute.xlu0 %1636
  %1638 = vset.pattern.permute.xlu0 0
  %1639 = vperm.xlu0 %1638, %v1452
  %v1640 = vpop.permute.xlu0 %1639
  %1641 = vset.pattern.permute.xlu0 0
  %1642 = vperm.xlu0 %1641, %v1453
  %v1643 = vpop.permute.xlu0 %1642
  %1644 = vset.pattern.permute.xlu0 0
  %1645 = vperm.xlu0 %1644, %v1454
  %v1646 = vpop.permute.xlu0 %1645
  %1647 = vset.pattern.permute.xlu0 0
  %1648 = vperm.xlu0 %1647, %v1455
  %v1649 = vpop.permute.xlu0 %1648
  %1650 = vset.pattern.permute.xlu0 0
  %1651 = vperm.xlu0 %1650, %v1456
  %v1652 = vpop.permute.xlu0 %1651
  %1653 = vset.pattern.permute.xlu0 0
  %1654 = vperm.xlu0 %1653, %v1457
  %v1655 = vpop.permute.xlu0 %1654
  %1656 = vset.pattern.permute.xlu0 0
  %1657 = vperm.xlu0 %1656, %v1458
  %v1658 = vpop.permute.xlu0 %1657
  %1659 = vset.pattern.permute.xlu0 0
  %1660 = vperm.xlu0 %1659, %v1459
  %v1661 = vpop.permute.xlu0 %1660
  %1662 = vset.pattern.permute.xlu0 0
  %1663 = vperm.xlu0 %1662, %v1460
  %v1664 = vpop.permute.xlu0 %1663
  %1665 = vset.pattern.permute.xlu0 0
  %1666 = vperm.xlu0 %1665, %v1461
  %v1667 = vpop.permute.xlu0 %1666
  %1668 = vset.pattern.permute.xlu0 0
  %1669 = vperm.xlu0 %1668, %v1462
  %v1670 = vpop.permute.xlu0 %1669
  %1671 = vset.pattern.permute.xlu0 0
  %1672 = vperm.xlu0 %1671, %v1463
  %v1673 = vpop.permute.xlu0 %1672
  %1674 = vset.pattern.permute.xlu0 0
  %1675 = vperm.xlu0 %1674, %v1464
  %v1676 = vpop.permute.xlu0 %1675
  %1677 = vset.pattern.permute.xlu0 0
  %1678 = vperm.xlu0 %1677, %v1465
  %v1679 = vpop.permute.xlu0 %1678
  %1680 = vset.pattern.permute.xlu0 0
  %1681 = vperm.xlu0 %1680, %v1466
  %v1682 = vpop.permute.xlu0 %1681
  %1683 = vset.pattern.permute.xlu0 0
  %1684 = vperm.xlu0 %1683, %v1467
  %v1685 = vpop.permute.xlu0 %1684
  %1686 = vset.pattern.permute.xlu0 0
  %1687 = vperm.xlu0 %1686, %v1468
  %v1688 = vpop.permute.xlu0 %1687
  %1689 = vset.pattern.permute.xlu0 0
  %1690 = vperm.xlu0 %1689, %v1469
  %v1691 = vpop.permute.xlu0 %1690
  %1692 = vset.pattern.permute.xlu0 0
  %1693 = vperm.xlu0 %1692, %v1470
  %v1694 = vpop.permute.xlu0 %1693
  %1695 = vset.pattern.permute.xlu0 0
  %1696 = vperm.xlu0 %1695, %v1471
  %v1697 = vpop.permute.xlu0 %1696
  %1698 = vset.pattern.permute.xlu0 0
  %1699 = vperm.xlu0 %1698, %v1472
  %v1700 = vpop.permute.xlu0 %1699
  %1701 = vset.pattern.permute.xlu0 0
  %1702 = vperm.xlu0 %1701, %v1473
  %v1703 = vpop.permute.xlu0 %1702
  %1704 = vset.pattern.permute.xlu0 0
  %1705 = vperm.xlu0 %1704, %v1474
  %v1706 = vpop.permute.xlu0 %1705
  %1707 = vset.pattern.permute.xlu0 0
  %1708 = vperm.xlu0 %1707, %v1475
  %v1709 = vpop.permute.xlu0 %1708
  %1710 = vset.pattern.permute.xlu0 0
  %1711 = vperm.xlu0 %1710, %v1476
  %v1712 = vpop.permute.xlu0 %1711
  %1713 = vset.pattern.permute.xlu0 0
  %1714 = vperm.xlu0 %1713, %v1477
  %v1715 = vpop.permute.xlu0 %1714
  %1716 = vset.pattern.permute.xlu0 0
  %1717 = vperm.xlu0 %1716, %v1478
  %v1718 = vpop.permute.xlu0 %1717
  %1719 = vset.pattern.permute.xlu0 0
  %1720 = vperm.xlu0 %1719, %v1479
  %v1721 = vpop.permute.xlu0 %1720
  %1722 = vset.pattern.permute.xlu0 0
  %1723 = vperm.xlu0 %1722, %v1480
  %v1724 = vpop.permute.xlu0 %1723
  %1725 = vset.pattern.permute.xlu0 0
  %1726 = vperm.xlu0 %1725, %v1481
  %v1727 = vpop.permute.xlu0 %1726
  %1728 = vset.pattern.permute.xlu0 0
  %1729 = vperm.xlu0 %1728, %v1482
  %v1730 = vpop.permute.xlu0 %1729
  %1731 = vset.pattern.permute.xlu0 0
  %1732 = vperm.xlu0 %1731, %v1483
  %v1733 = vpop.permute.xlu0 %1732
  %1734 = vset.pattern.permute.xlu0 0
  %1735 = vperm.xlu0 %1734, %v1484
  %v1736 = vpop.permute.xlu0 %1735
  %1737 = vset.pattern.permute.xlu0 0
  %1738 = vperm.xlu0 %1737, %v1485
  %v1739 = vpop.permute.xlu0 %1738
  %1740 = vset.pattern.permute.xlu0 0
  %1741 = vperm.xlu0 %1740, %v1486
  %v1742 = vpop.permute.xlu0 %1741
  %1743 = vset.pattern.permute.xlu0 0
  %1744 = vperm.xlu0 %1743, %v1487
  %v1745 = vpop.permute.xlu0 %1744
  %1746 = vset.pattern.permute.xlu0 0
  %1747 = vperm.xlu0 %1746, %v1488
  %v1748 = vpop.permute.xlu0 %1747
  %1749 = vset.pattern.permute.xlu0 0
  %1750 = vperm.xlu0 %1749, %v1489
  %v1751 = vpop.permute.xlu0 %1750
  %1752 = vset.pattern.permute.xlu0 0
  %1753 = vperm.xlu0 %1752, %v1490
  %v1754 = vpop.permute.xlu0 %1753
  %1755 = vset.pattern.permute.xlu0 0
  %1756 = vperm.xlu0 %1755, %v1491
  %v1757 = vpop.permute.xlu0 %1756
  %1758 = vset.pattern.permute.xlu0 0
  %1759 = vperm.xlu0 %1758, %v1492
  %v1760 = vpop.permute.xlu0 %1759
  %1761 = vset.pattern.permute.xlu0 0
  %1762 = vperm.xlu0 %1761, %v1493
  %v1763 = vpop.permute.xlu0 %1762
  %1764 = vset.pattern.permute.xlu0 0
  %1765 = vperm.xlu0 %1764, %v1494
  %v1766 = vpop.permute.xlu0 %1765
  %1767 = vset.pattern.permute.xlu0 0
  %1768 = vperm.xlu0 %1767, %v1495
  %v1769 = vpop.permute.xlu0 %1768
  %1770 = vset.pattern.permute.xlu0 0
  %1771 = vperm.xlu0 %1770, %v1496
  %v1772 = vpop.permute.xlu0 %1771
  %1773 = vset.pattern.permute.xlu0 0
  %1774 = vperm.xlu0 %1773, %v1497
  %v1775 = vpop.permute.xlu0 %1774
  %1776 = vset.pattern.permute.xlu0 0
  %1777 = vperm.xlu0 %1776, %v1498
  %v1778 = vpop.permute.xlu0 %1777
  %1779 = vset.pattern.permute.xlu0 0
  %1780 = vperm.xlu0 %1779, %v1499
  %v1781 = vpop.permute.xlu0 %1780
  %1782 = vset.pattern.permute.xlu0 0
  %1783 = vperm.xlu0 %1782, %v1500
  %v1784 = vpop.permute.xlu0 %1783
  %1785 = vset.pattern.permute.xlu0 0
  %1786 = vperm.xlu0 %1785, %v1501
  %v1787 = vpop.permute.xlu0 %1786
  %1788 = vset.pattern.permute.xlu0 0
  %1789 = vperm.xlu0 %1788, %v1502
  %v1790 = vpop.permute.xlu0 %1789
  %1791 = vset.pattern.permute.xlu0 0
  %1792 = vperm.xlu0 %1791, %v1503
  %v1793 = vpop.permute.xlu0 %1792
  %1794 = vset.pattern.permute.xlu0 0
  %1795 = vperm.xlu0 %1794, %v1504
  %v1796 = vpop.permute.xlu0 %1795
  %1797 = vset.pattern.permute.xlu0 0
  %1798 = vperm.xlu0 %1797, %v1505
  %v1799 = vpop.permute.xlu0 %1798
  %1800 = vset.pattern.permute.xlu0 0
  %1801 = vperm.xlu0 %1800, %v1506
  %v1802 = vpop.permute.xlu0 %1801
  %1803 = vset.pattern.permute.xlu0 0
  %1804 = vperm.xlu0 %1803, %v1507
  %v1805 = vpop.permute.xlu0 %1804
  %1806 = vset.pattern.permute.xlu0 0
  %1807 = vperm.xlu0 %1806, %v1508
  %v1808 = vpop.permute.xlu0 %1807
  %1809 = vset.pattern.permute.xlu0 0
  %1810 = vperm.xlu0 %1809, %v1509
  %v1811 = vpop.permute.xlu0 %1810
  %1812 = vset.pattern.permute.xlu0 0
  %1813 = vperm.xlu0 %1812, %v1510
  %v1814 = vpop.permute.xlu0 %1813
  %1815 = vset.pattern.permute.xlu0 0
  %1816 = vperm.xlu0 %1815, %v1511
  %v1817 = vpop.permute.xlu0 %1816
  %1818 = vset.pattern.permute.xlu0 0
  %1819 = vperm.xlu0 %1818, %v1512
  %v1820 = vpop.permute.xlu0 %1819
  %1821 = vset.pattern.permute.xlu0 0
  %1822 = vperm.xlu0 %1821, %v1513
  %v1823 = vpop.permute.xlu0 %1822
  %1824 = vset.pattern.permute.xlu0 0
  %1825 = vperm.xlu0 %1824, %v1514
  %v1826 = vpop.permute.xlu0 %1825
  %1827 = vset.pattern.permute.xlu0 0
  %1828 = vperm.xlu0 %1827, %v1515
  %v1829 = vpop.permute.xlu0 %1828
  %1830 = vset.pattern.permute.xlu0 0
  %1831 = vperm.xlu0 %1830, %v1516
  %v1832 = vpop.permute.xlu0 %1831
  %1833 = vset.pattern.permute.xlu0 0
  %1834 = vperm.xlu0 %1833, %v1517
  %v1835 = vpop.permute.xlu0 %1834
  %1836 = vset.pattern.permute.xlu0 0
  %1837 = vperm.xlu0 %1836, %v1518
  %v1838 = vpop.permute.xlu0 %1837
  %1839 = vset.pattern.permute.xlu0 0
  %1840 = vperm.xlu0 %1839, %v1519
  %v1841 = vpop.permute.xlu0 %1840
  %1842 = vset.pattern.permute.xlu0 0
  %1843 = vperm.xlu0 %1842, %v1520
  %v1844 = vpop.permute.xlu0 %1843
  %1845 = vset.pattern.permute.xlu0 0
  %1846 = vperm.xlu0 %1845, %v1521
  %v1847 = vpop.permute.xlu0 %1846
  %1848 = vset.pattern.permute.xlu0 0
  %1849 = vperm.xlu0 %1848, %v1522
  %v1850 = vpop.permute.xlu0 %1849
  %1851 = vset.pattern.permute.xlu0 0
  %1852 = vperm.xlu0 %1851, %v1523
  %v1853 = vpop.permute.xlu0 %1852
  %1854 = vset.pattern.permute.xlu0 0
  %1855 = vperm.xlu0 %1854, %v1524
  %v1856 = vpop.permute.xlu0 %1855
  %1857 = vset.pattern.permute.xlu0 0
  %1858 = vperm.xlu0 %1857, %v1525
  %v1859 = vpop.permute.xlu0 %1858
  %1860 = vset.pattern.permute.xlu0 0
  %1861 = vperm.xlu0 %1860, %v1526
  %v1862 = vpop.permute.xlu0 %1861
  %1863 = vset.pattern.permute.xlu0 0
  %1864 = vperm.xlu0 %1863, %v1527
  %v1865 = vpop.permute.xlu0 %1864
  %1866 = vset.pattern.permute.xlu0 0
  %1867 = vperm.xlu0 %1866, %v1528
  %v1868 = vpop.permute.xlu0 %1867
  %1869 = vset.pattern.permute.xlu0 0
  %1870 = vperm.xlu0 %1869, %v1529
  %v1871 = vpop.permute.xlu0 %1870
  %1872 = vset.pattern.permute.xlu0 0
  %1873 = vperm.xlu0 %1872, %v1530
  %v1874 = vpop.permute.xlu0 %1873
  %1875 = vset.pattern.permute.xlu0 0
  %1876 = vperm.xlu0 %1875, %v1531
  %v1877 = vpop.permute.xlu0 %1876
  %1878 = vset.pattern.permute.xlu0 0
  %1879 = vperm.xlu0 %1878, %v1532
  %v1880 = vpop.permute.xlu0 %1879
  %1881 = vset.pattern.permute.xlu0 0
  %1882 = vperm.xlu0 %1881, %v1533
  %v1883 = vpop.permute.xlu0 %1882
  %1884 = vset.pattern.permute.xlu0 0
  %1885 = vperm.xlu0 %1884, %v1534
  %v1886 = vpop.permute.xlu0 %1885
  %1887 = vset.pattern.permute.xlu0 0
  %1888 = vperm.xlu0 %1887, %v1535
  %v1889 = vpop.permute.xlu0 %1888
  %1890 = vset.pattern.permute.xlu0 0
  %1891 = vperm.xlu0 %1890, %v1536
  %v1892 = vpop.permute.xlu0 %1891
  %1893 = vset.pattern.permute.xlu0 0
  %1894 = vperm.xlu0 %1893, %v1537
  %v1895 = vpop.permute.xlu0 %1894
  %1896 = vset.pattern.permute.xlu0 0
  %1897 = vperm.xlu0 %1896, %v1538
  %v1898 = vpop.permute.xlu0 %1897
  %1899 = vset.pattern.permute.xlu0 0
  %1900 = vperm.xlu0 %1899, %v1539
  %v1901 = vpop.permute.xlu0 %1900
  %1902 = vset.pattern.permute.xlu0 0
  %1903 = vperm.xlu0 %1902, %v1540
  %v1904 = vpop.permute.xlu0 %1903
  %1905 = vset.pattern.permute.xlu0 0
  %1906 = vperm.xlu0 %1905, %v1541
  %v1907 = vpop.permute.xlu0 %1906
  %1908 = vset.pattern.permute.xlu0 0
  %1909 = vperm.xlu0 %1908, %v1542
  %v1910 = vpop.permute.xlu0 %1909
  %1911 = vset.pattern.permute.xlu0 0
  %1912 = vperm.xlu0 %1911, %v1543
  %v1913 = vpop.permute.xlu0 %1912
  %1914 = vset.pattern.permute.xlu0 0
  %1915 = vperm.xlu0 %1914, %v1544
  %v1916 = vpop.permute.xlu0 %1915
  %1917 = vset.pattern.permute.xlu0 0
  %1918 = vperm.xlu0 %1917, %v1545
  %v1919 = vpop.permute.xlu0 %1918
  %1920 = vset.pattern.permute.xlu0 0
  %1921 = vperm.xlu0 %1920, %v1546
  %v1922 = vpop.permute.xlu0 %1921
  %1923 = vset.pattern.permute.xlu0 0
  %1924 = vperm.xlu0 %1923, %v1547
  %v1925 = vpop.permute.xlu0 %1924
  %1926 = vset.pattern.permute.xlu0 0
  %1927 = vperm.xlu0 %1926, %v1548
  %v1928 = vpop.permute.xlu0 %1927
  %1929 = vset.pattern.permute.xlu0 0
  %1930 = vperm.xlu0 %1929, %v1549
  %v1931 = vpop.permute.xlu0 %1930
  %1932 = vset.pattern.permute.xlu0 0
  %1933 = vperm.xlu0 %1932, %v1550
  %v1934 = vpop.permute.xlu0 %1933
  %vm1935 = vcmp.eq.s32.totalorder %v1553, 1
  %vm1936 = vcmp.eq.s32.totalorder %v1556, 1
  %vm1937 = vcmp.eq.s32.totalorder %v1559, 1
  %vm1938 = vcmp.eq.s32.totalorder %v1562, 1
  %vm1939 = vcmp.eq.s32.totalorder %v1565, 1
  %vm1940 = vcmp.eq.s32.totalorder %v1568, 1
  %vm1941 = vcmp.eq.s32.totalorder %v1571, 1
  %vm1942 = vcmp.eq.s32.totalorder %v1574, 1
  %vm1943 = vcmp.eq.s32.totalorder %v1577, 1
  %vm1944 = vcmp.eq.s32.totalorder %v1580, 1
  %vm1945 = vcmp.eq.s32.totalorder %v1583, 1
  %vm1946 = vcmp.eq.s32.totalorder %v1586, 1
  %vm1947 = vcmp.eq.s32.totalorder %v1589, 1
  %vm1948 = vcmp.eq.s32.totalorder %v1592, 1
  %vm1949 = vcmp.eq.s32.totalorder %v1595, 1
  %vm1950 = vcmp.eq.s32.totalorder %v1598, 1
  %vm1951 = vcmp.eq.s32.totalorder %v1601, 1
  %vm1952 = vcmp.eq.s32.totalorder %v1604, 1
  %vm1953 = vcmp.eq.s32.totalorder %v1607, 1
  %vm1954 = vcmp.eq.s32.totalorder %v1610, 1
  %vm1955 = vcmp.eq.s32.totalorder %v1613, 1
  %vm1956 = vcmp.eq.s32.totalorder %v1616, 1
  %vm1957 = vcmp.eq.s32.totalorder %v1619, 1
  %vm1958 = vcmp.eq.s32.totalorder %v1622, 1
  %vm1959 = vcmp.eq.s32.totalorder %v1625, 1
  %vm1960 = vcmp.eq.s32.totalorder %v1628, 1
  %vm1961 = vcmp.eq.s32.totalorder %v1631, 1
  %vm1962 = vcmp.eq.s32.totalorder %v1634, 1
  %vm1963 = vcmp.eq.s32.totalorder %v1637, 1
  %vm1964 = vcmp.eq.s32.totalorder %v1640, 1
  %vm1965 = vcmp.eq.s32.totalorder %v1643, 1
  %vm1966 = vcmp.eq.s32.totalorder %v1646, 1
  %vm1967 = vcmp.eq.s32.totalorder %v1649, 1
  %vm1968 = vcmp.eq.s32.totalorder %v1652, 1
  %vm1969 = vcmp.eq.s32.totalorder %v1655, 1
  %vm1970 = vcmp.eq.s32.totalorder %v1658, 1
  %vm1971 = vcmp.eq.s32.totalorder %v1661, 1
  %vm1972 = vcmp.eq.s32.totalorder %v1664, 1
  %vm1973 = vcmp.eq.s32.totalorder %v1667, 1
  %vm1974 = vcmp.eq.s32.totalorder %v1670, 1
  %vm1975 = vcmp.eq.s32.totalorder %v1673, 1
  %vm1976 = vcmp.eq.s32.totalorder %v1676, 1
  %vm1977 = vcmp.eq.s32.totalorder %v1679, 1
  %vm1978 = vcmp.eq.s32.totalorder %v1682, 1
  %vm1979 = vcmp.eq.s32.totalorder %v1685, 1
  %vm1980 = vcmp.eq.s32.totalorder %v1688, 1
  %vm1981 = vcmp.eq.s32.totalorder %v1691, 1
  %vm1982 = vcmp.eq.s32.totalorder %v1694, 1
  %vm1983 = vcmp.eq.s32.totalorder %v1697, 1
  %vm1984 = vcmp.eq.s32.totalorder %v1700, 1
  %vm1985 = vcmp.eq.s32.totalorder %v1703, 1
  %vm1986 = vcmp.eq.s32.totalorder %v1706, 1
  %vm1987 = vcmp.eq.s32.totalorder %v1709, 1
  %vm1988 = vcmp.eq.s32.totalorder %v1712, 1
  %vm1989 = vcmp.eq.s32.totalorder %v1715, 1
  %vm1990 = vcmp.eq.s32.totalorder %v1718, 1
  %vm1991 = vcmp.eq.s32.totalorder %v1721, 1
  %vm1992 = vcmp.eq.s32.totalorder %v1724, 1
  %vm1993 = vcmp.eq.s32.totalorder %v1727, 1
  %vm1994 = vcmp.eq.s32.totalorder %v1730, 1
  %vm1995 = vcmp.eq.s32.totalorder %v1733, 1
  %vm1996 = vcmp.eq.s32.totalorder %v1736, 1
  %vm1997 = vcmp.eq.s32.totalorder %v1739, 1
  %vm1998 = vcmp.eq.s32.totalorder %v1742, 1
  %vm1999 = vcmp.eq.s32.totalorder %v1745, 1
  %vm2000 = vcmp.eq.s32.totalorder %v1748, 1
  %vm2001 = vcmp.eq.s32.totalorder %v1751, 1
  %vm2002 = vcmp.eq.s32.totalorder %v1754, 1
  %vm2003 = vcmp.eq.s32.totalorder %v1757, 1
  %vm2004 = vcmp.eq.s32.totalorder %v1760, 1
  %vm2005 = vcmp.eq.s32.totalorder %v1763, 1
  %vm2006 = vcmp.eq.s32.totalorder %v1766, 1
  %vm2007 = vcmp.eq.s32.totalorder %v1769, 1
  %vm2008 = vcmp.eq.s32.totalorder %v1772, 1
  %vm2009 = vcmp.eq.s32.totalorder %v1775, 1
  %vm2010 = vcmp.eq.s32.totalorder %v1778, 1
  %vm2011 = vcmp.eq.s32.totalorder %v1781, 1
  %vm2012 = vcmp.eq.s32.totalorder %v1784, 1
  %vm2013 = vcmp.eq.s32.totalorder %v1787, 1
  %vm2014 = vcmp.eq.s32.totalorder %v1790, 1
  %vm2015 = vcmp.eq.s32.totalorder %v1793, 1
  %vm2016 = vcmp.eq.s32.totalorder %v1796, 1
  %vm2017 = vcmp.eq.s32.totalorder %v1799, 1
  %vm2018 = vcmp.eq.s32.totalorder %v1802, 1
  %vm2019 = vcmp.eq.s32.totalorder %v1805, 1
  %vm2020 = vcmp.eq.s32.totalorder %v1808, 1
  %vm2021 = vcmp.eq.s32.totalorder %v1811, 1
  %vm2022 = vcmp.eq.s32.totalorder %v1814, 1
  %vm2023 = vcmp.eq.s32.totalorder %v1817, 1
  %vm2024 = vcmp.eq.s32.totalorder %v1820, 1
  %vm2025 = vcmp.eq.s32.totalorder %v1823, 1
  %vm2026 = vcmp.eq.s32.totalorder %v1826, 1
  %vm2027 = vcmp.eq.s32.totalorder %v1829, 1
  %vm2028 = vcmp.eq.s32.totalorder %v1832, 1
  %vm2029 = vcmp.eq.s32.totalorder %v1835, 1
  %vm2030 = vcmp.eq.s32.totalorder %v1838, 1
  %vm2031 = vcmp.eq.s32.totalorder %v1841, 1
  %vm2032 = vcmp.eq.s32.totalorder %v1844, 1
  %vm2033 = vcmp.eq.s32.totalorder %v1847, 1
  %vm2034 = vcmp.eq.s32.totalorder %v1850, 1
  %vm2035 = vcmp.eq.s32.totalorder %v1853, 1
  %vm2036 = vcmp.eq.s32.totalorder %v1856, 1
  %vm2037 = vcmp.eq.s32.totalorder %v1859, 1
  %vm2038 = vcmp.eq.s32.totalorder %v1862, 1
  %vm2039 = vcmp.eq.s32.totalorder %v1865, 1
  %vm2040 = vcmp.eq.s32.totalorder %v1868, 1
  %vm2041 = vcmp.eq.s32.totalorder %v1871, 1
  %vm2042 = vcmp.eq.s32.totalorder %v1874, 1
  %vm2043 = vcmp.eq.s32.totalorder %v1877, 1
  %vm2044 = vcmp.eq.s32.totalorder %v1880, 1
  %vm2045 = vcmp.eq.s32.totalorder %v1883, 1
  %vm2046 = vcmp.eq.s32.totalorder %v1886, 1
  %vm2047 = vcmp.eq.s32.totalorder %v1889, 1
  %vm2048 = vcmp.eq.s32.totalorder %v1892, 1
  %vm2049 = vcmp.eq.s32.totalorder %v1895, 1
  %vm2050 = vcmp.eq.s32.totalorder %v1898, 1
  %vm2051 = vcmp.eq.s32.totalorder %v1901, 1
  %vm2052 = vcmp.eq.s32.totalorder %v1904, 1
  %vm2053 = vcmp.eq.s32.totalorder %v1907, 1
  %vm2054 = vcmp.eq.s32.totalorder %v1910, 1
  %vm2055 = vcmp.eq.s32.totalorder %v1913, 1
  %vm2056 = vcmp.eq.s32.totalorder %v1916, 1
  %vm2057 = vcmp.eq.s32.totalorder %v1919, 1
  %vm2058 = vcmp.eq.s32.totalorder %v1922, 1
  %vm2059 = vcmp.eq.s32.totalorder %v1925, 1
  %vm2060 = vcmp.eq.s32.totalorder %v1928, 1
  %vm2061 = vcmp.eq.s32.totalorder %v1931, 1
  %vm2062 = vcmp.eq.s32.totalorder %v1934, 1
  %vm2063 = vmpackc.low %vm1935, %vm1935
  %vm2064 = vmpackc.low %vm1936, %vm1936
  %vm2065 = vmpackc.low %vm1937, %vm1937
  %vm2066 = vmpackc.low %vm1938, %vm1938
  %vm2067 = vmpackc.low %vm1939, %vm1939
  %vm2068 = vmpackc.low %vm1940, %vm1940
  %vm2069 = vmpackc.low %vm1941, %vm1941
  %vm2070 = vmpackc.low %vm1942, %vm1942
  %vm2071 = vmpackc.low %vm1943, %vm1943
  %vm2072 = vmpackc.low %vm1944, %vm1944
  %vm2073 = vmpackc.low %vm1945, %vm1945
  %vm2074 = vmpackc.low %vm1946, %vm1946
  %vm2075 = vmpackc.low %vm1947, %vm1947
  %vm2076 = vmpackc.low %vm1948, %vm1948
  %vm2077 = vmpackc.low %vm1949, %vm1949
  %vm2078 = vmpackc.low %vm1950, %vm1950
  %vm2079 = vmpackc.low %vm1951, %vm1951
  %vm2080 = vmpackc.low %vm1952, %vm1952
  %vm2081 = vmpackc.low %vm1953, %vm1953
  %vm2082 = vmpackc.low %vm1954, %vm1954
  %vm2083 = vmpackc.low %vm1955, %vm1955
  %vm2084 = vmpackc.low %vm1956, %vm1956
  %vm2085 = vmpackc.low %vm1957, %vm1957
  %vm2086 = vmpackc.low %vm1958, %vm1958
  %vm2087 = vmpackc.low %vm1959, %vm1959
  %vm2088 = vmpackc.low %vm1960, %vm1960
  %vm2089 = vmpackc.low %vm1961, %vm1961
  %vm2090 = vmpackc.low %vm1962, %vm1962
  %vm2091 = vmpackc.low %vm1963, %vm1963
  %vm2092 = vmpackc.low %vm1964, %vm1964
  %vm2093 = vmpackc.low %vm1965, %vm1965
  %vm2094 = vmpackc.low %vm1966, %vm1966
  %vm2095 = vmpackc.low %vm1967, %vm1967
  %vm2096 = vmpackc.low %vm1968, %vm1968
  %vm2097 = vmpackc.low %vm1969, %vm1969
  %vm2098 = vmpackc.low %vm1970, %vm1970
  %vm2099 = vmpackc.low %vm1971, %vm1971
  %vm2100 = vmpackc.low %vm1972, %vm1972
  %vm2101 = vmpackc.low %vm1973, %vm1973
  %vm2102 = vmpackc.low %vm1974, %vm1974
  %vm2103 = vmpackc.low %vm1975, %vm1975
  %vm2104 = vmpackc.low %vm1976, %vm1976
  %vm2105 = vmpackc.low %vm1977, %vm1977
  %vm2106 = vmpackc.low %vm1978, %vm1978
  %vm2107 = vmpackc.low %vm1979, %vm1979
  %vm2108 = vmpackc.low %vm1980, %vm1980
  %vm2109 = vmpackc.low %vm1981, %vm1981
  %vm2110 = vmpackc.low %vm1982, %vm1982
  %vm2111 = vmpackc.low %vm1983, %vm1983
  %vm2112 = vmpackc.low %vm1984, %vm1984
  %vm2113 = vmpackc.low %vm1985, %vm1985
  %vm2114 = vmpackc.low %vm1986, %vm1986
  %vm2115 = vmpackc.low %vm1987, %vm1987
  %vm2116 = vmpackc.low %vm1988, %vm1988
  %vm2117 = vmpackc.low %vm1989, %vm1989
  %vm2118 = vmpackc.low %vm1990, %vm1990
  %vm2119 = vmpackc.low %vm1991, %vm1991
  %vm2120 = vmpackc.low %vm1992, %vm1992
  %vm2121 = vmpackc.low %vm1993, %vm1993
  %vm2122 = vmpackc.low %vm1994, %vm1994
  %vm2123 = vmpackc.low %vm1995, %vm1995
  %vm2124 = vmpackc.low %vm1996, %vm1996
  %vm2125 = vmpackc.low %vm1997, %vm1997
  %vm2126 = vmpackc.low %vm1998, %vm1998
  %vm2127 = vmpackc.low %vm1999, %vm1999
  %vm2128 = vmpackc.low %vm2000, %vm2000
  %vm2129 = vmpackc.low %vm2001, %vm2001
  %vm2130 = vmpackc.low %vm2002, %vm2002
  %vm2131 = vmpackc.low %vm2003, %vm2003
  %vm2132 = vmpackc.low %vm2004, %vm2004
  %vm2133 = vmpackc.low %vm2005, %vm2005
  %vm2134 = vmpackc.low %vm2006, %vm2006
  %vm2135 = vmpackc.low %vm2007, %vm2007
  %vm2136 = vmpackc.low %vm2008, %vm2008
  %vm2137 = vmpackc.low %vm2009, %vm2009
  %vm2138 = vmpackc.low %vm2010, %vm2010
  %vm2139 = vmpackc.low %vm2011, %vm2011
  %vm2140 = vmpackc.low %vm2012, %vm2012
  %vm2141 = vmpackc.low %vm2013, %vm2013
  %vm2142 = vmpackc.low %vm2014, %vm2014
  %vm2143 = vmpackc.low %vm2015, %vm2015
  %vm2144 = vmpackc.low %vm2016, %vm2016
  %vm2145 = vmpackc.low %vm2017, %vm2017
  %vm2146 = vmpackc.low %vm2018, %vm2018
  %vm2147 = vmpackc.low %vm2019, %vm2019
  %vm2148 = vmpackc.low %vm2020, %vm2020
  %vm2149 = vmpackc.low %vm2021, %vm2021
  %vm2150 = vmpackc.low %vm2022, %vm2022
  %vm2151 = vmpackc.low %vm2023, %vm2023
  %vm2152 = vmpackc.low %vm2024, %vm2024
  %vm2153 = vmpackc.low %vm2025, %vm2025
  %vm2154 = vmpackc.low %vm2026, %vm2026
  %vm2155 = vmpackc.low %vm2027, %vm2027
  %vm2156 = vmpackc.low %vm2028, %vm2028
  %vm2157 = vmpackc.low %vm2029, %vm2029
  %vm2158 = vmpackc.low %vm2030, %vm2030
  %vm2159 = vmpackc.low %vm2031, %vm2031
  %vm2160 = vmpackc.low %vm2032, %vm2032
  %vm2161 = vmpackc.low %vm2033, %vm2033
  %vm2162 = vmpackc.low %vm2034, %vm2034
  %vm2163 = vmpackc.low %vm2035, %vm2035
  %vm2164 = vmpackc.low %vm2036, %vm2036
  %vm2165 = vmpackc.low %vm2037, %vm2037
  %vm2166 = vmpackc.low %vm2038, %vm2038
  %vm2167 = vmpackc.low %vm2039, %vm2039
  %vm2168 = vmpackc.low %vm2040, %vm2040
  %vm2169 = vmpackc.low %vm2041, %vm2041
  %vm2170 = vmpackc.low %vm2042, %vm2042
  %vm2171 = vmpackc.low %vm2043, %vm2043
  %vm2172 = vmpackc.low %vm2044, %vm2044
  %vm2173 = vmpackc.low %vm2045, %vm2045
  %vm2174 = vmpackc.low %vm2046, %vm2046
  %vm2175 = vmpackc.low %vm2047, %vm2047
  %vm2176 = vmpackc.low %vm2048, %vm2048
  %vm2177 = vmpackc.low %vm2049, %vm2049
  %vm2178 = vmpackc.low %vm2050, %vm2050
  %vm2179 = vmpackc.low %vm2051, %vm2051
  %vm2180 = vmpackc.low %vm2052, %vm2052
  %vm2181 = vmpackc.low %vm2053, %vm2053
  %vm2182 = vmpackc.low %vm2054, %vm2054
  %vm2183 = vmpackc.low %vm2055, %vm2055
  %vm2184 = vmpackc.low %vm2056, %vm2056
  %vm2185 = vmpackc.low %vm2057, %vm2057
  %vm2186 = vmpackc.low %vm2058, %vm2058
  %vm2187 = vmpackc.low %vm2059, %vm2059
  %vm2188 = vmpackc.low %vm2060, %vm2060
  %vm2189 = vmpackc.low %vm2061, %vm2061
  %vm2190 = vmpackc.low %vm2062, %vm2062
  %v2191 = vsel %vm2063, %v15, 0
  %v2192 = vsel %vm2064, %v16, 0
  %v2193 = vsel %vm2065, %v17, 0
  %v2194 = vsel %vm2066, %v18, 0
  %v2195 = vsel %vm2067, %v19, 0
  %v2196 = vsel %vm2068, %v20, 0
  %v2197 = vsel %vm2069, %v21, 0
  %v2198 = vsel %vm2070, %v22, 0
  %v2199 = vsel %vm2071, %v23, 0
  %v2200 = vsel %vm2072, %v24, 0
  %v2201 = vsel %vm2073, %v25, 0
  %v2202 = vsel %vm2074, %v26, 0
  %v2203 = vsel %vm2075, %v27, 0
  %v2204 = vsel %vm2076, %v28, 0
  %v2205 = vsel %vm2077, %v29, 0
  %v2206 = vsel %vm2078, %v30, 0
  %v2207 = vsel %vm2079, %v31, 0
  %v2208 = vsel %vm2080, %v32, 0
  %v2209 = vsel %vm2081, %v33, 0
  %v2210 = vsel %vm2082, %v34, 0
  %v2211 = vsel %vm2083, %v35, 0
  %v2212 = vsel %vm2084, %v36, 0
  %v2213 = vsel %vm2085, %v37, 0
  %v2214 = vsel %vm2086, %v38, 0
  %v2215 = vsel %vm2087, %v39, 0
  %v2216 = vsel %vm2088, %v40, 0
  %v2217 = vsel %vm2089, %v41, 0
  %v2218 = vsel %vm2090, %v42, 0
  %v2219 = vsel %vm2091, %v43, 0
  %v2220 = vsel %vm2092, %v44, 0
  %v2221 = vsel %vm2093, %v45, 0
  %v2222 = vsel %vm2094, %v46, 0
  %v2223 = vsel %vm2095, %v47, 0
  %v2224 = vsel %vm2096, %v48, 0
  %v2225 = vsel %vm2097, %v49, 0
  %v2226 = vsel %vm2098, %v50, 0
  %v2227 = vsel %vm2099, %v51, 0
  %v2228 = vsel %vm2100, %v52, 0
  %v2229 = vsel %vm2101, %v53, 0
  %v2230 = vsel %vm2102, %v54, 0
  %v2231 = vsel %vm2103, %v55, 0
  %v2232 = vsel %vm2104, %v56, 0
  %v2233 = vsel %vm2105, %v57, 0
  %v2234 = vsel %vm2106, %v58, 0
  %v2235 = vsel %vm2107, %v59, 0
  %v2236 = vsel %vm2108, %v60, 0
  %v2237 = vsel %vm2109, %v61, 0
  %v2238 = vsel %vm2110, %v62, 0
  %v2239 = vsel %vm2111, %v63, 0
  %v2240 = vsel %vm2112, %v64, 0
  %v2241 = vsel %vm2113, %v65, 0
  %v2242 = vsel %vm2114, %v66, 0
  %v2243 = vsel %vm2115, %v67, 0
  %v2244 = vsel %vm2116, %v68, 0
  %v2245 = vsel %vm2117, %v69, 0
  %v2246 = vsel %vm2118, %v70, 0
  %v2247 = vsel %vm2119, %v71, 0
  %v2248 = vsel %vm2120, %v72, 0
  %v2249 = vsel %vm2121, %v73, 0
  %v2250 = vsel %vm2122, %v74, 0
  %v2251 = vsel %vm2123, %v75, 0
  %v2252 = vsel %vm2124, %v76, 0
  %v2253 = vsel %vm2125, %v77, 0
  %v2254 = vsel %vm2126, %v78, 0
  %v2255 = vsel %vm2127, %v79, 0
  %v2256 = vsel %vm2128, %v80, 0
  %v2257 = vsel %vm2129, %v81, 0
  %v2258 = vsel %vm2130, %v82, 0
  %v2259 = vsel %vm2131, %v83, 0
  %v2260 = vsel %vm2132, %v84, 0
  %v2261 = vsel %vm2133, %v85, 0
  %v2262 = vsel %vm2134, %v86, 0
  %v2263 = vsel %vm2135, %v87, 0
  %v2264 = vsel %vm2136, %v88, 0
  %v2265 = vsel %vm2137, %v89, 0
  %v2266 = vsel %vm2138, %v90, 0
  %v2267 = vsel %vm2139, %v91, 0
  %v2268 = vsel %vm2140, %v92, 0
  %v2269 = vsel %vm2141, %v93, 0
  %v2270 = vsel %vm2142, %v94, 0
  %v2271 = vsel %vm2143, %v95, 0
  %v2272 = vsel %vm2144, %v96, 0
  %v2273 = vsel %vm2145, %v97, 0
  %v2274 = vsel %vm2146, %v98, 0
  %v2275 = vsel %vm2147, %v99, 0
  %v2276 = vsel %vm2148, %v100, 0
  %v2277 = vsel %vm2149, %v101, 0
  %v2278 = vsel %vm2150, %v102, 0
  %v2279 = vsel %vm2151, %v103, 0
  %v2280 = vsel %vm2152, %v104, 0
  %v2281 = vsel %vm2153, %v105, 0
  %v2282 = vsel %vm2154, %v106, 0
  %v2283 = vsel %vm2155, %v107, 0
  %v2284 = vsel %vm2156, %v108, 0
  %v2285 = vsel %vm2157, %v109, 0
  %v2286 = vsel %vm2158, %v110, 0
  %v2287 = vsel %vm2159, %v111, 0
  %v2288 = vsel %vm2160, %v112, 0
  %v2289 = vsel %vm2161, %v113, 0
  %v2290 = vsel %vm2162, %v114, 0
  %v2291 = vsel %vm2163, %v115, 0
  %v2292 = vsel %vm2164, %v116, 0
  %v2293 = vsel %vm2165, %v117, 0
  %v2294 = vsel %vm2166, %v118, 0
  %v2295 = vsel %vm2167, %v119, 0
  %v2296 = vsel %vm2168, %v120, 0
  %v2297 = vsel %vm2169, %v121, 0
  %v2298 = vsel %vm2170, %v122, 0
  %v2299 = vsel %vm2171, %v123, 0
  %v2300 = vsel %vm2172, %v124, 0
  %v2301 = vsel %vm2173, %v125, 0
  %v2302 = vsel %vm2174, %v126, 0
  %v2303 = vsel %vm2175, %v127, 0
  %v2304 = vsel %vm2176, %v128, 0
  %v2305 = vsel %vm2177, %v129, 0
  %v2306 = vsel %vm2178, %v130, 0
  %v2307 = vsel %vm2179, %v131, 0
  %v2308 = vsel %vm2180, %v132, 0
  %v2309 = vsel %vm2181, %v133, 0
  %v2310 = vsel %vm2182, %v134, 0
  %v2311 = vsel %vm2183, %v135, 0
  %v2312 = vsel %vm2184, %v136, 0
  %v2313 = vsel %vm2185, %v137, 0
  %v2314 = vsel %vm2186, %v138, 0
  %v2315 = vsel %vm2187, %v139, 0
  %v2316 = vsel %vm2188, %v140, 0
  %v2317 = vsel %vm2189, %v141, 0
  %v2318 = vsel %vm2190, %v142, 0
  %vm2319 = vcmp.eq.s32.totalorder %v143, 2
  %vm2320 = vcmp.eq.s32.totalorder %v144, 2
  %vm2321 = vcmp.eq.s32.totalorder %v145, 2
  %vm2322 = vcmp.eq.s32.totalorder %v146, 2
  %vm2323 = vcmp.eq.s32.totalorder %v147, 2
  %vm2324 = vcmp.eq.s32.totalorder %v148, 2
  %vm2325 = vcmp.eq.s32.totalorder %v149, 2
  %vm2326 = vcmp.eq.s32.totalorder %v150, 2
  %vm2327 = vcmp.eq.s32.totalorder %v151, 2
  %vm2328 = vcmp.eq.s32.totalorder %v152, 2
  %vm2329 = vcmp.eq.s32.totalorder %v153, 2
  %vm2330 = vcmp.eq.s32.totalorder %v154, 2
  %vm2331 = vcmp.eq.s32.totalorder %v155, 2
  %vm2332 = vcmp.eq.s32.totalorder %v156, 2
  %vm2333 = vcmp.eq.s32.totalorder %v157, 2
  %vm2334 = vcmp.eq.s32.totalorder %v158, 2
  %vm2335 = vcmp.eq.s32.totalorder %v159, 2
  %vm2336 = vcmp.eq.s32.totalorder %v160, 2
  %vm2337 = vcmp.eq.s32.totalorder %v161, 2
  %vm2338 = vcmp.eq.s32.totalorder %v162, 2
  %vm2339 = vcmp.eq.s32.totalorder %v163, 2
  %vm2340 = vcmp.eq.s32.totalorder %v164, 2
  %vm2341 = vcmp.eq.s32.totalorder %v165, 2
  %vm2342 = vcmp.eq.s32.totalorder %v166, 2
  %vm2343 = vcmp.eq.s32.totalorder %v167, 2
  %vm2344 = vcmp.eq.s32.totalorder %v168, 2
  %vm2345 = vcmp.eq.s32.totalorder %v169, 2
  %vm2346 = vcmp.eq.s32.totalorder %v170, 2
  %vm2347 = vcmp.eq.s32.totalorder %v171, 2
  %vm2348 = vcmp.eq.s32.totalorder %v172, 2
  %vm2349 = vcmp.eq.s32.totalorder %v173, 2
  %vm2350 = vcmp.eq.s32.totalorder %v174, 2
  %vm2351 = vcmp.eq.s32.totalorder %v175, 2
  %vm2352 = vcmp.eq.s32.totalorder %v176, 2
  %vm2353 = vcmp.eq.s32.totalorder %v177, 2
  %vm2354 = vcmp.eq.s32.totalorder %v178, 2
  %vm2355 = vcmp.eq.s32.totalorder %v179, 2
  %vm2356 = vcmp.eq.s32.totalorder %v180, 2
  %vm2357 = vcmp.eq.s32.totalorder %v181, 2
  %vm2358 = vcmp.eq.s32.totalorder %v182, 2
  %vm2359 = vcmp.eq.s32.totalorder %v183, 2
  %vm2360 = vcmp.eq.s32.totalorder %v184, 2
  %vm2361 = vcmp.eq.s32.totalorder %v185, 2
  %vm2362 = vcmp.eq.s32.totalorder %v186, 2
  %vm2363 = vcmp.eq.s32.totalorder %v187, 2
  %vm2364 = vcmp.eq.s32.totalorder %v188, 2
  %vm2365 = vcmp.eq.s32.totalorder %v189, 2
  %vm2366 = vcmp.eq.s32.totalorder %v190, 2
  %vm2367 = vcmp.eq.s32.totalorder %v191, 2
  %vm2368 = vcmp.eq.s32.totalorder %v192, 2
  %vm2369 = vcmp.eq.s32.totalorder %v193, 2
  %vm2370 = vcmp.eq.s32.totalorder %v194, 2
  %vm2371 = vcmp.eq.s32.totalorder %v195, 2
  %vm2372 = vcmp.eq.s32.totalorder %v196, 2
  %vm2373 = vcmp.eq.s32.totalorder %v197, 2
  %vm2374 = vcmp.eq.s32.totalorder %v198, 2
  %vm2375 = vcmp.eq.s32.totalorder %v199, 2
  %vm2376 = vcmp.eq.s32.totalorder %v200, 2
  %vm2377 = vcmp.eq.s32.totalorder %v201, 2
  %vm2378 = vcmp.eq.s32.totalorder %v202, 2
  %vm2379 = vcmp.eq.s32.totalorder %v203, 2
  %vm2380 = vcmp.eq.s32.totalorder %v204, 2
  %vm2381 = vcmp.eq.s32.totalorder %v205, 2
  %vm2382 = vcmp.eq.s32.totalorder %v206, 2
  %vm2383 = vcmp.eq.s32.totalorder %v207, 2
  %vm2384 = vcmp.eq.s32.totalorder %v208, 2
  %vm2385 = vcmp.eq.s32.totalorder %v209, 2
  %vm2386 = vcmp.eq.s32.totalorder %v210, 2
  %vm2387 = vcmp.eq.s32.totalorder %v211, 2
  %vm2388 = vcmp.eq.s32.totalorder %v212, 2
  %vm2389 = vcmp.eq.s32.totalorder %v213, 2
  %vm2390 = vcmp.eq.s32.totalorder %v214, 2
  %vm2391 = vcmp.eq.s32.totalorder %v215, 2
  %vm2392 = vcmp.eq.s32.totalorder %v216, 2
  %vm2393 = vcmp.eq.s32.totalorder %v217, 2
  %vm2394 = vcmp.eq.s32.totalorder %v218, 2
  %vm2395 = vcmp.eq.s32.totalorder %v219, 2
  %vm2396 = vcmp.eq.s32.totalorder %v220, 2
  %vm2397 = vcmp.eq.s32.totalorder %v221, 2
  %vm2398 = vcmp.eq.s32.totalorder %v222, 2
  %vm2399 = vcmp.eq.s32.totalorder %v223, 2
  %vm2400 = vcmp.eq.s32.totalorder %v224, 2
  %vm2401 = vcmp.eq.s32.totalorder %v225, 2
  %vm2402 = vcmp.eq.s32.totalorder %v226, 2
  %vm2403 = vcmp.eq.s32.totalorder %v227, 2
  %vm2404 = vcmp.eq.s32.totalorder %v228, 2
  %vm2405 = vcmp.eq.s32.totalorder %v229, 2
  %vm2406 = vcmp.eq.s32.totalorder %v230, 2
  %vm2407 = vcmp.eq.s32.totalorder %v231, 2
  %vm2408 = vcmp.eq.s32.totalorder %v232, 2
  %vm2409 = vcmp.eq.s32.totalorder %v233, 2
  %vm2410 = vcmp.eq.s32.totalorder %v234, 2
  %vm2411 = vcmp.eq.s32.totalorder %v235, 2
  %vm2412 = vcmp.eq.s32.totalorder %v236, 2
  %vm2413 = vcmp.eq.s32.totalorder %v237, 2
  %vm2414 = vcmp.eq.s32.totalorder %v238, 2
  %vm2415 = vcmp.eq.s32.totalorder %v239, 2
  %vm2416 = vcmp.eq.s32.totalorder %v240, 2
  %vm2417 = vcmp.eq.s32.totalorder %v241, 2
  %vm2418 = vcmp.eq.s32.totalorder %v242, 2
  %vm2419 = vcmp.eq.s32.totalorder %v243, 2
  %vm2420 = vcmp.eq.s32.totalorder %v244, 2
  %vm2421 = vcmp.eq.s32.totalorder %v245, 2
  %vm2422 = vcmp.eq.s32.totalorder %v246, 2
  %vm2423 = vcmp.eq.s32.totalorder %v247, 2
  %vm2424 = vcmp.eq.s32.totalorder %v248, 2
  %vm2425 = vcmp.eq.s32.totalorder %v249, 2
  %vm2426 = vcmp.eq.s32.totalorder %v250, 2
  %vm2427 = vcmp.eq.s32.totalorder %v251, 2
  %vm2428 = vcmp.eq.s32.totalorder %v252, 2
  %vm2429 = vcmp.eq.s32.totalorder %v253, 2
  %vm2430 = vcmp.eq.s32.totalorder %v254, 2
  %vm2431 = vcmp.eq.s32.totalorder %v255, 2
  %vm2432 = vcmp.eq.s32.totalorder %v256, 2
  %vm2433 = vcmp.eq.s32.totalorder %v257, 2
  %vm2434 = vcmp.eq.s32.totalorder %v258, 2
  %vm2435 = vcmp.eq.s32.totalorder %v259, 2
  %vm2436 = vcmp.eq.s32.totalorder %v260, 2
  %vm2437 = vcmp.eq.s32.totalorder %v261, 2
  %vm2438 = vcmp.eq.s32.totalorder %v262, 2
  %vm2439 = vcmp.eq.s32.totalorder %v263, 2
  %vm2440 = vcmp.eq.s32.totalorder %v264, 2
  %vm2441 = vcmp.eq.s32.totalorder %v265, 2
  %vm2442 = vcmp.eq.s32.totalorder %v266, 2
  %vm2443 = vcmp.eq.s32.totalorder %v267, 2
  %vm2444 = vcmp.eq.s32.totalorder %v268, 2
  %vm2445 = vcmp.eq.s32.totalorder %v269, 2
  %vm2446 = vcmp.eq.s32.totalorder %v270, 2
  %v2447 = vsel %vm2319, 1, 0
  %v2448 = vsel %vm2320, 1, 0
  %v2449 = vsel %vm2321, 1, 0
  %v2450 = vsel %vm2322, 1, 0
  %v2451 = vsel %vm2323, 1, 0
  %v2452 = vsel %vm2324, 1, 0
  %v2453 = vsel %vm2325, 1, 0
  %v2454 = vsel %vm2326, 1, 0
  %v2455 = vsel %vm2327, 1, 0
  %v2456 = vsel %vm2328, 1, 0
  %v2457 = vsel %vm2329, 1, 0
  %v2458 = vsel %vm2330, 1, 0
  %v2459 = vsel %vm2331, 1, 0
  %v2460 = vsel %vm2332, 1, 0
  %v2461 = vsel %vm2333, 1, 0
  %v2462 = vsel %vm2334, 1, 0
  %v2463 = vsel %vm2335, 1, 0
  %v2464 = vsel %vm2336, 1, 0
  %v2465 = vsel %vm2337, 1, 0
  %v2466 = vsel %vm2338, 1, 0
  %v2467 = vsel %vm2339, 1, 0
  %v2468 = vsel %vm2340, 1, 0
  %v2469 = vsel %vm2341, 1, 0
  %v2470 = vsel %vm2342, 1, 0
  %v2471 = vsel %vm2343, 1, 0
  %v2472 = vsel %vm2344, 1, 0
  %v2473 = vsel %vm2345, 1, 0
  %v2474 = vsel %vm2346, 1, 0
  %v2475 = vsel %vm2347, 1, 0
  %v2476 = vsel %vm2348, 1, 0
  %v2477 = vsel %vm2349, 1, 0
  %v2478 = vsel %vm2350, 1, 0
  %v2479 = vsel %vm2351, 1, 0
  %v2480 = vsel %vm2352, 1, 0
  %v2481 = vsel %vm2353, 1, 0
  %v2482 = vsel %vm2354, 1, 0
  %v2483 = vsel %vm2355, 1, 0
  %v2484 = vsel %vm2356, 1, 0
  %v2485 = vsel %vm2357, 1, 0
  %v2486 = vsel %vm2358, 1, 0
  %v2487 = vsel %vm2359, 1, 0
  %v2488 = vsel %vm2360, 1, 0
  %v2489 = vsel %vm2361, 1, 0
  %v2490 = vsel %vm2362, 1, 0
  %v2491 = vsel %vm2363, 1, 0
  %v2492 = vsel %vm2364, 1, 0
  %v2493 = vsel %vm2365, 1, 0
  %v2494 = vsel %vm2366, 1, 0
  %v2495 = vsel %vm2367, 1, 0
  %v2496 = vsel %vm2368, 1, 0
  %v2497 = vsel %vm2369, 1, 0
  %v2498 = vsel %vm2370, 1, 0
  %v2499 = vsel %vm2371, 1, 0
  %v2500 = vsel %vm2372, 1, 0
  %v2501 = vsel %vm2373, 1, 0
  %v2502 = vsel %vm2374, 1, 0
  %v2503 = vsel %vm2375, 1, 0
  %v2504 = vsel %vm2376, 1, 0
  %v2505 = vsel %vm2377, 1, 0
  %v2506 = vsel %vm2378, 1, 0
  %v2507 = vsel %vm2379, 1, 0
  %v2508 = vsel %vm2380, 1, 0
  %v2509 = vsel %vm2381, 1, 0
  %v2510 = vsel %vm2382, 1, 0
  %v2511 = vsel %vm2383, 1, 0
  %v2512 = vsel %vm2384, 1, 0
  %v2513 = vsel %vm2385, 1, 0
  %v2514 = vsel %vm2386, 1, 0
  %v2515 = vsel %vm2387, 1, 0
  %v2516 = vsel %vm2388, 1, 0
  %v2517 = vsel %vm2389, 1, 0
  %v2518 = vsel %vm2390, 1, 0
  %v2519 = vsel %vm2391, 1, 0
  %v2520 = vsel %vm2392, 1, 0
  %v2521 = vsel %vm2393, 1, 0
  %v2522 = vsel %vm2394, 1, 0
  %v2523 = vsel %vm2395, 1, 0
  %v2524 = vsel %vm2396, 1, 0
  %v2525 = vsel %vm2397, 1, 0
  %v2526 = vsel %vm2398, 1, 0
  %v2527 = vsel %vm2399, 1, 0
  %v2528 = vsel %vm2400, 1, 0
  %v2529 = vsel %vm2401, 1, 0
  %v2530 = vsel %vm2402, 1, 0
  %v2531 = vsel %vm2403, 1, 0
  %v2532 = vsel %vm2404, 1, 0
  %v2533 = vsel %vm2405, 1, 0
  %v2534 = vsel %vm2406, 1, 0
  %v2535 = vsel %vm2407, 1, 0
  %v2536 = vsel %vm2408, 1, 0
  %v2537 = vsel %vm2409, 1, 0
  %v2538 = vsel %vm2410, 1, 0
  %v2539 = vsel %vm2411, 1, 0
  %v2540 = vsel %vm2412, 1, 0
  %v2541 = vsel %vm2413, 1, 0
  %v2542 = vsel %vm2414, 1, 0
  %v2543 = vsel %vm2415, 1, 0
  %v2544 = vsel %vm2416, 1, 0
  %v2545 = vsel %vm2417, 1, 0
  %v2546 = vsel %vm2418, 1, 0
  %v2547 = vsel %vm2419, 1, 0
  %v2548 = vsel %vm2420, 1, 0
  %v2549 = vsel %vm2421, 1, 0
  %v2550 = vsel %vm2422, 1, 0
  %v2551 = vsel %vm2423, 1, 0
  %v2552 = vsel %vm2424, 1, 0
  %v2553 = vsel %vm2425, 1, 0
  %v2554 = vsel %vm2426, 1, 0
  %v2555 = vsel %vm2427, 1, 0
  %v2556 = vsel %vm2428, 1, 0
  %v2557 = vsel %vm2429, 1, 0
  %v2558 = vsel %vm2430, 1, 0
  %v2559 = vsel %vm2431, 1, 0
  %v2560 = vsel %vm2432, 1, 0
  %v2561 = vsel %vm2433, 1, 0
  %v2562 = vsel %vm2434, 1, 0
  %v2563 = vsel %vm2435, 1, 0
  %v2564 = vsel %vm2436, 1, 0
  %v2565 = vsel %vm2437, 1, 0
  %v2566 = vsel %vm2438, 1, 0
  %v2567 = vsel %vm2439, 1, 0
  %v2568 = vsel %vm2440, 1, 0
  %v2569 = vsel %vm2441, 1, 0
  %v2570 = vsel %vm2442, 1, 0
  %v2571 = vsel %vm2443, 1, 0
  %v2572 = vsel %vm2444, 1, 0
  %v2573 = vsel %vm2445, 1, 0
  %v2574 = vsel %vm2446, 1, 0
  %2575 = vset.pattern.permute.xlu0 0
  %2576 = vperm.xlu0 %2575, %v2447
  %v2577 = vpop.permute.xlu0 %2576
  %2578 = vset.pattern.permute.xlu0 0
  %2579 = vperm.xlu0 %2578, %v2448
  %v2580 = vpop.permute.xlu0 %2579
  %2581 = vset.pattern.permute.xlu0 0
  %2582 = vperm.xlu0 %2581, %v2449
  %v2583 = vpop.permute.xlu0 %2582
  %2584 = vset.pattern.permute.xlu0 0
  %2585 = vperm.xlu0 %2584, %v2450
  %v2586 = vpop.permute.xlu0 %2585
  %2587 = vset.pattern.permute.xlu0 0
  %2588 = vperm.xlu0 %2587, %v2451
  %v2589 = vpop.permute.xlu0 %2588
  %2590 = vset.pattern.permute.xlu0 0
  %2591 = vperm.xlu0 %2590, %v2452
  %v2592 = vpop.permute.xlu0 %2591
  %2593 = vset.pattern.permute.xlu0 0
  %2594 = vperm.xlu0 %2593, %v2453
  %v2595 = vpop.permute.xlu0 %2594
  %2596 = vset.pattern.permute.xlu0 0
  %2597 = vperm.xlu0 %2596, %v2454
  %v2598 = vpop.permute.xlu0 %2597
  %2599 = vset.pattern.permute.xlu0 0
  %2600 = vperm.xlu0 %2599, %v2455
  %v2601 = vpop.permute.xlu0 %2600
  %2602 = vset.pattern.permute.xlu0 0
  %2603 = vperm.xlu0 %2602, %v2456
  %v2604 = vpop.permute.xlu0 %2603
  %2605 = vset.pattern.permute.xlu0 0
  %2606 = vperm.xlu0 %2605, %v2457
  %v2607 = vpop.permute.xlu0 %2606
  %2608 = vset.pattern.permute.xlu0 0
  %2609 = vperm.xlu0 %2608, %v2458
  %v2610 = vpop.permute.xlu0 %2609
  %2611 = vset.pattern.permute.xlu0 0
  %2612 = vperm.xlu0 %2611, %v2459
  %v2613 = vpop.permute.xlu0 %2612
  %2614 = vset.pattern.permute.xlu0 0
  %2615 = vperm.xlu0 %2614, %v2460
  %v2616 = vpop.permute.xlu0 %2615
  %2617 = vset.pattern.permute.xlu0 0
  %2618 = vperm.xlu0 %2617, %v2461
  %v2619 = vpop.permute.xlu0 %2618
  %2620 = vset.pattern.permute.xlu0 0
  %2621 = vperm.xlu0 %2620, %v2462
  %v2622 = vpop.permute.xlu0 %2621
  %2623 = vset.pattern.permute.xlu0 0
  %2624 = vperm.xlu0 %2623, %v2463
  %v2625 = vpop.permute.xlu0 %2624
  %2626 = vset.pattern.permute.xlu0 0
  %2627 = vperm.xlu0 %2626, %v2464
  %v2628 = vpop.permute.xlu0 %2627
  %2629 = vset.pattern.permute.xlu0 0
  %2630 = vperm.xlu0 %2629, %v2465
  %v2631 = vpop.permute.xlu0 %2630
  %2632 = vset.pattern.permute.xlu0 0
  %2633 = vperm.xlu0 %2632, %v2466
  %v2634 = vpop.permute.xlu0 %2633
  %2635 = vset.pattern.permute.xlu0 0
  %2636 = vperm.xlu0 %2635, %v2467
  %v2637 = vpop.permute.xlu0 %2636
  %2638 = vset.pattern.permute.xlu0 0
  %2639 = vperm.xlu0 %2638, %v2468
  %v2640 = vpop.permute.xlu0 %2639
  %2641 = vset.pattern.permute.xlu0 0
  %2642 = vperm.xlu0 %2641, %v2469
  %v2643 = vpop.permute.xlu0 %2642
  %2644 = vset.pattern.permute.xlu0 0
  %2645 = vperm.xlu0 %2644, %v2470
  %v2646 = vpop.permute.xlu0 %2645
  %2647 = vset.pattern.permute.xlu0 0
  %2648 = vperm.xlu0 %2647, %v2471
  %v2649 = vpop.permute.xlu0 %2648
  %2650 = vset.pattern.permute.xlu0 0
  %2651 = vperm.xlu0 %2650, %v2472
  %v2652 = vpop.permute.xlu0 %2651
  %2653 = vset.pattern.permute.xlu0 0
  %2654 = vperm.xlu0 %2653, %v2473
  %v2655 = vpop.permute.xlu0 %2654
  %2656 = vset.pattern.permute.xlu0 0
  %2657 = vperm.xlu0 %2656, %v2474
  %v2658 = vpop.permute.xlu0 %2657
  %2659 = vset.pattern.permute.xlu0 0
  %2660 = vperm.xlu0 %2659, %v2475
  %v2661 = vpop.permute.xlu0 %2660
  %2662 = vset.pattern.permute.xlu0 0
  %2663 = vperm.xlu0 %2662, %v2476
  %v2664 = vpop.permute.xlu0 %2663
  %2665 = vset.pattern.permute.xlu0 0
  %2666 = vperm.xlu0 %2665, %v2477
  %v2667 = vpop.permute.xlu0 %2666
  %2668 = vset.pattern.permute.xlu0 0
  %2669 = vperm.xlu0 %2668, %v2478
  %v2670 = vpop.permute.xlu0 %2669
  %2671 = vset.pattern.permute.xlu0 0
  %2672 = vperm.xlu0 %2671, %v2479
  %v2673 = vpop.permute.xlu0 %2672
  %2674 = vset.pattern.permute.xlu0 0
  %2675 = vperm.xlu0 %2674, %v2480
  %v2676 = vpop.permute.xlu0 %2675
  %2677 = vset.pattern.permute.xlu0 0
  %2678 = vperm.xlu0 %2677, %v2481
  %v2679 = vpop.permute.xlu0 %2678
  %2680 = vset.pattern.permute.xlu0 0
  %2681 = vperm.xlu0 %2680, %v2482
  %v2682 = vpop.permute.xlu0 %2681
  %2683 = vset.pattern.permute.xlu0 0
  %2684 = vperm.xlu0 %2683, %v2483
  %v2685 = vpop.permute.xlu0 %2684
  %2686 = vset.pattern.permute.xlu0 0
  %2687 = vperm.xlu0 %2686, %v2484
  %v2688 = vpop.permute.xlu0 %2687
  %2689 = vset.pattern.permute.xlu0 0
  %2690 = vperm.xlu0 %2689, %v2485
  %v2691 = vpop.permute.xlu0 %2690
  %2692 = vset.pattern.permute.xlu0 0
  %2693 = vperm.xlu0 %2692, %v2486
  %v2694 = vpop.permute.xlu0 %2693
  %2695 = vset.pattern.permute.xlu0 0
  %2696 = vperm.xlu0 %2695, %v2487
  %v2697 = vpop.permute.xlu0 %2696
  %2698 = vset.pattern.permute.xlu0 0
  %2699 = vperm.xlu0 %2698, %v2488
  %v2700 = vpop.permute.xlu0 %2699
  %2701 = vset.pattern.permute.xlu0 0
  %2702 = vperm.xlu0 %2701, %v2489
  %v2703 = vpop.permute.xlu0 %2702
  %2704 = vset.pattern.permute.xlu0 0
  %2705 = vperm.xlu0 %2704, %v2490
  %v2706 = vpop.permute.xlu0 %2705
  %2707 = vset.pattern.permute.xlu0 0
  %2708 = vperm.xlu0 %2707, %v2491
  %v2709 = vpop.permute.xlu0 %2708
  %2710 = vset.pattern.permute.xlu0 0
  %2711 = vperm.xlu0 %2710, %v2492
  %v2712 = vpop.permute.xlu0 %2711
  %2713 = vset.pattern.permute.xlu0 0
  %2714 = vperm.xlu0 %2713, %v2493
  %v2715 = vpop.permute.xlu0 %2714
  %2716 = vset.pattern.permute.xlu0 0
  %2717 = vperm.xlu0 %2716, %v2494
  %v2718 = vpop.permute.xlu0 %2717
  %2719 = vset.pattern.permute.xlu0 0
  %2720 = vperm.xlu0 %2719, %v2495
  %v2721 = vpop.permute.xlu0 %2720
  %2722 = vset.pattern.permute.xlu0 0
  %2723 = vperm.xlu0 %2722, %v2496
  %v2724 = vpop.permute.xlu0 %2723
  %2725 = vset.pattern.permute.xlu0 0
  %2726 = vperm.xlu0 %2725, %v2497
  %v2727 = vpop.permute.xlu0 %2726
  %2728 = vset.pattern.permute.xlu0 0
  %2729 = vperm.xlu0 %2728, %v2498
  %v2730 = vpop.permute.xlu0 %2729
  %2731 = vset.pattern.permute.xlu0 0
  %2732 = vperm.xlu0 %2731, %v2499
  %v2733 = vpop.permute.xlu0 %2732
  %2734 = vset.pattern.permute.xlu0 0
  %2735 = vperm.xlu0 %2734, %v2500
  %v2736 = vpop.permute.xlu0 %2735
  %2737 = vset.pattern.permute.xlu0 0
  %2738 = vperm.xlu0 %2737, %v2501
  %v2739 = vpop.permute.xlu0 %2738
  %2740 = vset.pattern.permute.xlu0 0
  %2741 = vperm.xlu0 %2740, %v2502
  %v2742 = vpop.permute.xlu0 %2741
  %2743 = vset.pattern.permute.xlu0 0
  %2744 = vperm.xlu0 %2743, %v2503
  %v2745 = vpop.permute.xlu0 %2744
  %2746 = vset.pattern.permute.xlu0 0
  %2747 = vperm.xlu0 %2746, %v2504
  %v2748 = vpop.permute.xlu0 %2747
  %2749 = vset.pattern.permute.xlu0 0
  %2750 = vperm.xlu0 %2749, %v2505
  %v2751 = vpop.permute.xlu0 %2750
  %2752 = vset.pattern.permute.xlu0 0
  %2753 = vperm.xlu0 %2752, %v2506
  %v2754 = vpop.permute.xlu0 %2753
  %2755 = vset.pattern.permute.xlu0 0
  %2756 = vperm.xlu0 %2755, %v2507
  %v2757 = vpop.permute.xlu0 %2756
  %2758 = vset.pattern.permute.xlu0 0
  %2759 = vperm.xlu0 %2758, %v2508
  %v2760 = vpop.permute.xlu0 %2759
  %2761 = vset.pattern.permute.xlu0 0
  %2762 = vperm.xlu0 %2761, %v2509
  %v2763 = vpop.permute.xlu0 %2762
  %2764 = vset.pattern.permute.xlu0 0
  %2765 = vperm.xlu0 %2764, %v2510
  %v2766 = vpop.permute.xlu0 %2765
  %2767 = vset.pattern.permute.xlu0 0
  %2768 = vperm.xlu0 %2767, %v2511
  %v2769 = vpop.permute.xlu0 %2768
  %2770 = vset.pattern.permute.xlu0 0
  %2771 = vperm.xlu0 %2770, %v2512
  %v2772 = vpop.permute.xlu0 %2771
  %2773 = vset.pattern.permute.xlu0 0
  %2774 = vperm.xlu0 %2773, %v2513
  %v2775 = vpop.permute.xlu0 %2774
  %2776 = vset.pattern.permute.xlu0 0
  %2777 = vperm.xlu0 %2776, %v2514
  %v2778 = vpop.permute.xlu0 %2777
  %2779 = vset.pattern.permute.xlu0 0
  %2780 = vperm.xlu0 %2779, %v2515
  %v2781 = vpop.permute.xlu0 %2780
  %2782 = vset.pattern.permute.xlu0 0
  %2783 = vperm.xlu0 %2782, %v2516
  %v2784 = vpop.permute.xlu0 %2783
  %2785 = vset.pattern.permute.xlu0 0
  %2786 = vperm.xlu0 %2785, %v2517
  %v2787 = vpop.permute.xlu0 %2786
  %2788 = vset.pattern.permute.xlu0 0
  %2789 = vperm.xlu0 %2788, %v2518
  %v2790 = vpop.permute.xlu0 %2789
  %2791 = vset.pattern.permute.xlu0 0
  %2792 = vperm.xlu0 %2791, %v2519
  %v2793 = vpop.permute.xlu0 %2792
  %2794 = vset.pattern.permute.xlu0 0
  %2795 = vperm.xlu0 %2794, %v2520
  %v2796 = vpop.permute.xlu0 %2795
  %2797 = vset.pattern.permute.xlu0 0
  %2798 = vperm.xlu0 %2797, %v2521
  %v2799 = vpop.permute.xlu0 %2798
  %2800 = vset.pattern.permute.xlu0 0
  %2801 = vperm.xlu0 %2800, %v2522
  %v2802 = vpop.permute.xlu0 %2801
  %2803 = vset.pattern.permute.xlu0 0
  %2804 = vperm.xlu0 %2803, %v2523
  %v2805 = vpop.permute.xlu0 %2804
  %2806 = vset.pattern.permute.xlu0 0
  %2807 = vperm.xlu0 %2806, %v2524
  %v2808 = vpop.permute.xlu0 %2807
  %2809 = vset.pattern.permute.xlu0 0
  %2810 = vperm.xlu0 %2809, %v2525
  %v2811 = vpop.permute.xlu0 %2810
  %2812 = vset.pattern.permute.xlu0 0
  %2813 = vperm.xlu0 %2812, %v2526
  %v2814 = vpop.permute.xlu0 %2813
  %2815 = vset.pattern.permute.xlu0 0
  %2816 = vperm.xlu0 %2815, %v2527
  %v2817 = vpop.permute.xlu0 %2816
  %2818 = vset.pattern.permute.xlu0 0
  %2819 = vperm.xlu0 %2818, %v2528
  %v2820 = vpop.permute.xlu0 %2819
  %2821 = vset.pattern.permute.xlu0 0
  %2822 = vperm.xlu0 %2821, %v2529
  %v2823 = vpop.permute.xlu0 %2822
  %2824 = vset.pattern.permute.xlu0 0
  %2825 = vperm.xlu0 %2824, %v2530
  %v2826 = vpop.permute.xlu0 %2825
  %2827 = vset.pattern.permute.xlu0 0
  %2828 = vperm.xlu0 %2827, %v2531
  %v2829 = vpop.permute.xlu0 %2828
  %2830 = vset.pattern.permute.xlu0 0
  %2831 = vperm.xlu0 %2830, %v2532
  %v2832 = vpop.permute.xlu0 %2831
  %2833 = vset.pattern.permute.xlu0 0
  %2834 = vperm.xlu0 %2833, %v2533
  %v2835 = vpop.permute.xlu0 %2834
  %2836 = vset.pattern.permute.xlu0 0
  %2837 = vperm.xlu0 %2836, %v2534
  %v2838 = vpop.permute.xlu0 %2837
  %2839 = vset.pattern.permute.xlu0 0
  %2840 = vperm.xlu0 %2839, %v2535
  %v2841 = vpop.permute.xlu0 %2840
  %2842 = vset.pattern.permute.xlu0 0
  %2843 = vperm.xlu0 %2842, %v2536
  %v2844 = vpop.permute.xlu0 %2843
  %2845 = vset.pattern.permute.xlu0 0
  %2846 = vperm.xlu0 %2845, %v2537
  %v2847 = vpop.permute.xlu0 %2846
  %2848 = vset.pattern.permute.xlu0 0
  %2849 = vperm.xlu0 %2848, %v2538
  %v2850 = vpop.permute.xlu0 %2849
  %2851 = vset.pattern.permute.xlu0 0
  %2852 = vperm.xlu0 %2851, %v2539
  %v2853 = vpop.permute.xlu0 %2852
  %2854 = vset.pattern.permute.xlu0 0
  %2855 = vperm.xlu0 %2854, %v2540
  %v2856 = vpop.permute.xlu0 %2855
  %2857 = vset.pattern.permute.xlu0 0
  %2858 = vperm.xlu0 %2857, %v2541
  %v2859 = vpop.permute.xlu0 %2858
  %2860 = vset.pattern.permute.xlu0 0
  %2861 = vperm.xlu0 %2860, %v2542
  %v2862 = vpop.permute.xlu0 %2861
  %2863 = vset.pattern.permute.xlu0 0
  %2864 = vperm.xlu0 %2863, %v2543
  %v2865 = vpop.permute.xlu0 %2864
  %2866 = vset.pattern.permute.xlu0 0
  %2867 = vperm.xlu0 %2866, %v2544
  %v2868 = vpop.permute.xlu0 %2867
  %2869 = vset.pattern.permute.xlu0 0
  %2870 = vperm.xlu0 %2869, %v2545
  %v2871 = vpop.permute.xlu0 %2870
  %2872 = vset.pattern.permute.xlu0 0
  %2873 = vperm.xlu0 %2872, %v2546
  %v2874 = vpop.permute.xlu0 %2873
  %2875 = vset.pattern.permute.xlu0 0
  %2876 = vperm.xlu0 %2875, %v2547
  %v2877 = vpop.permute.xlu0 %2876
  %2878 = vset.pattern.permute.xlu0 0
  %2879 = vperm.xlu0 %2878, %v2548
  %v2880 = vpop.permute.xlu0 %2879
  %2881 = vset.pattern.permute.xlu0 0
  %2882 = vperm.xlu0 %2881, %v2549
  %v2883 = vpop.permute.xlu0 %2882
  %2884 = vset.pattern.permute.xlu0 0
  %2885 = vperm.xlu0 %2884, %v2550
  %v2886 = vpop.permute.xlu0 %2885
  %2887 = vset.pattern.permute.xlu0 0
  %2888 = vperm.xlu0 %2887, %v2551
  %v2889 = vpop.permute.xlu0 %2888
  %2890 = vset.pattern.permute.xlu0 0
  %2891 = vperm.xlu0 %2890, %v2552
  %v2892 = vpop.permute.xlu0 %2891
  %2893 = vset.pattern.permute.xlu0 0
  %2894 = vperm.xlu0 %2893, %v2553
  %v2895 = vpop.permute.xlu0 %2894
  %2896 = vset.pattern.permute.xlu0 0
  %2897 = vperm.xlu0 %2896, %v2554
  %v2898 = vpop.permute.xlu0 %2897
  %2899 = vset.pattern.permute.xlu0 0
  %2900 = vperm.xlu0 %2899, %v2555
  %v2901 = vpop.permute.xlu0 %2900
  %2902 = vset.pattern.permute.xlu0 0
  %2903 = vperm.xlu0 %2902, %v2556
  %v2904 = vpop.permute.xlu0 %2903
  %2905 = vset.pattern.permute.xlu0 0
  %2906 = vperm.xlu0 %2905, %v2557
  %v2907 = vpop.permute.xlu0 %2906
  %2908 = vset.pattern.permute.xlu0 0
  %2909 = vperm.xlu0 %2908, %v2558
  %v2910 = vpop.permute.xlu0 %2909
  %2911 = vset.pattern.permute.xlu0 0
  %2912 = vperm.xlu0 %2911, %v2559
  %v2913 = vpop.permute.xlu0 %2912
  %2914 = vset.pattern.permute.xlu0 0
  %2915 = vperm.xlu0 %2914, %v2560
  %v2916 = vpop.permute.xlu0 %2915
  %2917 = vset.pattern.permute.xlu0 0
  %2918 = vperm.xlu0 %2917, %v2561
  %v2919 = vpop.permute.xlu0 %2918
  %2920 = vset.pattern.permute.xlu0 0
  %2921 = vperm.xlu0 %2920, %v2562
  %v2922 = vpop.permute.xlu0 %2921
  %2923 = vset.pattern.permute.xlu0 0
  %2924 = vperm.xlu0 %2923, %v2563
  %v2925 = vpop.permute.xlu0 %2924
  %2926 = vset.pattern.permute.xlu0 0
  %2927 = vperm.xlu0 %2926, %v2564
  %v2928 = vpop.permute.xlu0 %2927
  %2929 = vset.pattern.permute.xlu0 0
  %2930 = vperm.xlu0 %2929, %v2565
  %v2931 = vpop.permute.xlu0 %2930
  %2932 = vset.pattern.permute.xlu0 0
  %2933 = vperm.xlu0 %2932, %v2566
  %v2934 = vpop.permute.xlu0 %2933
  %2935 = vset.pattern.permute.xlu0 0
  %2936 = vperm.xlu0 %2935, %v2567
  %v2937 = vpop.permute.xlu0 %2936
  %2938 = vset.pattern.permute.xlu0 0
  %2939 = vperm.xlu0 %2938, %v2568
  %v2940 = vpop.permute.xlu0 %2939
  %2941 = vset.pattern.permute.xlu0 0
  %2942 = vperm.xlu0 %2941, %v2569
  %v2943 = vpop.permute.xlu0 %2942
  %2944 = vset.pattern.permute.xlu0 0
  %2945 = vperm.xlu0 %2944, %v2570
  %v2946 = vpop.permute.xlu0 %2945
  %2947 = vset.pattern.permute.xlu0 0
  %2948 = vperm.xlu0 %2947, %v2571
  %v2949 = vpop.permute.xlu0 %2948
  %2950 = vset.pattern.permute.xlu0 0
  %2951 = vperm.xlu0 %2950, %v2572
  %v2952 = vpop.permute.xlu0 %2951
  %2953 = vset.pattern.permute.xlu0 0
  %2954 = vperm.xlu0 %2953, %v2573
  %v2955 = vpop.permute.xlu0 %2954
  %2956 = vset.pattern.permute.xlu0 0
  %2957 = vperm.xlu0 %2956, %v2574
  %v2958 = vpop.permute.xlu0 %2957
  %vm2959 = vcmp.eq.s32.totalorder %v2577, 1
  %vm2960 = vcmp.eq.s32.totalorder %v2580, 1
  %vm2961 = vcmp.eq.s32.totalorder %v2583, 1
  %vm2962 = vcmp.eq.s32.totalorder %v2586, 1
  %vm2963 = vcmp.eq.s32.totalorder %v2589, 1
  %vm2964 = vcmp.eq.s32.totalorder %v2592, 1
  %vm2965 = vcmp.eq.s32.totalorder %v2595, 1
  %vm2966 = vcmp.eq.s32.totalorder %v2598, 1
  %vm2967 = vcmp.eq.s32.totalorder %v2601, 1
  %vm2968 = vcmp.eq.s32.totalorder %v2604, 1
  %vm2969 = vcmp.eq.s32.totalorder %v2607, 1
  %vm2970 = vcmp.eq.s32.totalorder %v2610, 1
  %vm2971 = vcmp.eq.s32.totalorder %v2613, 1
  %vm2972 = vcmp.eq.s32.totalorder %v2616, 1
  %vm2973 = vcmp.eq.s32.totalorder %v2619, 1
  %vm2974 = vcmp.eq.s32.totalorder %v2622, 1
  %vm2975 = vcmp.eq.s32.totalorder %v2625, 1
  %vm2976 = vcmp.eq.s32.totalorder %v2628, 1
  %vm2977 = vcmp.eq.s32.totalorder %v2631, 1
  %vm2978 = vcmp.eq.s32.totalorder %v2634, 1
  %vm2979 = vcmp.eq.s32.totalorder %v2637, 1
  %vm2980 = vcmp.eq.s32.totalorder %v2640, 1
  %vm2981 = vcmp.eq.s32.totalorder %v2643, 1
  %vm2982 = vcmp.eq.s32.totalorder %v2646, 1
  %vm2983 = vcmp.eq.s32.totalorder %v2649, 1
  %vm2984 = vcmp.eq.s32.totalorder %v2652, 1
  %vm2985 = vcmp.eq.s32.totalorder %v2655, 1
  %vm2986 = vcmp.eq.s32.totalorder %v2658, 1
  %vm2987 = vcmp.eq.s32.totalorder %v2661, 1
  %vm2988 = vcmp.eq.s32.totalorder %v2664, 1
  %vm2989 = vcmp.eq.s32.totalorder %v2667, 1
  %vm2990 = vcmp.eq.s32.totalorder %v2670, 1
  %vm2991 = vcmp.eq.s32.totalorder %v2673, 1
  %vm2992 = vcmp.eq.s32.totalorder %v2676, 1
  %vm2993 = vcmp.eq.s32.totalorder %v2679, 1
  %vm2994 = vcmp.eq.s32.totalorder %v2682, 1
  %vm2995 = vcmp.eq.s32.totalorder %v2685, 1
  %vm2996 = vcmp.eq.s32.totalorder %v2688, 1
  %vm2997 = vcmp.eq.s32.totalorder %v2691, 1
  %vm2998 = vcmp.eq.s32.totalorder %v2694, 1
  %vm2999 = vcmp.eq.s32.totalorder %v2697, 1
  %vm3000 = vcmp.eq.s32.totalorder %v2700, 1
  %vm3001 = vcmp.eq.s32.totalorder %v2703, 1
  %vm3002 = vcmp.eq.s32.totalorder %v2706, 1
  %vm3003 = vcmp.eq.s32.totalorder %v2709, 1
  %vm3004 = vcmp.eq.s32.totalorder %v2712, 1
  %vm3005 = vcmp.eq.s32.totalorder %v2715, 1
  %vm3006 = vcmp.eq.s32.totalorder %v2718, 1
  %vm3007 = vcmp.eq.s32.totalorder %v2721, 1
  %vm3008 = vcmp.eq.s32.totalorder %v2724, 1
  %vm3009 = vcmp.eq.s32.totalorder %v2727, 1
  %vm3010 = vcmp.eq.s32.totalorder %v2730, 1
  %vm3011 = vcmp.eq.s32.totalorder %v2733, 1
  %vm3012 = vcmp.eq.s32.totalorder %v2736, 1
  %vm3013 = vcmp.eq.s32.totalorder %v2739, 1
  %vm3014 = vcmp.eq.s32.totalorder %v2742, 1
  %vm3015 = vcmp.eq.s32.totalorder %v2745, 1
  %vm3016 = vcmp.eq.s32.totalorder %v2748, 1
  %vm3017 = vcmp.eq.s32.totalorder %v2751, 1
  %vm3018 = vcmp.eq.s32.totalorder %v2754, 1
  %vm3019 = vcmp.eq.s32.totalorder %v2757, 1
  %vm3020 = vcmp.eq.s32.totalorder %v2760, 1
  %vm3021 = vcmp.eq.s32.totalorder %v2763, 1
  %vm3022 = vcmp.eq.s32.totalorder %v2766, 1
  %vm3023 = vcmp.eq.s32.totalorder %v2769, 1
  %vm3024 = vcmp.eq.s32.totalorder %v2772, 1
  %vm3025 = vcmp.eq.s32.totalorder %v2775, 1
  %vm3026 = vcmp.eq.s32.totalorder %v2778, 1
  %vm3027 = vcmp.eq.s32.totalorder %v2781, 1
  %vm3028 = vcmp.eq.s32.totalorder %v2784, 1
  %vm3029 = vcmp.eq.s32.totalorder %v2787, 1
  %vm3030 = vcmp.eq.s32.totalorder %v2790, 1
  %vm3031 = vcmp.eq.s32.totalorder %v2793, 1
  %vm3032 = vcmp.eq.s32.totalorder %v2796, 1
  %vm3033 = vcmp.eq.s32.totalorder %v2799, 1
  %vm3034 = vcmp.eq.s32.totalorder %v2802, 1
  %vm3035 = vcmp.eq.s32.totalorder %v2805, 1
  %vm3036 = vcmp.eq.s32.totalorder %v2808, 1
  %vm3037 = vcmp.eq.s32.totalorder %v2811, 1
  %vm3038 = vcmp.eq.s32.totalorder %v2814, 1
  %vm3039 = vcmp.eq.s32.totalorder %v2817, 1
  %vm3040 = vcmp.eq.s32.totalorder %v2820, 1
  %vm3041 = vcmp.eq.s32.totalorder %v2823, 1
  %vm3042 = vcmp.eq.s32.totalorder %v2826, 1
  %vm3043 = vcmp.eq.s32.totalorder %v2829, 1
  %vm3044 = vcmp.eq.s32.totalorder %v2832, 1
  %vm3045 = vcmp.eq.s32.totalorder %v2835, 1
  %vm3046 = vcmp.eq.s32.totalorder %v2838, 1
  %vm3047 = vcmp.eq.s32.totalorder %v2841, 1
  %vm3048 = vcmp.eq.s32.totalorder %v2844, 1
  %vm3049 = vcmp.eq.s32.totalorder %v2847, 1
  %vm3050 = vcmp.eq.s32.totalorder %v2850, 1
  %vm3051 = vcmp.eq.s32.totalorder %v2853, 1
  %vm3052 = vcmp.eq.s32.totalorder %v2856, 1
  %vm3053 = vcmp.eq.s32.totalorder %v2859, 1
  %vm3054 = vcmp.eq.s32.totalorder %v2862, 1
  %vm3055 = vcmp.eq.s32.totalorder %v2865, 1
  %vm3056 = vcmp.eq.s32.totalorder %v2868, 1
  %vm3057 = vcmp.eq.s32.totalorder %v2871, 1
  %vm3058 = vcmp.eq.s32.totalorder %v2874, 1
  %vm3059 = vcmp.eq.s32.totalorder %v2877, 1
  %vm3060 = vcmp.eq.s32.totalorder %v2880, 1
  %vm3061 = vcmp.eq.s32.totalorder %v2883, 1
  %vm3062 = vcmp.eq.s32.totalorder %v2886, 1
  %vm3063 = vcmp.eq.s32.totalorder %v2889, 1
  %vm3064 = vcmp.eq.s32.totalorder %v2892, 1
  %vm3065 = vcmp.eq.s32.totalorder %v2895, 1
  %vm3066 = vcmp.eq.s32.totalorder %v2898, 1
  %vm3067 = vcmp.eq.s32.totalorder %v2901, 1
  %vm3068 = vcmp.eq.s32.totalorder %v2904, 1
  %vm3069 = vcmp.eq.s32.totalorder %v2907, 1
  %vm3070 = vcmp.eq.s32.totalorder %v2910, 1
  %vm3071 = vcmp.eq.s32.totalorder %v2913, 1
  %vm3072 = vcmp.eq.s32.totalorder %v2916, 1
  %vm3073 = vcmp.eq.s32.totalorder %v2919, 1
  %vm3074 = vcmp.eq.s32.totalorder %v2922, 1
  %vm3075 = vcmp.eq.s32.totalorder %v2925, 1
  %vm3076 = vcmp.eq.s32.totalorder %v2928, 1
  %vm3077 = vcmp.eq.s32.totalorder %v2931, 1
  %vm3078 = vcmp.eq.s32.totalorder %v2934, 1
  %vm3079 = vcmp.eq.s32.totalorder %v2937, 1
  %vm3080 = vcmp.eq.s32.totalorder %v2940, 1
  %vm3081 = vcmp.eq.s32.totalorder %v2943, 1
  %vm3082 = vcmp.eq.s32.totalorder %v2946, 1
  %vm3083 = vcmp.eq.s32.totalorder %v2949, 1
  %vm3084 = vcmp.eq.s32.totalorder %v2952, 1
  %vm3085 = vcmp.eq.s32.totalorder %v2955, 1
  %vm3086 = vcmp.eq.s32.totalorder %v2958, 1
  %vm3087 = vmpackc.low %vm2959, %vm2959
  %vm3088 = vmpackc.low %vm2960, %vm2960
  %vm3089 = vmpackc.low %vm2961, %vm2961
  %vm3090 = vmpackc.low %vm2962, %vm2962
  %vm3091 = vmpackc.low %vm2963, %vm2963
  %vm3092 = vmpackc.low %vm2964, %vm2964
  %vm3093 = vmpackc.low %vm2965, %vm2965
  %vm3094 = vmpackc.low %vm2966, %vm2966
  %vm3095 = vmpackc.low %vm2967, %vm2967
  %vm3096 = vmpackc.low %vm2968, %vm2968
  %vm3097 = vmpackc.low %vm2969, %vm2969
  %vm3098 = vmpackc.low %vm2970, %vm2970
  %vm3099 = vmpackc.low %vm2971, %vm2971
  %vm3100 = vmpackc.low %vm2972, %vm2972
  %vm3101 = vmpackc.low %vm2973, %vm2973
  %vm3102 = vmpackc.low %vm2974, %vm2974
  %vm3103 = vmpackc.low %vm2975, %vm2975
  %vm3104 = vmpackc.low %vm2976, %vm2976
  %vm3105 = vmpackc.low %vm2977, %vm2977
  %vm3106 = vmpackc.low %vm2978, %vm2978
  %vm3107 = vmpackc.low %vm2979, %vm2979
  %vm3108 = vmpackc.low %vm2980, %vm2980
  %vm3109 = vmpackc.low %vm2981, %vm2981
  %vm3110 = vmpackc.low %vm2982, %vm2982
  %vm3111 = vmpackc.low %vm2983, %vm2983
  %vm3112 = vmpackc.low %vm2984, %vm2984
  %vm3113 = vmpackc.low %vm2985, %vm2985
  %vm3114 = vmpackc.low %vm2986, %vm2986
  %vm3115 = vmpackc.low %vm2987, %vm2987
  %vm3116 = vmpackc.low %vm2988, %vm2988
  %vm3117 = vmpackc.low %vm2989, %vm2989
  %vm3118 = vmpackc.low %vm2990, %vm2990
  %vm3119 = vmpackc.low %vm2991, %vm2991
  %vm3120 = vmpackc.low %vm2992, %vm2992
  %vm3121 = vmpackc.low %vm2993, %vm2993
  %vm3122 = vmpackc.low %vm2994, %vm2994
  %vm3123 = vmpackc.low %vm2995, %vm2995
  %vm3124 = vmpackc.low %vm2996, %vm2996
  %vm3125 = vmpackc.low %vm2997, %vm2997
  %vm3126 = vmpackc.low %vm2998, %vm2998
  %vm3127 = vmpackc.low %vm2999, %vm2999
  %vm3128 = vmpackc.low %vm3000, %vm3000
  %vm3129 = vmpackc.low %vm3001, %vm3001
  %vm3130 = vmpackc.low %vm3002, %vm3002
  %vm3131 = vmpackc.low %vm3003, %vm3003
  %vm3132 = vmpackc.low %vm3004, %vm3004
  %vm3133 = vmpackc.low %vm3005, %vm3005
  %vm3134 = vmpackc.low %vm3006, %vm3006
  %vm3135 = vmpackc.low %vm3007, %vm3007
  %vm3136 = vmpackc.low %vm3008, %vm3008
  %vm3137 = vmpackc.low %vm3009, %vm3009
  %vm3138 = vmpackc.low %vm3010, %vm3010
  %vm3139 = vmpackc.low %vm3011, %vm3011
  %vm3140 = vmpackc.low %vm3012, %vm3012
  %vm3141 = vmpackc.low %vm3013, %vm3013
  %vm3142 = vmpackc.low %vm3014, %vm3014
  %vm3143 = vmpackc.low %vm3015, %vm3015
  %vm3144 = vmpackc.low %vm3016, %vm3016
  %vm3145 = vmpackc.low %vm3017, %vm3017
  %vm3146 = vmpackc.low %vm3018, %vm3018
  %vm3147 = vmpackc.low %vm3019, %vm3019
  %vm3148 = vmpackc.low %vm3020, %vm3020
  %vm3149 = vmpackc.low %vm3021, %vm3021
  %vm3150 = vmpackc.low %vm3022, %vm3022
  %vm3151 = vmpackc.low %vm3023, %vm3023
  %vm3152 = vmpackc.low %vm3024, %vm3024
  %vm3153 = vmpackc.low %vm3025, %vm3025
  %vm3154 = vmpackc.low %vm3026, %vm3026
  %vm3155 = vmpackc.low %vm3027, %vm3027
  %vm3156 = vmpackc.low %vm3028, %vm3028
  %vm3157 = vmpackc.low %vm3029, %vm3029
  %vm3158 = vmpackc.low %vm3030, %vm3030
  %vm3159 = vmpackc.low %vm3031, %vm3031
  %vm3160 = vmpackc.low %vm3032, %vm3032
  %vm3161 = vmpackc.low %vm3033, %vm3033
  %vm3162 = vmpackc.low %vm3034, %vm3034
  %vm3163 = vmpackc.low %vm3035, %vm3035
  %vm3164 = vmpackc.low %vm3036, %vm3036
  %vm3165 = vmpackc.low %vm3037, %vm3037
  %vm3166 = vmpackc.low %vm3038, %vm3038
  %vm3167 = vmpackc.low %vm3039, %vm3039
  %vm3168 = vmpackc.low %vm3040, %vm3040
  %vm3169 = vmpackc.low %vm3041, %vm3041
  %vm3170 = vmpackc.low %vm3042, %vm3042
  %vm3171 = vmpackc.low %vm3043, %vm3043
  %vm3172 = vmpackc.low %vm3044, %vm3044
  %vm3173 = vmpackc.low %vm3045, %vm3045
  %vm3174 = vmpackc.low %vm3046, %vm3046
  %vm3175 = vmpackc.low %vm3047, %vm3047
  %vm3176 = vmpackc.low %vm3048, %vm3048
  %vm3177 = vmpackc.low %vm3049, %vm3049
  %vm3178 = vmpackc.low %vm3050, %vm3050
  %vm3179 = vmpackc.low %vm3051, %vm3051
  %vm3180 = vmpackc.low %vm3052, %vm3052
  %vm3181 = vmpackc.low %vm3053, %vm3053
  %vm3182 = vmpackc.low %vm3054, %vm3054
  %vm3183 = vmpackc.low %vm3055, %vm3055
  %vm3184 = vmpackc.low %vm3056, %vm3056
  %vm3185 = vmpackc.low %vm3057, %vm3057
  %vm3186 = vmpackc.low %vm3058, %vm3058
  %vm3187 = vmpackc.low %vm3059, %vm3059
  %vm3188 = vmpackc.low %vm3060, %vm3060
  %vm3189 = vmpackc.low %vm3061, %vm3061
  %vm3190 = vmpackc.low %vm3062, %vm3062
  %vm3191 = vmpackc.low %vm3063, %vm3063
  %vm3192 = vmpackc.low %vm3064, %vm3064
  %vm3193 = vmpackc.low %vm3065, %vm3065
  %vm3194 = vmpackc.low %vm3066, %vm3066
  %vm3195 = vmpackc.low %vm3067, %vm3067
  %vm3196 = vmpackc.low %vm3068, %vm3068
  %vm3197 = vmpackc.low %vm3069, %vm3069
  %vm3198 = vmpackc.low %vm3070, %vm3070
  %vm3199 = vmpackc.low %vm3071, %vm3071
  %vm3200 = vmpackc.low %vm3072, %vm3072
  %vm3201 = vmpackc.low %vm3073, %vm3073
  %vm3202 = vmpackc.low %vm3074, %vm3074
  %vm3203 = vmpackc.low %vm3075, %vm3075
  %vm3204 = vmpackc.low %vm3076, %vm3076
  %vm3205 = vmpackc.low %vm3077, %vm3077
  %vm3206 = vmpackc.low %vm3078, %vm3078
  %vm3207 = vmpackc.low %vm3079, %vm3079
  %vm3208 = vmpackc.low %vm3080, %vm3080
  %vm3209 = vmpackc.low %vm3081, %vm3081
  %vm3210 = vmpackc.low %vm3082, %vm3082
  %vm3211 = vmpackc.low %vm3083, %vm3083
  %vm3212 = vmpackc.low %vm3084, %vm3084
  %vm3213 = vmpackc.low %vm3085, %vm3085
  %vm3214 = vmpackc.low %vm3086, %vm3086
  %v3215 = vsel %vm3087, %v15, 0
  %v3216 = vsel %vm3088, %v16, 0
  %v3217 = vsel %vm3089, %v17, 0
  %v3218 = vsel %vm3090, %v18, 0
  %v3219 = vsel %vm3091, %v19, 0
  %v3220 = vsel %vm3092, %v20, 0
  %v3221 = vsel %vm3093, %v21, 0
  %v3222 = vsel %vm3094, %v22, 0
  %v3223 = vsel %vm3095, %v23, 0
  %v3224 = vsel %vm3096, %v24, 0
  %v3225 = vsel %vm3097, %v25, 0
  %v3226 = vsel %vm3098, %v26, 0
  %v3227 = vsel %vm3099, %v27, 0
  %v3228 = vsel %vm3100, %v28, 0
  %v3229 = vsel %vm3101, %v29, 0
  %v3230 = vsel %vm3102, %v30, 0
  %v3231 = vsel %vm3103, %v31, 0
  %v3232 = vsel %vm3104, %v32, 0
  %v3233 = vsel %vm3105, %v33, 0
  %v3234 = vsel %vm3106, %v34, 0
  %v3235 = vsel %vm3107, %v35, 0
  %v3236 = vsel %vm3108, %v36, 0
  %v3237 = vsel %vm3109, %v37, 0
  %v3238 = vsel %vm3110, %v38, 0
  %v3239 = vsel %vm3111, %v39, 0
  %v3240 = vsel %vm3112, %v40, 0
  %v3241 = vsel %vm3113, %v41, 0
  %v3242 = vsel %vm3114, %v42, 0
  %v3243 = vsel %vm3115, %v43, 0
  %v3244 = vsel %vm3116, %v44, 0
  %v3245 = vsel %vm3117, %v45, 0
  %v3246 = vsel %vm3118, %v46, 0
  %v3247 = vsel %vm3119, %v47, 0
  %v3248 = vsel %vm3120, %v48, 0
  %v3249 = vsel %vm3121, %v49, 0
  %v3250 = vsel %vm3122, %v50, 0
  %v3251 = vsel %vm3123, %v51, 0
  %v3252 = vsel %vm3124, %v52, 0
  %v3253 = vsel %vm3125, %v53, 0
  %v3254 = vsel %vm3126, %v54, 0
  %v3255 = vsel %vm3127, %v55, 0
  %v3256 = vsel %vm3128, %v56, 0
  %v3257 = vsel %vm3129, %v57, 0
  %v3258 = vsel %vm3130, %v58, 0
  %v3259 = vsel %vm3131, %v59, 0
  %v3260 = vsel %vm3132, %v60, 0
  %v3261 = vsel %vm3133, %v61, 0
  %v3262 = vsel %vm3134, %v62, 0
  %v3263 = vsel %vm3135, %v63, 0
  %v3264 = vsel %vm3136, %v64, 0
  %v3265 = vsel %vm3137, %v65, 0
  %v3266 = vsel %vm3138, %v66, 0
  %v3267 = vsel %vm3139, %v67, 0
  %v3268 = vsel %vm3140, %v68, 0
  %v3269 = vsel %vm3141, %v69, 0
  %v3270 = vsel %vm3142, %v70, 0
  %v3271 = vsel %vm3143, %v71, 0
  %v3272 = vsel %vm3144, %v72, 0
  %v3273 = vsel %vm3145, %v73, 0
  %v3274 = vsel %vm3146, %v74, 0
  %v3275 = vsel %vm3147, %v75, 0
  %v3276 = vsel %vm3148, %v76, 0
  %v3277 = vsel %vm3149, %v77, 0
  %v3278 = vsel %vm3150, %v78, 0
  %v3279 = vsel %vm3151, %v79, 0
  %v3280 = vsel %vm3152, %v80, 0
  %v3281 = vsel %vm3153, %v81, 0
  %v3282 = vsel %vm3154, %v82, 0
  %v3283 = vsel %vm3155, %v83, 0
  %v3284 = vsel %vm3156, %v84, 0
  %v3285 = vsel %vm3157, %v85, 0
  %v3286 = vsel %vm3158, %v86, 0
  %v3287 = vsel %vm3159, %v87, 0
  %v3288 = vsel %vm3160, %v88, 0
  %v3289 = vsel %vm3161, %v89, 0
  %v3290 = vsel %vm3162, %v90, 0
  %v3291 = vsel %vm3163, %v91, 0
  %v3292 = vsel %vm3164, %v92, 0
  %v3293 = vsel %vm3165, %v93, 0
  %v3294 = vsel %vm3166, %v94, 0
  %v3295 = vsel %vm3167, %v95, 0
  %v3296 = vsel %vm3168, %v96, 0
  %v3297 = vsel %vm3169, %v97, 0
  %v3298 = vsel %vm3170, %v98, 0
  %v3299 = vsel %vm3171, %v99, 0
  %v3300 = vsel %vm3172, %v100, 0
  %v3301 = vsel %vm3173, %v101, 0
  %v3302 = vsel %vm3174, %v102, 0
  %v3303 = vsel %vm3175, %v103, 0
  %v3304 = vsel %vm3176, %v104, 0
  %v3305 = vsel %vm3177, %v105, 0
  %v3306 = vsel %vm3178, %v106, 0
  %v3307 = vsel %vm3179, %v107, 0
  %v3308 = vsel %vm3180, %v108, 0
  %v3309 = vsel %vm3181, %v109, 0
  %v3310 = vsel %vm3182, %v110, 0
  %v3311 = vsel %vm3183, %v111, 0
  %v3312 = vsel %vm3184, %v112, 0
  %v3313 = vsel %vm3185, %v113, 0
  %v3314 = vsel %vm3186, %v114, 0
  %v3315 = vsel %vm3187, %v115, 0
  %v3316 = vsel %vm3188, %v116, 0
  %v3317 = vsel %vm3189, %v117, 0
  %v3318 = vsel %vm3190, %v118, 0
  %v3319 = vsel %vm3191, %v119, 0
  %v3320 = vsel %vm3192, %v120, 0
  %v3321 = vsel %vm3193, %v121, 0
  %v3322 = vsel %vm3194, %v122, 0
  %v3323 = vsel %vm3195, %v123, 0
  %v3324 = vsel %vm3196, %v124, 0
  %v3325 = vsel %vm3197, %v125, 0
  %v3326 = vsel %vm3198, %v126, 0
  %v3327 = vsel %vm3199, %v127, 0
  %v3328 = vsel %vm3200, %v128, 0
  %v3329 = vsel %vm3201, %v129, 0
  %v3330 = vsel %vm3202, %v130, 0
  %v3331 = vsel %vm3203, %v131, 0
  %v3332 = vsel %vm3204, %v132, 0
  %v3333 = vsel %vm3205, %v133, 0
  %v3334 = vsel %vm3206, %v134, 0
  %v3335 = vsel %vm3207, %v135, 0
  %v3336 = vsel %vm3208, %v136, 0
  %v3337 = vsel %vm3209, %v137, 0
  %v3338 = vsel %vm3210, %v138, 0
  %v3339 = vsel %vm3211, %v139, 0
  %v3340 = vsel %vm3212, %v140, 0
  %v3341 = vsel %vm3213, %v141, 0
  %v3342 = vsel %vm3214, %v142, 0
  %vm3343 = vcmp.eq.s32.totalorder %v143, 3
  %vm3344 = vcmp.eq.s32.totalorder %v144, 3
  %vm3345 = vcmp.eq.s32.totalorder %v145, 3
  %vm3346 = vcmp.eq.s32.totalorder %v146, 3
  %vm3347 = vcmp.eq.s32.totalorder %v147, 3
  %vm3348 = vcmp.eq.s32.totalorder %v148, 3
  %vm3349 = vcmp.eq.s32.totalorder %v149, 3
  %vm3350 = vcmp.eq.s32.totalorder %v150, 3
  %vm3351 = vcmp.eq.s32.totalorder %v151, 3
  %vm3352 = vcmp.eq.s32.totalorder %v152, 3
  %vm3353 = vcmp.eq.s32.totalorder %v153, 3
  %vm3354 = vcmp.eq.s32.totalorder %v154, 3
  %vm3355 = vcmp.eq.s32.totalorder %v155, 3
  %vm3356 = vcmp.eq.s32.totalorder %v156, 3
  %vm3357 = vcmp.eq.s32.totalorder %v157, 3
  %vm3358 = vcmp.eq.s32.totalorder %v158, 3
  %vm3359 = vcmp.eq.s32.totalorder %v159, 3
  %vm3360 = vcmp.eq.s32.totalorder %v160, 3
  %vm3361 = vcmp.eq.s32.totalorder %v161, 3
  %vm3362 = vcmp.eq.s32.totalorder %v162, 3
  %vm3363 = vcmp.eq.s32.totalorder %v163, 3
  %vm3364 = vcmp.eq.s32.totalorder %v164, 3
  %vm3365 = vcmp.eq.s32.totalorder %v165, 3
  %vm3366 = vcmp.eq.s32.totalorder %v166, 3
  %vm3367 = vcmp.eq.s32.totalorder %v167, 3
  %vm3368 = vcmp.eq.s32.totalorder %v168, 3
  %vm3369 = vcmp.eq.s32.totalorder %v169, 3
  %vm3370 = vcmp.eq.s32.totalorder %v170, 3
  %vm3371 = vcmp.eq.s32.totalorder %v171, 3
  %vm3372 = vcmp.eq.s32.totalorder %v172, 3
  %vm3373 = vcmp.eq.s32.totalorder %v173, 3
  %vm3374 = vcmp.eq.s32.totalorder %v174, 3
  %vm3375 = vcmp.eq.s32.totalorder %v175, 3
  %vm3376 = vcmp.eq.s32.totalorder %v176, 3
  %vm3377 = vcmp.eq.s32.totalorder %v177, 3
  %vm3378 = vcmp.eq.s32.totalorder %v178, 3
  %vm3379 = vcmp.eq.s32.totalorder %v179, 3
  %vm3380 = vcmp.eq.s32.totalorder %v180, 3
  %vm3381 = vcmp.eq.s32.totalorder %v181, 3
  %vm3382 = vcmp.eq.s32.totalorder %v182, 3
  %vm3383 = vcmp.eq.s32.totalorder %v183, 3
  %vm3384 = vcmp.eq.s32.totalorder %v184, 3
  %vm3385 = vcmp.eq.s32.totalorder %v185, 3
  %vm3386 = vcmp.eq.s32.totalorder %v186, 3
  %vm3387 = vcmp.eq.s32.totalorder %v187, 3
  %vm3388 = vcmp.eq.s32.totalorder %v188, 3
  %vm3389 = vcmp.eq.s32.totalorder %v189, 3
  %vm3390 = vcmp.eq.s32.totalorder %v190, 3
  %vm3391 = vcmp.eq.s32.totalorder %v191, 3
  %vm3392 = vcmp.eq.s32.totalorder %v192, 3
  %vm3393 = vcmp.eq.s32.totalorder %v193, 3
  %vm3394 = vcmp.eq.s32.totalorder %v194, 3
  %vm3395 = vcmp.eq.s32.totalorder %v195, 3
  %vm3396 = vcmp.eq.s32.totalorder %v196, 3
  %vm3397 = vcmp.eq.s32.totalorder %v197, 3
  %vm3398 = vcmp.eq.s32.totalorder %v198, 3
  %vm3399 = vcmp.eq.s32.totalorder %v199, 3
  %vm3400 = vcmp.eq.s32.totalorder %v200, 3
  %vm3401 = vcmp.eq.s32.totalorder %v201, 3
  %vm3402 = vcmp.eq.s32.totalorder %v202, 3
  %vm3403 = vcmp.eq.s32.totalorder %v203, 3
  %vm3404 = vcmp.eq.s32.totalorder %v204, 3
  %vm3405 = vcmp.eq.s32.totalorder %v205, 3
  %vm3406 = vcmp.eq.s32.totalorder %v206, 3
  %vm3407 = vcmp.eq.s32.totalorder %v207, 3
  %vm3408 = vcmp.eq.s32.totalorder %v208, 3
  %vm3409 = vcmp.eq.s32.totalorder %v209, 3
  %vm3410 = vcmp.eq.s32.totalorder %v210, 3
  %vm3411 = vcmp.eq.s32.totalorder %v211, 3
  %vm3412 = vcmp.eq.s32.totalorder %v212, 3
  %vm3413 = vcmp.eq.s32.totalorder %v213, 3
  %vm3414 = vcmp.eq.s32.totalorder %v214, 3
  %vm3415 = vcmp.eq.s32.totalorder %v215, 3
  %vm3416 = vcmp.eq.s32.totalorder %v216, 3
  %vm3417 = vcmp.eq.s32.totalorder %v217, 3
  %vm3418 = vcmp.eq.s32.totalorder %v218, 3
  %vm3419 = vcmp.eq.s32.totalorder %v219, 3
  %vm3420 = vcmp.eq.s32.totalorder %v220, 3
  %vm3421 = vcmp.eq.s32.totalorder %v221, 3
  %vm3422 = vcmp.eq.s32.totalorder %v222, 3
  %vm3423 = vcmp.eq.s32.totalorder %v223, 3
  %vm3424 = vcmp.eq.s32.totalorder %v224, 3
  %vm3425 = vcmp.eq.s32.totalorder %v225, 3
  %vm3426 = vcmp.eq.s32.totalorder %v226, 3
  %vm3427 = vcmp.eq.s32.totalorder %v227, 3
  %vm3428 = vcmp.eq.s32.totalorder %v228, 3
  %vm3429 = vcmp.eq.s32.totalorder %v229, 3
  %vm3430 = vcmp.eq.s32.totalorder %v230, 3
  %vm3431 = vcmp.eq.s32.totalorder %v231, 3
  %vm3432 = vcmp.eq.s32.totalorder %v232, 3
  %vm3433 = vcmp.eq.s32.totalorder %v233, 3
  %vm3434 = vcmp.eq.s32.totalorder %v234, 3
  %vm3435 = vcmp.eq.s32.totalorder %v235, 3
  %vm3436 = vcmp.eq.s32.totalorder %v236, 3
  %vm3437 = vcmp.eq.s32.totalorder %v237, 3
  %vm3438 = vcmp.eq.s32.totalorder %v238, 3
  %vm3439 = vcmp.eq.s32.totalorder %v239, 3
  %vm3440 = vcmp.eq.s32.totalorder %v240, 3
  %vm3441 = vcmp.eq.s32.totalorder %v241, 3
  %vm3442 = vcmp.eq.s32.totalorder %v242, 3
  %vm3443 = vcmp.eq.s32.totalorder %v243, 3
  %vm3444 = vcmp.eq.s32.totalorder %v244, 3
  %vm3445 = vcmp.eq.s32.totalorder %v245, 3
  %vm3446 = vcmp.eq.s32.totalorder %v246, 3
  %vm3447 = vcmp.eq.s32.totalorder %v247, 3
  %vm3448 = vcmp.eq.s32.totalorder %v248, 3
  %vm3449 = vcmp.eq.s32.totalorder %v249, 3
  %vm3450 = vcmp.eq.s32.totalorder %v250, 3
  %vm3451 = vcmp.eq.s32.totalorder %v251, 3
  %vm3452 = vcmp.eq.s32.totalorder %v252, 3
  %vm3453 = vcmp.eq.s32.totalorder %v253, 3
  %vm3454 = vcmp.eq.s32.totalorder %v254, 3
  %vm3455 = vcmp.eq.s32.totalorder %v255, 3
  %vm3456 = vcmp.eq.s32.totalorder %v256, 3
  %vm3457 = vcmp.eq.s32.totalorder %v257, 3
  %vm3458 = vcmp.eq.s32.totalorder %v258, 3
  %vm3459 = vcmp.eq.s32.totalorder %v259, 3
  %vm3460 = vcmp.eq.s32.totalorder %v260, 3
  %vm3461 = vcmp.eq.s32.totalorder %v261, 3
  %vm3462 = vcmp.eq.s32.totalorder %v262, 3
  %vm3463 = vcmp.eq.s32.totalorder %v263, 3
  %vm3464 = vcmp.eq.s32.totalorder %v264, 3
  %vm3465 = vcmp.eq.s32.totalorder %v265, 3
  %vm3466 = vcmp.eq.s32.totalorder %v266, 3
  %vm3467 = vcmp.eq.s32.totalorder %v267, 3
  %vm3468 = vcmp.eq.s32.totalorder %v268, 3
  %vm3469 = vcmp.eq.s32.totalorder %v269, 3
  %vm3470 = vcmp.eq.s32.totalorder %v270, 3
  %v3471 = vsel %vm3343, 1, 0
  %v3472 = vsel %vm3344, 1, 0
  %v3473 = vsel %vm3345, 1, 0
  %v3474 = vsel %vm3346, 1, 0
  %v3475 = vsel %vm3347, 1, 0
  %v3476 = vsel %vm3348, 1, 0
  %v3477 = vsel %vm3349, 1, 0
  %v3478 = vsel %vm3350, 1, 0
  %v3479 = vsel %vm3351, 1, 0
  %v3480 = vsel %vm3352, 1, 0
  %v3481 = vsel %vm3353, 1, 0
  %v3482 = vsel %vm3354, 1, 0
  %v3483 = vsel %vm3355, 1, 0
  %v3484 = vsel %vm3356, 1, 0
  %v3485 = vsel %vm3357, 1, 0
  %v3486 = vsel %vm3358, 1, 0
  %v3487 = vsel %vm3359, 1, 0
  %v3488 = vsel %vm3360, 1, 0
  %v3489 = vsel %vm3361, 1, 0
  %v3490 = vsel %vm3362, 1, 0
  %v3491 = vsel %vm3363, 1, 0
  %v3492 = vsel %vm3364, 1, 0
  %v3493 = vsel %vm3365, 1, 0
  %v3494 = vsel %vm3366, 1, 0
  %v3495 = vsel %vm3367, 1, 0
  %v3496 = vsel %vm3368, 1, 0
  %v3497 = vsel %vm3369, 1, 0
  %v3498 = vsel %vm3370, 1, 0
  %v3499 = vsel %vm3371, 1, 0
  %v3500 = vsel %vm3372, 1, 0
  %v3501 = vsel %vm3373, 1, 0
  %v3502 = vsel %vm3374, 1, 0
  %v3503 = vsel %vm3375, 1, 0
  %v3504 = vsel %vm3376, 1, 0
  %v3505 = vsel %vm3377, 1, 0
  %v3506 = vsel %vm3378, 1, 0
  %v3507 = vsel %vm3379, 1, 0
  %v3508 = vsel %vm3380, 1, 0
  %v3509 = vsel %vm3381, 1, 0
  %v3510 = vsel %vm3382, 1, 0
  %v3511 = vsel %vm3383, 1, 0
  %v3512 = vsel %vm3384, 1, 0
  %v3513 = vsel %vm3385, 1, 0
  %v3514 = vsel %vm3386, 1, 0
  %v3515 = vsel %vm3387, 1, 0
  %v3516 = vsel %vm3388, 1, 0
  %v3517 = vsel %vm3389, 1, 0
  %v3518 = vsel %vm3390, 1, 0
  %v3519 = vsel %vm3391, 1, 0
  %v3520 = vsel %vm3392, 1, 0
  %v3521 = vsel %vm3393, 1, 0
  %v3522 = vsel %vm3394, 1, 0
  %v3523 = vsel %vm3395, 1, 0
  %v3524 = vsel %vm3396, 1, 0
  %v3525 = vsel %vm3397, 1, 0
  %v3526 = vsel %vm3398, 1, 0
  %v3527 = vsel %vm3399, 1, 0
  %v3528 = vsel %vm3400, 1, 0
  %v3529 = vsel %vm3401, 1, 0
  %v3530 = vsel %vm3402, 1, 0
  %v3531 = vsel %vm3403, 1, 0
  %v3532 = vsel %vm3404, 1, 0
  %v3533 = vsel %vm3405, 1, 0
  %v3534 = vsel %vm3406, 1, 0
  %v3535 = vsel %vm3407, 1, 0
  %v3536 = vsel %vm3408, 1, 0
  %v3537 = vsel %vm3409, 1, 0
  %v3538 = vsel %vm3410, 1, 0
  %v3539 = vsel %vm3411, 1, 0
  %v3540 = vsel %vm3412, 1, 0
  %v3541 = vsel %vm3413, 1, 0
  %v3542 = vsel %vm3414, 1, 0
  %v3543 = vsel %vm3415, 1, 0
  %v3544 = vsel %vm3416, 1, 0
  %v3545 = vsel %vm3417, 1, 0
  %v3546 = vsel %vm3418, 1, 0
  %v3547 = vsel %vm3419, 1, 0
  %v3548 = vsel %vm3420, 1, 0
  %v3549 = vsel %vm3421, 1, 0
  %v3550 = vsel %vm3422, 1, 0
  %v3551 = vsel %vm3423, 1, 0
  %v3552 = vsel %vm3424, 1, 0
  %v3553 = vsel %vm3425, 1, 0
  %v3554 = vsel %vm3426, 1, 0
  %v3555 = vsel %vm3427, 1, 0
  %v3556 = vsel %vm3428, 1, 0
  %v3557 = vsel %vm3429, 1, 0
  %v3558 = vsel %vm3430, 1, 0
  %v3559 = vsel %vm3431, 1, 0
  %v3560 = vsel %vm3432, 1, 0
  %v3561 = vsel %vm3433, 1, 0
  %v3562 = vsel %vm3434, 1, 0
  %v3563 = vsel %vm3435, 1, 0
  %v3564 = vsel %vm3436, 1, 0
  %v3565 = vsel %vm3437, 1, 0
  %v3566 = vsel %vm3438, 1, 0
  %v3567 = vsel %vm3439, 1, 0
  %v3568 = vsel %vm3440, 1, 0
  %v3569 = vsel %vm3441, 1, 0
  %v3570 = vsel %vm3442, 1, 0
  %v3571 = vsel %vm3443, 1, 0
  %v3572 = vsel %vm3444, 1, 0
  %v3573 = vsel %vm3445, 1, 0
  %v3574 = vsel %vm3446, 1, 0
  %v3575 = vsel %vm3447, 1, 0
  %v3576 = vsel %vm3448, 1, 0
  %v3577 = vsel %vm3449, 1, 0
  %v3578 = vsel %vm3450, 1, 0
  %v3579 = vsel %vm3451, 1, 0
  %v3580 = vsel %vm3452, 1, 0
  %v3581 = vsel %vm3453, 1, 0
  %v3582 = vsel %vm3454, 1, 0
  %v3583 = vsel %vm3455, 1, 0
  %v3584 = vsel %vm3456, 1, 0
  %v3585 = vsel %vm3457, 1, 0
  %v3586 = vsel %vm3458, 1, 0
  %v3587 = vsel %vm3459, 1, 0
  %v3588 = vsel %vm3460, 1, 0
  %v3589 = vsel %vm3461, 1, 0
  %v3590 = vsel %vm3462, 1, 0
  %v3591 = vsel %vm3463, 1, 0
  %v3592 = vsel %vm3464, 1, 0
  %v3593 = vsel %vm3465, 1, 0
  %v3594 = vsel %vm3466, 1, 0
  %v3595 = vsel %vm3467, 1, 0
  %v3596 = vsel %vm3468, 1, 0
  %v3597 = vsel %vm3469, 1, 0
  %v3598 = vsel %vm3470, 1, 0
  %3599 = vset.pattern.permute.xlu0 0
  %3600 = vperm.xlu0 %3599, %v3471
  %v3601 = vpop.permute.xlu0 %3600
  %3602 = vset.pattern.permute.xlu0 0
  %3603 = vperm.xlu0 %3602, %v3472
  %v3604 = vpop.permute.xlu0 %3603
  %3605 = vset.pattern.permute.xlu0 0
  %3606 = vperm.xlu0 %3605, %v3473
  %v3607 = vpop.permute.xlu0 %3606
  %3608 = vset.pattern.permute.xlu0 0
  %3609 = vperm.xlu0 %3608, %v3474
  %v3610 = vpop.permute.xlu0 %3609
  %3611 = vset.pattern.permute.xlu0 0
  %3612 = vperm.xlu0 %3611, %v3475
  %v3613 = vpop.permute.xlu0 %3612
  %3614 = vset.pattern.permute.xlu0 0
  %3615 = vperm.xlu0 %3614, %v3476
  %v3616 = vpop.permute.xlu0 %3615
  %3617 = vset.pattern.permute.xlu0 0
  %3618 = vperm.xlu0 %3617, %v3477
  %v3619 = vpop.permute.xlu0 %3618
  %3620 = vset.pattern.permute.xlu0 0
  %3621 = vperm.xlu0 %3620, %v3478
  %v3622 = vpop.permute.xlu0 %3621
  %3623 = vset.pattern.permute.xlu0 0
  %3624 = vperm.xlu0 %3623, %v3479
  %v3625 = vpop.permute.xlu0 %3624
  %3626 = vset.pattern.permute.xlu0 0
  %3627 = vperm.xlu0 %3626, %v3480
  %v3628 = vpop.permute.xlu0 %3627
  %3629 = vset.pattern.permute.xlu0 0
  %3630 = vperm.xlu0 %3629, %v3481
  %v3631 = vpop.permute.xlu0 %3630
  %3632 = vset.pattern.permute.xlu0 0
  %3633 = vperm.xlu0 %3632, %v3482
  %v3634 = vpop.permute.xlu0 %3633
  %3635 = vset.pattern.permute.xlu0 0
  %3636 = vperm.xlu0 %3635, %v3483
  %v3637 = vpop.permute.xlu0 %3636
  %3638 = vset.pattern.permute.xlu0 0
  %3639 = vperm.xlu0 %3638, %v3484
  %v3640 = vpop.permute.xlu0 %3639
  %3641 = vset.pattern.permute.xlu0 0
  %3642 = vperm.xlu0 %3641, %v3485
  %v3643 = vpop.permute.xlu0 %3642
  %3644 = vset.pattern.permute.xlu0 0
  %3645 = vperm.xlu0 %3644, %v3486
  %v3646 = vpop.permute.xlu0 %3645
  %3647 = vset.pattern.permute.xlu0 0
  %3648 = vperm.xlu0 %3647, %v3487
  %v3649 = vpop.permute.xlu0 %3648
  %3650 = vset.pattern.permute.xlu0 0
  %3651 = vperm.xlu0 %3650, %v3488
  %v3652 = vpop.permute.xlu0 %3651
  %3653 = vset.pattern.permute.xlu0 0
  %3654 = vperm.xlu0 %3653, %v3489
  %v3655 = vpop.permute.xlu0 %3654
  %3656 = vset.pattern.permute.xlu0 0
  %3657 = vperm.xlu0 %3656, %v3490
  %v3658 = vpop.permute.xlu0 %3657
  %3659 = vset.pattern.permute.xlu0 0
  %3660 = vperm.xlu0 %3659, %v3491
  %v3661 = vpop.permute.xlu0 %3660
  %3662 = vset.pattern.permute.xlu0 0
  %3663 = vperm.xlu0 %3662, %v3492
  %v3664 = vpop.permute.xlu0 %3663
  %3665 = vset.pattern.permute.xlu0 0
  %3666 = vperm.xlu0 %3665, %v3493
  %v3667 = vpop.permute.xlu0 %3666
  %3668 = vset.pattern.permute.xlu0 0
  %3669 = vperm.xlu0 %3668, %v3494
  %v3670 = vpop.permute.xlu0 %3669
  %3671 = vset.pattern.permute.xlu0 0
  %3672 = vperm.xlu0 %3671, %v3495
  %v3673 = vpop.permute.xlu0 %3672
  %3674 = vset.pattern.permute.xlu0 0
  %3675 = vperm.xlu0 %3674, %v3496
  %v3676 = vpop.permute.xlu0 %3675
  %3677 = vset.pattern.permute.xlu0 0
  %3678 = vperm.xlu0 %3677, %v3497
  %v3679 = vpop.permute.xlu0 %3678
  %3680 = vset.pattern.permute.xlu0 0
  %3681 = vperm.xlu0 %3680, %v3498
  %v3682 = vpop.permute.xlu0 %3681
  %3683 = vset.pattern.permute.xlu0 0
  %3684 = vperm.xlu0 %3683, %v3499
  %v3685 = vpop.permute.xlu0 %3684
  %3686 = vset.pattern.permute.xlu0 0
  %3687 = vperm.xlu0 %3686, %v3500
  %v3688 = vpop.permute.xlu0 %3687
  %3689 = vset.pattern.permute.xlu0 0
  %3690 = vperm.xlu0 %3689, %v3501
  %v3691 = vpop.permute.xlu0 %3690
  %3692 = vset.pattern.permute.xlu0 0
  %3693 = vperm.xlu0 %3692, %v3502
  %v3694 = vpop.permute.xlu0 %3693
  %3695 = vset.pattern.permute.xlu0 0
  %3696 = vperm.xlu0 %3695, %v3503
  %v3697 = vpop.permute.xlu0 %3696
  %3698 = vset.pattern.permute.xlu0 0
  %3699 = vperm.xlu0 %3698, %v3504
  %v3700 = vpop.permute.xlu0 %3699
  %3701 = vset.pattern.permute.xlu0 0
  %3702 = vperm.xlu0 %3701, %v3505
  %v3703 = vpop.permute.xlu0 %3702
  %3704 = vset.pattern.permute.xlu0 0
  %3705 = vperm.xlu0 %3704, %v3506
  %v3706 = vpop.permute.xlu0 %3705
  %3707 = vset.pattern.permute.xlu0 0
  %3708 = vperm.xlu0 %3707, %v3507
  %v3709 = vpop.permute.xlu0 %3708
  %3710 = vset.pattern.permute.xlu0 0
  %3711 = vperm.xlu0 %3710, %v3508
  %v3712 = vpop.permute.xlu0 %3711
  %3713 = vset.pattern.permute.xlu0 0
  %3714 = vperm.xlu0 %3713, %v3509
  %v3715 = vpop.permute.xlu0 %3714
  %3716 = vset.pattern.permute.xlu0 0
  %3717 = vperm.xlu0 %3716, %v3510
  %v3718 = vpop.permute.xlu0 %3717
  %3719 = vset.pattern.permute.xlu0 0
  %3720 = vperm.xlu0 %3719, %v3511
  %v3721 = vpop.permute.xlu0 %3720
  %3722 = vset.pattern.permute.xlu0 0
  %3723 = vperm.xlu0 %3722, %v3512
  %v3724 = vpop.permute.xlu0 %3723
  %3725 = vset.pattern.permute.xlu0 0
  %3726 = vperm.xlu0 %3725, %v3513
  %v3727 = vpop.permute.xlu0 %3726
  %3728 = vset.pattern.permute.xlu0 0
  %3729 = vperm.xlu0 %3728, %v3514
  %v3730 = vpop.permute.xlu0 %3729
  %3731 = vset.pattern.permute.xlu0 0
  %3732 = vperm.xlu0 %3731, %v3515
  %v3733 = vpop.permute.xlu0 %3732
  %3734 = vset.pattern.permute.xlu0 0
  %3735 = vperm.xlu0 %3734, %v3516
  %v3736 = vpop.permute.xlu0 %3735
  %3737 = vset.pattern.permute.xlu0 0
  %3738 = vperm.xlu0 %3737, %v3517
  %v3739 = vpop.permute.xlu0 %3738
  %3740 = vset.pattern.permute.xlu0 0
  %3741 = vperm.xlu0 %3740, %v3518
  %v3742 = vpop.permute.xlu0 %3741
  %3743 = vset.pattern.permute.xlu0 0
  %3744 = vperm.xlu0 %3743, %v3519
  %v3745 = vpop.permute.xlu0 %3744
  %3746 = vset.pattern.permute.xlu0 0
  %3747 = vperm.xlu0 %3746, %v3520
  %v3748 = vpop.permute.xlu0 %3747
  %3749 = vset.pattern.permute.xlu0 0
  %3750 = vperm.xlu0 %3749, %v3521
  %v3751 = vpop.permute.xlu0 %3750
  %3752 = vset.pattern.permute.xlu0 0
  %3753 = vperm.xlu0 %3752, %v3522
  %v3754 = vpop.permute.xlu0 %3753
  %3755 = vset.pattern.permute.xlu0 0
  %3756 = vperm.xlu0 %3755, %v3523
  %v3757 = vpop.permute.xlu0 %3756
  %3758 = vset.pattern.permute.xlu0 0
  %3759 = vperm.xlu0 %3758, %v3524
  %v3760 = vpop.permute.xlu0 %3759
  %3761 = vset.pattern.permute.xlu0 0
  %3762 = vperm.xlu0 %3761, %v3525
  %v3763 = vpop.permute.xlu0 %3762
  %3764 = vset.pattern.permute.xlu0 0
  %3765 = vperm.xlu0 %3764, %v3526
  %v3766 = vpop.permute.xlu0 %3765
  %3767 = vset.pattern.permute.xlu0 0
  %3768 = vperm.xlu0 %3767, %v3527
  %v3769 = vpop.permute.xlu0 %3768
  %3770 = vset.pattern.permute.xlu0 0
  %3771 = vperm.xlu0 %3770, %v3528
  %v3772 = vpop.permute.xlu0 %3771
  %3773 = vset.pattern.permute.xlu0 0
  %3774 = vperm.xlu0 %3773, %v3529
  %v3775 = vpop.permute.xlu0 %3774
  %3776 = vset.pattern.permute.xlu0 0
  %3777 = vperm.xlu0 %3776, %v3530
  %v3778 = vpop.permute.xlu0 %3777
  %3779 = vset.pattern.permute.xlu0 0
  %3780 = vperm.xlu0 %3779, %v3531
  %v3781 = vpop.permute.xlu0 %3780
  %3782 = vset.pattern.permute.xlu0 0
  %3783 = vperm.xlu0 %3782, %v3532
  %v3784 = vpop.permute.xlu0 %3783
  %3785 = vset.pattern.permute.xlu0 0
  %3786 = vperm.xlu0 %3785, %v3533
  %v3787 = vpop.permute.xlu0 %3786
  %3788 = vset.pattern.permute.xlu0 0
  %3789 = vperm.xlu0 %3788, %v3534
  %v3790 = vpop.permute.xlu0 %3789
  %3791 = vset.pattern.permute.xlu0 0
  %3792 = vperm.xlu0 %3791, %v3535
  %v3793 = vpop.permute.xlu0 %3792
  %3794 = vset.pattern.permute.xlu0 0
  %3795 = vperm.xlu0 %3794, %v3536
  %v3796 = vpop.permute.xlu0 %3795
  %3797 = vset.pattern.permute.xlu0 0
  %3798 = vperm.xlu0 %3797, %v3537
  %v3799 = vpop.permute.xlu0 %3798
  %3800 = vset.pattern.permute.xlu0 0
  %3801 = vperm.xlu0 %3800, %v3538
  %v3802 = vpop.permute.xlu0 %3801
  %3803 = vset.pattern.permute.xlu0 0
  %3804 = vperm.xlu0 %3803, %v3539
  %v3805 = vpop.permute.xlu0 %3804
  %3806 = vset.pattern.permute.xlu0 0
  %3807 = vperm.xlu0 %3806, %v3540
  %v3808 = vpop.permute.xlu0 %3807
  %3809 = vset.pattern.permute.xlu0 0
  %3810 = vperm.xlu0 %3809, %v3541
  %v3811 = vpop.permute.xlu0 %3810
  %3812 = vset.pattern.permute.xlu0 0
  %3813 = vperm.xlu0 %3812, %v3542
  %v3814 = vpop.permute.xlu0 %3813
  %3815 = vset.pattern.permute.xlu0 0
  %3816 = vperm.xlu0 %3815, %v3543
  %v3817 = vpop.permute.xlu0 %3816
  %3818 = vset.pattern.permute.xlu0 0
  %3819 = vperm.xlu0 %3818, %v3544
  %v3820 = vpop.permute.xlu0 %3819
  %3821 = vset.pattern.permute.xlu0 0
  %3822 = vperm.xlu0 %3821, %v3545
  %v3823 = vpop.permute.xlu0 %3822
  %3824 = vset.pattern.permute.xlu0 0
  %3825 = vperm.xlu0 %3824, %v3546
  %v3826 = vpop.permute.xlu0 %3825
  %3827 = vset.pattern.permute.xlu0 0
  %3828 = vperm.xlu0 %3827, %v3547
  %v3829 = vpop.permute.xlu0 %3828
  %3830 = vset.pattern.permute.xlu0 0
  %3831 = vperm.xlu0 %3830, %v3548
  %v3832 = vpop.permute.xlu0 %3831
  %3833 = vset.pattern.permute.xlu0 0
  %3834 = vperm.xlu0 %3833, %v3549
  %v3835 = vpop.permute.xlu0 %3834
  %3836 = vset.pattern.permute.xlu0 0
  %3837 = vperm.xlu0 %3836, %v3550
  %v3838 = vpop.permute.xlu0 %3837
  %3839 = vset.pattern.permute.xlu0 0
  %3840 = vperm.xlu0 %3839, %v3551
  %v3841 = vpop.permute.xlu0 %3840
  %3842 = vset.pattern.permute.xlu0 0
  %3843 = vperm.xlu0 %3842, %v3552
  %v3844 = vpop.permute.xlu0 %3843
  %3845 = vset.pattern.permute.xlu0 0
  %3846 = vperm.xlu0 %3845, %v3553
  %v3847 = vpop.permute.xlu0 %3846
  %3848 = vset.pattern.permute.xlu0 0
  %3849 = vperm.xlu0 %3848, %v3554
  %v3850 = vpop.permute.xlu0 %3849
  %3851 = vset.pattern.permute.xlu0 0
  %3852 = vperm.xlu0 %3851, %v3555
  %v3853 = vpop.permute.xlu0 %3852
  %3854 = vset.pattern.permute.xlu0 0
  %3855 = vperm.xlu0 %3854, %v3556
  %v3856 = vpop.permute.xlu0 %3855
  %3857 = vset.pattern.permute.xlu0 0
  %3858 = vperm.xlu0 %3857, %v3557
  %v3859 = vpop.permute.xlu0 %3858
  %3860 = vset.pattern.permute.xlu0 0
  %3861 = vperm.xlu0 %3860, %v3558
  %v3862 = vpop.permute.xlu0 %3861
  %3863 = vset.pattern.permute.xlu0 0
  %3864 = vperm.xlu0 %3863, %v3559
  %v3865 = vpop.permute.xlu0 %3864
  %3866 = vset.pattern.permute.xlu0 0
  %3867 = vperm.xlu0 %3866, %v3560
  %v3868 = vpop.permute.xlu0 %3867
  %3869 = vset.pattern.permute.xlu0 0
  %3870 = vperm.xlu0 %3869, %v3561
  %v3871 = vpop.permute.xlu0 %3870
  %3872 = vset.pattern.permute.xlu0 0
  %3873 = vperm.xlu0 %3872, %v3562
  %v3874 = vpop.permute.xlu0 %3873
  %3875 = vset.pattern.permute.xlu0 0
  %3876 = vperm.xlu0 %3875, %v3563
  %v3877 = vpop.permute.xlu0 %3876
  %3878 = vset.pattern.permute.xlu0 0
  %3879 = vperm.xlu0 %3878, %v3564
  %v3880 = vpop.permute.xlu0 %3879
  %3881 = vset.pattern.permute.xlu0 0
  %3882 = vperm.xlu0 %3881, %v3565
  %v3883 = vpop.permute.xlu0 %3882
  %3884 = vset.pattern.permute.xlu0 0
  %3885 = vperm.xlu0 %3884, %v3566
  %v3886 = vpop.permute.xlu0 %3885
  %3887 = vset.pattern.permute.xlu0 0
  %3888 = vperm.xlu0 %3887, %v3567
  %v3889 = vpop.permute.xlu0 %3888
  %3890 = vset.pattern.permute.xlu0 0
  %3891 = vperm.xlu0 %3890, %v3568
  %v3892 = vpop.permute.xlu0 %3891
  %3893 = vset.pattern.permute.xlu0 0
  %3894 = vperm.xlu0 %3893, %v3569
  %v3895 = vpop.permute.xlu0 %3894
  %3896 = vset.pattern.permute.xlu0 0
  %3897 = vperm.xlu0 %3896, %v3570
  %v3898 = vpop.permute.xlu0 %3897
  %3899 = vset.pattern.permute.xlu0 0
  %3900 = vperm.xlu0 %3899, %v3571
  %v3901 = vpop.permute.xlu0 %3900
  %3902 = vset.pattern.permute.xlu0 0
  %3903 = vperm.xlu0 %3902, %v3572
  %v3904 = vpop.permute.xlu0 %3903
  %3905 = vset.pattern.permute.xlu0 0
  %3906 = vperm.xlu0 %3905, %v3573
  %v3907 = vpop.permute.xlu0 %3906
  %3908 = vset.pattern.permute.xlu0 0
  %3909 = vperm.xlu0 %3908, %v3574
  %v3910 = vpop.permute.xlu0 %3909
  %3911 = vset.pattern.permute.xlu0 0
  %3912 = vperm.xlu0 %3911, %v3575
  %v3913 = vpop.permute.xlu0 %3912
  %3914 = vset.pattern.permute.xlu0 0
  %3915 = vperm.xlu0 %3914, %v3576
  %v3916 = vpop.permute.xlu0 %3915
  %3917 = vset.pattern.permute.xlu0 0
  %3918 = vperm.xlu0 %3917, %v3577
  %v3919 = vpop.permute.xlu0 %3918
  %3920 = vset.pattern.permute.xlu0 0
  %3921 = vperm.xlu0 %3920, %v3578
  %v3922 = vpop.permute.xlu0 %3921
  %3923 = vset.pattern.permute.xlu0 0
  %3924 = vperm.xlu0 %3923, %v3579
  %v3925 = vpop.permute.xlu0 %3924
  %3926 = vset.pattern.permute.xlu0 0
  %3927 = vperm.xlu0 %3926, %v3580
  %v3928 = vpop.permute.xlu0 %3927
  %3929 = vset.pattern.permute.xlu0 0
  %3930 = vperm.xlu0 %3929, %v3581
  %v3931 = vpop.permute.xlu0 %3930
  %3932 = vset.pattern.permute.xlu0 0
  %3933 = vperm.xlu0 %3932, %v3582
  %v3934 = vpop.permute.xlu0 %3933
  %3935 = vset.pattern.permute.xlu0 0
  %3936 = vperm.xlu0 %3935, %v3583
  %v3937 = vpop.permute.xlu0 %3936
  %3938 = vset.pattern.permute.xlu0 0
  %3939 = vperm.xlu0 %3938, %v3584
  %v3940 = vpop.permute.xlu0 %3939
  %3941 = vset.pattern.permute.xlu0 0
  %3942 = vperm.xlu0 %3941, %v3585
  %v3943 = vpop.permute.xlu0 %3942
  %3944 = vset.pattern.permute.xlu0 0
  %3945 = vperm.xlu0 %3944, %v3586
  %v3946 = vpop.permute.xlu0 %3945
  %3947 = vset.pattern.permute.xlu0 0
  %3948 = vperm.xlu0 %3947, %v3587
  %v3949 = vpop.permute.xlu0 %3948
  %3950 = vset.pattern.permute.xlu0 0
  %3951 = vperm.xlu0 %3950, %v3588
  %v3952 = vpop.permute.xlu0 %3951
  %3953 = vset.pattern.permute.xlu0 0
  %3954 = vperm.xlu0 %3953, %v3589
  %v3955 = vpop.permute.xlu0 %3954
  %3956 = vset.pattern.permute.xlu0 0
  %3957 = vperm.xlu0 %3956, %v3590
  %v3958 = vpop.permute.xlu0 %3957
  %3959 = vset.pattern.permute.xlu0 0
  %3960 = vperm.xlu0 %3959, %v3591
  %v3961 = vpop.permute.xlu0 %3960
  %3962 = vset.pattern.permute.xlu0 0
  %3963 = vperm.xlu0 %3962, %v3592
  %v3964 = vpop.permute.xlu0 %3963
  %3965 = vset.pattern.permute.xlu0 0
  %3966 = vperm.xlu0 %3965, %v3593
  %v3967 = vpop.permute.xlu0 %3966
  %3968 = vset.pattern.permute.xlu0 0
  %3969 = vperm.xlu0 %3968, %v3594
  %v3970 = vpop.permute.xlu0 %3969
  %3971 = vset.pattern.permute.xlu0 0
  %3972 = vperm.xlu0 %3971, %v3595
  %v3973 = vpop.permute.xlu0 %3972
  %3974 = vset.pattern.permute.xlu0 0
  %3975 = vperm.xlu0 %3974, %v3596
  %v3976 = vpop.permute.xlu0 %3975
  %3977 = vset.pattern.permute.xlu0 0
  %3978 = vperm.xlu0 %3977, %v3597
  %v3979 = vpop.permute.xlu0 %3978
  %3980 = vset.pattern.permute.xlu0 0
  %3981 = vperm.xlu0 %3980, %v3598
  %v3982 = vpop.permute.xlu0 %3981
  %vm3983 = vcmp.eq.s32.totalorder %v3601, 1
  %vm3984 = vcmp.eq.s32.totalorder %v3604, 1
  %vm3985 = vcmp.eq.s32.totalorder %v3607, 1
  %vm3986 = vcmp.eq.s32.totalorder %v3610, 1
  %vm3987 = vcmp.eq.s32.totalorder %v3613, 1
  %vm3988 = vcmp.eq.s32.totalorder %v3616, 1
  %vm3989 = vcmp.eq.s32.totalorder %v3619, 1
  %vm3990 = vcmp.eq.s32.totalorder %v3622, 1
  %vm3991 = vcmp.eq.s32.totalorder %v3625, 1
  %vm3992 = vcmp.eq.s32.totalorder %v3628, 1
  %vm3993 = vcmp.eq.s32.totalorder %v3631, 1
  %vm3994 = vcmp.eq.s32.totalorder %v3634, 1
  %vm3995 = vcmp.eq.s32.totalorder %v3637, 1
  %vm3996 = vcmp.eq.s32.totalorder %v3640, 1
  %vm3997 = vcmp.eq.s32.totalorder %v3643, 1
  %vm3998 = vcmp.eq.s32.totalorder %v3646, 1
  %vm3999 = vcmp.eq.s32.totalorder %v3649, 1
  %vm4000 = vcmp.eq.s32.totalorder %v3652, 1
  %vm4001 = vcmp.eq.s32.totalorder %v3655, 1
  %vm4002 = vcmp.eq.s32.totalorder %v3658, 1
  %vm4003 = vcmp.eq.s32.totalorder %v3661, 1
  %vm4004 = vcmp.eq.s32.totalorder %v3664, 1
  %vm4005 = vcmp.eq.s32.totalorder %v3667, 1
  %vm4006 = vcmp.eq.s32.totalorder %v3670, 1
  %vm4007 = vcmp.eq.s32.totalorder %v3673, 1
  %vm4008 = vcmp.eq.s32.totalorder %v3676, 1
  %vm4009 = vcmp.eq.s32.totalorder %v3679, 1
  %vm4010 = vcmp.eq.s32.totalorder %v3682, 1
  %vm4011 = vcmp.eq.s32.totalorder %v3685, 1
  %vm4012 = vcmp.eq.s32.totalorder %v3688, 1
  %vm4013 = vcmp.eq.s32.totalorder %v3691, 1
  %vm4014 = vcmp.eq.s32.totalorder %v3694, 1
  %vm4015 = vcmp.eq.s32.totalorder %v3697, 1
  %vm4016 = vcmp.eq.s32.totalorder %v3700, 1
  %vm4017 = vcmp.eq.s32.totalorder %v3703, 1
  %vm4018 = vcmp.eq.s32.totalorder %v3706, 1
  %vm4019 = vcmp.eq.s32.totalorder %v3709, 1
  %vm4020 = vcmp.eq.s32.totalorder %v3712, 1
  %vm4021 = vcmp.eq.s32.totalorder %v3715, 1
  %vm4022 = vcmp.eq.s32.totalorder %v3718, 1
  %vm4023 = vcmp.eq.s32.totalorder %v3721, 1
  %vm4024 = vcmp.eq.s32.totalorder %v3724, 1
  %vm4025 = vcmp.eq.s32.totalorder %v3727, 1
  %vm4026 = vcmp.eq.s32.totalorder %v3730, 1
  %vm4027 = vcmp.eq.s32.totalorder %v3733, 1
  %vm4028 = vcmp.eq.s32.totalorder %v3736, 1
  %vm4029 = vcmp.eq.s32.totalorder %v3739, 1
  %vm4030 = vcmp.eq.s32.totalorder %v3742, 1
  %vm4031 = vcmp.eq.s32.totalorder %v3745, 1
  %vm4032 = vcmp.eq.s32.totalorder %v3748, 1
  %vm4033 = vcmp.eq.s32.totalorder %v3751, 1
  %vm4034 = vcmp.eq.s32.totalorder %v3754, 1
  %vm4035 = vcmp.eq.s32.totalorder %v3757, 1
  %vm4036 = vcmp.eq.s32.totalorder %v3760, 1
  %vm4037 = vcmp.eq.s32.totalorder %v3763, 1
  %vm4038 = vcmp.eq.s32.totalorder %v3766, 1
  %vm4039 = vcmp.eq.s32.totalorder %v3769, 1
  %vm4040 = vcmp.eq.s32.totalorder %v3772, 1
  %vm4041 = vcmp.eq.s32.totalorder %v3775, 1
  %vm4042 = vcmp.eq.s32.totalorder %v3778, 1
  %vm4043 = vcmp.eq.s32.totalorder %v3781, 1
  %vm4044 = vcmp.eq.s32.totalorder %v3784, 1
  %vm4045 = vcmp.eq.s32.totalorder %v3787, 1
  %vm4046 = vcmp.eq.s32.totalorder %v3790, 1
  %vm4047 = vcmp.eq.s32.totalorder %v3793, 1
  %vm4048 = vcmp.eq.s32.totalorder %v3796, 1
  %vm4049 = vcmp.eq.s32.totalorder %v3799, 1
  %vm4050 = vcmp.eq.s32.totalorder %v3802, 1
  %vm4051 = vcmp.eq.s32.totalorder %v3805, 1
  %vm4052 = vcmp.eq.s32.totalorder %v3808, 1
  %vm4053 = vcmp.eq.s32.totalorder %v3811, 1
  %vm4054 = vcmp.eq.s32.totalorder %v3814, 1
  %vm4055 = vcmp.eq.s32.totalorder %v3817, 1
  %vm4056 = vcmp.eq.s32.totalorder %v3820, 1
  %vm4057 = vcmp.eq.s32.totalorder %v3823, 1
  %vm4058 = vcmp.eq.s32.totalorder %v3826, 1
  %vm4059 = vcmp.eq.s32.totalorder %v3829, 1
  %vm4060 = vcmp.eq.s32.totalorder %v3832, 1
  %vm4061 = vcmp.eq.s32.totalorder %v3835, 1
  %vm4062 = vcmp.eq.s32.totalorder %v3838, 1
  %vm4063 = vcmp.eq.s32.totalorder %v3841, 1
  %vm4064 = vcmp.eq.s32.totalorder %v3844, 1
  %vm4065 = vcmp.eq.s32.totalorder %v3847, 1
  %vm4066 = vcmp.eq.s32.totalorder %v3850, 1
  %vm4067 = vcmp.eq.s32.totalorder %v3853, 1
  %vm4068 = vcmp.eq.s32.totalorder %v3856, 1
  %vm4069 = vcmp.eq.s32.totalorder %v3859, 1
  %vm4070 = vcmp.eq.s32.totalorder %v3862, 1
  %vm4071 = vcmp.eq.s32.totalorder %v3865, 1
  %vm4072 = vcmp.eq.s32.totalorder %v3868, 1
  %vm4073 = vcmp.eq.s32.totalorder %v3871, 1
  %vm4074 = vcmp.eq.s32.totalorder %v3874, 1
  %vm4075 = vcmp.eq.s32.totalorder %v3877, 1
  %vm4076 = vcmp.eq.s32.totalorder %v3880, 1
  %vm4077 = vcmp.eq.s32.totalorder %v3883, 1
  %vm4078 = vcmp.eq.s32.totalorder %v3886, 1
  %vm4079 = vcmp.eq.s32.totalorder %v3889, 1
  %vm4080 = vcmp.eq.s32.totalorder %v3892, 1
  %vm4081 = vcmp.eq.s32.totalorder %v3895, 1
  %vm4082 = vcmp.eq.s32.totalorder %v3898, 1
  %vm4083 = vcmp.eq.s32.totalorder %v3901, 1
  %vm4084 = vcmp.eq.s32.totalorder %v3904, 1
  %vm4085 = vcmp.eq.s32.totalorder %v3907, 1
  %vm4086 = vcmp.eq.s32.totalorder %v3910, 1
  %vm4087 = vcmp.eq.s32.totalorder %v3913, 1
  %vm4088 = vcmp.eq.s32.totalorder %v3916, 1
  %vm4089 = vcmp.eq.s32.totalorder %v3919, 1
  %vm4090 = vcmp.eq.s32.totalorder %v3922, 1
  %vm4091 = vcmp.eq.s32.totalorder %v3925, 1
  %vm4092 = vcmp.eq.s32.totalorder %v3928, 1
  %vm4093 = vcmp.eq.s32.totalorder %v3931, 1
  %vm4094 = vcmp.eq.s32.totalorder %v3934, 1
  %vm4095 = vcmp.eq.s32.totalorder %v3937, 1
  %vm4096 = vcmp.eq.s32.totalorder %v3940, 1
  %vm4097 = vcmp.eq.s32.totalorder %v3943, 1
  %vm4098 = vcmp.eq.s32.totalorder %v3946, 1
  %vm4099 = vcmp.eq.s32.totalorder %v3949, 1
  %vm4100 = vcmp.eq.s32.totalorder %v3952, 1
  %vm4101 = vcmp.eq.s32.totalorder %v3955, 1
  %vm4102 = vcmp.eq.s32.totalorder %v3958, 1
  %vm4103 = vcmp.eq.s32.totalorder %v3961, 1
  %vm4104 = vcmp.eq.s32.totalorder %v3964, 1
  %vm4105 = vcmp.eq.s32.totalorder %v3967, 1
  %vm4106 = vcmp.eq.s32.totalorder %v3970, 1
  %vm4107 = vcmp.eq.s32.totalorder %v3973, 1
  %vm4108 = vcmp.eq.s32.totalorder %v3976, 1
  %vm4109 = vcmp.eq.s32.totalorder %v3979, 1
  %vm4110 = vcmp.eq.s32.totalorder %v3982, 1
  %vm4111 = vmpackc.low %vm3983, %vm3983
  %vm4112 = vmpackc.low %vm3984, %vm3984
  %vm4113 = vmpackc.low %vm3985, %vm3985
  %vm4114 = vmpackc.low %vm3986, %vm3986
  %vm4115 = vmpackc.low %vm3987, %vm3987
  %vm4116 = vmpackc.low %vm3988, %vm3988
  %vm4117 = vmpackc.low %vm3989, %vm3989
  %vm4118 = vmpackc.low %vm3990, %vm3990
  %vm4119 = vmpackc.low %vm3991, %vm3991
  %vm4120 = vmpackc.low %vm3992, %vm3992
  %vm4121 = vmpackc.low %vm3993, %vm3993
  %vm4122 = vmpackc.low %vm3994, %vm3994
  %vm4123 = vmpackc.low %vm3995, %vm3995
  %vm4124 = vmpackc.low %vm3996, %vm3996
  %vm4125 = vmpackc.low %vm3997, %vm3997
  %vm4126 = vmpackc.low %vm3998, %vm3998
  %vm4127 = vmpackc.low %vm3999, %vm3999
  %vm4128 = vmpackc.low %vm4000, %vm4000
  %vm4129 = vmpackc.low %vm4001, %vm4001
  %vm4130 = vmpackc.low %vm4002, %vm4002
  %vm4131 = vmpackc.low %vm4003, %vm4003
  %vm4132 = vmpackc.low %vm4004, %vm4004
  %vm4133 = vmpackc.low %vm4005, %vm4005
  %vm4134 = vmpackc.low %vm4006, %vm4006
  %vm4135 = vmpackc.low %vm4007, %vm4007
  %vm4136 = vmpackc.low %vm4008, %vm4008
  %vm4137 = vmpackc.low %vm4009, %vm4009
  %vm4138 = vmpackc.low %vm4010, %vm4010
  %vm4139 = vmpackc.low %vm4011, %vm4011
  %vm4140 = vmpackc.low %vm4012, %vm4012
  %vm4141 = vmpackc.low %vm4013, %vm4013
  %vm4142 = vmpackc.low %vm4014, %vm4014
  %vm4143 = vmpackc.low %vm4015, %vm4015
  %vm4144 = vmpackc.low %vm4016, %vm4016
  %vm4145 = vmpackc.low %vm4017, %vm4017
  %vm4146 = vmpackc.low %vm4018, %vm4018
  %vm4147 = vmpackc.low %vm4019, %vm4019
  %vm4148 = vmpackc.low %vm4020, %vm4020
  %vm4149 = vmpackc.low %vm4021, %vm4021
  %vm4150 = vmpackc.low %vm4022, %vm4022
  %vm4151 = vmpackc.low %vm4023, %vm4023
  %vm4152 = vmpackc.low %vm4024, %vm4024
  %vm4153 = vmpackc.low %vm4025, %vm4025
  %vm4154 = vmpackc.low %vm4026, %vm4026
  %vm4155 = vmpackc.low %vm4027, %vm4027
  %vm4156 = vmpackc.low %vm4028, %vm4028
  %vm4157 = vmpackc.low %vm4029, %vm4029
  %vm4158 = vmpackc.low %vm4030, %vm4030
  %vm4159 = vmpackc.low %vm4031, %vm4031
  %vm4160 = vmpackc.low %vm4032, %vm4032
  %vm4161 = vmpackc.low %vm4033, %vm4033
  %vm4162 = vmpackc.low %vm4034, %vm4034
  %vm4163 = vmpackc.low %vm4035, %vm4035
  %vm4164 = vmpackc.low %vm4036, %vm4036
  %vm4165 = vmpackc.low %vm4037, %vm4037
  %vm4166 = vmpackc.low %vm4038, %vm4038
  %vm4167 = vmpackc.low %vm4039, %vm4039
  %vm4168 = vmpackc.low %vm4040, %vm4040
  %vm4169 = vmpackc.low %vm4041, %vm4041
  %vm4170 = vmpackc.low %vm4042, %vm4042
  %vm4171 = vmpackc.low %vm4043, %vm4043
  %vm4172 = vmpackc.low %vm4044, %vm4044
  %vm4173 = vmpackc.low %vm4045, %vm4045
  %vm4174 = vmpackc.low %vm4046, %vm4046
  %vm4175 = vmpackc.low %vm4047, %vm4047
  %vm4176 = vmpackc.low %vm4048, %vm4048
  %vm4177 = vmpackc.low %vm4049, %vm4049
  %vm4178 = vmpackc.low %vm4050, %vm4050
  %vm4179 = vmpackc.low %vm4051, %vm4051
  %vm4180 = vmpackc.low %vm4052, %vm4052
  %vm4181 = vmpackc.low %vm4053, %vm4053
  %vm4182 = vmpackc.low %vm4054, %vm4054
  %vm4183 = vmpackc.low %vm4055, %vm4055
  %vm4184 = vmpackc.low %vm4056, %vm4056
  %vm4185 = vmpackc.low %vm4057, %vm4057
  %vm4186 = vmpackc.low %vm4058, %vm4058
  %vm4187 = vmpackc.low %vm4059, %vm4059
  %vm4188 = vmpackc.low %vm4060, %vm4060
  %vm4189 = vmpackc.low %vm4061, %vm4061
  %vm4190 = vmpackc.low %vm4062, %vm4062
  %vm4191 = vmpackc.low %vm4063, %vm4063
  %vm4192 = vmpackc.low %vm4064, %vm4064
  %vm4193 = vmpackc.low %vm4065, %vm4065
  %vm4194 = vmpackc.low %vm4066, %vm4066
  %vm4195 = vmpackc.low %vm4067, %vm4067
  %vm4196 = vmpackc.low %vm4068, %vm4068
  %vm4197 = vmpackc.low %vm4069, %vm4069
  %vm4198 = vmpackc.low %vm4070, %vm4070
  %vm4199 = vmpackc.low %vm4071, %vm4071
  %vm4200 = vmpackc.low %vm4072, %vm4072
  %vm4201 = vmpackc.low %vm4073, %vm4073
  %vm4202 = vmpackc.low %vm4074, %vm4074
  %vm4203 = vmpackc.low %vm4075, %vm4075
  %vm4204 = vmpackc.low %vm4076, %vm4076
  %vm4205 = vmpackc.low %vm4077, %vm4077
  %vm4206 = vmpackc.low %vm4078, %vm4078
  %vm4207 = vmpackc.low %vm4079, %vm4079
  %vm4208 = vmpackc.low %vm4080, %vm4080
  %vm4209 = vmpackc.low %vm4081, %vm4081
  %vm4210 = vmpackc.low %vm4082, %vm4082
  %vm4211 = vmpackc.low %vm4083, %vm4083
  %vm4212 = vmpackc.low %vm4084, %vm4084
  %vm4213 = vmpackc.low %vm4085, %vm4085
  %vm4214 = vmpackc.low %vm4086, %vm4086
  %vm4215 = vmpackc.low %vm4087, %vm4087
  %vm4216 = vmpackc.low %vm4088, %vm4088
  %vm4217 = vmpackc.low %vm4089, %vm4089
  %vm4218 = vmpackc.low %vm4090, %vm4090
  %vm4219 = vmpackc.low %vm4091, %vm4091
  %vm4220 = vmpackc.low %vm4092, %vm4092
  %vm4221 = vmpackc.low %vm4093, %vm4093
  %vm4222 = vmpackc.low %vm4094, %vm4094
  %vm4223 = vmpackc.low %vm4095, %vm4095
  %vm4224 = vmpackc.low %vm4096, %vm4096
  %vm4225 = vmpackc.low %vm4097, %vm4097
  %vm4226 = vmpackc.low %vm4098, %vm4098
  %vm4227 = vmpackc.low %vm4099, %vm4099
  %vm4228 = vmpackc.low %vm4100, %vm4100
  %vm4229 = vmpackc.low %vm4101, %vm4101
  %vm4230 = vmpackc.low %vm4102, %vm4102
  %vm4231 = vmpackc.low %vm4103, %vm4103
  %vm4232 = vmpackc.low %vm4104, %vm4104
  %vm4233 = vmpackc.low %vm4105, %vm4105
  %vm4234 = vmpackc.low %vm4106, %vm4106
  %vm4235 = vmpackc.low %vm4107, %vm4107
  %vm4236 = vmpackc.low %vm4108, %vm4108
  %vm4237 = vmpackc.low %vm4109, %vm4109
  %vm4238 = vmpackc.low %vm4110, %vm4110
  %v4239 = vsel %vm4111, %v15, 0
  %v4240 = vsel %vm4112, %v16, 0
  %v4241 = vsel %vm4113, %v17, 0
  %v4242 = vsel %vm4114, %v18, 0
  %v4243 = vsel %vm4115, %v19, 0
  %v4244 = vsel %vm4116, %v20, 0
  %v4245 = vsel %vm4117, %v21, 0
  %v4246 = vsel %vm4118, %v22, 0
  %v4247 = vsel %vm4119, %v23, 0
  %v4248 = vsel %vm4120, %v24, 0
  %v4249 = vsel %vm4121, %v25, 0
  %v4250 = vsel %vm4122, %v26, 0
  %v4251 = vsel %vm4123, %v27, 0
  %v4252 = vsel %vm4124, %v28, 0
  %v4253 = vsel %vm4125, %v29, 0
  %v4254 = vsel %vm4126, %v30, 0
  %v4255 = vsel %vm4127, %v31, 0
  %v4256 = vsel %vm4128, %v32, 0
  %v4257 = vsel %vm4129, %v33, 0
  %v4258 = vsel %vm4130, %v34, 0
  %v4259 = vsel %vm4131, %v35, 0
  %v4260 = vsel %vm4132, %v36, 0
  %v4261 = vsel %vm4133, %v37, 0
  %v4262 = vsel %vm4134, %v38, 0
  %v4263 = vsel %vm4135, %v39, 0
  %v4264 = vsel %vm4136, %v40, 0
  %v4265 = vsel %vm4137, %v41, 0
  %v4266 = vsel %vm4138, %v42, 0
  %v4267 = vsel %vm4139, %v43, 0
  %v4268 = vsel %vm4140, %v44, 0
  %v4269 = vsel %vm4141, %v45, 0
  %v4270 = vsel %vm4142, %v46, 0
  %v4271 = vsel %vm4143, %v47, 0
  %v4272 = vsel %vm4144, %v48, 0
  %v4273 = vsel %vm4145, %v49, 0
  %v4274 = vsel %vm4146, %v50, 0
  %v4275 = vsel %vm4147, %v51, 0
  %v4276 = vsel %vm4148, %v52, 0
  %v4277 = vsel %vm4149, %v53, 0
  %v4278 = vsel %vm4150, %v54, 0
  %v4279 = vsel %vm4151, %v55, 0
  %v4280 = vsel %vm4152, %v56, 0
  %v4281 = vsel %vm4153, %v57, 0
  %v4282 = vsel %vm4154, %v58, 0
  %v4283 = vsel %vm4155, %v59, 0
  %v4284 = vsel %vm4156, %v60, 0
  %v4285 = vsel %vm4157, %v61, 0
  %v4286 = vsel %vm4158, %v62, 0
  %v4287 = vsel %vm4159, %v63, 0
  %v4288 = vsel %vm4160, %v64, 0
  %v4289 = vsel %vm4161, %v65, 0
  %v4290 = vsel %vm4162, %v66, 0
  %v4291 = vsel %vm4163, %v67, 0
  %v4292 = vsel %vm4164, %v68, 0
  %v4293 = vsel %vm4165, %v69, 0
  %v4294 = vsel %vm4166, %v70, 0
  %v4295 = vsel %vm4167, %v71, 0
  %v4296 = vsel %vm4168, %v72, 0
  %v4297 = vsel %vm4169, %v73, 0
  %v4298 = vsel %vm4170, %v74, 0
  %v4299 = vsel %vm4171, %v75, 0
  %v4300 = vsel %vm4172, %v76, 0
  %v4301 = vsel %vm4173, %v77, 0
  %v4302 = vsel %vm4174, %v78, 0
  %v4303 = vsel %vm4175, %v79, 0
  %v4304 = vsel %vm4176, %v80, 0
  %v4305 = vsel %vm4177, %v81, 0
  %v4306 = vsel %vm4178, %v82, 0
  %v4307 = vsel %vm4179, %v83, 0
  %v4308 = vsel %vm4180, %v84, 0
  %v4309 = vsel %vm4181, %v85, 0
  %v4310 = vsel %vm4182, %v86, 0
  %v4311 = vsel %vm4183, %v87, 0
  %v4312 = vsel %vm4184, %v88, 0
  %v4313 = vsel %vm4185, %v89, 0
  %v4314 = vsel %vm4186, %v90, 0
  %v4315 = vsel %vm4187, %v91, 0
  %v4316 = vsel %vm4188, %v92, 0
  %v4317 = vsel %vm4189, %v93, 0
  %v4318 = vsel %vm4190, %v94, 0
  %v4319 = vsel %vm4191, %v95, 0
  %v4320 = vsel %vm4192, %v96, 0
  %v4321 = vsel %vm4193, %v97, 0
  %v4322 = vsel %vm4194, %v98, 0
  %v4323 = vsel %vm4195, %v99, 0
  %v4324 = vsel %vm4196, %v100, 0
  %v4325 = vsel %vm4197, %v101, 0
  %v4326 = vsel %vm4198, %v102, 0
  %v4327 = vsel %vm4199, %v103, 0
  %v4328 = vsel %vm4200, %v104, 0
  %v4329 = vsel %vm4201, %v105, 0
  %v4330 = vsel %vm4202, %v106, 0
  %v4331 = vsel %vm4203, %v107, 0
  %v4332 = vsel %vm4204, %v108, 0
  %v4333 = vsel %vm4205, %v109, 0
  %v4334 = vsel %vm4206, %v110, 0
  %v4335 = vsel %vm4207, %v111, 0
  %v4336 = vsel %vm4208, %v112, 0
  %v4337 = vsel %vm4209, %v113, 0
  %v4338 = vsel %vm4210, %v114, 0
  %v4339 = vsel %vm4211, %v115, 0
  %v4340 = vsel %vm4212, %v116, 0
  %v4341 = vsel %vm4213, %v117, 0
  %v4342 = vsel %vm4214, %v118, 0
  %v4343 = vsel %vm4215, %v119, 0
  %v4344 = vsel %vm4216, %v120, 0
  %v4345 = vsel %vm4217, %v121, 0
  %v4346 = vsel %vm4218, %v122, 0
  %v4347 = vsel %vm4219, %v123, 0
  %v4348 = vsel %vm4220, %v124, 0
  %v4349 = vsel %vm4221, %v125, 0
  %v4350 = vsel %vm4222, %v126, 0
  %v4351 = vsel %vm4223, %v127, 0
  %v4352 = vsel %vm4224, %v128, 0
  %v4353 = vsel %vm4225, %v129, 0
  %v4354 = vsel %vm4226, %v130, 0
  %v4355 = vsel %vm4227, %v131, 0
  %v4356 = vsel %vm4228, %v132, 0
  %v4357 = vsel %vm4229, %v133, 0
  %v4358 = vsel %vm4230, %v134, 0
  %v4359 = vsel %vm4231, %v135, 0
  %v4360 = vsel %vm4232, %v136, 0
  %v4361 = vsel %vm4233, %v137, 0
  %v4362 = vsel %vm4234, %v138, 0
  %v4363 = vsel %vm4235, %v139, 0
  %v4364 = vsel %vm4236, %v140, 0
  %v4365 = vsel %vm4237, %v141, 0
  %v4366 = vsel %vm4238, %v142, 0
  %v4495 = vunpack.c.l.b16 %v1167
  %v4496 = vunpack.c.l.b16 %v1168
  %v4497 = vunpack.c.l.b16 %v1169
  %v4498 = vunpack.c.l.b16 %v1170
  %v4499 = vunpack.c.l.b16 %v1171
  %v4500 = vunpack.c.l.b16 %v1172
  %v4501 = vunpack.c.l.b16 %v1173
  %v4502 = vunpack.c.l.b16 %v1174
  %v4503 = vunpack.c.l.b16 %v1175
  %v4504 = vunpack.c.l.b16 %v1176
  %v4505 = vunpack.c.l.b16 %v1177
  %v4506 = vunpack.c.l.b16 %v1178
  %v4507 = vunpack.c.l.b16 %v1179
  %v4508 = vunpack.c.l.b16 %v1180
  %v4509 = vunpack.c.l.b16 %v1181
  %v4510 = vunpack.c.l.b16 %v1182
  %v4511 = vunpack.c.l.b16 %v1183
  %v4512 = vunpack.c.l.b16 %v1184
  %v4513 = vunpack.c.l.b16 %v1185
  %v4514 = vunpack.c.l.b16 %v1186
  %v4515 = vunpack.c.l.b16 %v1187
  %v4516 = vunpack.c.l.b16 %v1188
  %v4517 = vunpack.c.l.b16 %v1189
  %v4518 = vunpack.c.l.b16 %v1190
  %v4519 = vunpack.c.l.b16 %v1191
  %v4520 = vunpack.c.l.b16 %v1192
  %v4521 = vunpack.c.l.b16 %v1193
  %v4522 = vunpack.c.l.b16 %v1194
  %v4523 = vunpack.c.l.b16 %v1195
  %v4524 = vunpack.c.l.b16 %v1196
  %v4525 = vunpack.c.l.b16 %v1197
  %v4526 = vunpack.c.l.b16 %v1198
  %v4527 = vunpack.c.l.b16 %v1199
  %v4528 = vunpack.c.l.b16 %v1200
  %v4529 = vunpack.c.l.b16 %v1201
  %v4530 = vunpack.c.l.b16 %v1202
  %v4531 = vunpack.c.l.b16 %v1203
  %v4532 = vunpack.c.l.b16 %v1204
  %v4533 = vunpack.c.l.b16 %v1205
  %v4534 = vunpack.c.l.b16 %v1206
  %v4535 = vunpack.c.l.b16 %v1207
  %v4536 = vunpack.c.l.b16 %v1208
  %v4537 = vunpack.c.l.b16 %v1209
  %v4538 = vunpack.c.l.b16 %v1210
  %v4539 = vunpack.c.l.b16 %v1211
  %v4540 = vunpack.c.l.b16 %v1212
  %v4541 = vunpack.c.l.b16 %v1213
  %v4542 = vunpack.c.l.b16 %v1214
  %v4543 = vunpack.c.l.b16 %v1215
  %v4544 = vunpack.c.l.b16 %v1216
  %v4545 = vunpack.c.l.b16 %v1217
  %v4546 = vunpack.c.l.b16 %v1218
  %v4547 = vunpack.c.l.b16 %v1219
  %v4548 = vunpack.c.l.b16 %v1220
  %v4549 = vunpack.c.l.b16 %v1221
  %v4550 = vunpack.c.l.b16 %v1222
  %v4551 = vunpack.c.l.b16 %v1223
  %v4552 = vunpack.c.l.b16 %v1224
  %v4553 = vunpack.c.l.b16 %v1225
  %v4554 = vunpack.c.l.b16 %v1226
  %v4555 = vunpack.c.l.b16 %v1227
  %v4556 = vunpack.c.l.b16 %v1228
  %v4557 = vunpack.c.l.b16 %v1229
  %v4558 = vunpack.c.l.b16 %v1230
  %v4559 = vunpack.c.l.b16 %v1231
  %v4560 = vunpack.c.l.b16 %v1232
  %v4561 = vunpack.c.l.b16 %v1233
  %v4562 = vunpack.c.l.b16 %v1234
  %v4563 = vunpack.c.l.b16 %v1235
  %v4564 = vunpack.c.l.b16 %v1236
  %v4565 = vunpack.c.l.b16 %v1237
  %v4566 = vunpack.c.l.b16 %v1238
  %v4567 = vunpack.c.l.b16 %v1239
  %v4568 = vunpack.c.l.b16 %v1240
  %v4569 = vunpack.c.l.b16 %v1241
  %v4570 = vunpack.c.l.b16 %v1242
  %v4571 = vunpack.c.l.b16 %v1243
  %v4572 = vunpack.c.l.b16 %v1244
  %v4573 = vunpack.c.l.b16 %v1245
  %v4574 = vunpack.c.l.b16 %v1246
  %v4575 = vunpack.c.l.b16 %v1247
  %v4576 = vunpack.c.l.b16 %v1248
  %v4577 = vunpack.c.l.b16 %v1249
  %v4578 = vunpack.c.l.b16 %v1250
  %v4579 = vunpack.c.l.b16 %v1251
  %v4580 = vunpack.c.l.b16 %v1252
  %v4581 = vunpack.c.l.b16 %v1253
  %v4582 = vunpack.c.l.b16 %v1254
  %v4583 = vunpack.c.l.b16 %v1255
  %v4584 = vunpack.c.l.b16 %v1256
  %v4585 = vunpack.c.l.b16 %v1257
  %v4586 = vunpack.c.l.b16 %v1258
  %v4587 = vunpack.c.l.b16 %v1259
  %v4588 = vunpack.c.l.b16 %v1260
  %v4589 = vunpack.c.l.b16 %v1261
  %v4590 = vunpack.c.l.b16 %v1262
  %v4591 = vunpack.c.l.b16 %v1263
  %v4592 = vunpack.c.l.b16 %v1264
  %v4593 = vunpack.c.l.b16 %v1265
  %v4594 = vunpack.c.l.b16 %v1266
  %v4595 = vunpack.c.l.b16 %v1267
  %v4596 = vunpack.c.l.b16 %v1268
  %v4597 = vunpack.c.l.b16 %v1269
  %v4598 = vunpack.c.l.b16 %v1270
  %v4599 = vunpack.c.l.b16 %v1271
  %v4600 = vunpack.c.l.b16 %v1272
  %v4601 = vunpack.c.l.b16 %v1273
  %v4602 = vunpack.c.l.b16 %v1274
  %v4603 = vunpack.c.l.b16 %v1275
  %v4604 = vunpack.c.l.b16 %v1276
  %v4605 = vunpack.c.l.b16 %v1277
  %v4606 = vunpack.c.l.b16 %v1278
  %v4607 = vunpack.c.l.b16 %v1279
  %v4608 = vunpack.c.l.b16 %v1280
  %v4609 = vunpack.c.l.b16 %v1281
  %v4610 = vunpack.c.l.b16 %v1282
  %v4611 = vunpack.c.l.b16 %v1283
  %v4612 = vunpack.c.l.b16 %v1284
  %v4613 = vunpack.c.l.b16 %v1285
  %v4614 = vunpack.c.l.b16 %v1286
  %v4615 = vunpack.c.l.b16 %v1287
  %v4616 = vunpack.c.l.b16 %v1288
  %v4617 = vunpack.c.l.b16 %v1289
  %v4618 = vunpack.c.l.b16 %v1290
  %v4619 = vunpack.c.l.b16 %v1291
  %v4620 = vunpack.c.l.b16 %v1292
  %v4621 = vunpack.c.l.b16 %v1293
  %v4622 = vunpack.c.l.b16 %v1294
  %v4623 = vpack.c.b16 %v4496, %v4495
  %v4624 = vpack.c.b16 %v4498, %v4497
  %v4625 = vpack.c.b16 %v4500, %v4499
  %v4626 = vpack.c.b16 %v4502, %v4501
  %v4627 = vpack.c.b16 %v4504, %v4503
  %v4628 = vpack.c.b16 %v4506, %v4505
  %v4629 = vpack.c.b16 %v4508, %v4507
  %v4630 = vpack.c.b16 %v4510, %v4509
  %v4631 = vpack.c.b16 %v4512, %v4511
  %v4632 = vpack.c.b16 %v4514, %v4513
  %v4633 = vpack.c.b16 %v4516, %v4515
  %v4634 = vpack.c.b16 %v4518, %v4517
  %v4635 = vpack.c.b16 %v4520, %v4519
  %v4636 = vpack.c.b16 %v4522, %v4521
  %v4637 = vpack.c.b16 %v4524, %v4523
  %v4638 = vpack.c.b16 %v4526, %v4525
  %v4639 = vpack.c.b16 %v4528, %v4527
  %v4640 = vpack.c.b16 %v4530, %v4529
  %v4641 = vpack.c.b16 %v4532, %v4531
  %v4642 = vpack.c.b16 %v4534, %v4533
  %v4643 = vpack.c.b16 %v4536, %v4535
  %v4644 = vpack.c.b16 %v4538, %v4537
  %v4645 = vpack.c.b16 %v4540, %v4539
  %v4646 = vpack.c.b16 %v4542, %v4541
  %v4647 = vpack.c.b16 %v4544, %v4543
  %v4648 = vpack.c.b16 %v4546, %v4545
  %v4649 = vpack.c.b16 %v4548, %v4547
  %v4650 = vpack.c.b16 %v4550, %v4549
  %v4651 = vpack.c.b16 %v4552, %v4551
  %v4652 = vpack.c.b16 %v4554, %v4553
  %v4653 = vpack.c.b16 %v4556, %v4555
  %v4654 = vpack.c.b16 %v4558, %v4557
  %v4655 = vpack.c.b16 %v4560, %v4559
  %v4656 = vpack.c.b16 %v4562, %v4561
  %v4657 = vpack.c.b16 %v4564, %v4563
  %v4658 = vpack.c.b16 %v4566, %v4565
  %v4659 = vpack.c.b16 %v4568, %v4567
  %v4660 = vpack.c.b16 %v4570, %v4569
  %v4661 = vpack.c.b16 %v4572, %v4571
  %v4662 = vpack.c.b16 %v4574, %v4573
  %v4663 = vpack.c.b16 %v4576, %v4575
  %v4664 = vpack.c.b16 %v4578, %v4577
  %v4665 = vpack.c.b16 %v4580, %v4579
  %v4666 = vpack.c.b16 %v4582, %v4581
  %v4667 = vpack.c.b16 %v4584, %v4583
  %v4668 = vpack.c.b16 %v4586, %v4585
  %v4669 = vpack.c.b16 %v4588, %v4587
  %v4670 = vpack.c.b16 %v4590, %v4589
  %v4671 = vpack.c.b16 %v4592, %v4591
  %v4672 = vpack.c.b16 %v4594, %v4593
  %v4673 = vpack.c.b16 %v4596, %v4595
  %v4674 = vpack.c.b16 %v4598, %v4597
  %v4675 = vpack.c.b16 %v4600, %v4599
  %v4676 = vpack.c.b16 %v4602, %v4601
  %v4677 = vpack.c.b16 %v4604, %v4603
  %v4678 = vpack.c.b16 %v4606, %v4605
  %v4679 = vpack.c.b16 %v4608, %v4607
  %v4680 = vpack.c.b16 %v4610, %v4609
  %v4681 = vpack.c.b16 %v4612, %v4611
  %v4682 = vpack.c.b16 %v4614, %v4613
  %v4683 = vpack.c.b16 %v4616, %v4615
  %v4684 = vpack.c.b16 %v4618, %v4617
  %v4685 = vpack.c.b16 %v4620, %v4619
  %v4686 = vpack.c.b16 %v4622, %v4621
  %v4815 = vunpack.c.l.b16 %v2191
  %v4816 = vunpack.c.l.b16 %v2192
  %v4817 = vunpack.c.l.b16 %v2193
  %v4818 = vunpack.c.l.b16 %v2194
  %v4819 = vunpack.c.l.b16 %v2195
  %v4820 = vunpack.c.l.b16 %v2196
  %v4821 = vunpack.c.l.b16 %v2197
  %v4822 = vunpack.c.l.b16 %v2198
  %v4823 = vunpack.c.l.b16 %v2199
  %v4824 = vunpack.c.l.b16 %v2200
  %v4825 = vunpack.c.l.b16 %v2201
  %v4826 = vunpack.c.l.b16 %v2202
  %v4827 = vunpack.c.l.b16 %v2203
  %v4828 = vunpack.c.l.b16 %v2204
  %v4829 = vunpack.c.l.b16 %v2205
  %v4830 = vunpack.c.l.b16 %v2206
  %v4831 = vunpack.c.l.b16 %v2207
  %v4832 = vunpack.c.l.b16 %v2208
  %v4833 = vunpack.c.l.b16 %v2209
  %v4834 = vunpack.c.l.b16 %v2210
  %v4835 = vunpack.c.l.b16 %v2211
  %v4836 = vunpack.c.l.b16 %v2212
  %v4837 = vunpack.c.l.b16 %v2213
  %v4838 = vunpack.c.l.b16 %v2214
  %v4839 = vunpack.c.l.b16 %v2215
  %v4840 = vunpack.c.l.b16 %v2216
  %v4841 = vunpack.c.l.b16 %v2217
  %v4842 = vunpack.c.l.b16 %v2218
  %v4843 = vunpack.c.l.b16 %v2219
  %v4844 = vunpack.c.l.b16 %v2220
  %v4845 = vunpack.c.l.b16 %v2221
  %v4846 = vunpack.c.l.b16 %v2222
  %v4847 = vunpack.c.l.b16 %v2223
  %v4848 = vunpack.c.l.b16 %v2224
  %v4849 = vunpack.c.l.b16 %v2225
  %v4850 = vunpack.c.l.b16 %v2226
  %v4851 = vunpack.c.l.b16 %v2227
  %v4852 = vunpack.c.l.b16 %v2228
  %v4853 = vunpack.c.l.b16 %v2229
  %v4854 = vunpack.c.l.b16 %v2230
  %v4855 = vunpack.c.l.b16 %v2231
  %v4856 = vunpack.c.l.b16 %v2232
  %v4857 = vunpack.c.l.b16 %v2233
  %v4858 = vunpack.c.l.b16 %v2234
  %v4859 = vunpack.c.l.b16 %v2235
  %v4860 = vunpack.c.l.b16 %v2236
  %v4861 = vunpack.c.l.b16 %v2237
  %v4862 = vunpack.c.l.b16 %v2238
  %v4863 = vunpack.c.l.b16 %v2239
  %v4864 = vunpack.c.l.b16 %v2240
  %v4865 = vunpack.c.l.b16 %v2241
  %v4866 = vunpack.c.l.b16 %v2242
  %v4867 = vunpack.c.l.b16 %v2243
  %v4868 = vunpack.c.l.b16 %v2244
  %v4869 = vunpack.c.l.b16 %v2245
  %v4870 = vunpack.c.l.b16 %v2246
  %v4871 = vunpack.c.l.b16 %v2247
  %v4872 = vunpack.c.l.b16 %v2248
  %v4873 = vunpack.c.l.b16 %v2249
  %v4874 = vunpack.c.l.b16 %v2250
  %v4875 = vunpack.c.l.b16 %v2251
  %v4876 = vunpack.c.l.b16 %v2252
  %v4877 = vunpack.c.l.b16 %v2253
  %v4878 = vunpack.c.l.b16 %v2254
  %v4879 = vunpack.c.l.b16 %v2255
  %v4880 = vunpack.c.l.b16 %v2256
  %v4881 = vunpack.c.l.b16 %v2257
  %v4882 = vunpack.c.l.b16 %v2258
  %v4883 = vunpack.c.l.b16 %v2259
  %v4884 = vunpack.c.l.b16 %v2260
  %v4885 = vunpack.c.l.b16 %v2261
  %v4886 = vunpack.c.l.b16 %v2262
  %v4887 = vunpack.c.l.b16 %v2263
  %v4888 = vunpack.c.l.b16 %v2264
  %v4889 = vunpack.c.l.b16 %v2265
  %v4890 = vunpack.c.l.b16 %v2266
  %v4891 = vunpack.c.l.b16 %v2267
  %v4892 = vunpack.c.l.b16 %v2268
  %v4893 = vunpack.c.l.b16 %v2269
  %v4894 = vunpack.c.l.b16 %v2270
  %v4895 = vunpack.c.l.b16 %v2271
  %v4896 = vunpack.c.l.b16 %v2272
  %v4897 = vunpack.c.l.b16 %v2273
  %v4898 = vunpack.c.l.b16 %v2274
  %v4899 = vunpack.c.l.b16 %v2275
  %v4900 = vunpack.c.l.b16 %v2276
  %v4901 = vunpack.c.l.b16 %v2277
  %v4902 = vunpack.c.l.b16 %v2278
  %v4903 = vunpack.c.l.b16 %v2279
  %v4904 = vunpack.c.l.b16 %v2280
  %v4905 = vunpack.c.l.b16 %v2281
  %v4906 = vunpack.c.l.b16 %v2282
  %v4907 = vunpack.c.l.b16 %v2283
  %v4908 = vunpack.c.l.b16 %v2284
  %v4909 = vunpack.c.l.b16 %v2285
  %v4910 = vunpack.c.l.b16 %v2286
  %v4911 = vunpack.c.l.b16 %v2287
  %v4912 = vunpack.c.l.b16 %v2288
  %v4913 = vunpack.c.l.b16 %v2289
  %v4914 = vunpack.c.l.b16 %v2290
  %v4915 = vunpack.c.l.b16 %v2291
  %v4916 = vunpack.c.l.b16 %v2292
  %v4917 = vunpack.c.l.b16 %v2293
  %v4918 = vunpack.c.l.b16 %v2294
  %v4919 = vunpack.c.l.b16 %v2295
  %v4920 = vunpack.c.l.b16 %v2296
  %v4921 = vunpack.c.l.b16 %v2297
  %v4922 = vunpack.c.l.b16 %v2298
  %v4923 = vunpack.c.l.b16 %v2299
  %v4924 = vunpack.c.l.b16 %v2300
  %v4925 = vunpack.c.l.b16 %v2301
  %v4926 = vunpack.c.l.b16 %v2302
  %v4927 = vunpack.c.l.b16 %v2303
  %v4928 = vunpack.c.l.b16 %v2304
  %v4929 = vunpack.c.l.b16 %v2305
  %v4930 = vunpack.c.l.b16 %v2306
  %v4931 = vunpack.c.l.b16 %v2307
  %v4932 = vunpack.c.l.b16 %v2308
  %v4933 = vunpack.c.l.b16 %v2309
  %v4934 = vunpack.c.l.b16 %v2310
  %v4935 = vunpack.c.l.b16 %v2311
  %v4936 = vunpack.c.l.b16 %v2312
  %v4937 = vunpack.c.l.b16 %v2313
  %v4938 = vunpack.c.l.b16 %v2314
  %v4939 = vunpack.c.l.b16 %v2315
  %v4940 = vunpack.c.l.b16 %v2316
  %v4941 = vunpack.c.l.b16 %v2317
  %v4942 = vunpack.c.l.b16 %v2318
  %v4943 = vpack.c.b16 %v4816, %v4815
  %v4944 = vpack.c.b16 %v4818, %v4817
  %v4945 = vpack.c.b16 %v4820, %v4819
  %v4946 = vpack.c.b16 %v4822, %v4821
  %v4947 = vpack.c.b16 %v4824, %v4823
  %v4948 = vpack.c.b16 %v4826, %v4825
  %v4949 = vpack.c.b16 %v4828, %v4827
  %v4950 = vpack.c.b16 %v4830, %v4829
  %v4951 = vpack.c.b16 %v4832, %v4831
  %v4952 = vpack.c.b16 %v4834, %v4833
  %v4953 = vpack.c.b16 %v4836, %v4835
  %v4954 = vpack.c.b16 %v4838, %v4837
  %v4955 = vpack.c.b16 %v4840, %v4839
  %v4956 = vpack.c.b16 %v4842, %v4841
  %v4957 = vpack.c.b16 %v4844, %v4843
  %v4958 = vpack.c.b16 %v4846, %v4845
  %v4959 = vpack.c.b16 %v4848, %v4847
  %v4960 = vpack.c.b16 %v4850, %v4849
  %v4961 = vpack.c.b16 %v4852, %v4851
  %v4962 = vpack.c.b16 %v4854, %v4853
  %v4963 = vpack.c.b16 %v4856, %v4855
  %v4964 = vpack.c.b16 %v4858, %v4857
  %v4965 = vpack.c.b16 %v4860, %v4859
  %v4966 = vpack.c.b16 %v4862, %v4861
  %v4967 = vpack.c.b16 %v4864, %v4863
  %v4968 = vpack.c.b16 %v4866, %v4865
  %v4969 = vpack.c.b16 %v4868, %v4867
  %v4970 = vpack.c.b16 %v4870, %v4869
  %v4971 = vpack.c.b16 %v4872, %v4871
  %v4972 = vpack.c.b16 %v4874, %v4873
  %v4973 = vpack.c.b16 %v4876, %v4875
  %v4974 = vpack.c.b16 %v4878, %v4877
  %v4975 = vpack.c.b16 %v4880, %v4879
  %v4976 = vpack.c.b16 %v4882, %v4881
  %v4977 = vpack.c.b16 %v4884, %v4883
  %v4978 = vpack.c.b16 %v4886, %v4885
  %v4979 = vpack.c.b16 %v4888, %v4887
  %v4980 = vpack.c.b16 %v4890, %v4889
  %v4981 = vpack.c.b16 %v4892, %v4891
  %v4982 = vpack.c.b16 %v4894, %v4893
  %v4983 = vpack.c.b16 %v4896, %v4895
  %v4984 = vpack.c.b16 %v4898, %v4897
  %v4985 = vpack.c.b16 %v4900, %v4899
  %v4986 = vpack.c.b16 %v4902, %v4901
  %v4987 = vpack.c.b16 %v4904, %v4903
  %v4988 = vpack.c.b16 %v4906, %v4905
  %v4989 = vpack.c.b16 %v4908, %v4907
  %v4990 = vpack.c.b16 %v4910, %v4909
  %v4991 = vpack.c.b16 %v4912, %v4911
  %v4992 = vpack.c.b16 %v4914, %v4913
  %v4993 = vpack.c.b16 %v4916, %v4915
  %v4994 = vpack.c.b16 %v4918, %v4917
  %v4995 = vpack.c.b16 %v4920, %v4919
  %v4996 = vpack.c.b16 %v4922, %v4921
  %v4997 = vpack.c.b16 %v4924, %v4923
  %v4998 = vpack.c.b16 %v4926, %v4925
  %v4999 = vpack.c.b16 %v4928, %v4927
  %v5000 = vpack.c.b16 %v4930, %v4929
  %v5001 = vpack.c.b16 %v4932, %v4931
  %v5002 = vpack.c.b16 %v4934, %v4933
  %v5003 = vpack.c.b16 %v4936, %v4935
  %v5004 = vpack.c.b16 %v4938, %v4937
  %v5005 = vpack.c.b16 %v4940, %v4939
  %v5006 = vpack.c.b16 %v4942, %v4941
  %5007 = vrot.lane.b32.xlu0 %v4943, 8
  %v5008 = vpop.permute.xlu0 %5007
  %5009 = vrot.lane.b32.xlu0 %v4944, 8
  %v5010 = vpop.permute.xlu0 %5009
  %5011 = vrot.lane.b32.xlu0 %v4945, 8
  %v5012 = vpop.permute.xlu0 %5011
  %5013 = vrot.lane.b32.xlu0 %v4946, 8
  %v5014 = vpop.permute.xlu0 %5013
  %5015 = vrot.lane.b32.xlu0 %v4947, 8
  %v5016 = vpop.permute.xlu0 %5015
  %5017 = vrot.lane.b32.xlu0 %v4948, 8
  %v5018 = vpop.permute.xlu0 %5017
  %5019 = vrot.lane.b32.xlu0 %v4949, 8
  %v5020 = vpop.permute.xlu0 %5019
  %5021 = vrot.lane.b32.xlu0 %v4950, 8
  %v5022 = vpop.permute.xlu0 %5021
  %5023 = vrot.lane.b32.xlu0 %v4951, 8
  %v5024 = vpop.permute.xlu0 %5023
  %5025 = vrot.lane.b32.xlu0 %v4952, 8
  %v5026 = vpop.permute.xlu0 %5025
  %5027 = vrot.lane.b32.xlu0 %v4953, 8
  %v5028 = vpop.permute.xlu0 %5027
  %5029 = vrot.lane.b32.xlu0 %v4954, 8
  %v5030 = vpop.permute.xlu0 %5029
  %5031 = vrot.lane.b32.xlu0 %v4955, 8
  %v5032 = vpop.permute.xlu0 %5031
  %5033 = vrot.lane.b32.xlu0 %v4956, 8
  %v5034 = vpop.permute.xlu0 %5033
  %5035 = vrot.lane.b32.xlu0 %v4957, 8
  %v5036 = vpop.permute.xlu0 %5035
  %5037 = vrot.lane.b32.xlu0 %v4958, 8
  %v5038 = vpop.permute.xlu0 %5037
  %5039 = vrot.lane.b32.xlu0 %v4959, 8
  %v5040 = vpop.permute.xlu0 %5039
  %5041 = vrot.lane.b32.xlu0 %v4960, 8
  %v5042 = vpop.permute.xlu0 %5041
  %5043 = vrot.lane.b32.xlu0 %v4961, 8
  %v5044 = vpop.permute.xlu0 %5043
  %5045 = vrot.lane.b32.xlu0 %v4962, 8
  %v5046 = vpop.permute.xlu0 %5045
  %5047 = vrot.lane.b32.xlu0 %v4963, 8
  %v5048 = vpop.permute.xlu0 %5047
  %5049 = vrot.lane.b32.xlu0 %v4964, 8
  %v5050 = vpop.permute.xlu0 %5049
  %5051 = vrot.lane.b32.xlu0 %v4965, 8
  %v5052 = vpop.permute.xlu0 %5051
  %5053 = vrot.lane.b32.xlu0 %v4966, 8
  %v5054 = vpop.permute.xlu0 %5053
  %5055 = vrot.lane.b32.xlu0 %v4967, 8
  %v5056 = vpop.permute.xlu0 %5055
  %5057 = vrot.lane.b32.xlu0 %v4968, 8
  %v5058 = vpop.permute.xlu0 %5057
  %5059 = vrot.lane.b32.xlu0 %v4969, 8
  %v5060 = vpop.permute.xlu0 %5059
  %5061 = vrot.lane.b32.xlu0 %v4970, 8
  %v5062 = vpop.permute.xlu0 %5061
  %5063 = vrot.lane.b32.xlu0 %v4971, 8
  %v5064 = vpop.permute.xlu0 %5063
  %5065 = vrot.lane.b32.xlu0 %v4972, 8
  %v5066 = vpop.permute.xlu0 %5065
  %5067 = vrot.lane.b32.xlu0 %v4973, 8
  %v5068 = vpop.permute.xlu0 %5067
  %5069 = vrot.lane.b32.xlu0 %v4974, 8
  %v5070 = vpop.permute.xlu0 %5069
  %5071 = vrot.lane.b32.xlu0 %v4975, 8
  %v5072 = vpop.permute.xlu0 %5071
  %5073 = vrot.lane.b32.xlu0 %v4976, 8
  %v5074 = vpop.permute.xlu0 %5073
  %5075 = vrot.lane.b32.xlu0 %v4977, 8
  %v5076 = vpop.permute.xlu0 %5075
  %5077 = vrot.lane.b32.xlu0 %v4978, 8
  %v5078 = vpop.permute.xlu0 %5077
  %5079 = vrot.lane.b32.xlu0 %v4979, 8
  %v5080 = vpop.permute.xlu0 %5079
  %5081 = vrot.lane.b32.xlu0 %v4980, 8
  %v5082 = vpop.permute.xlu0 %5081
  %5083 = vrot.lane.b32.xlu0 %v4981, 8
  %v5084 = vpop.permute.xlu0 %5083
  %5085 = vrot.lane.b32.xlu0 %v4982, 8
  %v5086 = vpop.permute.xlu0 %5085
  %5087 = vrot.lane.b32.xlu0 %v4983, 8
  %v5088 = vpop.permute.xlu0 %5087
  %5089 = vrot.lane.b32.xlu0 %v4984, 8
  %v5090 = vpop.permute.xlu0 %5089
  %5091 = vrot.lane.b32.xlu0 %v4985, 8
  %v5092 = vpop.permute.xlu0 %5091
  %5093 = vrot.lane.b32.xlu0 %v4986, 8
  %v5094 = vpop.permute.xlu0 %5093
  %5095 = vrot.lane.b32.xlu0 %v4987, 8
  %v5096 = vpop.permute.xlu0 %5095
  %5097 = vrot.lane.b32.xlu0 %v4988, 8
  %v5098 = vpop.permute.xlu0 %5097
  %5099 = vrot.lane.b32.xlu0 %v4989, 8
  %v5100 = vpop.permute.xlu0 %5099
  %5101 = vrot.lane.b32.xlu0 %v4990, 8
  %v5102 = vpop.permute.xlu0 %5101
  %5103 = vrot.lane.b32.xlu0 %v4991, 8
  %v5104 = vpop.permute.xlu0 %5103
  %5105 = vrot.lane.b32.xlu0 %v4992, 8
  %v5106 = vpop.permute.xlu0 %5105
  %5107 = vrot.lane.b32.xlu0 %v4993, 8
  %v5108 = vpop.permute.xlu0 %5107
  %5109 = vrot.lane.b32.xlu0 %v4994, 8
  %v5110 = vpop.permute.xlu0 %5109
  %5111 = vrot.lane.b32.xlu0 %v4995, 8
  %v5112 = vpop.permute.xlu0 %5111
  %5113 = vrot.lane.b32.xlu0 %v4996, 8
  %v5114 = vpop.permute.xlu0 %5113
  %5115 = vrot.lane.b32.xlu0 %v4997, 8
  %v5116 = vpop.permute.xlu0 %5115
  %5117 = vrot.lane.b32.xlu0 %v4998, 8
  %v5118 = vpop.permute.xlu0 %5117
  %5119 = vrot.lane.b32.xlu0 %v4999, 8
  %v5120 = vpop.permute.xlu0 %5119
  %5121 = vrot.lane.b32.xlu0 %v5000, 8
  %v5122 = vpop.permute.xlu0 %5121
  %5123 = vrot.lane.b32.xlu0 %v5001, 8
  %v5124 = vpop.permute.xlu0 %5123
  %5125 = vrot.lane.b32.xlu0 %v5002, 8
  %v5126 = vpop.permute.xlu0 %5125
  %5127 = vrot.lane.b32.xlu0 %v5003, 8
  %v5128 = vpop.permute.xlu0 %5127
  %5129 = vrot.lane.b32.xlu0 %v5004, 8
  %v5130 = vpop.permute.xlu0 %5129
  %5131 = vrot.lane.b32.xlu0 %v5005, 8
  %v5132 = vpop.permute.xlu0 %5131
  %5133 = vrot.lane.b32.xlu0 %v5006, 8
  %v5134 = vpop.permute.xlu0 %5133
  %v5263 = vunpack.c.l.b16 %v3215
  %v5264 = vunpack.c.l.b16 %v3216
  %v5265 = vunpack.c.l.b16 %v3217
  %v5266 = vunpack.c.l.b16 %v3218
  %v5267 = vunpack.c.l.b16 %v3219
  %v5268 = vunpack.c.l.b16 %v3220
  %v5269 = vunpack.c.l.b16 %v3221
  %v5270 = vunpack.c.l.b16 %v3222
  %v5271 = vunpack.c.l.b16 %v3223
  %v5272 = vunpack.c.l.b16 %v3224
  %v5273 = vunpack.c.l.b16 %v3225
  %v5274 = vunpack.c.l.b16 %v3226
  %v5275 = vunpack.c.l.b16 %v3227
  %v5276 = vunpack.c.l.b16 %v3228
  %v5277 = vunpack.c.l.b16 %v3229
  %v5278 = vunpack.c.l.b16 %v3230
  %v5279 = vunpack.c.l.b16 %v3231
  %v5280 = vunpack.c.l.b16 %v3232
  %v5281 = vunpack.c.l.b16 %v3233
  %v5282 = vunpack.c.l.b16 %v3234
  %v5283 = vunpack.c.l.b16 %v3235
  %v5284 = vunpack.c.l.b16 %v3236
  %v5285 = vunpack.c.l.b16 %v3237
  %v5286 = vunpack.c.l.b16 %v3238
  %v5287 = vunpack.c.l.b16 %v3239
  %v5288 = vunpack.c.l.b16 %v3240
  %v5289 = vunpack.c.l.b16 %v3241
  %v5290 = vunpack.c.l.b16 %v3242
  %v5291 = vunpack.c.l.b16 %v3243
  %v5292 = vunpack.c.l.b16 %v3244
  %v5293 = vunpack.c.l.b16 %v3245
  %v5294 = vunpack.c.l.b16 %v3246
  %v5295 = vunpack.c.l.b16 %v3247
  %v5296 = vunpack.c.l.b16 %v3248
  %v5297 = vunpack.c.l.b16 %v3249
  %v5298 = vunpack.c.l.b16 %v3250
  %v5299 = vunpack.c.l.b16 %v3251
  %v5300 = vunpack.c.l.b16 %v3252
  %v5301 = vunpack.c.l.b16 %v3253
  %v5302 = vunpack.c.l.b16 %v3254
  %v5303 = vunpack.c.l.b16 %v3255
  %v5304 = vunpack.c.l.b16 %v3256
  %v5305 = vunpack.c.l.b16 %v3257
  %v5306 = vunpack.c.l.b16 %v3258
  %v5307 = vunpack.c.l.b16 %v3259
  %v5308 = vunpack.c.l.b16 %v3260
  %v5309 = vunpack.c.l.b16 %v3261
  %v5310 = vunpack.c.l.b16 %v3262
  %v5311 = vunpack.c.l.b16 %v3263
  %v5312 = vunpack.c.l.b16 %v3264
  %v5313 = vunpack.c.l.b16 %v3265
  %v5314 = vunpack.c.l.b16 %v3266
  %v5315 = vunpack.c.l.b16 %v3267
  %v5316 = vunpack.c.l.b16 %v3268
  %v5317 = vunpack.c.l.b16 %v3269
  %v5318 = vunpack.c.l.b16 %v3270
  %v5319 = vunpack.c.l.b16 %v3271
  %v5320 = vunpack.c.l.b16 %v3272
  %v5321 = vunpack.c.l.b16 %v3273
  %v5322 = vunpack.c.l.b16 %v3274
  %v5323 = vunpack.c.l.b16 %v3275
  %v5324 = vunpack.c.l.b16 %v3276
  %v5325 = vunpack.c.l.b16 %v3277
  %v5326 = vunpack.c.l.b16 %v3278
  %v5327 = vunpack.c.l.b16 %v3279
  %v5328 = vunpack.c.l.b16 %v3280
  %v5329 = vunpack.c.l.b16 %v3281
  %v5330 = vunpack.c.l.b16 %v3282
  %v5331 = vunpack.c.l.b16 %v3283
  %v5332 = vunpack.c.l.b16 %v3284
  %v5333 = vunpack.c.l.b16 %v3285
  %v5334 = vunpack.c.l.b16 %v3286
  %v5335 = vunpack.c.l.b16 %v3287
  %v5336 = vunpack.c.l.b16 %v3288
  %v5337 = vunpack.c.l.b16 %v3289
  %v5338 = vunpack.c.l.b16 %v3290
  %v5339 = vunpack.c.l.b16 %v3291
  %v5340 = vunpack.c.l.b16 %v3292
  %v5341 = vunpack.c.l.b16 %v3293
  %v5342 = vunpack.c.l.b16 %v3294
  %v5343 = vunpack.c.l.b16 %v3295
  %v5344 = vunpack.c.l.b16 %v3296
  %v5345 = vunpack.c.l.b16 %v3297
  %v5346 = vunpack.c.l.b16 %v3298
  %v5347 = vunpack.c.l.b16 %v3299
  %v5348 = vunpack.c.l.b16 %v3300
  %v5349 = vunpack.c.l.b16 %v3301
  %v5350 = vunpack.c.l.b16 %v3302
  %v5351 = vunpack.c.l.b16 %v3303
  %v5352 = vunpack.c.l.b16 %v3304
  %v5353 = vunpack.c.l.b16 %v3305
  %v5354 = vunpack.c.l.b16 %v3306
  %v5355 = vunpack.c.l.b16 %v3307
  %v5356 = vunpack.c.l.b16 %v3308
  %v5357 = vunpack.c.l.b16 %v3309
  %v5358 = vunpack.c.l.b16 %v3310
  %v5359 = vunpack.c.l.b16 %v3311
  %v5360 = vunpack.c.l.b16 %v3312
  %v5361 = vunpack.c.l.b16 %v3313
  %v5362 = vunpack.c.l.b16 %v3314
  %v5363 = vunpack.c.l.b16 %v3315
  %v5364 = vunpack.c.l.b16 %v3316
  %v5365 = vunpack.c.l.b16 %v3317
  %v5366 = vunpack.c.l.b16 %v3318
  %v5367 = vunpack.c.l.b16 %v3319
  %v5368 = vunpack.c.l.b16 %v3320
  %v5369 = vunpack.c.l.b16 %v3321
  %v5370 = vunpack.c.l.b16 %v3322
  %v5371 = vunpack.c.l.b16 %v3323
  %v5372 = vunpack.c.l.b16 %v3324
  %v5373 = vunpack.c.l.b16 %v3325
  %v5374 = vunpack.c.l.b16 %v3326
  %v5375 = vunpack.c.l.b16 %v3327
  %v5376 = vunpack.c.l.b16 %v3328
  %v5377 = vunpack.c.l.b16 %v3329
  %v5378 = vunpack.c.l.b16 %v3330
  %v5379 = vunpack.c.l.b16 %v3331
  %v5380 = vunpack.c.l.b16 %v3332
  %v5381 = vunpack.c.l.b16 %v3333
  %v5382 = vunpack.c.l.b16 %v3334
  %v5383 = vunpack.c.l.b16 %v3335
  %v5384 = vunpack.c.l.b16 %v3336
  %v5385 = vunpack.c.l.b16 %v3337
  %v5386 = vunpack.c.l.b16 %v3338
  %v5387 = vunpack.c.l.b16 %v3339
  %v5388 = vunpack.c.l.b16 %v3340
  %v5389 = vunpack.c.l.b16 %v3341
  %v5390 = vunpack.c.l.b16 %v3342
  %v5391 = vpack.c.b16 %v5264, %v5263
  %v5392 = vpack.c.b16 %v5266, %v5265
  %v5393 = vpack.c.b16 %v5268, %v5267
  %v5394 = vpack.c.b16 %v5270, %v5269
  %v5395 = vpack.c.b16 %v5272, %v5271
  %v5396 = vpack.c.b16 %v5274, %v5273
  %v5397 = vpack.c.b16 %v5276, %v5275
  %v5398 = vpack.c.b16 %v5278, %v5277
  %v5399 = vpack.c.b16 %v5280, %v5279
  %v5400 = vpack.c.b16 %v5282, %v5281
  %v5401 = vpack.c.b16 %v5284, %v5283
  %v5402 = vpack.c.b16 %v5286, %v5285
  %v5403 = vpack.c.b16 %v5288, %v5287
  %v5404 = vpack.c.b16 %v5290, %v5289
  %v5405 = vpack.c.b16 %v5292, %v5291
  %v5406 = vpack.c.b16 %v5294, %v5293
  %v5407 = vpack.c.b16 %v5296, %v5295
  %v5408 = vpack.c.b16 %v5298, %v5297
  %v5409 = vpack.c.b16 %v5300, %v5299
  %v5410 = vpack.c.b16 %v5302, %v5301
  %v5411 = vpack.c.b16 %v5304, %v5303
  %v5412 = vpack.c.b16 %v5306, %v5305
  %v5413 = vpack.c.b16 %v5308, %v5307
  %v5414 = vpack.c.b16 %v5310, %v5309
  %v5415 = vpack.c.b16 %v5312, %v5311
  %v5416 = vpack.c.b16 %v5314, %v5313
  %v5417 = vpack.c.b16 %v5316, %v5315
  %v5418 = vpack.c.b16 %v5318, %v5317
  %v5419 = vpack.c.b16 %v5320, %v5319
  %v5420 = vpack.c.b16 %v5322, %v5321
  %v5421 = vpack.c.b16 %v5324, %v5323
  %v5422 = vpack.c.b16 %v5326, %v5325
  %v5423 = vpack.c.b16 %v5328, %v5327
  %v5424 = vpack.c.b16 %v5330, %v5329
  %v5425 = vpack.c.b16 %v5332, %v5331
  %v5426 = vpack.c.b16 %v5334, %v5333
  %v5427 = vpack.c.b16 %v5336, %v5335
  %v5428 = vpack.c.b16 %v5338, %v5337
  %v5429 = vpack.c.b16 %v5340, %v5339
  %v5430 = vpack.c.b16 %v5342, %v5341
  %v5431 = vpack.c.b16 %v5344, %v5343
  %v5432 = vpack.c.b16 %v5346, %v5345
  %v5433 = vpack.c.b16 %v5348, %v5347
  %v5434 = vpack.c.b16 %v5350, %v5349
  %v5435 = vpack.c.b16 %v5352, %v5351
  %v5436 = vpack.c.b16 %v5354, %v5353
  %v5437 = vpack.c.b16 %v5356, %v5355
  %v5438 = vpack.c.b16 %v5358, %v5357
  %v5439 = vpack.c.b16 %v5360, %v5359
  %v5440 = vpack.c.b16 %v5362, %v5361
  %v5441 = vpack.c.b16 %v5364, %v5363
  %v5442 = vpack.c.b16 %v5366, %v5365
  %v5443 = vpack.c.b16 %v5368, %v5367
  %v5444 = vpack.c.b16 %v5370, %v5369
  %v5445 = vpack.c.b16 %v5372, %v5371
  %v5446 = vpack.c.b16 %v5374, %v5373
  %v5447 = vpack.c.b16 %v5376, %v5375
  %v5448 = vpack.c.b16 %v5378, %v5377
  %v5449 = vpack.c.b16 %v5380, %v5379
  %v5450 = vpack.c.b16 %v5382, %v5381
  %v5451 = vpack.c.b16 %v5384, %v5383
  %v5452 = vpack.c.b16 %v5386, %v5385
  %v5453 = vpack.c.b16 %v5388, %v5387
  %v5454 = vpack.c.b16 %v5390, %v5389
  %5455 = vrot.lane.b32.xlu0 %v5391, 16
  %v5456 = vpop.permute.xlu0 %5455
  %5457 = vrot.lane.b32.xlu0 %v5392, 16
  %v5458 = vpop.permute.xlu0 %5457
  %5459 = vrot.lane.b32.xlu0 %v5393, 16
  %v5460 = vpop.permute.xlu0 %5459
  %5461 = vrot.lane.b32.xlu0 %v5394, 16
  %v5462 = vpop.permute.xlu0 %5461
  %5463 = vrot.lane.b32.xlu0 %v5395, 16
  %v5464 = vpop.permute.xlu0 %5463
  %5465 = vrot.lane.b32.xlu0 %v5396, 16
  %v5466 = vpop.permute.xlu0 %5465
  %5467 = vrot.lane.b32.xlu0 %v5397, 16
  %v5468 = vpop.permute.xlu0 %5467
  %5469 = vrot.lane.b32.xlu0 %v5398, 16
  %v5470 = vpop.permute.xlu0 %5469
  %5471 = vrot.lane.b32.xlu0 %v5399, 16
  %v5472 = vpop.permute.xlu0 %5471
  %5473 = vrot.lane.b32.xlu0 %v5400, 16
  %v5474 = vpop.permute.xlu0 %5473
  %5475 = vrot.lane.b32.xlu0 %v5401, 16
  %v5476 = vpop.permute.xlu0 %5475
  %5477 = vrot.lane.b32.xlu0 %v5402, 16
  %v5478 = vpop.permute.xlu0 %5477
  %5479 = vrot.lane.b32.xlu0 %v5403, 16
  %v5480 = vpop.permute.xlu0 %5479
  %5481 = vrot.lane.b32.xlu0 %v5404, 16
  %v5482 = vpop.permute.xlu0 %5481
  %5483 = vrot.lane.b32.xlu0 %v5405, 16
  %v5484 = vpop.permute.xlu0 %5483
  %5485 = vrot.lane.b32.xlu0 %v5406, 16
  %v5486 = vpop.permute.xlu0 %5485
  %5487 = vrot.lane.b32.xlu0 %v5407, 16
  %v5488 = vpop.permute.xlu0 %5487
  %5489 = vrot.lane.b32.xlu0 %v5408, 16
  %v5490 = vpop.permute.xlu0 %5489
  %5491 = vrot.lane.b32.xlu0 %v5409, 16
  %v5492 = vpop.permute.xlu0 %5491
  %5493 = vrot.lane.b32.xlu0 %v5410, 16
  %v5494 = vpop.permute.xlu0 %5493
  %5495 = vrot.lane.b32.xlu0 %v5411, 16
  %v5496 = vpop.permute.xlu0 %5495
  %5497 = vrot.lane.b32.xlu0 %v5412, 16
  %v5498 = vpop.permute.xlu0 %5497
  %5499 = vrot.lane.b32.xlu0 %v5413, 16
  %v5500 = vpop.permute.xlu0 %5499
  %5501 = vrot.lane.b32.xlu0 %v5414, 16
  %v5502 = vpop.permute.xlu0 %5501
  %5503 = vrot.lane.b32.xlu0 %v5415, 16
  %v5504 = vpop.permute.xlu0 %5503
  %5505 = vrot.lane.b32.xlu0 %v5416, 16
  %v5506 = vpop.permute.xlu0 %5505
  %5507 = vrot.lane.b32.xlu0 %v5417, 16
  %v5508 = vpop.permute.xlu0 %5507
  %5509 = vrot.lane.b32.xlu0 %v5418, 16
  %v5510 = vpop.permute.xlu0 %5509
  %5511 = vrot.lane.b32.xlu0 %v5419, 16
  %v5512 = vpop.permute.xlu0 %5511
  %5513 = vrot.lane.b32.xlu0 %v5420, 16
  %v5514 = vpop.permute.xlu0 %5513
  %5515 = vrot.lane.b32.xlu0 %v5421, 16
  %v5516 = vpop.permute.xlu0 %5515
  %5517 = vrot.lane.b32.xlu0 %v5422, 16
  %v5518 = vpop.permute.xlu0 %5517
  %5519 = vrot.lane.b32.xlu0 %v5423, 16
  %v5520 = vpop.permute.xlu0 %5519
  %5521 = vrot.lane.b32.xlu0 %v5424, 16
  %v5522 = vpop.permute.xlu0 %5521
  %5523 = vrot.lane.b32.xlu0 %v5425, 16
  %v5524 = vpop.permute.xlu0 %5523
  %5525 = vrot.lane.b32.xlu0 %v5426, 16
  %v5526 = vpop.permute.xlu0 %5525
  %5527 = vrot.lane.b32.xlu0 %v5427, 16
  %v5528 = vpop.permute.xlu0 %5527
  %5529 = vrot.lane.b32.xlu0 %v5428, 16
  %v5530 = vpop.permute.xlu0 %5529
  %5531 = vrot.lane.b32.xlu0 %v5429, 16
  %v5532 = vpop.permute.xlu0 %5531
  %5533 = vrot.lane.b32.xlu0 %v5430, 16
  %v5534 = vpop.permute.xlu0 %5533
  %5535 = vrot.lane.b32.xlu0 %v5431, 16
  %v5536 = vpop.permute.xlu0 %5535
  %5537 = vrot.lane.b32.xlu0 %v5432, 16
  %v5538 = vpop.permute.xlu0 %5537
  %5539 = vrot.lane.b32.xlu0 %v5433, 16
  %v5540 = vpop.permute.xlu0 %5539
  %5541 = vrot.lane.b32.xlu0 %v5434, 16
  %v5542 = vpop.permute.xlu0 %5541
  %5543 = vrot.lane.b32.xlu0 %v5435, 16
  %v5544 = vpop.permute.xlu0 %5543
  %5545 = vrot.lane.b32.xlu0 %v5436, 16
  %v5546 = vpop.permute.xlu0 %5545
  %5547 = vrot.lane.b32.xlu0 %v5437, 16
  %v5548 = vpop.permute.xlu0 %5547
  %5549 = vrot.lane.b32.xlu0 %v5438, 16
  %v5550 = vpop.permute.xlu0 %5549
  %5551 = vrot.lane.b32.xlu0 %v5439, 16
  %v5552 = vpop.permute.xlu0 %5551
  %5553 = vrot.lane.b32.xlu0 %v5440, 16
  %v5554 = vpop.permute.xlu0 %5553
  %5555 = vrot.lane.b32.xlu0 %v5441, 16
  %v5556 = vpop.permute.xlu0 %5555
  %5557 = vrot.lane.b32.xlu0 %v5442, 16
  %v5558 = vpop.permute.xlu0 %5557
  %5559 = vrot.lane.b32.xlu0 %v5443, 16
  %v5560 = vpop.permute.xlu0 %5559
  %5561 = vrot.lane.b32.xlu0 %v5444, 16
  %v5562 = vpop.permute.xlu0 %5561
  %5563 = vrot.lane.b32.xlu0 %v5445, 16
  %v5564 = vpop.permute.xlu0 %5563
  %5565 = vrot.lane.b32.xlu0 %v5446, 16
  %v5566 = vpop.permute.xlu0 %5565
  %5567 = vrot.lane.b32.xlu0 %v5447, 16
  %v5568 = vpop.permute.xlu0 %5567
  %5569 = vrot.lane.b32.xlu0 %v5448, 16
  %v5570 = vpop.permute.xlu0 %5569
  %5571 = vrot.lane.b32.xlu0 %v5449, 16
  %v5572 = vpop.permute.xlu0 %5571
  %5573 = vrot.lane.b32.xlu0 %v5450, 16
  %v5574 = vpop.permute.xlu0 %5573
  %5575 = vrot.lane.b32.xlu0 %v5451, 16
  %v5576 = vpop.permute.xlu0 %5575
  %5577 = vrot.lane.b32.xlu0 %v5452, 16
  %v5578 = vpop.permute.xlu0 %5577
  %5579 = vrot.lane.b32.xlu0 %v5453, 16
  %v5580 = vpop.permute.xlu0 %5579
  %5581 = vrot.lane.b32.xlu0 %v5454, 16
  %v5582 = vpop.permute.xlu0 %5581
  %v5711 = vunpack.c.l.b16 %v4239
  %v5712 = vunpack.c.l.b16 %v4240
  %v5713 = vunpack.c.l.b16 %v4241
  %v5714 = vunpack.c.l.b16 %v4242
  %v5715 = vunpack.c.l.b16 %v4243
  %v5716 = vunpack.c.l.b16 %v4244
  %v5717 = vunpack.c.l.b16 %v4245
  %v5718 = vunpack.c.l.b16 %v4246
  %v5719 = vunpack.c.l.b16 %v4247
  %v5720 = vunpack.c.l.b16 %v4248
  %v5721 = vunpack.c.l.b16 %v4249
  %v5722 = vunpack.c.l.b16 %v4250
  %v5723 = vunpack.c.l.b16 %v4251
  %v5724 = vunpack.c.l.b16 %v4252
  %v5725 = vunpack.c.l.b16 %v4253
  %v5726 = vunpack.c.l.b16 %v4254
  %v5727 = vunpack.c.l.b16 %v4255
  %v5728 = vunpack.c.l.b16 %v4256
  %v5729 = vunpack.c.l.b16 %v4257
  %v5730 = vunpack.c.l.b16 %v4258
  %v5731 = vunpack.c.l.b16 %v4259
  %v5732 = vunpack.c.l.b16 %v4260
  %v5733 = vunpack.c.l.b16 %v4261
  %v5734 = vunpack.c.l.b16 %v4262
  %v5735 = vunpack.c.l.b16 %v4263
  %v5736 = vunpack.c.l.b16 %v4264
  %v5737 = vunpack.c.l.b16 %v4265
  %v5738 = vunpack.c.l.b16 %v4266
  %v5739 = vunpack.c.l.b16 %v4267
  %v5740 = vunpack.c.l.b16 %v4268
  %v5741 = vunpack.c.l.b16 %v4269
  %v5742 = vunpack.c.l.b16 %v4270
  %v5743 = vunpack.c.l.b16 %v4271
  %v5744 = vunpack.c.l.b16 %v4272
  %v5745 = vunpack.c.l.b16 %v4273
  %v5746 = vunpack.c.l.b16 %v4274
  %v5747 = vunpack.c.l.b16 %v4275
  %v5748 = vunpack.c.l.b16 %v4276
  %v5749 = vunpack.c.l.b16 %v4277
  %v5750 = vunpack.c.l.b16 %v4278
  %v5751 = vunpack.c.l.b16 %v4279
  %v5752 = vunpack.c.l.b16 %v4280
  %v5753 = vunpack.c.l.b16 %v4281
  %v5754 = vunpack.c.l.b16 %v4282
  %v5755 = vunpack.c.l.b16 %v4283
  %v5756 = vunpack.c.l.b16 %v4284
  %v5757 = vunpack.c.l.b16 %v4285
  %v5758 = vunpack.c.l.b16 %v4286
  %v5759 = vunpack.c.l.b16 %v4287
  %v5760 = vunpack.c.l.b16 %v4288
  %v5761 = vunpack.c.l.b16 %v4289
  %v5762 = vunpack.c.l.b16 %v4290
  %v5763 = vunpack.c.l.b16 %v4291
  %v5764 = vunpack.c.l.b16 %v4292
  %v5765 = vunpack.c.l.b16 %v4293
  %v5766 = vunpack.c.l.b16 %v4294
  %v5767 = vunpack.c.l.b16 %v4295
  %v5768 = vunpack.c.l.b16 %v4296
  %v5769 = vunpack.c.l.b16 %v4297
  %v5770 = vunpack.c.l.b16 %v4298
  %v5771 = vunpack.c.l.b16 %v4299
  %v5772 = vunpack.c.l.b16 %v4300
  %v5773 = vunpack.c.l.b16 %v4301
  %v5774 = vunpack.c.l.b16 %v4302
  %v5775 = vunpack.c.l.b16 %v4303
  %v5776 = vunpack.c.l.b16 %v4304
  %v5777 = vunpack.c.l.b16 %v4305
  %v5778 = vunpack.c.l.b16 %v4306
  %v5779 = vunpack.c.l.b16 %v4307
  %v5780 = vunpack.c.l.b16 %v4308
  %v5781 = vunpack.c.l.b16 %v4309
  %v5782 = vunpack.c.l.b16 %v4310
  %v5783 = vunpack.c.l.b16 %v4311
  %v5784 = vunpack.c.l.b16 %v4312
  %v5785 = vunpack.c.l.b16 %v4313
  %v5786 = vunpack.c.l.b16 %v4314
  %v5787 = vunpack.c.l.b16 %v4315
  %v5788 = vunpack.c.l.b16 %v4316
  %v5789 = vunpack.c.l.b16 %v4317
  %v5790 = vunpack.c.l.b16 %v4318
  %v5791 = vunpack.c.l.b16 %v4319
  %v5792 = vunpack.c.l.b16 %v4320
  %v5793 = vunpack.c.l.b16 %v4321
  %v5794 = vunpack.c.l.b16 %v4322
  %v5795 = vunpack.c.l.b16 %v4323
  %v5796 = vunpack.c.l.b16 %v4324
  %v5797 = vunpack.c.l.b16 %v4325
  %v5798 = vunpack.c.l.b16 %v4326
  %v5799 = vunpack.c.l.b16 %v4327
  %v5800 = vunpack.c.l.b16 %v4328
  %v5801 = vunpack.c.l.b16 %v4329
  %v5802 = vunpack.c.l.b16 %v4330
  %v5803 = vunpack.c.l.b16 %v4331
  %v5804 = vunpack.c.l.b16 %v4332
  %v5805 = vunpack.c.l.b16 %v4333
  %v5806 = vunpack.c.l.b16 %v4334
  %v5807 = vunpack.c.l.b16 %v4335
  %v5808 = vunpack.c.l.b16 %v4336
  %v5809 = vunpack.c.l.b16 %v4337
  %v5810 = vunpack.c.l.b16 %v4338
  %v5811 = vunpack.c.l.b16 %v4339
  %v5812 = vunpack.c.l.b16 %v4340
  %v5813 = vunpack.c.l.b16 %v4341
  %v5814 = vunpack.c.l.b16 %v4342
  %v5815 = vunpack.c.l.b16 %v4343
  %v5816 = vunpack.c.l.b16 %v4344
  %v5817 = vunpack.c.l.b16 %v4345
  %v5818 = vunpack.c.l.b16 %v4346
  %v5819 = vunpack.c.l.b16 %v4347
  %v5820 = vunpack.c.l.b16 %v4348
  %v5821 = vunpack.c.l.b16 %v4349
  %v5822 = vunpack.c.l.b16 %v4350
  %v5823 = vunpack.c.l.b16 %v4351
  %v5824 = vunpack.c.l.b16 %v4352
  %v5825 = vunpack.c.l.b16 %v4353
  %v5826 = vunpack.c.l.b16 %v4354
  %v5827 = vunpack.c.l.b16 %v4355
  %v5828 = vunpack.c.l.b16 %v4356
  %v5829 = vunpack.c.l.b16 %v4357
  %v5830 = vunpack.c.l.b16 %v4358
  %v5831 = vunpack.c.l.b16 %v4359
  %v5832 = vunpack.c.l.b16 %v4360
  %v5833 = vunpack.c.l.b16 %v4361
  %v5834 = vunpack.c.l.b16 %v4362
  %v5835 = vunpack.c.l.b16 %v4363
  %v5836 = vunpack.c.l.b16 %v4364
  %v5837 = vunpack.c.l.b16 %v4365
  %v5838 = vunpack.c.l.b16 %v4366
  %v5839 = vpack.c.b16 %v5712, %v5711
  %v5840 = vpack.c.b16 %v5714, %v5713
  %v5841 = vpack.c.b16 %v5716, %v5715
  %v5842 = vpack.c.b16 %v5718, %v5717
  %v5843 = vpack.c.b16 %v5720, %v5719
  %v5844 = vpack.c.b16 %v5722, %v5721
  %v5845 = vpack.c.b16 %v5724, %v5723
  %v5846 = vpack.c.b16 %v5726, %v5725
  %v5847 = vpack.c.b16 %v5728, %v5727
  %v5848 = vpack.c.b16 %v5730, %v5729
  %v5849 = vpack.c.b16 %v5732, %v5731
  %v5850 = vpack.c.b16 %v5734, %v5733
  %v5851 = vpack.c.b16 %v5736, %v5735
  %v5852 = vpack.c.b16 %v5738, %v5737
  %v5853 = vpack.c.b16 %v5740, %v5739
  %v5854 = vpack.c.b16 %v5742, %v5741
  %v5855 = vpack.c.b16 %v5744, %v5743
  %v5856 = vpack.c.b16 %v5746, %v5745
  %v5857 = vpack.c.b16 %v5748, %v5747
  %v5858 = vpack.c.b16 %v5750, %v5749
  %v5859 = vpack.c.b16 %v5752, %v5751
  %v5860 = vpack.c.b16 %v5754, %v5753
  %v5861 = vpack.c.b16 %v5756, %v5755
  %v5862 = vpack.c.b16 %v5758, %v5757
  %v5863 = vpack.c.b16 %v5760, %v5759
  %v5864 = vpack.c.b16 %v5762, %v5761
  %v5865 = vpack.c.b16 %v5764, %v5763
  %v5866 = vpack.c.b16 %v5766, %v5765
  %v5867 = vpack.c.b16 %v5768, %v5767
  %v5868 = vpack.c.b16 %v5770, %v5769
  %v5869 = vpack.c.b16 %v5772, %v5771
  %v5870 = vpack.c.b16 %v5774, %v5773
  %v5871 = vpack.c.b16 %v5776, %v5775
  %v5872 = vpack.c.b16 %v5778, %v5777
  %v5873 = vpack.c.b16 %v5780, %v5779
  %v5874 = vpack.c.b16 %v5782, %v5781
  %v5875 = vpack.c.b16 %v5784, %v5783
  %v5876 = vpack.c.b16 %v5786, %v5785
  %v5877 = vpack.c.b16 %v5788, %v5787
  %v5878 = vpack.c.b16 %v5790, %v5789
  %v5879 = vpack.c.b16 %v5792, %v5791
  %v5880 = vpack.c.b16 %v5794, %v5793
  %v5881 = vpack.c.b16 %v5796, %v5795
  %v5882 = vpack.c.b16 %v5798, %v5797
  %v5883 = vpack.c.b16 %v5800, %v5799
  %v5884 = vpack.c.b16 %v5802, %v5801
  %v5885 = vpack.c.b16 %v5804, %v5803
  %v5886 = vpack.c.b16 %v5806, %v5805
  %v5887 = vpack.c.b16 %v5808, %v5807
  %v5888 = vpack.c.b16 %v5810, %v5809
  %v5889 = vpack.c.b16 %v5812, %v5811
  %v5890 = vpack.c.b16 %v5814, %v5813
  %v5891 = vpack.c.b16 %v5816, %v5815
  %v5892 = vpack.c.b16 %v5818, %v5817
  %v5893 = vpack.c.b16 %v5820, %v5819
  %v5894 = vpack.c.b16 %v5822, %v5821
  %v5895 = vpack.c.b16 %v5824, %v5823
  %v5896 = vpack.c.b16 %v5826, %v5825
  %v5897 = vpack.c.b16 %v5828, %v5827
  %v5898 = vpack.c.b16 %v5830, %v5829
  %v5899 = vpack.c.b16 %v5832, %v5831
  %v5900 = vpack.c.b16 %v5834, %v5833
  %v5901 = vpack.c.b16 %v5836, %v5835
  %v5902 = vpack.c.b16 %v5838, %v5837
  %5903 = vrot.lane.b32.xlu0 %v5839, 24
  %v5904 = vpop.permute.xlu0 %5903
  %5905 = vrot.lane.b32.xlu0 %v5840, 24
  %v5906 = vpop.permute.xlu0 %5905
  %5907 = vrot.lane.b32.xlu0 %v5841, 24
  %v5908 = vpop.permute.xlu0 %5907
  %5909 = vrot.lane.b32.xlu0 %v5842, 24
  %v5910 = vpop.permute.xlu0 %5909
  %5911 = vrot.lane.b32.xlu0 %v5843, 24
  %v5912 = vpop.permute.xlu0 %5911
  %5913 = vrot.lane.b32.xlu0 %v5844, 24
  %v5914 = vpop.permute.xlu0 %5913
  %5915 = vrot.lane.b32.xlu0 %v5845, 24
  %v5916 = vpop.permute.xlu0 %5915
  %5917 = vrot.lane.b32.xlu0 %v5846, 24
  %v5918 = vpop.permute.xlu0 %5917
  %5919 = vrot.lane.b32.xlu0 %v5847, 24
  %v5920 = vpop.permute.xlu0 %5919
  %5921 = vrot.lane.b32.xlu0 %v5848, 24
  %v5922 = vpop.permute.xlu0 %5921
  %5923 = vrot.lane.b32.xlu0 %v5849, 24
  %v5924 = vpop.permute.xlu0 %5923
  %5925 = vrot.lane.b32.xlu0 %v5850, 24
  %v5926 = vpop.permute.xlu0 %5925
  %5927 = vrot.lane.b32.xlu0 %v5851, 24
  %v5928 = vpop.permute.xlu0 %5927
  %5929 = vrot.lane.b32.xlu0 %v5852, 24
  %v5930 = vpop.permute.xlu0 %5929
  %5931 = vrot.lane.b32.xlu0 %v5853, 24
  %v5932 = vpop.permute.xlu0 %5931
  %5933 = vrot.lane.b32.xlu0 %v5854, 24
  %v5934 = vpop.permute.xlu0 %5933
  %5935 = vrot.lane.b32.xlu0 %v5855, 24
  %v5936 = vpop.permute.xlu0 %5935
  %5937 = vrot.lane.b32.xlu0 %v5856, 24
  %v5938 = vpop.permute.xlu0 %5937
  %5939 = vrot.lane.b32.xlu0 %v5857, 24
  %v5940 = vpop.permute.xlu0 %5939
  %5941 = vrot.lane.b32.xlu0 %v5858, 24
  %v5942 = vpop.permute.xlu0 %5941
  %5943 = vrot.lane.b32.xlu0 %v5859, 24
  %v5944 = vpop.permute.xlu0 %5943
  %5945 = vrot.lane.b32.xlu0 %v5860, 24
  %v5946 = vpop.permute.xlu0 %5945
  %5947 = vrot.lane.b32.xlu0 %v5861, 24
  %v5948 = vpop.permute.xlu0 %5947
  %5949 = vrot.lane.b32.xlu0 %v5862, 24
  %v5950 = vpop.permute.xlu0 %5949
  %5951 = vrot.lane.b32.xlu0 %v5863, 24
  %v5952 = vpop.permute.xlu0 %5951
  %5953 = vrot.lane.b32.xlu0 %v5864, 24
  %v5954 = vpop.permute.xlu0 %5953
  %5955 = vrot.lane.b32.xlu0 %v5865, 24
  %v5956 = vpop.permute.xlu0 %5955
  %5957 = vrot.lane.b32.xlu0 %v5866, 24
  %v5958 = vpop.permute.xlu0 %5957
  %5959 = vrot.lane.b32.xlu0 %v5867, 24
  %v5960 = vpop.permute.xlu0 %5959
  %5961 = vrot.lane.b32.xlu0 %v5868, 24
  %v5962 = vpop.permute.xlu0 %5961
  %5963 = vrot.lane.b32.xlu0 %v5869, 24
  %v5964 = vpop.permute.xlu0 %5963
  %5965 = vrot.lane.b32.xlu0 %v5870, 24
  %v5966 = vpop.permute.xlu0 %5965
  %5967 = vrot.lane.b32.xlu0 %v5871, 24
  %v5968 = vpop.permute.xlu0 %5967
  %5969 = vrot.lane.b32.xlu0 %v5872, 24
  %v5970 = vpop.permute.xlu0 %5969
  %5971 = vrot.lane.b32.xlu0 %v5873, 24
  %v5972 = vpop.permute.xlu0 %5971
  %5973 = vrot.lane.b32.xlu0 %v5874, 24
  %v5974 = vpop.permute.xlu0 %5973
  %5975 = vrot.lane.b32.xlu0 %v5875, 24
  %v5976 = vpop.permute.xlu0 %5975
  %5977 = vrot.lane.b32.xlu0 %v5876, 24
  %v5978 = vpop.permute.xlu0 %5977
  %5979 = vrot.lane.b32.xlu0 %v5877, 24
  %v5980 = vpop.permute.xlu0 %5979
  %5981 = vrot.lane.b32.xlu0 %v5878, 24
  %v5982 = vpop.permute.xlu0 %5981
  %5983 = vrot.lane.b32.xlu0 %v5879, 24
  %v5984 = vpop.permute.xlu0 %5983
  %5985 = vrot.lane.b32.xlu0 %v5880, 24
  %v5986 = vpop.permute.xlu0 %5985
  %5987 = vrot.lane.b32.xlu0 %v5881, 24
  %v5988 = vpop.permute.xlu0 %5987
  %5989 = vrot.lane.b32.xlu0 %v5882, 24
  %v5990 = vpop.permute.xlu0 %5989
  %5991 = vrot.lane.b32.xlu0 %v5883, 24
  %v5992 = vpop.permute.xlu0 %5991
  %5993 = vrot.lane.b32.xlu0 %v5884, 24
  %v5994 = vpop.permute.xlu0 %5993
  %5995 = vrot.lane.b32.xlu0 %v5885, 24
  %v5996 = vpop.permute.xlu0 %5995
  %5997 = vrot.lane.b32.xlu0 %v5886, 24
  %v5998 = vpop.permute.xlu0 %5997
  %5999 = vrot.lane.b32.xlu0 %v5887, 24
  %v6000 = vpop.permute.xlu0 %5999
  %6001 = vrot.lane.b32.xlu0 %v5888, 24
  %v6002 = vpop.permute.xlu0 %6001
  %6003 = vrot.lane.b32.xlu0 %v5889, 24
  %v6004 = vpop.permute.xlu0 %6003
  %6005 = vrot.lane.b32.xlu0 %v5890, 24
  %v6006 = vpop.permute.xlu0 %6005
  %6007 = vrot.lane.b32.xlu0 %v5891, 24
  %v6008 = vpop.permute.xlu0 %6007
  %6009 = vrot.lane.b32.xlu0 %v5892, 24
  %v6010 = vpop.permute.xlu0 %6009
  %6011 = vrot.lane.b32.xlu0 %v5893, 24
  %v6012 = vpop.permute.xlu0 %6011
  %6013 = vrot.lane.b32.xlu0 %v5894, 24
  %v6014 = vpop.permute.xlu0 %6013
  %6015 = vrot.lane.b32.xlu0 %v5895, 24
  %v6016 = vpop.permute.xlu0 %6015
  %6017 = vrot.lane.b32.xlu0 %v5896, 24
  %v6018 = vpop.permute.xlu0 %6017
  %6019 = vrot.lane.b32.xlu0 %v5897, 24
  %v6020 = vpop.permute.xlu0 %6019
  %6021 = vrot.lane.b32.xlu0 %v5898, 24
  %v6022 = vpop.permute.xlu0 %6021
  %6023 = vrot.lane.b32.xlu0 %v5899, 24
  %v6024 = vpop.permute.xlu0 %6023
  %6025 = vrot.lane.b32.xlu0 %v5900, 24
  %v6026 = vpop.permute.xlu0 %6025
  %6027 = vrot.lane.b32.xlu0 %v5901, 24
  %v6028 = vpop.permute.xlu0 %6027
  %6029 = vrot.lane.b32.xlu0 %v5902, 24
  %v6030 = vpop.permute.xlu0 %6029
  %vm6031 = vcmask 64512
  %v6034 = vsel %vm6031, %v4623, %v5008
  %v6037 = vsel %vm6031, %v4624, %v5010
  %v6040 = vsel %vm6031, %v4625, %v5012
  %v6043 = vsel %vm6031, %v4626, %v5014
  %v6046 = vsel %vm6031, %v4627, %v5016
  %v6049 = vsel %vm6031, %v4628, %v5018
  %v6052 = vsel %vm6031, %v4629, %v5020
  %v6055 = vsel %vm6031, %v4630, %v5022
  %v6058 = vsel %vm6031, %v4631, %v5024
  %v6061 = vsel %vm6031, %v4632, %v5026
  %v6064 = vsel %vm6031, %v4633, %v5028
  %v6067 = vsel %vm6031, %v4634, %v5030
  %v6070 = vsel %vm6031, %v4635, %v5032
  %v6073 = vsel %vm6031, %v4636, %v5034
  %v6076 = vsel %vm6031, %v4637, %v5036
  %v6079 = vsel %vm6031, %v4638, %v5038
  %v6082 = vsel %vm6031, %v4639, %v5040
  %v6085 = vsel %vm6031, %v4640, %v5042
  %v6088 = vsel %vm6031, %v4641, %v5044
  %v6091 = vsel %vm6031, %v4642, %v5046
  %v6094 = vsel %vm6031, %v4643, %v5048
  %v6097 = vsel %vm6031, %v4644, %v5050
  %v6100 = vsel %vm6031, %v4645, %v5052
  %v6103 = vsel %vm6031, %v4646, %v5054
  %v6106 = vsel %vm6031, %v4647, %v5056
  %v6109 = vsel %vm6031, %v4648, %v5058
  %v6112 = vsel %vm6031, %v4649, %v5060
  %v6115 = vsel %vm6031, %v4650, %v5062
  %v6118 = vsel %vm6031, %v4651, %v5064
  %v6121 = vsel %vm6031, %v4652, %v5066
  %v6124 = vsel %vm6031, %v4653, %v5068
  %v6127 = vsel %vm6031, %v4654, %v5070
  %v6130 = vsel %vm6031, %v4655, %v5072
  %v6133 = vsel %vm6031, %v4656, %v5074
  %v6136 = vsel %vm6031, %v4657, %v5076
  %v6139 = vsel %vm6031, %v4658, %v5078
  %v6142 = vsel %vm6031, %v4659, %v5080
  %v6145 = vsel %vm6031, %v4660, %v5082
  %v6148 = vsel %vm6031, %v4661, %v5084
  %v6151 = vsel %vm6031, %v4662, %v5086
  %v6154 = vsel %vm6031, %v4663, %v5088
  %v6157 = vsel %vm6031, %v4664, %v5090
  %v6160 = vsel %vm6031, %v4665, %v5092
  %v6163 = vsel %vm6031, %v4666, %v5094
  %v6166 = vsel %vm6031, %v4667, %v5096
  %v6169 = vsel %vm6031, %v4668, %v5098
  %v6172 = vsel %vm6031, %v4669, %v5100
  %v6175 = vsel %vm6031, %v4670, %v5102
  %v6178 = vsel %vm6031, %v4671, %v5104
  %v6181 = vsel %vm6031, %v4672, %v5106
  %v6184 = vsel %vm6031, %v4673, %v5108
  %v6187 = vsel %vm6031, %v4674, %v5110
  %v6190 = vsel %vm6031, %v4675, %v5112
  %v6193 = vsel %vm6031, %v4676, %v5114
  %v6196 = vsel %vm6031, %v4677, %v5116
  %v6199 = vsel %vm6031, %v4678, %v5118
  %v6202 = vsel %vm6031, %v4679, %v5120
  %v6205 = vsel %vm6031, %v4680, %v5122
  %v6208 = vsel %vm6031, %v4681, %v5124
  %v6211 = vsel %vm6031, %v4682, %v5126
  %v6214 = vsel %vm6031, %v4683, %v5128
  %v6217 = vsel %vm6031, %v4684, %v5130
  %v6220 = vsel %vm6031, %v4685, %v5132
  %v6223 = vsel %vm6031, %v4686, %v5134
  %vm6224 = vcmask 130048
  %v6226 = vsel %vm6224, %v6034, %v5456
  %v6228 = vsel %vm6224, %v6037, %v5458
  %v6230 = vsel %vm6224, %v6040, %v5460
  %v6232 = vsel %vm6224, %v6043, %v5462
  %v6234 = vsel %vm6224, %v6046, %v5464
  %v6236 = vsel %vm6224, %v6049, %v5466
  %v6238 = vsel %vm6224, %v6052, %v5468
  %v6240 = vsel %vm6224, %v6055, %v5470
  %v6242 = vsel %vm6224, %v6058, %v5472
  %v6244 = vsel %vm6224, %v6061, %v5474
  %v6246 = vsel %vm6224, %v6064, %v5476
  %v6248 = vsel %vm6224, %v6067, %v5478
  %v6250 = vsel %vm6224, %v6070, %v5480
  %v6252 = vsel %vm6224, %v6073, %v5482
  %v6254 = vsel %vm6224, %v6076, %v5484
  %v6256 = vsel %vm6224, %v6079, %v5486
  %v6258 = vsel %vm6224, %v6082, %v5488
  %v6260 = vsel %vm6224, %v6085, %v5490
  %v6262 = vsel %vm6224, %v6088, %v5492
  %v6264 = vsel %vm6224, %v6091, %v5494
  %v6266 = vsel %vm6224, %v6094, %v5496
  %v6268 = vsel %vm6224, %v6097, %v5498
  %v6270 = vsel %vm6224, %v6100, %v5500
  %v6272 = vsel %vm6224, %v6103, %v5502
  %v6274 = vsel %vm6224, %v6106, %v5504
  %v6276 = vsel %vm6224, %v6109, %v5506
  %v6278 = vsel %vm6224, %v6112, %v5508
  %v6280 = vsel %vm6224, %v6115, %v5510
  %v6282 = vsel %vm6224, %v6118, %v5512
  %v6284 = vsel %vm6224, %v6121, %v5514
  %v6286 = vsel %vm6224, %v6124, %v5516
  %v6288 = vsel %vm6224, %v6127, %v5518
  %v6290 = vsel %vm6224, %v6130, %v5520
  %v6292 = vsel %vm6224, %v6133, %v5522
  %v6294 = vsel %vm6224, %v6136, %v5524
  %v6296 = vsel %vm6224, %v6139, %v5526
  %v6298 = vsel %vm6224, %v6142, %v5528
  %v6300 = vsel %vm6224, %v6145, %v5530
  %v6302 = vsel %vm6224, %v6148, %v5532
  %v6304 = vsel %vm6224, %v6151, %v5534
  %v6306 = vsel %vm6224, %v6154, %v5536
  %v6308 = vsel %vm6224, %v6157, %v5538
  %v6310 = vsel %vm6224, %v6160, %v5540
  %v6312 = vsel %vm6224, %v6163, %v5542
  %v6314 = vsel %vm6224, %v6166, %v5544
  %v6316 = vsel %vm6224, %v6169, %v5546
  %v6318 = vsel %vm6224, %v6172, %v5548
  %v6320 = vsel %vm6224, %v6175, %v5550
  %v6322 = vsel %vm6224, %v6178, %v5552
  %v6324 = vsel %vm6224, %v6181, %v5554
  %v6326 = vsel %vm6224, %v6184, %v5556
  %v6328 = vsel %vm6224, %v6187, %v5558
  %v6330 = vsel %vm6224, %v6190, %v5560
  %v6332 = vsel %vm6224, %v6193, %v5562
  %v6334 = vsel %vm6224, %v6196, %v5564
  %v6336 = vsel %vm6224, %v6199, %v5566
  %v6338 = vsel %vm6224, %v6202, %v5568
  %v6340 = vsel %vm6224, %v6205, %v5570
  %v6342 = vsel %vm6224, %v6208, %v5572
  %v6344 = vsel %vm6224, %v6211, %v5574
  %v6346 = vsel %vm6224, %v6214, %v5576
  %v6348 = vsel %vm6224, %v6217, %v5578
  %v6350 = vsel %vm6224, %v6220, %v5580
  %v6352 = vsel %vm6224, %v6223, %v5582
  %vm6353 = vcmask 195584
  %v6355 = vsel %vm6353, %v6226, %v5904
  %v6357 = vsel %vm6353, %v6228, %v5906
  %v6359 = vsel %vm6353, %v6230, %v5908
  %v6361 = vsel %vm6353, %v6232, %v5910
  %v6363 = vsel %vm6353, %v6234, %v5912
  %v6365 = vsel %vm6353, %v6236, %v5914
  %v6367 = vsel %vm6353, %v6238, %v5916
  %v6369 = vsel %vm6353, %v6240, %v5918
  %v6371 = vsel %vm6353, %v6242, %v5920
  %v6373 = vsel %vm6353, %v6244, %v5922
  %v6375 = vsel %vm6353, %v6246, %v5924
  %v6377 = vsel %vm6353, %v6248, %v5926
  %v6379 = vsel %vm6353, %v6250, %v5928
  %v6381 = vsel %vm6353, %v6252, %v5930
  %v6383 = vsel %vm6353, %v6254, %v5932
  %v6385 = vsel %vm6353, %v6256, %v5934
  %v6387 = vsel %vm6353, %v6258, %v5936
  %v6389 = vsel %vm6353, %v6260, %v5938
  %v6391 = vsel %vm6353, %v6262, %v5940
  %v6393 = vsel %vm6353, %v6264, %v5942
  %v6395 = vsel %vm6353, %v6266, %v5944
  %v6397 = vsel %vm6353, %v6268, %v5946
  %v6399 = vsel %vm6353, %v6270, %v5948
  %v6401 = vsel %vm6353, %v6272, %v5950
  %v6403 = vsel %vm6353, %v6274, %v5952
  %v6405 = vsel %vm6353, %v6276, %v5954
  %v6407 = vsel %vm6353, %v6278, %v5956
  %v6409 = vsel %vm6353, %v6280, %v5958
  %v6411 = vsel %vm6353, %v6282, %v5960
  %v6413 = vsel %vm6353, %v6284, %v5962
  %v6415 = vsel %vm6353, %v6286, %v5964
  %v6417 = vsel %vm6353, %v6288, %v5966
  %v6419 = vsel %vm6353, %v6290, %v5968
  %v6421 = vsel %vm6353, %v6292, %v5970
  %v6423 = vsel %vm6353, %v6294, %v5972
  %v6425 = vsel %vm6353, %v6296, %v5974
  %v6427 = vsel %vm6353, %v6298, %v5976
  %v6429 = vsel %vm6353, %v6300, %v5978
  %v6431 = vsel %vm6353, %v6302, %v5980
  %v6433 = vsel %vm6353, %v6304, %v5982
  %v6435 = vsel %vm6353, %v6306, %v5984
  %v6437 = vsel %vm6353, %v6308, %v5986
  %v6439 = vsel %vm6353, %v6310, %v5988
  %v6441 = vsel %vm6353, %v6312, %v5990
  %v6443 = vsel %vm6353, %v6314, %v5992
  %v6445 = vsel %vm6353, %v6316, %v5994
  %v6447 = vsel %vm6353, %v6318, %v5996
  %v6449 = vsel %vm6353, %v6320, %v5998
  %v6451 = vsel %vm6353, %v6322, %v6000
  %v6453 = vsel %vm6353, %v6324, %v6002
  %v6455 = vsel %vm6353, %v6326, %v6004
  %v6457 = vsel %vm6353, %v6328, %v6006
  %v6459 = vsel %vm6353, %v6330, %v6008
  %v6461 = vsel %vm6353, %v6332, %v6010
  %v6463 = vsel %vm6353, %v6334, %v6012
  %v6465 = vsel %vm6353, %v6336, %v6014
  %v6467 = vsel %vm6353, %v6338, %v6016
  %v6469 = vsel %vm6353, %v6340, %v6018
  %v6471 = vsel %vm6353, %v6342, %v6020
  %v6473 = vsel %vm6353, %v6344, %v6022
  %v6475 = vsel %vm6353, %v6346, %v6024
  %v6477 = vsel %vm6353, %v6348, %v6026
  %v6479 = vsel %vm6353, %v6350, %v6028
  %v6481 = vsel %vm6353, %v6352, %v6030
  %v6482 = vld [vmem:[%s2] sm:$0xf]
  %v6483 = vld [vmem:[%s2 + $0x4] sm:$0xf]
  %v6484 = vld [vmem:[%s2 + $0x8] sm:$0xf]
  %v6485 = vld [vmem:[%s2 + $0xc] sm:$0xf]
  %v6490 = vunpack.c.l.b16 %v6482
  %v6491 = vunpack.c.l.b16 %v6483
  %v6492 = vunpack.c.l.b16 %v6484
  %v6493 = vunpack.c.l.b16 %v6485
  %v6494 = vpack.c.b16 %v6491, %v6490
  %v6495 = vpack.c.b16 %v6493, %v6492
  %vm6498 = vcmask 261120
  %v6499 = vsel %vm6498, %v6355, 0
  %v6501 = vsel %vm6498, %v6357, 0
  %v6503 = vsel %vm6498, %v6359, 0
  %v6505 = vsel %vm6498, %v6361, 0
  %v6507 = vsel %vm6498, %v6363, 0
  %v6509 = vsel %vm6498, %v6365, 0
  %v6511 = vsel %vm6498, %v6367, 0
  %v6513 = vsel %vm6498, %v6369, 0
  %v6515 = vsel %vm6498, %v6371, 0
  %v6517 = vsel %vm6498, %v6373, 0
  %v6519 = vsel %vm6498, %v6375, 0
  %v6521 = vsel %vm6498, %v6377, 0
  %v6523 = vsel %vm6498, %v6379, 0
  %v6525 = vsel %vm6498, %v6381, 0
  %v6527 = vsel %vm6498, %v6383, 0
  %v6529 = vsel %vm6498, %v6385, 0
  %v6531 = vsel %vm6498, %v6387, 0
  %v6533 = vsel %vm6498, %v6389, 0
  %v6535 = vsel %vm6498, %v6391, 0
  %v6537 = vsel %vm6498, %v6393, 0
  %v6539 = vsel %vm6498, %v6395, 0
  %v6541 = vsel %vm6498, %v6397, 0
  %v6543 = vsel %vm6498, %v6399, 0
  %v6545 = vsel %vm6498, %v6401, 0
  %v6547 = vsel %vm6498, %v6403, 0
  %v6549 = vsel %vm6498, %v6405, 0
  %v6551 = vsel %vm6498, %v6407, 0
  %v6553 = vsel %vm6498, %v6409, 0
  %v6555 = vsel %vm6498, %v6411, 0
  %v6557 = vsel %vm6498, %v6413, 0
  %v6559 = vsel %vm6498, %v6415, 0
  %v6561 = vsel %vm6498, %v6417, 0
  %v6563 = vsel %vm6498, %v6419, 0
  %v6565 = vsel %vm6498, %v6421, 0
  %v6567 = vsel %vm6498, %v6423, 0
  %v6569 = vsel %vm6498, %v6425, 0
  %v6571 = vsel %vm6498, %v6427, 0
  %v6573 = vsel %vm6498, %v6429, 0
  %v6575 = vsel %vm6498, %v6431, 0
  %v6577 = vsel %vm6498, %v6433, 0
  %v6579 = vsel %vm6498, %v6435, 0
  %v6581 = vsel %vm6498, %v6437, 0
  %v6583 = vsel %vm6498, %v6439, 0
  %v6585 = vsel %vm6498, %v6441, 0
  %v6587 = vsel %vm6498, %v6443, 0
  %v6589 = vsel %vm6498, %v6445, 0
  %v6591 = vsel %vm6498, %v6447, 0
  %v6593 = vsel %vm6498, %v6449, 0
  %v6595 = vsel %vm6498, %v6451, 0
  %v6597 = vsel %vm6498, %v6453, 0
  %v6599 = vsel %vm6498, %v6455, 0
  %v6601 = vsel %vm6498, %v6457, 0
  %v6603 = vsel %vm6498, %v6459, 0
  %v6605 = vsel %vm6498, %v6461, 0
  %v6607 = vsel %vm6498, %v6463, 0
  %v6609 = vsel %vm6498, %v6465, 0
  %v6611 = vsel %vm6498, %v6467, 0
  %v6613 = vsel %vm6498, %v6469, 0
  %v6615 = vsel %vm6498, %v6471, 0
  %v6617 = vsel %vm6498, %v6473, 0
  %v6619 = vsel %vm6498, %v6475, 0
  %v6621 = vsel %vm6498, %v6477, 0
  %v6623 = vsel %vm6498, %v6479, 0
  %v6625 = vsel %vm6498, %v6481, 0
  %6627 = vmatprep.subr.bf16.mxu0 0
  %6628 = vmatpush1.bf16.msra.mxu0 %v6494
  %6629 = vmatprep.subr.bf16.mxu0 0
  %6630 = vmatpush1.bf16.msra.mxu0 %v6495
  %6631 = vmatprep.subr.bf16.mxu0 0
  %6632 = vmatpush1.bf16.msra.mxu0 0
  %6633 = vmatprep.subr.bf16.mxu0 0
  %6634 = vmatpush1.bf16.msra.mxu0 0
  %6635 = vmatprep.subr.bf16.mxu0 0
  %6636 = vmatpush1.bf16.msra.mxu0 0
  %6637 = vmatprep.subr.bf16.mxu0 0
  %6638 = vmatpush1.bf16.msra.mxu0 0
  %6639 = vmatprep.subr.bf16.mxu0 0
  %6640 = vmatpush1.bf16.msra.mxu0 0
  %6641 = vmatprep.subr.bf16.mxu0 0
  %6642 = vmatpush1.bf16.msra.mxu0 0
  %6643 = vmatprep.subr.bf16.mxu0 0
  %6644 = vmatpush1.bf16.msra.mxu0 0
  %6645 = vmatprep.subr.bf16.mxu0 0
  %6646 = vmatpush1.bf16.msra.mxu0 0
  %6647 = vmatprep.subr.bf16.mxu0 0
  %6648 = vmatpush1.bf16.msra.mxu0 0
  %6649 = vmatprep.subr.bf16.mxu0 0
  %6650 = vmatpush1.bf16.msra.mxu0 0
  %6651 = vmatprep.subr.bf16.mxu0 0
  %6652 = vmatpush1.bf16.msra.mxu0 0
  %6653 = vmatprep.subr.bf16.mxu0 0
  %6654 = vmatpush1.bf16.msra.mxu0 0
  %6655 = vmatprep.subr.bf16.mxu0 0
  %6656 = vmatpush1.bf16.msra.mxu0 0
  %6657 = vmatprep.subr.bf16.mxu0 0
  %6658 = vmatpush1.bf16.msra.mxu0 0
  %6659 = vmatprep.mubr.bf16.mxu0 0
  %6660 = vmatmul.mubr.bf16.gmra.mrb[0].mxu0 %v6499
  %v6661 = vpop.f32.mrb[0].mxu0
  %v6662 = vadd.f32 0.0, %v6661
  %v6663 = vpop.f32.mrb[0].mxu0
  %v6664 = vpop.f32.mrb[0].mxu0
  %v6665 = vadd.f32 0.0, %v6664
  %v6666 = vpop.f32.mrb[0].mxu0
  %6667 = vmatprep.mubr.bf16.mxu0 0
  %6668 = vmatmul.mubr.bf16.gmra.mrb[0].mxu0 %v6501
  %v6669 = vpop.f32.mrb[0].mxu0
  %v6670 = vadd.f32 0.0, %v6669
  %v6671 = vpop.f32.mrb[0].mxu0
  %v6672 = vpop.f32.mrb[0].mxu0
  %v6673 = vadd.f32 0.0, %v6672
  %v6674 = vpop.f32.mrb[0].mxu0
  %6675 = vmatprep.mubr.bf16.mxu0 0
  %6676 = vmatmul.mubr.bf16.gmra.mrb[0].mxu0 %v6503
  %v6677 = vpop.f32.mrb[0].mxu0
  %v6678 = vadd.f32 0.0, %v6677
  %v6679 = vpop.f32.mrb[0].mxu0
  %v6680 = vpop.f32.mrb[0].mxu0
  %v6681 = vadd.f32 0.0, %v6680
  %v6682 = vpop.f32.mrb[0].mxu0
  %6683 = vmatprep.mubr.bf16.mxu0 0
  %6684 = vmatmul.mubr.bf16.gmra.mrb[0].mxu0 %v6505
  %v6685 = vpop.f32.mrb[0].mxu0
  %v6686 = vadd.f32 0.0, %v6685
  %v6687 = vpop.f32.mrb[0].mxu0
  %v6688 = vpop.f32.mrb[0].mxu0
  %v6689 = vadd.f32 0.0, %v6688
  %v6690 = vpop.f32.mrb[0].mxu0
  %6691 = vmatprep.mubr.bf16.mxu0 0
  %6692 = vmatmul.mubr.bf16.gmra.mrb[0].mxu0 %v6507
  %v6693 = vpop.f32.mrb[0].mxu0
  %v6694 = vadd.f32 0.0, %v6693
  %v6695 = vpop.f32.mrb[0].mxu0
  %v6696 = vpop.f32.mrb[0].mxu0
  %v6697 = vadd.f32 0.0, %v6696
  %v6698 = vpop.f32.mrb[0].mxu0
  %6699 = vmatprep.mubr.bf16.mxu0 0
  %6700 = vmatmul.mubr.bf16.gmra.mrb[0].mxu0 %v6509
  %v6701 = vpop.f32.mrb[0].mxu0
  %v6702 = vadd.f32 0.0, %v6701
  %v6703 = vpop.f32.mrb[0].mxu0
  %v6704 = vpop.f32.mrb[0].mxu0
  %v6705 = vadd.f32 0.0, %v6704
  %v6706 = vpop.f32.mrb[0].mxu0
  %6707 = vmatprep.mubr.bf16.mxu0 0
  %6708 = vmatmul.mubr.bf16.gmra.mrb[0].mxu0 %v6511
  %v6709 = vpop.f32.mrb[0].mxu0
  %v6710 = vadd.f32 0.0, %v6709
  %v6711 = vpop.f32.mrb[0].mxu0
  %v6712 = vpop.f32.mrb[0].mxu0
  %v6713 = vadd.f32 0.0, %v6712
  %v6714 = vpop.f32.mrb[0].mxu0
  %6715 = vmatprep.mubr.bf16.mxu0 0
  %6716 = vmatmul.mubr.bf16.gmra.mrb[0].mxu0 %v6513
  %v6717 = vpop.f32.mrb[0].mxu0
  %v6718 = vadd.f32 0.0, %v6717
  %v6719 = vpop.f32.mrb[0].mxu0
  %v6720 = vpop.f32.mrb[0].mxu0
  %v6721 = vadd.f32 0.0, %v6720
  %v6722 = vpop.f32.mrb[0].mxu0
  %6723 = vmatprep.mubr.bf16.mxu0 0
  %6724 = vmatmul.mubr.bf16.gmra.mrb[0].mxu0 %v6515
  %v6725 = vpop.f32.mrb[0].mxu0
  %v6726 = vadd.f32 0.0, %v6725
  %v6727 = vpop.f32.mrb[0].mxu0
  %v6728 = vpop.f32.mrb[0].mxu0
  %v6729 = vadd.f32 0.0, %v6728
  %v6730 = vpop.f32.mrb[0].mxu0
  %6731 = vmatprep.mubr.bf16.mxu0 0
  %6732 = vmatmul.mubr.bf16.gmra.mrb[0].mxu0 %v6517
  %v6733 = vpop.f32.mrb[0].mxu0
  %v6734 = vadd.f32 0.0, %v6733
  %v6735 = vpop.f32.mrb[0].mxu0
  %v6736 = vpop.f32.mrb[0].mxu0
  %v6737 = vadd.f32 0.0, %v6736
  %v6738 = vpop.f32.mrb[0].mxu0
  %6739 = vmatprep.mubr.bf16.mxu0 0
  %6740 = vmatmul.mubr.bf16.gmra.mrb[0].mxu0 %v6519
  %v6741 = vpop.f32.mrb[0].mxu0
  %v6742 = vadd.f32 0.0, %v6741
  %v6743 = vpop.f32.mrb[0].mxu0
  %v6744 = vpop.f32.mrb[0].mxu0
  %v6745 = vadd.f32 0.0, %v6744
  %v6746 = vpop.f32.mrb[0].mxu0
  %6747 = vmatprep.mubr.bf16.mxu0 0
  %6748 = vmatmul.mubr.bf16.gmra.mrb[0].mxu0 %v6521
  %v6749 = vpop.f32.mrb[0].mxu0
  %v6750 = vadd.f32 0.0, %v6749
  %v6751 = vpop.f32.mrb[0].mxu0
  %v6752 = vpop.f32.mrb[0].mxu0
  %v6753 = vadd.f32 0.0, %v6752
  %v6754 = vpop.f32.mrb[0].mxu0
  %6755 = vmatprep.mubr.bf16.mxu0 0
  %6756 = vmatmul.mubr.bf16.gmra.mrb[0].mxu0 %v6523
  %v6757 = vpop.f32.mrb[0].mxu0
  %v6758 = vadd.f32 0.0, %v6757
  %v6759 = vpop.f32.mrb[0].mxu0
  %v6760 = vpop.f32.mrb[0].mxu0
  %v6761 = vadd.f32 0.0, %v6760
  %v6762 = vpop.f32.mrb[0].mxu0
  %6763 = vmatprep.mubr.bf16.mxu0 0
  %6764 = vmatmul.mubr.bf16.gmra.mrb[0].mxu0 %v6525
  %v6765 = vpop.f32.mrb[0].mxu0
  %v6766 = vadd.f32 0.0, %v6765
  %v6767 = vpop.f32.mrb[0].mxu0
  %v6768 = vpop.f32.mrb[0].mxu0
  %v6769 = vadd.f32 0.0, %v6768
  %v6770 = vpop.f32.mrb[0].mxu0
  %6771 = vmatprep.mubr.bf16.mxu0 0
  %6772 = vmatmul.mubr.bf16.gmra.mrb[0].mxu0 %v6527
  %v6773 = vpop.f32.mrb[0].mxu0
  %v6774 = vadd.f32 0.0, %v6773
  %v6775 = vpop.f32.mrb[0].mxu0
  %v6776 = vpop.f32.mrb[0].mxu0
  %v6777 = vadd.f32 0.0, %v6776
  %v6778 = vpop.f32.mrb[0].mxu0
  %6779 = vmatprep.mubr.bf16.mxu0 0
  %6780 = vmatmul.mubr.bf16.gmra.mrb[0].mxu0 %v6529
  %v6781 = vpop.f32.mrb[0].mxu0
  %v6782 = vadd.f32 0.0, %v6781
  %v6783 = vpop.f32.mrb[0].mxu0
  %v6784 = vpop.f32.mrb[0].mxu0
  %v6785 = vadd.f32 0.0, %v6784
  %v6786 = vpop.f32.mrb[0].mxu0
  %6787 = vmatprep.mubr.bf16.mxu0 0
  %6788 = vmatmul.mubr.bf16.gmra.mrb[0].mxu0 %v6531
  %v6789 = vpop.f32.mrb[0].mxu0
  %v6790 = vadd.f32 0.0, %v6789
  %v6791 = vpop.f32.mrb[0].mxu0
  %v6792 = vpop.f32.mrb[0].mxu0
  %v6793 = vadd.f32 0.0, %v6792
  %v6794 = vpop.f32.mrb[0].mxu0
  %6795 = vmatprep.mubr.bf16.mxu0 0
  %6796 = vmatmul.mubr.bf16.gmra.mrb[0].mxu0 %v6533
  %v6797 = vpop.f32.mrb[0].mxu0
  %v6798 = vadd.f32 0.0, %v6797
  %v6799 = vpop.f32.mrb[0].mxu0
  %v6800 = vpop.f32.mrb[0].mxu0
  %v6801 = vadd.f32 0.0, %v6800
  %v6802 = vpop.f32.mrb[0].mxu0
  %6803 = vmatprep.mubr.bf16.mxu0 0
  %6804 = vmatmul.mubr.bf16.gmra.mrb[0].mxu0 %v6535
  %v6805 = vpop.f32.mrb[0].mxu0
  %v6806 = vadd.f32 0.0, %v6805
  %v6807 = vpop.f32.mrb[0].mxu0
  %v6808 = vpop.f32.mrb[0].mxu0
  %v6809 = vadd.f32 0.0, %v6808
  %v6810 = vpop.f32.mrb[0].mxu0
  %6811 = vmatprep.mubr.bf16.mxu0 0
  %6812 = vmatmul.mubr.bf16.gmra.mrb[0].mxu0 %v6537
  %v6813 = vpop.f32.mrb[0].mxu0
  %v6814 = vadd.f32 0.0, %v6813
  %v6815 = vpop.f32.mrb[0].mxu0
  %v6816 = vpop.f32.mrb[0].mxu0
  %v6817 = vadd.f32 0.0, %v6816
  %v6818 = vpop.f32.mrb[0].mxu0
  %6819 = vmatprep.mubr.bf16.mxu0 0
  %6820 = vmatmul.mubr.bf16.gmra.mrb[0].mxu0 %v6539
  %v6821 = vpop.f32.mrb[0].mxu0
  %v6822 = vadd.f32 0.0, %v6821
  %v6823 = vpop.f32.mrb[0].mxu0
  %v6824 = vpop.f32.mrb[0].mxu0
  %v6825 = vadd.f32 0.0, %v6824
  %v6826 = vpop.f32.mrb[0].mxu0
  %6827 = vmatprep.mubr.bf16.mxu0 0
  %6828 = vmatmul.mubr.bf16.gmra.mrb[0].mxu0 %v6541
  %v6829 = vpop.f32.mrb[0].mxu0
  %v6830 = vadd.f32 0.0, %v6829
  %v6831 = vpop.f32.mrb[0].mxu0
  %v6832 = vpop.f32.mrb[0].mxu0
  %v6833 = vadd.f32 0.0, %v6832
  %v6834 = vpop.f32.mrb[0].mxu0
  %6835 = vmatprep.mubr.bf16.mxu0 0
  %6836 = vmatmul.mubr.bf16.gmra.mrb[0].mxu0 %v6543
  %v6837 = vpop.f32.mrb[0].mxu0
  %v6838 = vadd.f32 0.0, %v6837
  %v6839 = vpop.f32.mrb[0].mxu0
  %v6840 = vpop.f32.mrb[0].mxu0
  %v6841 = vadd.f32 0.0, %v6840
  %v6842 = vpop.f32.mrb[0].mxu0
  %6843 = vmatprep.mubr.bf16.mxu0 0
  %6844 = vmatmul.mubr.bf16.gmra.mrb[0].mxu0 %v6545
  %v6845 = vpop.f32.mrb[0].mxu0
  %v6846 = vadd.f32 0.0, %v6845
  %v6847 = vpop.f32.mrb[0].mxu0
  %v6848 = vpop.f32.mrb[0].mxu0
  %v6849 = vadd.f32 0.0, %v6848
  %v6850 = vpop.f32.mrb[0].mxu0
  %6851 = vmatprep.mubr.bf16.mxu0 0
  %6852 = vmatmul.mubr.bf16.gmra.mrb[0].mxu0 %v6547
  %v6853 = vpop.f32.mrb[0].mxu0
  %v6854 = vadd.f32 0.0, %v6853
  %v6855 = vpop.f32.mrb[0].mxu0
  %v6856 = vpop.f32.mrb[0].mxu0
  %v6857 = vadd.f32 0.0, %v6856
  %v6858 = vpop.f32.mrb[0].mxu0
  %6859 = vmatprep.mubr.bf16.mxu0 0
  %6860 = vmatmul.mubr.bf16.gmra.mrb[0].mxu0 %v6549
  %v6861 = vpop.f32.mrb[0].mxu0
  %v6862 = vadd.f32 0.0, %v6861
  %v6863 = vpop.f32.mrb[0].mxu0
  %v6864 = vpop.f32.mrb[0].mxu0
  %v6865 = vadd.f32 0.0, %v6864
  %v6866 = vpop.f32.mrb[0].mxu0
  %6867 = vmatprep.mubr.bf16.mxu0 0
  %6868 = vmatmul.mubr.bf16.gmra.mrb[0].mxu0 %v6551
  %v6869 = vpop.f32.mrb[0].mxu0
  %v6870 = vadd.f32 0.0, %v6869
  %v6871 = vpop.f32.mrb[0].mxu0
  %v6872 = vpop.f32.mrb[0].mxu0
  %v6873 = vadd.f32 0.0, %v6872
  %v6874 = vpop.f32.mrb[0].mxu0
  %6875 = vmatprep.mubr.bf16.mxu0 0
  %6876 = vmatmul.mubr.bf16.gmra.mrb[0].mxu0 %v6553
  %v6877 = vpop.f32.mrb[0].mxu0
  %v6878 = vadd.f32 0.0, %v6877
  %v6879 = vpop.f32.mrb[0].mxu0
  %v6880 = vpop.f32.mrb[0].mxu0
  %v6881 = vadd.f32 0.0, %v6880
  %v6882 = vpop.f32.mrb[0].mxu0
  %6883 = vmatprep.mubr.bf16.mxu0 0
  %6884 = vmatmul.mubr.bf16.gmra.mrb[0].mxu0 %v6555
  %v6885 = vpop.f32.mrb[0].mxu0
  %v6886 = vadd.f32 0.0, %v6885
  %v6887 = vpop.f32.mrb[0].mxu0
  %v6888 = vpop.f32.mrb[0].mxu0
  %v6889 = vadd.f32 0.0, %v6888
  %v6890 = vpop.f32.mrb[0].mxu0
  %6891 = vmatprep.mubr.bf16.mxu0 0
  %6892 = vmatmul.mubr.bf16.gmra.mrb[0].mxu0 %v6557
  %v6893 = vpop.f32.mrb[0].mxu0
  %v6894 = vadd.f32 0.0, %v6893
  %v6895 = vpop.f32.mrb[0].mxu0
  %v6896 = vpop.f32.mrb[0].mxu0
  %v6897 = vadd.f32 0.0, %v6896
  %v6898 = vpop.f32.mrb[0].mxu0
  %6899 = vmatprep.mubr.bf16.mxu0 0
  %6900 = vmatmul.mubr.bf16.gmra.mrb[0].mxu0 %v6559
  %v6901 = vpop.f32.mrb[0].mxu0
  %v6902 = vadd.f32 0.0, %v6901
  %v6903 = vpop.f32.mrb[0].mxu0
  %v6904 = vpop.f32.mrb[0].mxu0
  %v6905 = vadd.f32 0.0, %v6904
  %v6906 = vpop.f32.mrb[0].mxu0
  %6907 = vmatprep.mubr.bf16.mxu0 0
  %6908 = vmatmul.mubr.bf16.gmra.mrb[0].mxu0 %v6561
  %v6909 = vpop.f32.mrb[0].mxu0
  %v6910 = vadd.f32 0.0, %v6909
  %v6911 = vpop.f32.mrb[0].mxu0
  %v6912 = vpop.f32.mrb[0].mxu0
  %v6913 = vadd.f32 0.0, %v6912
  %v6914 = vpop.f32.mrb[0].mxu0
  %6915 = vmatprep.mubr.bf16.mxu0 0
  %6916 = vmatmul.mubr.bf16.gmra.mrb[0].mxu0 %v6563
  %v6917 = vpop.f32.mrb[0].mxu0
  %v6918 = vadd.f32 0.0, %v6917
  %v6919 = vpop.f32.mrb[0].mxu0
  %v6920 = vpop.f32.mrb[0].mxu0
  %v6921 = vadd.f32 0.0, %v6920
  %v6922 = vpop.f32.mrb[0].mxu0
  %6923 = vmatprep.mubr.bf16.mxu0 0
  %6924 = vmatmul.mubr.bf16.gmra.mrb[0].mxu0 %v6565
  %v6925 = vpop.f32.mrb[0].mxu0
  %v6926 = vadd.f32 0.0, %v6925
  %v6927 = vpop.f32.mrb[0].mxu0
  %v6928 = vpop.f32.mrb[0].mxu0
  %v6929 = vadd.f32 0.0, %v6928
  %v6930 = vpop.f32.mrb[0].mxu0
  %6931 = vmatprep.mubr.bf16.mxu0 0
  %6932 = vmatmul.mubr.bf16.gmra.mrb[0].mxu0 %v6567
  %v6933 = vpop.f32.mrb[0].mxu0
  %v6934 = vadd.f32 0.0, %v6933
  %v6935 = vpop.f32.mrb[0].mxu0
  %v6936 = vpop.f32.mrb[0].mxu0
  %v6937 = vadd.f32 0.0, %v6936
  %v6938 = vpop.f32.mrb[0].mxu0
  %6939 = vmatprep.mubr.bf16.mxu0 0
  %6940 = vmatmul.mubr.bf16.gmra.mrb[0].mxu0 %v6569
  %v6941 = vpop.f32.mrb[0].mxu0
  %v6942 = vadd.f32 0.0, %v6941
  %v6943 = vpop.f32.mrb[0].mxu0
  %v6944 = vpop.f32.mrb[0].mxu0
  %v6945 = vadd.f32 0.0, %v6944
  %v6946 = vpop.f32.mrb[0].mxu0
  %6947 = vmatprep.mubr.bf16.mxu0 0
  %6948 = vmatmul.mubr.bf16.gmra.mrb[0].mxu0 %v6571
  %v6949 = vpop.f32.mrb[0].mxu0
  %v6950 = vadd.f32 0.0, %v6949
  %v6951 = vpop.f32.mrb[0].mxu0
  %v6952 = vpop.f32.mrb[0].mxu0
  %v6953 = vadd.f32 0.0, %v6952
  %v6954 = vpop.f32.mrb[0].mxu0
  %6955 = vmatprep.mubr.bf16.mxu0 0
  %6956 = vmatmul.mubr.bf16.gmra.mrb[0].mxu0 %v6573
  %v6957 = vpop.f32.mrb[0].mxu0
  %v6958 = vadd.f32 0.0, %v6957
  %v6959 = vpop.f32.mrb[0].mxu0
  %v6960 = vpop.f32.mrb[0].mxu0
  %v6961 = vadd.f32 0.0, %v6960
  %v6962 = vpop.f32.mrb[0].mxu0
  %6963 = vmatprep.mubr.bf16.mxu0 0
  %6964 = vmatmul.mubr.bf16.gmra.mrb[0].mxu0 %v6575
  %v6965 = vpop.f32.mrb[0].mxu0
  %v6966 = vadd.f32 0.0, %v6965
  %v6967 = vpop.f32.mrb[0].mxu0
  %v6968 = vpop.f32.mrb[0].mxu0
  %v6969 = vadd.f32 0.0, %v6968
  %v6970 = vpop.f32.mrb[0].mxu0
  %6971 = vmatprep.mubr.bf16.mxu0 0
  %6972 = vmatmul.mubr.bf16.gmra.mrb[0].mxu0 %v6577
  %v6973 = vpop.f32.mrb[0].mxu0
  %v6974 = vadd.f32 0.0, %v6973
  %v6975 = vpop.f32.mrb[0].mxu0
  %v6976 = vpop.f32.mrb[0].mxu0
  %v6977 = vadd.f32 0.0, %v6976
  %v6978 = vpop.f32.mrb[0].mxu0
  %6979 = vmatprep.mubr.bf16.mxu0 0
  %6980 = vmatmul.mubr.bf16.gmra.mrb[0].mxu0 %v6579
  %v6981 = vpop.f32.mrb[0].mxu0
  %v6982 = vadd.f32 0.0, %v6981
  %v6983 = vpop.f32.mrb[0].mxu0
  %v6984 = vpop.f32.mrb[0].mxu0
  %v6985 = vadd.f32 0.0, %v6984
  %v6986 = vpop.f32.mrb[0].mxu0
  %6987 = vmatprep.mubr.bf16.mxu0 0
  %6988 = vmatmul.mubr.bf16.gmra.mrb[0].mxu0 %v6581
  %v6989 = vpop.f32.mrb[0].mxu0
  %v6990 = vadd.f32 0.0, %v6989
  %v6991 = vpop.f32.mrb[0].mxu0
  %v6992 = vpop.f32.mrb[0].mxu0
  %v6993 = vadd.f32 0.0, %v6992
  %v6994 = vpop.f32.mrb[0].mxu0
  %6995 = vmatprep.mubr.bf16.mxu0 0
  %6996 = vmatmul.mubr.bf16.gmra.mrb[0].mxu0 %v6583
  %v6997 = vpop.f32.mrb[0].mxu0
  %v6998 = vadd.f32 0.0, %v6997
  %v6999 = vpop.f32.mrb[0].mxu0
  %v7000 = vpop.f32.mrb[0].mxu0
  %v7001 = vadd.f32 0.0, %v7000
  %v7002 = vpop.f32.mrb[0].mxu0
  %7003 = vmatprep.mubr.bf16.mxu0 0
  %7004 = vmatmul.mubr.bf16.gmra.mrb[0].mxu0 %v6585
  %v7005 = vpop.f32.mrb[0].mxu0
  %v7006 = vadd.f32 0.0, %v7005
  %v7007 = vpop.f32.mrb[0].mxu0
  %v7008 = vpop.f32.mrb[0].mxu0
  %v7009 = vadd.f32 0.0, %v7008
  %v7010 = vpop.f32.mrb[0].mxu0
  %7011 = vmatprep.mubr.bf16.mxu0 0
  %7012 = vmatmul.mubr.bf16.gmra.mrb[0].mxu0 %v6587
  %v7013 = vpop.f32.mrb[0].mxu0
  %v7014 = vadd.f32 0.0, %v7013
  %v7015 = vpop.f32.mrb[0].mxu0
  %v7016 = vpop.f32.mrb[0].mxu0
  %v7017 = vadd.f32 0.0, %v7016
  %v7018 = vpop.f32.mrb[0].mxu0
  %7019 = vmatprep.mubr.bf16.mxu0 0
  %7020 = vmatmul.mubr.bf16.gmra.mrb[0].mxu0 %v6589
  %v7021 = vpop.f32.mrb[0].mxu0
  %v7022 = vadd.f32 0.0, %v7021
  %v7023 = vpop.f32.mrb[0].mxu0
  %v7024 = vpop.f32.mrb[0].mxu0
  %v7025 = vadd.f32 0.0, %v7024
  %v7026 = vpop.f32.mrb[0].mxu0
  %7027 = vmatprep.mubr.bf16.mxu0 0
  %7028 = vmatmul.mubr.bf16.gmra.mrb[0].mxu0 %v6591
  %v7029 = vpop.f32.mrb[0].mxu0
  %v7030 = vadd.f32 0.0, %v7029
  %v7031 = vpop.f32.mrb[0].mxu0
  %v7032 = vpop.f32.mrb[0].mxu0
  %v7033 = vadd.f32 0.0, %v7032
  %v7034 = vpop.f32.mrb[0].mxu0
  %7035 = vmatprep.mubr.bf16.mxu0 0
  %7036 = vmatmul.mubr.bf16.gmra.mrb[0].mxu0 %v6593
  %v7037 = vpop.f32.mrb[0].mxu0
  %v7038 = vadd.f32 0.0, %v7037
  %v7039 = vpop.f32.mrb[0].mxu0
  %v7040 = vpop.f32.mrb[0].mxu0
  %v7041 = vadd.f32 0.0, %v7040
  %v7042 = vpop.f32.mrb[0].mxu0
  %7043 = vmatprep.mubr.bf16.mxu0 0
  %7044 = vmatmul.mubr.bf16.gmra.mrb[0].mxu0 %v6595
  %v7045 = vpop.f32.mrb[0].mxu0
  %v7046 = vadd.f32 0.0, %v7045
  %v7047 = vpop.f32.mrb[0].mxu0
  %v7048 = vpop.f32.mrb[0].mxu0
  %v7049 = vadd.f32 0.0, %v7048
  %v7050 = vpop.f32.mrb[0].mxu0
  %7051 = vmatprep.mubr.bf16.mxu0 0
  %7052 = vmatmul.mubr.bf16.gmra.mrb[0].mxu0 %v6597
  %v7053 = vpop.f32.mrb[0].mxu0
  %v7054 = vadd.f32 0.0, %v7053
  %v7055 = vpop.f32.mrb[0].mxu0
  %v7056 = vpop.f32.mrb[0].mxu0
  %v7057 = vadd.f32 0.0, %v7056
  %v7058 = vpop.f32.mrb[0].mxu0
  %7059 = vmatprep.mubr.bf16.mxu0 0
  %7060 = vmatmul.mubr.bf16.gmra.mrb[0].mxu0 %v6599
  %v7061 = vpop.f32.mrb[0].mxu0
  %v7062 = vadd.f32 0.0, %v7061
  %v7063 = vpop.f32.mrb[0].mxu0
  %v7064 = vpop.f32.mrb[0].mxu0
  %v7065 = vadd.f32 0.0, %v7064
  %v7066 = vpop.f32.mrb[0].mxu0
  %7067 = vmatprep.mubr.bf16.mxu0 0
  %7068 = vmatmul.mubr.bf16.gmra.mrb[0].mxu0 %v6601
  %v7069 = vpop.f32.mrb[0].mxu0
  %v7070 = vadd.f32 0.0, %v7069
  %v7071 = vpop.f32.mrb[0].mxu0
  %v7072 = vpop.f32.mrb[0].mxu0
  %v7073 = vadd.f32 0.0, %v7072
  %v7074 = vpop.f32.mrb[0].mxu0
  %7075 = vmatprep.mubr.bf16.mxu0 0
  %7076 = vmatmul.mubr.bf16.gmra.mrb[0].mxu0 %v6603
  %v7077 = vpop.f32.mrb[0].mxu0
  %v7078 = vadd.f32 0.0, %v7077
  %v7079 = vpop.f32.mrb[0].mxu0
  %v7080 = vpop.f32.mrb[0].mxu0
  %v7081 = vadd.f32 0.0, %v7080
  %v7082 = vpop.f32.mrb[0].mxu0
  %7083 = vmatprep.mubr.bf16.mxu0 0
  %7084 = vmatmul.mubr.bf16.gmra.mrb[0].mxu0 %v6605
  %v7085 = vpop.f32.mrb[0].mxu0
  %v7086 = vadd.f32 0.0, %v7085
  %v7087 = vpop.f32.mrb[0].mxu0
  %v7088 = vpop.f32.mrb[0].mxu0
  %v7089 = vadd.f32 0.0, %v7088
  %v7090 = vpop.f32.mrb[0].mxu0
  %7091 = vmatprep.mubr.bf16.mxu0 0
  %7092 = vmatmul.mubr.bf16.gmra.mrb[0].mxu0 %v6607
  %v7093 = vpop.f32.mrb[0].mxu0
  %v7094 = vadd.f32 0.0, %v7093
  %v7095 = vpop.f32.mrb[0].mxu0
  %v7096 = vpop.f32.mrb[0].mxu0
  %v7097 = vadd.f32 0.0, %v7096
  %v7098 = vpop.f32.mrb[0].mxu0
  %7099 = vmatprep.mubr.bf16.mxu0 0
  %7100 = vmatmul.mubr.bf16.gmra.mrb[0].mxu0 %v6609
  %v7101 = vpop.f32.mrb[0].mxu0
  %v7102 = vadd.f32 0.0, %v7101
  %v7103 = vpop.f32.mrb[0].mxu0
  %v7104 = vpop.f32.mrb[0].mxu0
  %v7105 = vadd.f32 0.0, %v7104
  %v7106 = vpop.f32.mrb[0].mxu0
  %7107 = vmatprep.mubr.bf16.mxu0 0
  %7108 = vmatmul.mubr.bf16.gmra.mrb[0].mxu0 %v6611
  %v7109 = vpop.f32.mrb[0].mxu0
  %v7110 = vadd.f32 0.0, %v7109
  %v7111 = vpop.f32.mrb[0].mxu0
  %v7112 = vpop.f32.mrb[0].mxu0
  %v7113 = vadd.f32 0.0, %v7112
  %v7114 = vpop.f32.mrb[0].mxu0
  %7115 = vmatprep.mubr.bf16.mxu0 0
  %7116 = vmatmul.mubr.bf16.gmra.mrb[0].mxu0 %v6613
  %v7117 = vpop.f32.mrb[0].mxu0
  %v7118 = vadd.f32 0.0, %v7117
  %v7119 = vpop.f32.mrb[0].mxu0
  %v7120 = vpop.f32.mrb[0].mxu0
  %v7121 = vadd.f32 0.0, %v7120
  %v7122 = vpop.f32.mrb[0].mxu0
  %7123 = vmatprep.mubr.bf16.mxu0 0
  %7124 = vmatmul.mubr.bf16.gmra.mrb[0].mxu0 %v6615
  %v7125 = vpop.f32.mrb[0].mxu0
  %v7126 = vadd.f32 0.0, %v7125
  %v7127 = vpop.f32.mrb[0].mxu0
  %v7128 = vpop.f32.mrb[0].mxu0
  %v7129 = vadd.f32 0.0, %v7128
  %v7130 = vpop.f32.mrb[0].mxu0
  %7131 = vmatprep.mubr.bf16.mxu0 0
  %7132 = vmatmul.mubr.bf16.gmra.mrb[0].mxu0 %v6617
  %v7133 = vpop.f32.mrb[0].mxu0
  %v7134 = vadd.f32 0.0, %v7133
  %v7135 = vpop.f32.mrb[0].mxu0
  %v7136 = vpop.f32.mrb[0].mxu0
  %v7137 = vadd.f32 0.0, %v7136
  %v7138 = vpop.f32.mrb[0].mxu0
  %7139 = vmatprep.mubr.bf16.mxu0 0
  %7140 = vmatmul.mubr.bf16.gmra.mrb[0].mxu0 %v6619
  %v7141 = vpop.f32.mrb[0].mxu0
  %v7142 = vadd.f32 0.0, %v7141
  %v7143 = vpop.f32.mrb[0].mxu0
  %v7144 = vpop.f32.mrb[0].mxu0
  %v7145 = vadd.f32 0.0, %v7144
  %v7146 = vpop.f32.mrb[0].mxu0
  %7147 = vmatprep.mubr.bf16.mxu0 0
  %7148 = vmatmul.mubr.bf16.gmra.mrb[0].mxu0 %v6621
  %v7149 = vpop.f32.mrb[0].mxu0
  %v7150 = vadd.f32 0.0, %v7149
  %v7151 = vpop.f32.mrb[0].mxu0
  %v7152 = vpop.f32.mrb[0].mxu0
  %v7153 = vadd.f32 0.0, %v7152
  %v7154 = vpop.f32.mrb[0].mxu0
  %7155 = vmatprep.mubr.bf16.mxu0 0
  %7156 = vmatmul.mubr.bf16.gmra.mrb[0].mxu0 %v6623
  %v7157 = vpop.f32.mrb[0].mxu0
  %v7158 = vadd.f32 0.0, %v7157
  %v7159 = vpop.f32.mrb[0].mxu0
  %v7160 = vpop.f32.mrb[0].mxu0
  %v7161 = vadd.f32 0.0, %v7160
  %v7162 = vpop.f32.mrb[0].mxu0
  %7163 = vmatprep.mubr.bf16.mxu0 0
  %7164 = vmatmul.mubr.bf16.gmra.mrb[0].mxu0 %v6625
  %v7165 = vpop.f32.mrb[0].mxu0
  %v7166 = vadd.f32 0.0, %v7165
  %v7167 = vpop.f32.mrb[0].mxu0
  %v7168 = vpop.f32.mrb[0].mxu0
  %v7169 = vadd.f32 0.0, %v7168
  %v7170 = vpop.f32.mrb[0].mxu0
  %7171 = vdwg.mxu0
  %7172 = vst.msk [vmem:[%s3] sm:$0xff] %vm6031, %v6662
  %7173 = vst.msk [vmem:[%s3 + $0x8] sm:$0xff] %vm6031, %v6665
  %7174 = vst.msk [vmem:[%s3 + $0x10] sm:$0xff] %vm6031, %v6670
  %7175 = vst.msk [vmem:[%s3 + $0x18] sm:$0xff] %vm6031, %v6673
  %7176 = vst.msk [vmem:[%s3 + $0x20] sm:$0xff] %vm6031, %v6678
  %7177 = vst.msk [vmem:[%s3 + $0x28] sm:$0xff] %vm6031, %v6681
  %7178 = vst.msk [vmem:[%s3 + $0x30] sm:$0xff] %vm6031, %v6686
  %7179 = vst.msk [vmem:[%s3 + $0x38] sm:$0xff] %vm6031, %v6689
  %7180 = vst.msk [vmem:[%s3 + $0x40] sm:$0xff] %vm6031, %v6694
  %7181 = vst.msk [vmem:[%s3 + $0x48] sm:$0xff] %vm6031, %v6697
  %7182 = vst.msk [vmem:[%s3 + $0x50] sm:$0xff] %vm6031, %v6702
  %7183 = vst.msk [vmem:[%s3 + $0x58] sm:$0xff] %vm6031, %v6705
  %7184 = vst.msk [vmem:[%s3 + $0x60] sm:$0xff] %vm6031, %v6710
  %7185 = vst.msk [vmem:[%s3 + $0x68] sm:$0xff] %vm6031, %v6713
  %7186 = vst.msk [vmem:[%s3 + $0x70] sm:$0xff] %vm6031, %v6718
  %7187 = vst.msk [vmem:[%s3 + $0x78] sm:$0xff] %vm6031, %v6721
  %7188 = vst.msk [vmem:[%s3 + $0x80] sm:$0xff] %vm6031, %v6726
  %7189 = vst.msk [vmem:[%s3 + $0x88] sm:$0xff] %vm6031, %v6729
  %7190 = vst.msk [vmem:[%s3 + $0x90] sm:$0xff] %vm6031, %v6734
  %7191 = vst.msk [vmem:[%s3 + $0x98] sm:$0xff] %vm6031, %v6737
  %7192 = vst.msk [vmem:[%s3 + $0xa0] sm:$0xff] %vm6031, %v6742
  %7193 = vst.msk [vmem:[%s3 + $0xa8] sm:$0xff] %vm6031, %v6745
  %7194 = vst.msk [vmem:[%s3 + $0xb0] sm:$0xff] %vm6031, %v6750
  %7195 = vst.msk [vmem:[%s3 + $0xb8] sm:$0xff] %vm6031, %v6753
  %7196 = vst.msk [vmem:[%s3 + $0xc0] sm:$0xff] %vm6031, %v6758
  %7197 = vst.msk [vmem:[%s3 + $0xc8] sm:$0xff] %vm6031, %v6761
  %7198 = vst.msk [vmem:[%s3 + $0xd0] sm:$0xff] %vm6031, %v6766
  %7199 = vst.msk [vmem:[%s3 + $0xd8] sm:$0xff] %vm6031, %v6769
  %7200 = vst.msk [vmem:[%s3 + $0xe0] sm:$0xff] %vm6031, %v6774
  %7201 = vst.msk [vmem:[%s3 + $0xe8] sm:$0xff] %vm6031, %v6777
  %7202 = vst.msk [vmem:[%s3 + $0xf0] sm:$0xff] %vm6031, %v6782
  %7203 = vst.msk [vmem:[%s3 + $0xf8] sm:$0xff] %vm6031, %v6785
  %7204 = vst.msk [vmem:[%s3 + $0x100] sm:$0xff] %vm6031, %v6790
  %7205 = vst.msk [vmem:[%s3 + $0x108] sm:$0xff] %vm6031, %v6793
  %7206 = vst.msk [vmem:[%s3 + $0x110] sm:$0xff] %vm6031, %v6798
  %7207 = vst.msk [vmem:[%s3 + $0x118] sm:$0xff] %vm6031, %v6801
  %7208 = vst.msk [vmem:[%s3 + $0x120] sm:$0xff] %vm6031, %v6806
  %7209 = vst.msk [vmem:[%s3 + $0x128] sm:$0xff] %vm6031, %v6809
  %7210 = vst.msk [vmem:[%s3 + $0x130] sm:$0xff] %vm6031, %v6814
  %7211 = vst.msk [vmem:[%s3 + $0x138] sm:$0xff] %vm6031, %v6817
  %7212 = vst.msk [vmem:[%s3 + $0x140] sm:$0xff] %vm6031, %v6822
  %7213 = vst.msk [vmem:[%s3 + $0x148] sm:$0xff] %vm6031, %v6825
  %7214 = vst.msk [vmem:[%s3 + $0x150] sm:$0xff] %vm6031, %v6830
  %7215 = vst.msk [vmem:[%s3 + $0x158] sm:$0xff] %vm6031, %v6833
  %7216 = vst.msk [vmem:[%s3 + $0x160] sm:$0xff] %vm6031, %v6838
  %7217 = vst.msk [vmem:[%s3 + $0x168] sm:$0xff] %vm6031, %v6841
  %7218 = vst.msk [vmem:[%s3 + $0x170] sm:$0xff] %vm6031, %v6846
  %7219 = vst.msk [vmem:[%s3 + $0x178] sm:$0xff] %vm6031, %v6849
  %7220 = vst.msk [vmem:[%s3 + $0x180] sm:$0xff] %vm6031, %v6854
  %7221 = vst.msk [vmem:[%s3 + $0x188] sm:$0xff] %vm6031, %v6857
  %7222 = vst.msk [vmem:[%s3 + $0x190] sm:$0xff] %vm6031, %v6862
  %7223 = vst.msk [vmem:[%s3 + $0x198] sm:$0xff] %vm6031, %v6865
  %7224 = vst.msk [vmem:[%s3 + $0x1a0] sm:$0xff] %vm6031, %v6870
  %7225 = vst.msk [vmem:[%s3 + $0x1a8] sm:$0xff] %vm6031, %v6873
  %7226 = vst.msk [vmem:[%s3 + $0x1b0] sm:$0xff] %vm6031, %v6878
  %7227 = vst.msk [vmem:[%s3 + $0x1b8] sm:$0xff] %vm6031, %v6881
  %7228 = vst.msk [vmem:[%s3 + $0x1c0] sm:$0xff] %vm6031, %v6886
  %7229 = vst.msk [vmem:[%s3 + $0x1c8] sm:$0xff] %vm6031, %v6889
  %7230 = vst.msk [vmem:[%s3 + $0x1d0] sm:$0xff] %vm6031, %v6894
  %7231 = vst.msk [vmem:[%s3 + $0x1d8] sm:$0xff] %vm6031, %v6897
  %7232 = vst.msk [vmem:[%s3 + $0x1e0] sm:$0xff] %vm6031, %v6902
  %7233 = vst.msk [vmem:[%s3 + $0x1e8] sm:$0xff] %vm6031, %v6905
  %7234 = vst.msk [vmem:[%s3 + $0x1f0] sm:$0xff] %vm6031, %v6910
  %7235 = vst.msk [vmem:[%s3 + $0x1f8] sm:$0xff] %vm6031, %v6913
  %7236 = vst.msk [vmem:[%s3 + $0x200] sm:$0xff] %vm6031, %v6918
  %7237 = vst.msk [vmem:[%s3 + $0x208] sm:$0xff] %vm6031, %v6921
  %7238 = vst.msk [vmem:[%s3 + $0x210] sm:$0xff] %vm6031, %v6926
  %7239 = vst.msk [vmem:[%s3 + $0x218] sm:$0xff] %vm6031, %v6929
  %7240 = vst.msk [vmem:[%s3 + $0x220] sm:$0xff] %vm6031, %v6934
  %7241 = vst.msk [vmem:[%s3 + $0x228] sm:$0xff] %vm6031, %v6937
  %7242 = vst.msk [vmem:[%s3 + $0x230] sm:$0xff] %vm6031, %v6942
  %7243 = vst.msk [vmem:[%s3 + $0x238] sm:$0xff] %vm6031, %v6945
  %7244 = vst.msk [vmem:[%s3 + $0x240] sm:$0xff] %vm6031, %v6950
  %7245 = vst.msk [vmem:[%s3 + $0x248] sm:$0xff] %vm6031, %v6953
  %7246 = vst.msk [vmem:[%s3 + $0x250] sm:$0xff] %vm6031, %v6958
  %7247 = vst.msk [vmem:[%s3 + $0x258] sm:$0xff] %vm6031, %v6961
  %7248 = vst.msk [vmem:[%s3 + $0x260] sm:$0xff] %vm6031, %v6966
  %7249 = vst.msk [vmem:[%s3 + $0x268] sm:$0xff] %vm6031, %v6969
  %7250 = vst.msk [vmem:[%s3 + $0x270] sm:$0xff] %vm6031, %v6974
  %7251 = vst.msk [vmem:[%s3 + $0x278] sm:$0xff] %vm6031, %v6977
  %7252 = vst.msk [vmem:[%s3 + $0x280] sm:$0xff] %vm6031, %v6982
  %7253 = vst.msk [vmem:[%s3 + $0x288] sm:$0xff] %vm6031, %v6985
  %7254 = vst.msk [vmem:[%s3 + $0x290] sm:$0xff] %vm6031, %v6990
  %7255 = vst.msk [vmem:[%s3 + $0x298] sm:$0xff] %vm6031, %v6993
  %7256 = vst.msk [vmem:[%s3 + $0x2a0] sm:$0xff] %vm6031, %v6998
  %7257 = vst.msk [vmem:[%s3 + $0x2a8] sm:$0xff] %vm6031, %v7001
  %7258 = vst.msk [vmem:[%s3 + $0x2b0] sm:$0xff] %vm6031, %v7006
  %7259 = vst.msk [vmem:[%s3 + $0x2b8] sm:$0xff] %vm6031, %v7009
  %7260 = vst.msk [vmem:[%s3 + $0x2c0] sm:$0xff] %vm6031, %v7014
  %7261 = vst.msk [vmem:[%s3 + $0x2c8] sm:$0xff] %vm6031, %v7017
  %7262 = vst.msk [vmem:[%s3 + $0x2d0] sm:$0xff] %vm6031, %v7022
  %7263 = vst.msk [vmem:[%s3 + $0x2d8] sm:$0xff] %vm6031, %v7025
  %7264 = vst.msk [vmem:[%s3 + $0x2e0] sm:$0xff] %vm6031, %v7030
  %7265 = vst.msk [vmem:[%s3 + $0x2e8] sm:$0xff] %vm6031, %v7033
  %7266 = vst.msk [vmem:[%s3 + $0x2f0] sm:$0xff] %vm6031, %v7038
  %7267 = vst.msk [vmem:[%s3 + $0x2f8] sm:$0xff] %vm6031, %v7041
  %7268 = vst.msk [vmem:[%s3 + $0x300] sm:$0xff] %vm6031, %v7046
  %7269 = vst.msk [vmem:[%s3 + $0x308] sm:$0xff] %vm6031, %v7049
  %7270 = vst.msk [vmem:[%s3 + $0x310] sm:$0xff] %vm6031, %v7054
  %7271 = vst.msk [vmem:[%s3 + $0x318] sm:$0xff] %vm6031, %v7057
  %7272 = vst.msk [vmem:[%s3 + $0x320] sm:$0xff] %vm6031, %v7062
  %7273 = vst.msk [vmem:[%s3 + $0x328] sm:$0xff] %vm6031, %v7065
  %7274 = vst.msk [vmem:[%s3 + $0x330] sm:$0xff] %vm6031, %v7070
  %7275 = vst.msk [vmem:[%s3 + $0x338] sm:$0xff] %vm6031, %v7073
  %7276 = vst.msk [vmem:[%s3 + $0x340] sm:$0xff] %vm6031, %v7078
  %7277 = vst.msk [vmem:[%s3 + $0x348] sm:$0xff] %vm6031, %v7081
  %7278 = vst.msk [vmem:[%s3 + $0x350] sm:$0xff] %vm6031, %v7086
  %7279 = vst.msk [vmem:[%s3 + $0x358] sm:$0xff] %vm6031, %v7089
  %7280 = vst.msk [vmem:[%s3 + $0x360] sm:$0xff] %vm6031, %v7094
  %7281 = vst.msk [vmem:[%s3 + $0x368] sm:$0xff] %vm6031, %v7097
  %7282 = vst.msk [vmem:[%s3 + $0x370] sm:$0xff] %vm6031, %v7102
  %7283 = vst.msk [vmem:[%s3 + $0x378] sm:$0xff] %vm6031, %v7105
  %7284 = vst.msk [vmem:[%s3 + $0x380] sm:$0xff] %vm6031, %v7110
  %7285 = vst.msk [vmem:[%s3 + $0x388] sm:$0xff] %vm6031, %v7113
  %7286 = vst.msk [vmem:[%s3 + $0x390] sm:$0xff] %vm6031, %v7118
  %7287 = vst.msk [vmem:[%s3 + $0x398] sm:$0xff] %vm6031, %v7121
  %7288 = vst.msk [vmem:[%s3 + $0x3a0] sm:$0xff] %vm6031, %v7126
  %7289 = vst.msk [vmem:[%s3 + $0x3a8] sm:$0xff] %vm6031, %v7129
  %7290 = vst.msk [vmem:[%s3 + $0x3b0] sm:$0xff] %vm6031, %v7134
  %7291 = vst.msk [vmem:[%s3 + $0x3b8] sm:$0xff] %vm6031, %v7137
  %7292 = vst.msk [vmem:[%s3 + $0x3c0] sm:$0xff] %vm6031, %v7142
  %7293 = vst.msk [vmem:[%s3 + $0x3c8] sm:$0xff] %vm6031, %v7145
  %7294 = vst.msk [vmem:[%s3 + $0x3d0] sm:$0xff] %vm6031, %v7150
  %7295 = vst.msk [vmem:[%s3 + $0x3d8] sm:$0xff] %vm6031, %v7153
  %7296 = vst.msk [vmem:[%s3 + $0x3e0] sm:$0xff] %vm6031, %v7158
  %7297 = vst.msk [vmem:[%s3 + $0x3e8] sm:$0xff] %vm6031, %v7161
  %7298 = vst.msk [vmem:[%s3 + $0x3f0] sm:$0xff] %vm6031, %v7166
  %7299 = vst.msk [vmem:[%s3 + $0x3f8] sm:$0xff] %vm6031, %v7169
  // Predicated region
  $region14: #{tpu_custom_call.1} parent=0 // pred_check
    _
  $region15: #{tpu_custom_call.1} parent=0 // pred_check_branch
    %7301 = sbr.rel (0) target = $region17
  $region16: #{tpu_custom_call.1} parent=0 // pred_region
    _
  $region17: #{tpu_custom_call.1} parent=0 // pred_fallthru
    _
  // Predicated region
  $region18: #{tpu_custom_call.1} parent=0 // pred_check
    _
  $region19: #{tpu_custom_call.1} parent=0 // pred_check_branch
    %7303 = sbr.rel (0) target = $region21
  $region20: #{tpu_custom_call.1} parent=0 // pred_region
    _
  $region21: #{tpu_custom_call.1} parent=0 // pred_fallthru
    _

</llo_original>
